<compile_context>
chip_gen: v7x
topology: tpu7x:2x2x1
jax: 0.10.0
libtpu: 0.0.40
codegen_flags: <defaults>
</compile_context>

<pallas_src>
import functools
import math

import jax
import jax.numpy as jnp
from jax.experimental import pallas as pl
from jax.experimental.pallas import tpu as pltpu


# ----------------------------------------------------------------------------
# Kernels
# ----------------------------------------------------------------------------
def _conv3x3_bn_kernel(xp_ref, w_ref, scale_ref, shift_ref, *rest,
                       H, W, Cout, apply_relu, has_residual):
    """Fused 3x3 conv (stride 1 on a zero-padded input) + BN + (residual) + (ReLU).

    xp_ref   : (1, H+2, W+2, Cin)  zero-padded NHWC input tile (bf16)
    w_ref    : (9, Cin, Cout)      conv weights, 3x3 taps flattened (bf16)
    scale_ref: (1, Cout)           folded BN scale (f32)
    shift_ref: (1, Cout)           folded BN shift (f32)
    res_ref  : (1, H, W, Cout)     optional residual to add (bf16)
    out_ref  : (1, H, W, Cout)     output tile (bf16)
    """
    if has_residual:
        res_ref, out_ref = rest
    else:
        (out_ref,) = rest

    xp = xp_ref[0]                                      # (H+2, W+2, Cin)
    cin = xp.shape[-1]

    acc = jnp.zeros((H * W, Cout), jnp.float32)
    for dy in range(3):
        for dx in range(3):
            patch = xp[dy:dy + H, dx:dx + W, :]         # (H, W, Cin)
            patch2d = patch.reshape(H * W, cin)
            wk = w_ref[dy * 3 + dx]                     # (Cin, Cout)
            acc = acc + jnp.dot(patch2d, wk,
                                preferred_element_type=jnp.float32)

    y = acc * scale_ref[...] + shift_ref[...]           # (H*W, Cout) f32
    if has_residual:
        y = y + res_ref[0].reshape(H * W, Cout).astype(jnp.float32)
    if apply_relu:
        y = jnp.maximum(y, 0.0)
    out_ref[0] = y.reshape(H, W, Cout).astype(out_ref.dtype)


def _pool_fc_kernel(x_ref, w_ref, b_ref, o_ref, *, inv_hw):
    """Fused global average pool (== AvgPool2d(8) at 8x8 spatial) + linear head.

    x_ref: (B, Hs, Ws, C) bf16 ; w_ref: (C, num_classes) f32 ;
    b_ref: (1, num_classes) f32 ; o_ref: (B, num_classes) f32
    """
    x = x_ref[...].astype(jnp.float32)
    s = jnp.sum(x, axis=2)                              # (B, Hs, C)
    s = jnp.sum(s, axis=1)                              # (B, C)
    pooled = s * inv_hw
    o_ref[...] = (jnp.dot(pooled, w_ref[...],
                          preferred_element_type=jnp.float32)
                  + b_ref[...]).astype(o_ref.dtype)


# ----------------------------------------------------------------------------
# Pallas wrappers
# ----------------------------------------------------------------------------
def conv3x3_bn(x, w9, scale, shift, *, stride=1, relu=False, residual=None):
    """x: (B, H, W, Cin) NHWC bf16.  Returns (B, H/stride, W/stride, Cout)."""
    B, H, W, Cin = x.shape
    Cout = w9.shape[-1]
    xp = jnp.pad(x, ((0, 0), (1, 1), (1, 1), (0, 0)))   # zero pad, padding=1
    has_res = residual is not None

    kernel = functools.partial(
        _conv3x3_bn_kernel, H=H, W=W, Cout=Cout,
        apply_relu=relu, has_residual=has_res)

    in_specs = [
        pl.BlockSpec((1, H + 2, W + 2, Cin), lambda b: (b, 0, 0, 0)),
        pl.BlockSpec((9, Cin, Cout), lambda b: (0, 0, 0)),
        pl.BlockSpec((1, Cout), lambda b: (0, 0)),
        pl.BlockSpec((1, Cout), lambda b: (0, 0)),
    ]
    args = [xp, w9, scale.reshape(1, Cout), shift.reshape(1, Cout)]
    if has_res:
        in_specs.append(pl.BlockSpec((1, H, W, Cout), lambda b: (b, 0, 0, 0)))
        args.append(residual)

    out = pl.pallas_call(
        kernel,
        out_shape=jax.ShapeDtypeStruct((B, H, W, Cout), x.dtype),
        grid=(B,),
        in_specs=in_specs,
        out_specs=pl.BlockSpec((1, H, W, Cout), lambda b: (b, 0, 0, 0)),
        compiler_params=pltpu.CompilerParams(
            dimension_semantics=("parallel",)),
    )(*args)

    if stride == 2:
        # stride-2 3x3 conv (padding=1) == stride-1 conv sampled at even pixels
        out = out[:, ::2, ::2, :]
    return out


def avgpool_fc(x, w_fc, b_fc):
    """x: (B, Hs, Ws, C) bf16 -> logits (B, num_classes) f32."""
    B, Hs, Ws, C = x.shape
    num_classes = w_fc.shape[1]
    kernel = functools.partial(_pool_fc_kernel, inv_hw=1.0 / float(Hs * Ws))
    return pl.pallas_call(
        kernel,
        out_shape=jax.ShapeDtypeStruct((B, num_classes), jnp.float32),
    )(x, w_fc, b_fc.reshape(1, num_classes))


# ----------------------------------------------------------------------------
# ResNet structure (parameters + forward)
# ----------------------------------------------------------------------------
def _fold_bn(gamma, beta, mean, var, eps=1e-5):
    scale = gamma / jnp.sqrt(var + eps)
    shift = beta - mean * scale
    return scale.astype(jnp.float32), shift.astype(jnp.float32)


def _init_conv(key, cin, cout, dtype=jnp.bfloat16):
    std = math.sqrt(2.0 / (9 * cin))
    w = jax.random.normal(key, (3, 3, cin, cout), jnp.float32) * std
    return w.reshape(9, cin, cout).astype(dtype)


def _init_bn(cout):
    # torch.nn.BatchNorm2d defaults: weight=1, bias=0, running_mean=0, running_var=1
    gamma = jnp.ones((cout,), jnp.float32)
    beta = jnp.zeros((cout,), jnp.float32)
    mean = jnp.zeros((cout,), jnp.float32)
    var = jnp.ones((cout,), jnp.float32)
    return _fold_bn(gamma, beta, mean, var)


def _init_block(key, cin, cout, stride):
    k1, k2, kd = jax.random.split(key, 3)
    p = {"w1": _init_conv(k1, cin, cout), "w2": _init_conv(k2, cout, cout)}
    p["scale1"], p["shift1"] = _init_bn(cout)
    p["scale2"], p["shift2"] = _init_bn(cout)
    if stride != 1 or cin != cout:                      # downsample branch
        p["wd"] = _init_conv(kd, cin, cout)
        p["scaled"], p["shiftd"] = _init_bn(cout)
    return p


def init_resnet(key, layers=(1, 1, 1), num_classes=10):
    keys = jax.random.split(key, 2 + sum(layers))
    params = {"w_stem": _init_conv(keys[0], 4, 16)}
    params["scale_stem"], params["shift_stem"] = _init_bn(16)

    blocks = []
    idx = 1
    in_c = 16
    for out_c, n_blocks, stage_stride in zip((16, 32, 64), layers, (1, 2, 2)):
        stage = []
        for b in range(n_blocks):
            s = stage_stride if b == 0 else 1
            stage.append((_init_block(keys[idx], in_c, out_c, s), s))
            in_c = out_c
            idx += 1
        blocks.append(stage)
    params["blocks"] = blocks

    limit = 1.0 / math.sqrt(64)
    kw, kb = jax.random.split(keys[-1])
    params["w_fc"] = jax.random.uniform(kw, (64, num_classes), jnp.float32,
                                        -limit, limit)
    params["b_fc"] = jax.random.uniform(kb, (num_classes,), jnp.float32,
                                        -limit, limit)
    return params


def residual_block(x, p, *, stride):
    # out = relu(bn1(conv1(x)))
    out = conv3x3_bn(x, p["w1"], p["scale1"], p["shift1"],
                     stride=stride, relu=True)
    # residual = downsample(x) if present else x
    if "wd" in p:
        res = conv3x3_bn(x, p["wd"], p["scaled"], p["shiftd"],
                         stride=stride, relu=False)
    else:
        res = x
    # out = relu(bn2(conv2(out)) + residual)   (fused into one kernel)
    out = conv3x3_bn(out, p["w2"], p["scale2"], p["shift2"],
                     stride=1, relu=True, residual=res)
    return out


def resnet_forward(params, x):
    """x: (B, 4, H, W) NCHW float32 (same as the PyTorch module input)."""
    x = jnp.transpose(x, (0, 2, 3, 1)).astype(jnp.bfloat16)   # NHWC, bf16
    out = conv3x3_bn(x, params["w_stem"], params["scale_stem"],
                     params["shift_stem"], stride=1, relu=True)
    for stage in params["blocks"]:
        for block_params, stride in stage:
            out = residual_block(out, block_params, stride=stride)
    return avgpool_fc(out, params["w_fc"], params["b_fc"])


# ----------------------------------------------------------------------------
# Main
# ----------------------------------------------------------------------------
if __name__ == "__main__":
    # 32x32 input so that layer3 output is 8x8 and AvgPool2d(8) -> 1x1 (fc(64)).
    B, C_in, H, W = 2, 4, 32, 32
    num_classes = 10
    layers = (1, 1, 1)    # one residual block per stage (small ResNet)

    root = jax.random.PRNGKey(0)
    k_params, k_x = jax.random.split(root)

    params = init_resnet(k_params, layers=layers, num_classes=num_classes)
    x = jax.random.normal(k_x, (B, C_in, H, W), jnp.float32)

    out = resnet_forward(params, x)
    out = jax.block_until_ready(out)

    assert out.shape == (B, num_classes), out.shape
    assert bool(jnp.all(jnp.isfinite(out)))

    print("KERNEL_OK")
</pallas_src>

<mosaic_0001>
module attributes {stable_mosaic.version = 11 : i64} {
  func.func @_conv3x3_bn_kernel(%arg0: i32, %arg1: memref<1x34x34x4xbf16, #tpu.memory_space<vmem>>, %arg2: memref<9x4x16xbf16, #tpu.memory_space<vmem>>, %arg3: memref<1x16xf32, #tpu.memory_space<vmem>>, %arg4: memref<1x16xf32, #tpu.memory_space<vmem>>, %arg5: memref<1x32x32x16xbf16, #tpu.memory_space<vmem>>) attributes {dimension_semantics = [#tpu.dimension_semantics<parallel>], iteration_bounds = array<i64: 2>, scalar_prefetch = 0 : i64, scratch_operands = 0 : i64, tpu.core_type = #tpu.core_type<tc>, window_params = [{transform_indices = @transform_0, window_bounds = array<i64: 1, 34, 34, 4>}, {pipeline_mode = #tpu.pipeline_mode<synchronous>, transform_indices = @transform_1, window_bounds = array<i64: 9, 4, 16>}, {pipeline_mode = #tpu.pipeline_mode<synchronous>, transform_indices = @transform_2, window_bounds = array<i64: 1, 16>}, {pipeline_mode = #tpu.pipeline_mode<synchronous>, transform_indices = @transform_3, window_bounds = array<i64: 1, 16>}, {transform_indices = @transform_4, window_bounds = array<i64: 1, 32, 32, 16>}]} {
    %c0 = arith.constant 0 : index
    %c0_0 = arith.constant 0 : index
    %c0_1 = arith.constant 0 : index
    %c0_2 = arith.constant 0 : index
    %0 = vector.load %arg1[%c0, %c0_0, %c0_1, %c0_2] : memref<1x34x34x4xbf16, #tpu.memory_space<vmem>>, vector<1x34x34x4xbf16>
    %1 = vector.shape_cast %0 : vector<1x34x34x4xbf16> to vector<34x34x4xbf16>
    %cst = arith.constant 0.000000e+00 : f32
    %2 = vector.broadcast %cst : f32 to vector<1024x16xf32>
    %3 = vector.extract_strided_slice %1 {offsets = [0, 0, 0], sizes = [32, 32, 4], strides = [1, 1, 1]} : vector<34x34x4xbf16> to vector<32x32x4xbf16>
    %4 = vector.shape_cast %3 : vector<32x32x4xbf16> to vector<1024x4xbf16>
    %c0_3 = arith.constant 0 : index
    %c0_4 = arith.constant 0 : index
    %c0_5 = arith.constant 0 : index
    %5 = vector.load %arg2[%c0_3, %c0_4, %c0_5] : memref<9x4x16xbf16, #tpu.memory_space<vmem>>, vector<1x4x16xbf16>
    %6 = vector.shape_cast %5 : vector<1x4x16xbf16> to vector<4x16xbf16>
    %cst_6 = arith.constant dense<0.000000e+00> : vector<1024x16xf32>
    %7 = tpu.matmul %4, %6, %cst_6 {dimension_numbers = #tpu.dot_dimension_numbers<[1], [0], [0], [1], [0, 0, 1, 1], [], []>} : vector<1024x4xbf16>, vector<4x16xbf16>, vector<1024x16xf32> -> vector<1024x16xf32>
    %8 = arith.addf %2, %7 : vector<1024x16xf32>
    %9 = vector.extract_strided_slice %1 {offsets = [0, 1, 0], sizes = [32, 32, 4], strides = [1, 1, 1]} : vector<34x34x4xbf16> to vector<32x32x4xbf16>
    %10 = vector.shape_cast %9 : vector<32x32x4xbf16> to vector<1024x4xbf16>
    %c1 = arith.constant 1 : index
    %c0_7 = arith.constant 0 : index
    %c0_8 = arith.constant 0 : index
    %11 = vector.load %arg2[%c1, %c0_7, %c0_8] : memref<9x4x16xbf16, #tpu.memory_space<vmem>>, vector<1x4x16xbf16>
    %12 = vector.shape_cast %11 : vector<1x4x16xbf16> to vector<4x16xbf16>
    %cst_9 = arith.constant dense<0.000000e+00> : vector<1024x16xf32>
    %13 = tpu.matmul %10, %12, %cst_9 {dimension_numbers = #tpu.dot_dimension_numbers<[1], [0], [0], [1], [0, 0, 1, 1], [], []>} : vector<1024x4xbf16>, vector<4x16xbf16>, vector<1024x16xf32> -> vector<1024x16xf32>
    %14 = arith.addf %8, %13 : vector<1024x16xf32>
    %15 = vector.extract_strided_slice %1 {offsets = [0, 2, 0], sizes = [32, 32, 4], strides = [1, 1, 1]} : vector<34x34x4xbf16> to vector<32x32x4xbf16>
    %16 = vector.shape_cast %15 : vector<32x32x4xbf16> to vector<1024x4xbf16>
    %c2 = arith.constant 2 : index
    %c0_10 = arith.constant 0 : index
    %c0_11 = arith.constant 0 : index
    %17 = vector.load %arg2[%c2, %c0_10, %c0_11] : memref<9x4x16xbf16, #tpu.memory_space<vmem>>, vector<1x4x16xbf16>
    %18 = vector.shape_cast %17 : vector<1x4x16xbf16> to vector<4x16xbf16>
    %cst_12 = arith.constant dense<0.000000e+00> : vector<1024x16xf32>
    %19 = tpu.matmul %16, %18, %cst_12 {dimension_numbers = #tpu.dot_dimension_numbers<[1], [0], [0], [1], [0, 0, 1, 1], [], []>} : vector<1024x4xbf16>, vector<4x16xbf16>, vector<1024x16xf32> -> vector<1024x16xf32>
    %20 = arith.addf %14, %19 : vector<1024x16xf32>
    %21 = vector.extract_strided_slice %1 {offsets = [1, 0, 0], sizes = [32, 32, 4], strides = [1, 1, 1]} : vector<34x34x4xbf16> to vector<32x32x4xbf16>
    %22 = vector.shape_cast %21 : vector<32x32x4xbf16> to vector<1024x4xbf16>
    %c3 = arith.constant 3 : index
    %c0_13 = arith.constant 0 : index
    %c0_14 = arith.constant 0 : index
    %23 = vector.load %arg2[%c3, %c0_13, %c0_14] : memref<9x4x16xbf16, #tpu.memory_space<vmem>>, vector<1x4x16xbf16>
    %24 = vector.shape_cast %23 : vector<1x4x16xbf16> to vector<4x16xbf16>
    %cst_15 = arith.constant dense<0.000000e+00> : vector<1024x16xf32>
    %25 = tpu.matmul %22, %24, %cst_15 {dimension_numbers = #tpu.dot_dimension_numbers<[1], [0], [0], [1], [0, 0, 1, 1], [], []>} : vector<1024x4xbf16>, vector<4x16xbf16>, vector<1024x16xf32> -> vector<1024x16xf32>
    %26 = arith.addf %20, %25 : vector<1024x16xf32>
    %27 = vector.extract_strided_slice %1 {offsets = [1, 1, 0], sizes = [32, 32, 4], strides = [1, 1, 1]} : vector<34x34x4xbf16> to vector<32x32x4xbf16>
    %28 = vector.shape_cast %27 : vector<32x32x4xbf16> to vector<1024x4xbf16>
    %c4 = arith.constant 4 : index
    %c0_16 = arith.constant 0 : index
    %c0_17 = arith.constant 0 : index
    %29 = vector.load %arg2[%c4, %c0_16, %c0_17] : memref<9x4x16xbf16, #tpu.memory_space<vmem>>, vector<1x4x16xbf16>
    %30 = vector.shape_cast %29 : vector<1x4x16xbf16> to vector<4x16xbf16>
    %cst_18 = arith.constant dense<0.000000e+00> : vector<1024x16xf32>
    %31 = tpu.matmul %28, %30, %cst_18 {dimension_numbers = #tpu.dot_dimension_numbers<[1], [0], [0], [1], [0, 0, 1, 1], [], []>} : vector<1024x4xbf16>, vector<4x16xbf16>, vector<1024x16xf32> -> vector<1024x16xf32>
    %32 = arith.addf %26, %31 : vector<1024x16xf32>
    %33 = vector.extract_strided_slice %1 {offsets = [1, 2, 0], sizes = [32, 32, 4], strides = [1, 1, 1]} : vector<34x34x4xbf16> to vector<32x32x4xbf16>
    %34 = vector.shape_cast %33 : vector<32x32x4xbf16> to vector<1024x4xbf16>
    %c5 = arith.constant 5 : index
    %c0_19 = arith.constant 0 : index
    %c0_20 = arith.constant 0 : index
    %35 = vector.load %arg2[%c5, %c0_19, %c0_20] : memref<9x4x16xbf16, #tpu.memory_space<vmem>>, vector<1x4x16xbf16>
    %36 = vector.shape_cast %35 : vector<1x4x16xbf16> to vector<4x16xbf16>
    %cst_21 = arith.constant dense<0.000000e+00> : vector<1024x16xf32>
    %37 = tpu.matmul %34, %36, %cst_21 {dimension_numbers = #tpu.dot_dimension_numbers<[1], [0], [0], [1], [0, 0, 1, 1], [], []>} : vector<1024x4xbf16>, vector<4x16xbf16>, vector<1024x16xf32> -> vector<1024x16xf32>
    %38 = arith.addf %32, %37 : vector<1024x16xf32>
    %39 = vector.extract_strided_slice %1 {offsets = [2, 0, 0], sizes = [32, 32, 4], strides = [1, 1, 1]} : vector<34x34x4xbf16> to vector<32x32x4xbf16>
    %40 = vector.shape_cast %39 : vector<32x32x4xbf16> to vector<1024x4xbf16>
    %c6 = arith.constant 6 : index
    %c0_22 = arith.constant 0 : index
    %c0_23 = arith.constant 0 : index
    %41 = vector.load %arg2[%c6, %c0_22, %c0_23] : memref<9x4x16xbf16, #tpu.memory_space<vmem>>, vector<1x4x16xbf16>
    %42 = vector.shape_cast %41 : vector<1x4x16xbf16> to vector<4x16xbf16>
    %cst_24 = arith.constant dense<0.000000e+00> : vector<1024x16xf32>
    %43 = tpu.matmul %40, %42, %cst_24 {dimension_numbers = #tpu.dot_dimension_numbers<[1], [0], [0], [1], [0, 0, 1, 1], [], []>} : vector<1024x4xbf16>, vector<4x16xbf16>, vector<1024x16xf32> -> vector<1024x16xf32>
    %44 = arith.addf %38, %43 : vector<1024x16xf32>
    %45 = vector.extract_strided_slice %1 {offsets = [2, 1, 0], sizes = [32, 32, 4], strides = [1, 1, 1]} : vector<34x34x4xbf16> to vector<32x32x4xbf16>
    %46 = vector.shape_cast %45 : vector<32x32x4xbf16> to vector<1024x4xbf16>
    %c7 = arith.constant 7 : index
    %c0_25 = arith.constant 0 : index
    %c0_26 = arith.constant 0 : index
    %47 = vector.load %arg2[%c7, %c0_25, %c0_26] : memref<9x4x16xbf16, #tpu.memory_space<vmem>>, vector<1x4x16xbf16>
    %48 = vector.shape_cast %47 : vector<1x4x16xbf16> to vector<4x16xbf16>
    %cst_27 = arith.constant dense<0.000000e+00> : vector<1024x16xf32>
    %49 = tpu.matmul %46, %48, %cst_27 {dimension_numbers = #tpu.dot_dimension_numbers<[1], [0], [0], [1], [0, 0, 1, 1], [], []>} : vector<1024x4xbf16>, vector<4x16xbf16>, vector<1024x16xf32> -> vector<1024x16xf32>
    %50 = arith.addf %44, %49 : vector<1024x16xf32>
    %51 = vector.extract_strided_slice %1 {offsets = [2, 2, 0], sizes = [32, 32, 4], strides = [1, 1, 1]} : vector<34x34x4xbf16> to vector<32x32x4xbf16>
    %52 = vector.shape_cast %51 : vector<32x32x4xbf16> to vector<1024x4xbf16>
    %c8 = arith.constant 8 : index
    %c0_28 = arith.constant 0 : index
    %c0_29 = arith.constant 0 : index
    %53 = vector.load %arg2[%c8, %c0_28, %c0_29] : memref<9x4x16xbf16, #tpu.memory_space<vmem>>, vector<1x4x16xbf16>
    %54 = vector.shape_cast %53 : vector<1x4x16xbf16> to vector<4x16xbf16>
    %cst_30 = arith.constant dense<0.000000e+00> : vector<1024x16xf32>
    %55 = tpu.matmul %52, %54, %cst_30 {dimension_numbers = #tpu.dot_dimension_numbers<[1], [0], [0], [1], [0, 0, 1, 1], [], []>} : vector<1024x4xbf16>, vector<4x16xbf16>, vector<1024x16xf32> -> vector<1024x16xf32>
    %56 = arith.addf %50, %55 : vector<1024x16xf32>
    %c0_31 = arith.constant 0 : index
    %c0_32 = arith.constant 0 : index
    %57 = vector.load %arg3[%c0_31, %c0_32] : memref<1x16xf32, #tpu.memory_space<vmem>>, vector<1x16xf32>
    %58 = vector.broadcast %57 : vector<1x16xf32> to vector<1024x16xf32>
    %59 = arith.mulf %56, %58 : vector<1024x16xf32>
    %c0_33 = arith.constant 0 : index
    %c0_34 = arith.constant 0 : index
    %60 = vector.load %arg4[%c0_33, %c0_34] : memref<1x16xf32, #tpu.memory_space<vmem>>, vector<1x16xf32>
    %61 = vector.broadcast %60 : vector<1x16xf32> to vector<1024x16xf32>
    %62 = arith.addf %59, %61 : vector<1024x16xf32>
    %cst_35 = arith.constant 0.000000e+00 : f32
    %63 = vector.broadcast %cst_35 : f32 to vector<1024x16xf32>
    %64 = arith.maximumf %62, %63 : vector<1024x16xf32>
    %65 = vector.shape_cast %64 : vector<1024x16xf32> to vector<32x32x16xf32>
    %66 = arith.truncf %65 : vector<32x32x16xf32> to vector<32x32x16xbf16>
    %c0_36 = arith.constant 0 : index
    %c0_37 = arith.constant 0 : index
    %c0_38 = arith.constant 0 : index
    %c0_39 = arith.constant 0 : index
    %67 = vector.load %arg5[%c0_36, %c0_37, %c0_38, %c0_39] : memref<1x32x32x16xbf16, #tpu.memory_space<vmem>>, vector<1x32x32x16xbf16>
    %68 = vector.shape_cast %67 : vector<1x32x32x16xbf16> to vector<32x32x16xbf16>
    %69 = vector.shape_cast %66 : vector<32x32x16xbf16> to vector<1x32x32x16xbf16>
    tpu.vector_store %arg5[%c0_36, %c0_37, %c0_38, %c0_39], %69 {strides = array<i32>} : memref<1x32x32x16xbf16, #tpu.memory_space<vmem>>, vector<1x32x32x16xbf16>,
    return
  }
  func.func @transform_0(%arg0: i32) -> (i32, i32, i32, i32) {
    %c0_i32 = arith.constant 0 : i32
    %c0_i32_0 = arith.constant 0 : i32
    %c0_i32_1 = arith.constant 0 : i32
    %c0_i32_2 = arith.constant 0 : i32
    return %arg0, %c0_i32, %c0_i32_0, %c0_i32_1 : i32, i32, i32, i32
  }
  func.func @transform_1(%arg0: i32) -> (i32, i32, i32) {
    %c0_i32 = arith.constant 0 : i32
    %c0_i32_0 = arith.constant 0 : i32
    %c0_i32_1 = arith.constant 0 : i32
    %c0_i32_2 = arith.constant 0 : i32
    return %c0_i32, %c0_i32_0, %c0_i32_1 : i32, i32, i32
  }
  func.func @transform_2(%arg0: i32) -> (i32, i32) {
    %c0_i32 = arith.constant 0 : i32
    %c0_i32_0 = arith.constant 0 : i32
    %c0_i32_1 = arith.constant 0 : i32
    return %c0_i32, %c0_i32_0 : i32, i32
  }
  func.func @transform_3(%arg0: i32) -> (i32, i32) {
    %c0_i32 = arith.constant 0 : i32
    %c0_i32_0 = arith.constant 0 : i32
    %c0_i32_1 = arith.constant 0 : i32
    return %c0_i32, %c0_i32_0 : i32, i32
  }
  func.func @transform_4(%arg0: i32) -> (i32, i32, i32, i32) {
    %c0_i32 = arith.constant 0 : i32
    %c0_i32_0 = arith.constant 0 : i32
    %c0_i32_1 = arith.constant 0 : i32
    %c0_i32_2 = arith.constant 0 : i32
    return %arg0, %c0_i32, %c0_i32_0, %c0_i32_1 : i32, i32, i32, i32
  }
}

</mosaic_0001>

<llo_original>
// kernel: tpu_custom_call.1
$region0: #{tpu_custom_call.1}
  #allocation0 [shape = 'u32[]', space=smem, size = 0x4, offset = 0x4, fixed_abs, tag = 'smem constant byte address 0x4 - core index']
  #allocation1 [shape = 'u32[144,128]{1,0:T(1,128)}', space=vmem, size = 0x12000, scoped, tag = 'internal scratch']
  %s0 = inlined_call_operand.vmem [shape: bf16[2,34,34,4], index: 0, kind: input, shape index: {}]
  %s1 = inlined_call_operand.vmem [shape: bf16[9,4,16], index: 1, kind: input, shape index: {}]
  %s2 = inlined_call_operand.vmem [shape: f32[1,16], index: 2, kind: input, shape index: {}]
  %s3 = inlined_call_operand.vmem [shape: f32[1,16], index: 3, kind: input, shape index: {}]
  %s4 = inlined_call_operand.vmem [shape: bf16[2,32,32,16], index: 4, kind: output, shape index: {}]
  %s5 = sld [smem:[#allocation0]]
  $region49: #{tpu_custom_call.1} parent=0
    _
  %s7 = ssub.s32 1, %s5
  %s8 = scalar_select 0, %s7, %s5
  loop: start=0, step=1, limit=4
  $region2: #{tpu_custom_call.1} parent=0 // loop_pre_header
    _
  $region3: #{tpu_custom_call.1} parent=0 // loop_header
    %s10 = sphi 0, %s14
    %p11 = scmp.ge.s32.totalorder %s10, 4
    %s20 = sphi 0, %s22
    %s23 = sphi 0, %s20
    %s24 = sphi 0, %s23
    %s40 = sphi 0, %s24
    %s44 = sphi 0, %s44
    %s46 = sphi 0, %s44
    %s47 = sphi 0, %s46
    %s61 = sphi 0, %s47
    %s65 = sphi 0, %s65
    %s67 = sphi 0, %s65
    %s68 = sphi 0, %s67
    %s82 = sphi 0, %s68
    %s86 = sphi 0, %s86
    %s88 = sphi 0, %s86
    %s89 = sphi 0, %s88
    %s103 = sphi 0, %s89
    %s109 = sphi 0, %s111
    %s112 = sphi 0, %s109
    %s113 = sphi 0, %s112
    %s129 = sphi 0, %s113
  $region4: #{tpu_custom_call.1} parent=0 // loop_header_branch
    %13 = sbr.rel (%p11) target = $region8
  $region5: #{tpu_custom_call.1} parent=0 // loop_body
    %s15 = ssub.s32 %s10, 1
    %s16 = ssub.s32 %s10, 2
    %s17 = sadd.s32 %s10, 1
    %s18 = ssub.s32 %s10, %s17
    %p19 = scmp.eq.s32.totalorder %s18, 0
    %s21 = sadd.s32 %s20, 1
    %s22 = scalar_select %p19, %s20, %s21
    %p25 = pneg %p19
    %p26 = scmp.eq.s32.totalorder %s10, 1
    %p27 = por %p25, %p26
    %p28 = scmp.ne.s32.totalorder %s20, %s23
    %p29 = scmp.eq.s32.totalorder %s10, 0
    %p30 = por %p28, %p29
    %p31 = scmp.ne.s32.totalorder %s20, %s23
    %p32 = scmp.eq.s32.totalorder %s15, 1
    %p33 = por %p31, %p32
    %p34 = scmp.ne.s32.totalorder %s23, %s24
    %p35 = scmp.eq.s32.totalorder %s15, 0
    %p36 = por %p34, %p35
    %p37 = scmp.ne.s32.totalorder %s23, %s24
    %p38 = scmp.eq.s32.totalorder %s16, 1
    %p39 = por %p37, %p38
    %p41 = scmp.ne.s32.totalorder %s24, %s40
    %p42 = scmp.eq.s32.totalorder %s16, 0
    %p43 = por %p41, %p42
    %s45 = sadd.s32 %s44, 1
    %p48 = scmp.eq.s32.totalorder %s10, 1
    %p49 = scmp.ne.s32.totalorder %s44, %s46
    %p50 = scmp.eq.s32.totalorder %s10, 0
    %p51 = por %p49, %p50
    %p52 = scmp.ne.s32.totalorder %s44, %s46
    %p53 = scmp.eq.s32.totalorder %s15, 1
    %p54 = por %p52, %p53
    %p55 = scmp.ne.s32.totalorder %s46, %s47
    %p56 = scmp.eq.s32.totalorder %s15, 0
    %p57 = por %p55, %p56
    %p58 = scmp.ne.s32.totalorder %s46, %s47
    %p59 = scmp.eq.s32.totalorder %s16, 1
    %p60 = por %p58, %p59
    %p62 = scmp.ne.s32.totalorder %s47, %s61
    %p63 = scmp.eq.s32.totalorder %s16, 0
    %p64 = por %p62, %p63
    %s66 = sadd.s32 %s65, 1
    %p69 = scmp.eq.s32.totalorder %s10, 1
    %p70 = scmp.ne.s32.totalorder %s65, %s67
    %p71 = scmp.eq.s32.totalorder %s10, 0
    %p72 = por %p70, %p71
    %p73 = scmp.ne.s32.totalorder %s65, %s67
    %p74 = scmp.eq.s32.totalorder %s15, 1
    %p75 = por %p73, %p74
    %p76 = scmp.ne.s32.totalorder %s67, %s68
    %p77 = scmp.eq.s32.totalorder %s15, 0
    %p78 = por %p76, %p77
    %p79 = scmp.ne.s32.totalorder %s67, %s68
    %p80 = scmp.eq.s32.totalorder %s16, 1
    %p81 = por %p79, %p80
    %p83 = scmp.ne.s32.totalorder %s68, %s82
    %p84 = scmp.eq.s32.totalorder %s16, 0
    %p85 = por %p83, %p84
    %s87 = sadd.s32 %s86, 1
    %p90 = scmp.eq.s32.totalorder %s10, 1
    %p91 = scmp.ne.s32.totalorder %s86, %s88
    %p92 = scmp.eq.s32.totalorder %s10, 0
    %p93 = por %p91, %p92
    %p94 = scmp.ne.s32.totalorder %s86, %s88
    %p95 = scmp.eq.s32.totalorder %s15, 1
    %p96 = por %p94, %p95
    %p97 = scmp.ne.s32.totalorder %s88, %s89
    %p98 = scmp.eq.s32.totalorder %s15, 0
    %p99 = por %p97, %p98
    %p100 = scmp.ne.s32.totalorder %s88, %s89
    %p101 = scmp.eq.s32.totalorder %s16, 1
    %p102 = por %p100, %p101
    %p104 = scmp.ne.s32.totalorder %s89, %s103
    %p105 = scmp.eq.s32.totalorder %s16, 0
    %p106 = por %p104, %p105
    %s107 = ssub.s32 %s10, %s17
    %p108 = scmp.eq.s32.totalorder %s107, 0
    %s110 = sadd.s32 %s109, 1
    %s111 = scalar_select %p108, %s109, %s110
    %p114 = pneg %p108
    %p115 = scmp.eq.s32.totalorder %s10, 1
    %p116 = por %p114, %p115
    %p117 = scmp.ne.s32.totalorder %s109, %s112
    %p118 = scmp.eq.s32.totalorder %s10, 0
    %p119 = por %p117, %p118
    %p120 = scmp.ne.s32.totalorder %s109, %s112
    %p121 = scmp.eq.s32.totalorder %s15, 1
    %p122 = por %p120, %p121
    %p123 = scmp.ne.s32.totalorder %s112, %s113
    %p124 = scmp.eq.s32.totalorder %s15, 0
    %p125 = por %p123, %p124
    %p126 = scmp.ne.s32.totalorder %s112, %s113
    %p127 = scmp.eq.s32.totalorder %s16, 1
    %p128 = por %p126, %p127
    %p130 = scmp.ne.s32.totalorder %s113, %s129
    %p131 = scmp.eq.s32.totalorder %s16, 0
    %p132 = por %p130, %p131
    %p133 = scmp.le.s32.totalorder 1, %s10
    %p134 = scmp.lt.s32.totalorder %s10, 3
    %p135 = pnand %p133, %p134
    %p136 = pneg %p135
    // Predicated region
    $region9: #{tpu_custom_call.1} parent=5 // pred_check
      _
    $region10: #{tpu_custom_call.1} parent=5 // pred_check_branch
      %138 = sbr.rel (%p135) target = $region12
    $region11: #{tpu_custom_call.1} parent=5 // pred_region
      %s139 = ssub.s32 %s10, 1
      // Predicated region
      $region13: #{tpu_custom_call.1} parent=11 // pred_check
        %p140 = pneg %p57
      $region14: #{tpu_custom_call.1} parent=11 // pred_check_branch
        %142 = sbr.rel (%p140) target = $region16
      $region15: #{tpu_custom_call.1} parent=11 // pred_region
        _
      $region16: #{tpu_custom_call.1} parent=11 // pred_fallthru
        _
      // Predicated region
      $region17: #{tpu_custom_call.1} parent=11 // pred_check
        %p143 = pneg %p78
      $region18: #{tpu_custom_call.1} parent=11 // pred_check_branch
        %145 = sbr.rel (%p143) target = $region20
      $region19: #{tpu_custom_call.1} parent=11 // pred_region
        _
      $region20: #{tpu_custom_call.1} parent=11 // pred_fallthru
        _
      // Predicated region
      $region21: #{tpu_custom_call.1} parent=11 // pred_check
        %p146 = pneg %p99
      $region22: #{tpu_custom_call.1} parent=11 // pred_check_branch
        %148 = sbr.rel (%p146) target = $region24
      $region23: #{tpu_custom_call.1} parent=11 // pred_region
        _
      $region24: #{tpu_custom_call.1} parent=11 // pred_fallthru
        _
    $region12: #{tpu_custom_call.1} parent=5 // pred_fallthru
      _
    %p149 = scmp.lt.s32.totalorder %s10, 2
    // Predicated region
    $region25: #{tpu_custom_call.1} parent=5 // pred_check
      %p150 = pneg %p149
    $region26: #{tpu_custom_call.1} parent=5 // pred_check_branch
      %152 = sbr.rel (%p150) target = $region28
    $region27: #{tpu_custom_call.1} parent=5 // pred_region
      // Predicated region
      $region29: #{tpu_custom_call.1} parent=27 // pred_check
        %p153 = pneg %p30
      $region30: #{tpu_custom_call.1} parent=27 // pred_check_branch
        %155 = sbr.rel (%p153) target = $region32
      $region31: #{tpu_custom_call.1} parent=27 // pred_region
        %p156 = scmp.lt.s32.totalorder %s10, 1
        %s157 = scalar_select %p156, %s10, 1
        %s158 = smul.addr %s157, 170
        %s159 = smul.addr %s158, 4
        %s160 = scalar_lea.vmem %s0, %s159
      $region32: #{tpu_custom_call.1} parent=27 // pred_fallthru
        _
    $region28: #{tpu_custom_call.1} parent=5 // pred_fallthru
      _
    %p161 = scmp.le.s32.totalorder 1, %s10
    %p162 = scmp.lt.s32.totalorder %s10, 3
    %p163 = pnand %p161, %p162
    %p164 = pneg %p163
    // Predicated region
    $region33: #{tpu_custom_call.1} parent=5 // pred_check
      _
    $region34: #{tpu_custom_call.1} parent=5 // pred_check_branch
      %166 = sbr.rel (%p163) target = $region36
    $region35: #{tpu_custom_call.1} parent=5 // pred_region
      %s167 = ssub.s32 %s10, 1
      %p168 = scmp.lt.s32.totalorder %s15, 1
      %s169 = scalar_select %p168, %s15, 1
      %s170 = smul.addr %s169, 170
      %s171 = smul.addr %s170, 4
      %s172 = scalar_lea.vmem %s0, %s171
      %p173 = pneg %p36
      %p174 = pneg %p33
      %p175 = pneg %p57
      %p176 = pneg %p54
      %p177 = pneg %p78
      %p178 = pneg %p75
      %p179 = pneg %p99
      %p180 = pneg %p96
      %p181 = pneg %p125
      %p182 = pneg %p122
      %p183 = scmp.lt.s32.totalorder %s15, 1
      %s184 = scalar_select %p183, %s15, 1
      %s185 = smul.addr %s184, 128
      %s186 = smul.addr %s185, 4
      %s187 = scalar_lea.vmem %s4, %s186
      %p188 = scmp.lt.s32.totalorder %s15, 1
      %s189 = scalar_select %p188, %s15, 1
      %s190 = smul.addr %s189, 170
      %s191 = smul.addr %s190, 4
      %s192 = scalar_lea.vmem %s0, %s191
      %p193 = scmp.lt.s32.totalorder %s15, 1
      %s194 = scalar_select %p193, %s15, 1
      %s195 = smul.addr %s194, 128
      %s196 = smul.addr %s195, 4
      %s197 = scalar_lea.vmem %s4, %s196
      %v199 = vld [vmem:[%s192] sm:$0xf]
      %v200 = vld [vmem:[%s192 + $0x4] sm:$0xf]
      %v201 = vld [vmem:[%s192 + $0x8] sm:$0xf]
      %v202 = vld [vmem:[%s192 + $0xc] sm:$0xf]
      %v203 = vld [vmem:[%s192 + $0x10] sm:$0x1]
      %v204 = vld [vmem:[%s192 + $0x14] sm:$0xf]
      %v205 = vld [vmem:[%s192 + $0x18] sm:$0xf]
      %v206 = vld [vmem:[%s192 + $0x1c] sm:$0xf]
      %v207 = vld [vmem:[%s192 + $0x20] sm:$0xf]
      %v208 = vld [vmem:[%s192 + $0x24] sm:$0x1]
      %v209 = vld [vmem:[%s192 + $0x28] sm:$0xf]
      %v210 = vld [vmem:[%s192 + $0x2c] sm:$0xf]
      %v211 = vld [vmem:[%s192 + $0x30] sm:$0xf]
      %v212 = vld [vmem:[%s192 + $0x34] sm:$0xf]
      %v213 = vld [vmem:[%s192 + $0x38] sm:$0x1]
      %v214 = vld [vmem:[%s192 + $0x3c] sm:$0xf]
      %v215 = vld [vmem:[%s192 + $0x40] sm:$0xf]
      %v216 = vld [vmem:[%s192 + $0x44] sm:$0xf]
      %v217 = vld [vmem:[%s192 + $0x48] sm:$0xf]
      %v218 = vld [vmem:[%s192 + $0x4c] sm:$0x1]
      %v219 = vld [vmem:[%s192 + $0x50] sm:$0xf]
      %v220 = vld [vmem:[%s192 + $0x54] sm:$0xf]
      %v221 = vld [vmem:[%s192 + $0x58] sm:$0xf]
      %v222 = vld [vmem:[%s192 + $0x5c] sm:$0xf]
      %v223 = vld [vmem:[%s192 + $0x60] sm:$0x1]
      %v224 = vld [vmem:[%s192 + $0x64] sm:$0xf]
      %v225 = vld [vmem:[%s192 + $0x68] sm:$0xf]
      %v226 = vld [vmem:[%s192 + $0x6c] sm:$0xf]
      %v227 = vld [vmem:[%s192 + $0x70] sm:$0xf]
      %v228 = vld [vmem:[%s192 + $0x74] sm:$0x1]
      %v229 = vld [vmem:[%s192 + $0x78] sm:$0xf]
      %v230 = vld [vmem:[%s192 + $0x7c] sm:$0xf]
      %v231 = vld [vmem:[%s192 + $0x80] sm:$0xf]
      %v232 = vld [vmem:[%s192 + $0x84] sm:$0xf]
      %v233 = vld [vmem:[%s192 + $0x88] sm:$0x1]
      %v234 = vld [vmem:[%s192 + $0x8c] sm:$0xf]
      %v235 = vld [vmem:[%s192 + $0x90] sm:$0xf]
      %v236 = vld [vmem:[%s192 + $0x94] sm:$0xf]
      %v237 = vld [vmem:[%s192 + $0x98] sm:$0xf]
      %v238 = vld [vmem:[%s192 + $0x9c] sm:$0x1]
      %v239 = vld [vmem:[%s192 + $0xa0] sm:$0xf]
      %v240 = vld [vmem:[%s192 + $0xa4] sm:$0xf]
      %v241 = vld [vmem:[%s192 + $0xa8] sm:$0xf]
      %v242 = vld [vmem:[%s192 + $0xac] sm:$0xf]
      %v243 = vld [vmem:[%s192 + $0xb0] sm:$0x1]
      %v244 = vld [vmem:[%s192 + $0xb4] sm:$0xf]
      %v245 = vld [vmem:[%s192 + $0xb8] sm:$0xf]
      %v246 = vld [vmem:[%s192 + $0xbc] sm:$0xf]
      %v247 = vld [vmem:[%s192 + $0xc0] sm:$0xf]
      %v248 = vld [vmem:[%s192 + $0xc4] sm:$0x1]
      %v249 = vld [vmem:[%s192 + $0xc8] sm:$0xf]
      %v250 = vld [vmem:[%s192 + $0xcc] sm:$0xf]
      %v251 = vld [vmem:[%s192 + $0xd0] sm:$0xf]
      %v252 = vld [vmem:[%s192 + $0xd4] sm:$0xf]
      %v253 = vld [vmem:[%s192 + $0xd8] sm:$0x1]
      %v254 = vld [vmem:[%s192 + $0xdc] sm:$0xf]
      %v255 = vld [vmem:[%s192 + $0xe0] sm:$0xf]
      %v256 = vld [vmem:[%s192 + $0xe4] sm:$0xf]
      %v257 = vld [vmem:[%s192 + $0xe8] sm:$0xf]
      %v258 = vld [vmem:[%s192 + $0xec] sm:$0x1]
      %v259 = vld [vmem:[%s192 + $0xf0] sm:$0xf]
      %v260 = vld [vmem:[%s192 + $0xf4] sm:$0xf]
      %v261 = vld [vmem:[%s192 + $0xf8] sm:$0xf]
      %v262 = vld [vmem:[%s192 + $0xfc] sm:$0xf]
      %v263 = vld [vmem:[%s192 + $0x100] sm:$0x1]
      %v264 = vld [vmem:[%s192 + $0x104] sm:$0xf]
      %v265 = vld [vmem:[%s192 + $0x108] sm:$0xf]
      %v266 = vld [vmem:[%s192 + $0x10c] sm:$0xf]
      %v267 = vld [vmem:[%s192 + $0x110] sm:$0xf]
      %v268 = vld [vmem:[%s192 + $0x114] sm:$0x1]
      %v269 = vld [vmem:[%s192 + $0x118] sm:$0xf]
      %v270 = vld [vmem:[%s192 + $0x11c] sm:$0xf]
      %v271 = vld [vmem:[%s192 + $0x120] sm:$0xf]
      %v272 = vld [vmem:[%s192 + $0x124] sm:$0xf]
      %v273 = vld [vmem:[%s192 + $0x128] sm:$0x1]
      %v274 = vld [vmem:[%s192 + $0x12c] sm:$0xf]
      %v275 = vld [vmem:[%s192 + $0x130] sm:$0xf]
      %v276 = vld [vmem:[%s192 + $0x134] sm:$0xf]
      %v277 = vld [vmem:[%s192 + $0x138] sm:$0xf]
      %v278 = vld [vmem:[%s192 + $0x13c] sm:$0x1]
      %v279 = vld [vmem:[%s192 + $0x140] sm:$0xf]
      %v280 = vld [vmem:[%s192 + $0x144] sm:$0xf]
      %v281 = vld [vmem:[%s192 + $0x148] sm:$0xf]
      %v282 = vld [vmem:[%s192 + $0x14c] sm:$0xf]
      %v283 = vld [vmem:[%s192 + $0x150] sm:$0x1]
      %v284 = vld [vmem:[%s192 + $0x154] sm:$0xf]
      %v285 = vld [vmem:[%s192 + $0x158] sm:$0xf]
      %v286 = vld [vmem:[%s192 + $0x15c] sm:$0xf]
      %v287 = vld [vmem:[%s192 + $0x160] sm:$0xf]
      %v288 = vld [vmem:[%s192 + $0x164] sm:$0x1]
      %v289 = vld [vmem:[%s192 + $0x168] sm:$0xf]
      %v290 = vld [vmem:[%s192 + $0x16c] sm:$0xf]
      %v291 = vld [vmem:[%s192 + $0x170] sm:$0xf]
      %v292 = vld [vmem:[%s192 + $0x174] sm:$0xf]
      %v293 = vld [vmem:[%s192 + $0x178] sm:$0x1]
      %v294 = vld [vmem:[%s192 + $0x17c] sm:$0xf]
      %v295 = vld [vmem:[%s192 + $0x180] sm:$0xf]
      %v296 = vld [vmem:[%s192 + $0x184] sm:$0xf]
      %v297 = vld [vmem:[%s192 + $0x188] sm:$0xf]
      %v298 = vld [vmem:[%s192 + $0x18c] sm:$0x1]
      %v299 = vld [vmem:[%s192 + $0x190] sm:$0xf]
      %v300 = vld [vmem:[%s192 + $0x194] sm:$0xf]
      %v301 = vld [vmem:[%s192 + $0x198] sm:$0xf]
      %v302 = vld [vmem:[%s192 + $0x19c] sm:$0xf]
      %v303 = vld [vmem:[%s192 + $0x1a0] sm:$0x1]
      %v304 = vld [vmem:[%s192 + $0x1a4] sm:$0xf]
      %v305 = vld [vmem:[%s192 + $0x1a8] sm:$0xf]
      %v306 = vld [vmem:[%s192 + $0x1ac] sm:$0xf]
      %v307 = vld [vmem:[%s192 + $0x1b0] sm:$0xf]
      %v308 = vld [vmem:[%s192 + $0x1b4] sm:$0x1]
      %v309 = vld [vmem:[%s192 + $0x1b8] sm:$0xf]
      %v310 = vld [vmem:[%s192 + $0x1bc] sm:$0xf]
      %v311 = vld [vmem:[%s192 + $0x1c0] sm:$0xf]
      %v312 = vld [vmem:[%s192 + $0x1c4] sm:$0xf]
      %v313 = vld [vmem:[%s192 + $0x1c8] sm:$0x1]
      %v314 = vld [vmem:[%s192 + $0x1cc] sm:$0xf]
      %v315 = vld [vmem:[%s192 + $0x1d0] sm:$0xf]
      %v316 = vld [vmem:[%s192 + $0x1d4] sm:$0xf]
      %v317 = vld [vmem:[%s192 + $0x1d8] sm:$0xf]
      %v318 = vld [vmem:[%s192 + $0x1dc] sm:$0x1]
      %v319 = vld [vmem:[%s192 + $0x1e0] sm:$0xf]
      %v320 = vld [vmem:[%s192 + $0x1e4] sm:$0xf]
      %v321 = vld [vmem:[%s192 + $0x1e8] sm:$0xf]
      %v322 = vld [vmem:[%s192 + $0x1ec] sm:$0xf]
      %v323 = vld [vmem:[%s192 + $0x1f0] sm:$0x1]
      %v324 = vld [vmem:[%s192 + $0x1f4] sm:$0xf]
      %v325 = vld [vmem:[%s192 + $0x1f8] sm:$0xf]
      %v326 = vld [vmem:[%s192 + $0x1fc] sm:$0xf]
      %v327 = vld [vmem:[%s192 + $0x200] sm:$0xf]
      %v328 = vld [vmem:[%s192 + $0x204] sm:$0x1]
      %v329 = vld [vmem:[%s192 + $0x208] sm:$0xf]
      %v330 = vld [vmem:[%s192 + $0x20c] sm:$0xf]
      %v331 = vld [vmem:[%s192 + $0x210] sm:$0xf]
      %v332 = vld [vmem:[%s192 + $0x214] sm:$0xf]
      %v333 = vld [vmem:[%s192 + $0x218] sm:$0x1]
      %v334 = vld [vmem:[%s192 + $0x21c] sm:$0xf]
      %v335 = vld [vmem:[%s192 + $0x220] sm:$0xf]
      %v336 = vld [vmem:[%s192 + $0x224] sm:$0xf]
      %v337 = vld [vmem:[%s192 + $0x228] sm:$0xf]
      %v338 = vld [vmem:[%s192 + $0x22c] sm:$0x1]
      %v339 = vld [vmem:[%s192 + $0x230] sm:$0xf]
      %v340 = vld [vmem:[%s192 + $0x234] sm:$0xf]
      %v341 = vld [vmem:[%s192 + $0x238] sm:$0xf]
      %v342 = vld [vmem:[%s192 + $0x23c] sm:$0xf]
      %v343 = vld [vmem:[%s192 + $0x240] sm:$0x1]
      %v344 = vld [vmem:[%s192 + $0x244] sm:$0xf]
      %v345 = vld [vmem:[%s192 + $0x248] sm:$0xf]
      %v346 = vld [vmem:[%s192 + $0x24c] sm:$0xf]
      %v347 = vld [vmem:[%s192 + $0x250] sm:$0xf]
      %v348 = vld [vmem:[%s192 + $0x254] sm:$0x1]
      %v349 = vld [vmem:[%s192 + $0x258] sm:$0xf]
      %v350 = vld [vmem:[%s192 + $0x25c] sm:$0xf]
      %v351 = vld [vmem:[%s192 + $0x260] sm:$0xf]
      %v352 = vld [vmem:[%s192 + $0x264] sm:$0xf]
      %v353 = vld [vmem:[%s192 + $0x268] sm:$0x1]
      %v354 = vld [vmem:[%s192 + $0x26c] sm:$0xf]
      %v355 = vld [vmem:[%s192 + $0x270] sm:$0xf]
      %v356 = vld [vmem:[%s192 + $0x274] sm:$0xf]
      %v357 = vld [vmem:[%s192 + $0x278] sm:$0xf]
      %v358 = vld [vmem:[%s192 + $0x27c] sm:$0x1]
      %v359 = vld [vmem:[%s192 + $0x280] sm:$0xf]
      %v360 = vld [vmem:[%s192 + $0x284] sm:$0xf]
      %v361 = vld [vmem:[%s192 + $0x288] sm:$0xf]
      %v362 = vld [vmem:[%s192 + $0x28c] sm:$0xf]
      %v363 = vld [vmem:[%s192 + $0x290] sm:$0x1]
      %v364 = vld [vmem:[%s192 + $0x294] sm:$0xf]
      %v365 = vld [vmem:[%s192 + $0x298] sm:$0xf]
      %v366 = vld [vmem:[%s192 + $0x29c] sm:$0xf]
      %v367 = vld [vmem:[%s192 + $0x2a0] sm:$0xf]
      %v368 = vld [vmem:[%s192 + $0x2a4] sm:$0x1]
      %v369 = vld [vmem:[%s1] sm:$0x3]
      %vm370 = vsmask.f32 3328
      %vm371 = vsmask.f32 7440
      %vm372 = vmor %vm370, %vm371
      %v374 = vshrl.u32 %v199, 16
      %v376 = vrot.slane %v374, 4
      %v377 = vshll.u32 %v199, 16
      %v379 = vrot.slane %v377, 5
      %v380 = vor.u32 %v376, %v379
      %v381 = vrot.slane %v380, 4
      %v383 = vshll.u32 %v200, 16
      %v385 = vrot.slane %v383, 5
      %v386 = vsel %vm372, %v381, %v385
      %v387 = vshrl.u32 %v200, 16
      %v389 = vrot.slane %v387, 4
      %v390 = vor.u32 %v389, %v385
      %v391 = vrot.slane %v390, 4
      %v393 = vshll.u32 %v201, 16
      %v395 = vrot.slane %v393, 5
      %v396 = vsel %vm372, %v391, %v395
      %v397 = vshrl.u32 %v201, 16
      %v399 = vrot.slane %v397, 4
      %v400 = vor.u32 %v399, %v395
      %v401 = vrot.slane %v400, 4
      %v403 = vshll.u32 %v202, 16
      %v405 = vrot.slane %v403, 5
      %v406 = vsel %vm372, %v401, %v405
      %v407 = vshrl.u32 %v202, 16
      %v409 = vrot.slane %v407, 4
      %v410 = vor.u32 %v409, %v405
      %v411 = vrot.slane %v410, 4
      %v413 = vshll.u32 %v203, 16
      %v415 = vrot.slane %v413, 5
      %v416 = vsel %vm372, %v411, %v415
      %v418 = vshrl.u32 %v204, 16
      %v420 = vrot.slane %v418, 4
      %v421 = vshll.u32 %v204, 16
      %v423 = vrot.slane %v421, 5
      %v424 = vor.u32 %v420, %v423
      %v425 = vrot.slane %v424, 4
      %v427 = vshll.u32 %v205, 16
      %v429 = vrot.slane %v427, 5
      %v430 = vsel %vm372, %v425, %v429
      %v431 = vshrl.u32 %v205, 16
      %v433 = vrot.slane %v431, 4
      %v434 = vor.u32 %v433, %v429
      %v435 = vrot.slane %v434, 4
      %v437 = vshll.u32 %v206, 16
      %v439 = vrot.slane %v437, 5
      %v440 = vsel %vm372, %v435, %v439
      %v441 = vshrl.u32 %v206, 16
      %v443 = vrot.slane %v441, 4
      %v444 = vor.u32 %v443, %v439
      %v445 = vrot.slane %v444, 4
      %v447 = vshll.u32 %v207, 16
      %v449 = vrot.slane %v447, 5
      %v450 = vsel %vm372, %v445, %v449
      %v451 = vshrl.u32 %v207, 16
      %v453 = vrot.slane %v451, 4
      %v454 = vor.u32 %v453, %v449
      %v455 = vrot.slane %v454, 4
      %v457 = vshll.u32 %v208, 16
      %v459 = vrot.slane %v457, 5
      %v460 = vsel %vm372, %v455, %v459
      %v462 = vshrl.u32 %v209, 16
      %v464 = vrot.slane %v462, 4
      %v465 = vshll.u32 %v209, 16
      %v467 = vrot.slane %v465, 5
      %v468 = vor.u32 %v464, %v467
      %v469 = vrot.slane %v468, 4
      %v471 = vshll.u32 %v210, 16
      %v473 = vrot.slane %v471, 5
      %v474 = vsel %vm372, %v469, %v473
      %v475 = vshrl.u32 %v210, 16
      %v477 = vrot.slane %v475, 4
      %v478 = vor.u32 %v477, %v473
      %v479 = vrot.slane %v478, 4
      %v481 = vshll.u32 %v211, 16
      %v483 = vrot.slane %v481, 5
      %v484 = vsel %vm372, %v479, %v483
      %v485 = vshrl.u32 %v211, 16
      %v487 = vrot.slane %v485, 4
      %v488 = vor.u32 %v487, %v483
      %v489 = vrot.slane %v488, 4
      %v491 = vshll.u32 %v212, 16
      %v493 = vrot.slane %v491, 5
      %v494 = vsel %vm372, %v489, %v493
      %v495 = vshrl.u32 %v212, 16
      %v497 = vrot.slane %v495, 4
      %v498 = vor.u32 %v497, %v493
      %v499 = vrot.slane %v498, 4
      %v501 = vshll.u32 %v213, 16
      %v503 = vrot.slane %v501, 5
      %v504 = vsel %vm372, %v499, %v503
      %v506 = vshrl.u32 %v214, 16
      %v508 = vrot.slane %v506, 4
      %v509 = vshll.u32 %v214, 16
      %v511 = vrot.slane %v509, 5
      %v512 = vor.u32 %v508, %v511
      %v513 = vrot.slane %v512, 4
      %v515 = vshll.u32 %v215, 16
      %v517 = vrot.slane %v515, 5
      %v518 = vsel %vm372, %v513, %v517
      %v519 = vshrl.u32 %v215, 16
      %v521 = vrot.slane %v519, 4
      %v522 = vor.u32 %v521, %v517
      %v523 = vrot.slane %v522, 4
      %v525 = vshll.u32 %v216, 16
      %v527 = vrot.slane %v525, 5
      %v528 = vsel %vm372, %v523, %v527
      %v529 = vshrl.u32 %v216, 16
      %v531 = vrot.slane %v529, 4
      %v532 = vor.u32 %v531, %v527
      %v533 = vrot.slane %v532, 4
      %v535 = vshll.u32 %v217, 16
      %v537 = vrot.slane %v535, 5
      %v538 = vsel %vm372, %v533, %v537
      %v539 = vshrl.u32 %v217, 16
      %v541 = vrot.slane %v539, 4
      %v542 = vor.u32 %v541, %v537
      %v543 = vrot.slane %v542, 4
      %v545 = vshll.u32 %v218, 16
      %v547 = vrot.slane %v545, 5
      %v548 = vsel %vm372, %v543, %v547
      %v550 = vshrl.u32 %v219, 16
      %v552 = vrot.slane %v550, 4
      %v553 = vshll.u32 %v219, 16
      %v555 = vrot.slane %v553, 5
      %v556 = vor.u32 %v552, %v555
      %v557 = vrot.slane %v556, 4
      %v559 = vshll.u32 %v220, 16
      %v561 = vrot.slane %v559, 5
      %v562 = vsel %vm372, %v557, %v561
      %v563 = vshrl.u32 %v220, 16
      %v565 = vrot.slane %v563, 4
      %v566 = vor.u32 %v565, %v561
      %v567 = vrot.slane %v566, 4
      %v569 = vshll.u32 %v221, 16
      %v571 = vrot.slane %v569, 5
      %v572 = vsel %vm372, %v567, %v571
      %v573 = vshrl.u32 %v221, 16
      %v575 = vrot.slane %v573, 4
      %v576 = vor.u32 %v575, %v571
      %v577 = vrot.slane %v576, 4
      %v579 = vshll.u32 %v222, 16
      %v581 = vrot.slane %v579, 5
      %v582 = vsel %vm372, %v577, %v581
      %v583 = vshrl.u32 %v222, 16
      %v585 = vrot.slane %v583, 4
      %v586 = vor.u32 %v585, %v581
      %v587 = vrot.slane %v586, 4
      %v589 = vshll.u32 %v223, 16
      %v591 = vrot.slane %v589, 5
      %v592 = vsel %vm372, %v587, %v591
      %v594 = vshrl.u32 %v224, 16
      %v596 = vrot.slane %v594, 4
      %v597 = vshll.u32 %v224, 16
      %v599 = vrot.slane %v597, 5
      %v600 = vor.u32 %v596, %v599
      %v601 = vrot.slane %v600, 4
      %v603 = vshll.u32 %v225, 16
      %v605 = vrot.slane %v603, 5
      %v606 = vsel %vm372, %v601, %v605
      %v607 = vshrl.u32 %v225, 16
      %v609 = vrot.slane %v607, 4
      %v610 = vor.u32 %v609, %v605
      %v611 = vrot.slane %v610, 4
      %v613 = vshll.u32 %v226, 16
      %v615 = vrot.slane %v613, 5
      %v616 = vsel %vm372, %v611, %v615
      %v617 = vshrl.u32 %v226, 16
      %v619 = vrot.slane %v617, 4
      %v620 = vor.u32 %v619, %v615
      %v621 = vrot.slane %v620, 4
      %v623 = vshll.u32 %v227, 16
      %v625 = vrot.slane %v623, 5
      %v626 = vsel %vm372, %v621, %v625
      %v627 = vshrl.u32 %v227, 16
      %v629 = vrot.slane %v627, 4
      %v630 = vor.u32 %v629, %v625
      %v631 = vrot.slane %v630, 4
      %v633 = vshll.u32 %v228, 16
      %v635 = vrot.slane %v633, 5
      %v636 = vsel %vm372, %v631, %v635
      %v638 = vshrl.u32 %v229, 16
      %v640 = vrot.slane %v638, 4
      %v641 = vshll.u32 %v229, 16
      %v643 = vrot.slane %v641, 5
      %v644 = vor.u32 %v640, %v643
      %v645 = vrot.slane %v644, 4
      %v647 = vshll.u32 %v230, 16
      %v649 = vrot.slane %v647, 5
      %v650 = vsel %vm372, %v645, %v649
      %v651 = vshrl.u32 %v230, 16
      %v653 = vrot.slane %v651, 4
      %v654 = vor.u32 %v653, %v649
      %v655 = vrot.slane %v654, 4
      %v657 = vshll.u32 %v231, 16
      %v659 = vrot.slane %v657, 5
      %v660 = vsel %vm372, %v655, %v659
      %v661 = vshrl.u32 %v231, 16
      %v663 = vrot.slane %v661, 4
      %v664 = vor.u32 %v663, %v659
      %v665 = vrot.slane %v664, 4
      %v667 = vshll.u32 %v232, 16
      %v669 = vrot.slane %v667, 5
      %v670 = vsel %vm372, %v665, %v669
      %v671 = vshrl.u32 %v232, 16
      %v673 = vrot.slane %v671, 4
      %v674 = vor.u32 %v673, %v669
      %v675 = vrot.slane %v674, 4
      %v677 = vshll.u32 %v233, 16
      %v679 = vrot.slane %v677, 5
      %v680 = vsel %vm372, %v675, %v679
      %v682 = vshrl.u32 %v234, 16
      %v684 = vrot.slane %v682, 4
      %v685 = vshll.u32 %v234, 16
      %v687 = vrot.slane %v685, 5
      %v688 = vor.u32 %v684, %v687
      %v689 = vrot.slane %v688, 4
      %v691 = vshll.u32 %v235, 16
      %v693 = vrot.slane %v691, 5
      %v694 = vsel %vm372, %v689, %v693
      %v695 = vshrl.u32 %v235, 16
      %v697 = vrot.slane %v695, 4
      %v698 = vor.u32 %v697, %v693
      %v699 = vrot.slane %v698, 4
      %v701 = vshll.u32 %v236, 16
      %v703 = vrot.slane %v701, 5
      %v704 = vsel %vm372, %v699, %v703
      %v705 = vshrl.u32 %v236, 16
      %v707 = vrot.slane %v705, 4
      %v708 = vor.u32 %v707, %v703
      %v709 = vrot.slane %v708, 4
      %v711 = vshll.u32 %v237, 16
      %v713 = vrot.slane %v711, 5
      %v714 = vsel %vm372, %v709, %v713
      %v715 = vshrl.u32 %v237, 16
      %v717 = vrot.slane %v715, 4
      %v718 = vor.u32 %v717, %v713
      %v719 = vrot.slane %v718, 4
      %v721 = vshll.u32 %v238, 16
      %v723 = vrot.slane %v721, 5
      %v724 = vsel %vm372, %v719, %v723
      %v726 = vshrl.u32 %v239, 16
      %v728 = vrot.slane %v726, 4
      %v729 = vshll.u32 %v239, 16
      %v731 = vrot.slane %v729, 5
      %v732 = vor.u32 %v728, %v731
      %v733 = vrot.slane %v732, 4
      %v735 = vshll.u32 %v240, 16
      %v737 = vrot.slane %v735, 5
      %v738 = vsel %vm372, %v733, %v737
      %v739 = vshrl.u32 %v240, 16
      %v741 = vrot.slane %v739, 4
      %v742 = vor.u32 %v741, %v737
      %v743 = vrot.slane %v742, 4
      %v745 = vshll.u32 %v241, 16
      %v747 = vrot.slane %v745, 5
      %v748 = vsel %vm372, %v743, %v747
      %v749 = vshrl.u32 %v241, 16
      %v751 = vrot.slane %v749, 4
      %v752 = vor.u32 %v751, %v747
      %v753 = vrot.slane %v752, 4
      %v755 = vshll.u32 %v242, 16
      %v757 = vrot.slane %v755, 5
      %v758 = vsel %vm372, %v753, %v757
      %v759 = vshrl.u32 %v242, 16
      %v761 = vrot.slane %v759, 4
      %v762 = vor.u32 %v761, %v757
      %v763 = vrot.slane %v762, 4
      %v765 = vshll.u32 %v243, 16
      %v767 = vrot.slane %v765, 5
      %v768 = vsel %vm372, %v763, %v767
      %v770 = vshrl.u32 %v244, 16
      %v772 = vrot.slane %v770, 4
      %v773 = vshll.u32 %v244, 16
      %v775 = vrot.slane %v773, 5
      %v776 = vor.u32 %v772, %v775
      %v777 = vrot.slane %v776, 4
      %v779 = vshll.u32 %v245, 16
      %v781 = vrot.slane %v779, 5
      %v782 = vsel %vm372, %v777, %v781
      %v783 = vshrl.u32 %v245, 16
      %v785 = vrot.slane %v783, 4
      %v786 = vor.u32 %v785, %v781
      %v787 = vrot.slane %v786, 4
      %v789 = vshll.u32 %v246, 16
      %v791 = vrot.slane %v789, 5
      %v792 = vsel %vm372, %v787, %v791
      %v793 = vshrl.u32 %v246, 16
      %v795 = vrot.slane %v793, 4
      %v796 = vor.u32 %v795, %v791
      %v797 = vrot.slane %v796, 4
      %v799 = vshll.u32 %v247, 16
      %v801 = vrot.slane %v799, 5
      %v802 = vsel %vm372, %v797, %v801
      %v803 = vshrl.u32 %v247, 16
      %v805 = vrot.slane %v803, 4
      %v806 = vor.u32 %v805, %v801
      %v807 = vrot.slane %v806, 4
      %v809 = vshll.u32 %v248, 16
      %v811 = vrot.slane %v809, 5
      %v812 = vsel %vm372, %v807, %v811
      %v814 = vshrl.u32 %v249, 16
      %v816 = vrot.slane %v814, 4
      %v817 = vshll.u32 %v249, 16
      %v819 = vrot.slane %v817, 5
      %v820 = vor.u32 %v816, %v819
      %v821 = vrot.slane %v820, 4
      %v823 = vshll.u32 %v250, 16
      %v825 = vrot.slane %v823, 5
      %v826 = vsel %vm372, %v821, %v825
      %v827 = vshrl.u32 %v250, 16
      %v829 = vrot.slane %v827, 4
      %v830 = vor.u32 %v829, %v825
      %v831 = vrot.slane %v830, 4
      %v833 = vshll.u32 %v251, 16
      %v835 = vrot.slane %v833, 5
      %v836 = vsel %vm372, %v831, %v835
      %v837 = vshrl.u32 %v251, 16
      %v839 = vrot.slane %v837, 4
      %v840 = vor.u32 %v839, %v835
      %v841 = vrot.slane %v840, 4
      %v843 = vshll.u32 %v252, 16
      %v845 = vrot.slane %v843, 5
      %v846 = vsel %vm372, %v841, %v845
      %v847 = vshrl.u32 %v252, 16
      %v849 = vrot.slane %v847, 4
      %v850 = vor.u32 %v849, %v845
      %v851 = vrot.slane %v850, 4
      %v853 = vshll.u32 %v253, 16
      %v855 = vrot.slane %v853, 5
      %v856 = vsel %vm372, %v851, %v855
      %v858 = vshrl.u32 %v254, 16
      %v860 = vrot.slane %v858, 4
      %v861 = vshll.u32 %v254, 16
      %v863 = vrot.slane %v861, 5
      %v864 = vor.u32 %v860, %v863
      %v865 = vrot.slane %v864, 4
      %v867 = vshll.u32 %v255, 16
      %v869 = vrot.slane %v867, 5
      %v870 = vsel %vm372, %v865, %v869
      %v871 = vshrl.u32 %v255, 16
      %v873 = vrot.slane %v871, 4
      %v874 = vor.u32 %v873, %v869
      %v875 = vrot.slane %v874, 4
      %v877 = vshll.u32 %v256, 16
      %v879 = vrot.slane %v877, 5
      %v880 = vsel %vm372, %v875, %v879
      %v881 = vshrl.u32 %v256, 16
      %v883 = vrot.slane %v881, 4
      %v884 = vor.u32 %v883, %v879
      %v885 = vrot.slane %v884, 4
      %v887 = vshll.u32 %v257, 16
      %v889 = vrot.slane %v887, 5
      %v890 = vsel %vm372, %v885, %v889
      %v891 = vshrl.u32 %v257, 16
      %v893 = vrot.slane %v891, 4
      %v894 = vor.u32 %v893, %v889
      %v895 = vrot.slane %v894, 4
      %v897 = vshll.u32 %v258, 16
      %v899 = vrot.slane %v897, 5
      %v900 = vsel %vm372, %v895, %v899
      %v902 = vshrl.u32 %v259, 16
      %v904 = vrot.slane %v902, 4
      %v905 = vshll.u32 %v259, 16
      %v907 = vrot.slane %v905, 5
      %v908 = vor.u32 %v904, %v907
      %v909 = vrot.slane %v908, 4
      %v911 = vshll.u32 %v260, 16
      %v913 = vrot.slane %v911, 5
      %v914 = vsel %vm372, %v909, %v913
      %v915 = vshrl.u32 %v260, 16
      %v917 = vrot.slane %v915, 4
      %v918 = vor.u32 %v917, %v913
      %v919 = vrot.slane %v918, 4
      %v921 = vshll.u32 %v261, 16
      %v923 = vrot.slane %v921, 5
      %v924 = vsel %vm372, %v919, %v923
      %v925 = vshrl.u32 %v261, 16
      %v927 = vrot.slane %v925, 4
      %v928 = vor.u32 %v927, %v923
      %v929 = vrot.slane %v928, 4
      %v931 = vshll.u32 %v262, 16
      %v933 = vrot.slane %v931, 5
      %v934 = vsel %vm372, %v929, %v933
      %v935 = vshrl.u32 %v262, 16
      %v937 = vrot.slane %v935, 4
      %v938 = vor.u32 %v937, %v933
      %v939 = vrot.slane %v938, 4
      %v941 = vshll.u32 %v263, 16
      %v943 = vrot.slane %v941, 5
      %v944 = vsel %vm372, %v939, %v943
      %v946 = vshrl.u32 %v264, 16
      %v948 = vrot.slane %v946, 4
      %v949 = vshll.u32 %v264, 16
      %v951 = vrot.slane %v949, 5
      %v952 = vor.u32 %v948, %v951
      %v953 = vrot.slane %v952, 4
      %v955 = vshll.u32 %v265, 16
      %v957 = vrot.slane %v955, 5
      %v958 = vsel %vm372, %v953, %v957
      %v959 = vshrl.u32 %v265, 16
      %v961 = vrot.slane %v959, 4
      %v962 = vor.u32 %v961, %v957
      %v963 = vrot.slane %v962, 4
      %v965 = vshll.u32 %v266, 16
      %v967 = vrot.slane %v965, 5
      %v968 = vsel %vm372, %v963, %v967
      %v969 = vshrl.u32 %v266, 16
      %v971 = vrot.slane %v969, 4
      %v972 = vor.u32 %v971, %v967
      %v973 = vrot.slane %v972, 4
      %v975 = vshll.u32 %v267, 16
      %v977 = vrot.slane %v975, 5
      %v978 = vsel %vm372, %v973, %v977
      %v979 = vshrl.u32 %v267, 16
      %v981 = vrot.slane %v979, 4
      %v982 = vor.u32 %v981, %v977
      %v983 = vrot.slane %v982, 4
      %v985 = vshll.u32 %v268, 16
      %v987 = vrot.slane %v985, 5
      %v988 = vsel %vm372, %v983, %v987
      %v990 = vshrl.u32 %v269, 16
      %v992 = vrot.slane %v990, 4
      %v993 = vshll.u32 %v269, 16
      %v995 = vrot.slane %v993, 5
      %v996 = vor.u32 %v992, %v995
      %v997 = vrot.slane %v996, 4
      %v999 = vshll.u32 %v270, 16
      %v1001 = vrot.slane %v999, 5
      %v1002 = vsel %vm372, %v997, %v1001
      %v1003 = vshrl.u32 %v270, 16
      %v1005 = vrot.slane %v1003, 4
      %v1006 = vor.u32 %v1005, %v1001
      %v1007 = vrot.slane %v1006, 4
      %v1009 = vshll.u32 %v271, 16
      %v1011 = vrot.slane %v1009, 5
      %v1012 = vsel %vm372, %v1007, %v1011
      %v1013 = vshrl.u32 %v271, 16
      %v1015 = vrot.slane %v1013, 4
      %v1016 = vor.u32 %v1015, %v1011
      %v1017 = vrot.slane %v1016, 4
      %v1019 = vshll.u32 %v272, 16
      %v1021 = vrot.slane %v1019, 5
      %v1022 = vsel %vm372, %v1017, %v1021
      %v1023 = vshrl.u32 %v272, 16
      %v1025 = vrot.slane %v1023, 4
      %v1026 = vor.u32 %v1025, %v1021
      %v1027 = vrot.slane %v1026, 4
      %v1029 = vshll.u32 %v273, 16
      %v1031 = vrot.slane %v1029, 5
      %v1032 = vsel %vm372, %v1027, %v1031
      %v1034 = vshrl.u32 %v274, 16
      %v1036 = vrot.slane %v1034, 4
      %v1037 = vshll.u32 %v274, 16
      %v1039 = vrot.slane %v1037, 5
      %v1040 = vor.u32 %v1036, %v1039
      %v1041 = vrot.slane %v1040, 4
      %v1043 = vshll.u32 %v275, 16
      %v1045 = vrot.slane %v1043, 5
      %v1046 = vsel %vm372, %v1041, %v1045
      %v1047 = vshrl.u32 %v275, 16
      %v1049 = vrot.slane %v1047, 4
      %v1050 = vor.u32 %v1049, %v1045
      %v1051 = vrot.slane %v1050, 4
      %v1053 = vshll.u32 %v276, 16
      %v1055 = vrot.slane %v1053, 5
      %v1056 = vsel %vm372, %v1051, %v1055
      %v1057 = vshrl.u32 %v276, 16
      %v1059 = vrot.slane %v1057, 4
      %v1060 = vor.u32 %v1059, %v1055
      %v1061 = vrot.slane %v1060, 4
      %v1063 = vshll.u32 %v277, 16
      %v1065 = vrot.slane %v1063, 5
      %v1066 = vsel %vm372, %v1061, %v1065
      %v1067 = vshrl.u32 %v277, 16
      %v1069 = vrot.slane %v1067, 4
      %v1070 = vor.u32 %v1069, %v1065
      %v1071 = vrot.slane %v1070, 4
      %v1073 = vshll.u32 %v278, 16
      %v1075 = vrot.slane %v1073, 5
      %v1076 = vsel %vm372, %v1071, %v1075
      %v1078 = vshrl.u32 %v279, 16
      %v1080 = vrot.slane %v1078, 4
      %v1081 = vshll.u32 %v279, 16
      %v1083 = vrot.slane %v1081, 5
      %v1084 = vor.u32 %v1080, %v1083
      %v1085 = vrot.slane %v1084, 4
      %v1087 = vshll.u32 %v280, 16
      %v1089 = vrot.slane %v1087, 5
      %v1090 = vsel %vm372, %v1085, %v1089
      %v1091 = vshrl.u32 %v280, 16
      %v1093 = vrot.slane %v1091, 4
      %v1094 = vor.u32 %v1093, %v1089
      %v1095 = vrot.slane %v1094, 4
      %v1097 = vshll.u32 %v281, 16
      %v1099 = vrot.slane %v1097, 5
      %v1100 = vsel %vm372, %v1095, %v1099
      %v1101 = vshrl.u32 %v281, 16
      %v1103 = vrot.slane %v1101, 4
      %v1104 = vor.u32 %v1103, %v1099
      %v1105 = vrot.slane %v1104, 4
      %v1107 = vshll.u32 %v282, 16
      %v1109 = vrot.slane %v1107, 5
      %v1110 = vsel %vm372, %v1105, %v1109
      %v1111 = vshrl.u32 %v282, 16
      %v1113 = vrot.slane %v1111, 4
      %v1114 = vor.u32 %v1113, %v1109
      %v1115 = vrot.slane %v1114, 4
      %v1117 = vshll.u32 %v283, 16
      %v1119 = vrot.slane %v1117, 5
      %v1120 = vsel %vm372, %v1115, %v1119
      %v1122 = vshrl.u32 %v284, 16
      %v1124 = vrot.slane %v1122, 4
      %v1125 = vshll.u32 %v284, 16
      %v1127 = vrot.slane %v1125, 5
      %v1128 = vor.u32 %v1124, %v1127
      %v1129 = vrot.slane %v1128, 4
      %v1131 = vshll.u32 %v285, 16
      %v1133 = vrot.slane %v1131, 5
      %v1134 = vsel %vm372, %v1129, %v1133
      %v1135 = vshrl.u32 %v285, 16
      %v1137 = vrot.slane %v1135, 4
      %v1138 = vor.u32 %v1137, %v1133
      %v1139 = vrot.slane %v1138, 4
      %v1141 = vshll.u32 %v286, 16
      %v1143 = vrot.slane %v1141, 5
      %v1144 = vsel %vm372, %v1139, %v1143
      %v1145 = vshrl.u32 %v286, 16
      %v1147 = vrot.slane %v1145, 4
      %v1148 = vor.u32 %v1147, %v1143
      %v1149 = vrot.slane %v1148, 4
      %v1151 = vshll.u32 %v287, 16
      %v1153 = vrot.slane %v1151, 5
      %v1154 = vsel %vm372, %v1149, %v1153
      %v1155 = vshrl.u32 %v287, 16
      %v1157 = vrot.slane %v1155, 4
      %v1158 = vor.u32 %v1157, %v1153
      %v1159 = vrot.slane %v1158, 4
      %v1161 = vshll.u32 %v288, 16
      %v1163 = vrot.slane %v1161, 5
      %v1164 = vsel %vm372, %v1159, %v1163
      %v1166 = vshrl.u32 %v289, 16
      %v1168 = vrot.slane %v1166, 4
      %v1169 = vshll.u32 %v289, 16
      %v1171 = vrot.slane %v1169, 5
      %v1172 = vor.u32 %v1168, %v1171
      %v1173 = vrot.slane %v1172, 4
      %v1175 = vshll.u32 %v290, 16
      %v1177 = vrot.slane %v1175, 5
      %v1178 = vsel %vm372, %v1173, %v1177
      %v1179 = vshrl.u32 %v290, 16
      %v1181 = vrot.slane %v1179, 4
      %v1182 = vor.u32 %v1181, %v1177
      %v1183 = vrot.slane %v1182, 4
      %v1185 = vshll.u32 %v291, 16
      %v1187 = vrot.slane %v1185, 5
      %v1188 = vsel %vm372, %v1183, %v1187
      %v1189 = vshrl.u32 %v291, 16
      %v1191 = vrot.slane %v1189, 4
      %v1192 = vor.u32 %v1191, %v1187
      %v1193 = vrot.slane %v1192, 4
      %v1195 = vshll.u32 %v292, 16
      %v1197 = vrot.slane %v1195, 5
      %v1198 = vsel %vm372, %v1193, %v1197
      %v1199 = vshrl.u32 %v292, 16
      %v1201 = vrot.slane %v1199, 4
      %v1202 = vor.u32 %v1201, %v1197
      %v1203 = vrot.slane %v1202, 4
      %v1205 = vshll.u32 %v293, 16
      %v1207 = vrot.slane %v1205, 5
      %v1208 = vsel %vm372, %v1203, %v1207
      %v1210 = vshrl.u32 %v294, 16
      %v1212 = vrot.slane %v1210, 4
      %v1213 = vshll.u32 %v294, 16
      %v1215 = vrot.slane %v1213, 5
      %v1216 = vor.u32 %v1212, %v1215
      %v1217 = vrot.slane %v1216, 4
      %v1219 = vshll.u32 %v295, 16
      %v1221 = vrot.slane %v1219, 5
      %v1222 = vsel %vm372, %v1217, %v1221
      %v1223 = vshrl.u32 %v295, 16
      %v1225 = vrot.slane %v1223, 4
      %v1226 = vor.u32 %v1225, %v1221
      %v1227 = vrot.slane %v1226, 4
      %v1229 = vshll.u32 %v296, 16
      %v1231 = vrot.slane %v1229, 5
      %v1232 = vsel %vm372, %v1227, %v1231
      %v1233 = vshrl.u32 %v296, 16
      %v1235 = vrot.slane %v1233, 4
      %v1236 = vor.u32 %v1235, %v1231
      %v1237 = vrot.slane %v1236, 4
      %v1239 = vshll.u32 %v297, 16
      %v1241 = vrot.slane %v1239, 5
      %v1242 = vsel %vm372, %v1237, %v1241
      %v1243 = vshrl.u32 %v297, 16
      %v1245 = vrot.slane %v1243, 4
      %v1246 = vor.u32 %v1245, %v1241
      %v1247 = vrot.slane %v1246, 4
      %v1249 = vshll.u32 %v298, 16
      %v1251 = vrot.slane %v1249, 5
      %v1252 = vsel %vm372, %v1247, %v1251
      %v1254 = vshrl.u32 %v299, 16
      %v1256 = vrot.slane %v1254, 4
      %v1257 = vshll.u32 %v299, 16
      %v1259 = vrot.slane %v1257, 5
      %v1260 = vor.u32 %v1256, %v1259
      %v1261 = vrot.slane %v1260, 4
      %v1263 = vshll.u32 %v300, 16
      %v1265 = vrot.slane %v1263, 5
      %v1266 = vsel %vm372, %v1261, %v1265
      %v1267 = vshrl.u32 %v300, 16
      %v1269 = vrot.slane %v1267, 4
      %v1270 = vor.u32 %v1269, %v1265
      %v1271 = vrot.slane %v1270, 4
      %v1273 = vshll.u32 %v301, 16
      %v1275 = vrot.slane %v1273, 5
      %v1276 = vsel %vm372, %v1271, %v1275
      %v1277 = vshrl.u32 %v301, 16
      %v1279 = vrot.slane %v1277, 4
      %v1280 = vor.u32 %v1279, %v1275
      %v1281 = vrot.slane %v1280, 4
      %v1283 = vshll.u32 %v302, 16
      %v1285 = vrot.slane %v1283, 5
      %v1286 = vsel %vm372, %v1281, %v1285
      %v1287 = vshrl.u32 %v302, 16
      %v1289 = vrot.slane %v1287, 4
      %v1290 = vor.u32 %v1289, %v1285
      %v1291 = vrot.slane %v1290, 4
      %v1293 = vshll.u32 %v303, 16
      %v1295 = vrot.slane %v1293, 5
      %v1296 = vsel %vm372, %v1291, %v1295
      %v1298 = vshrl.u32 %v304, 16
      %v1300 = vrot.slane %v1298, 4
      %v1301 = vshll.u32 %v304, 16
      %v1303 = vrot.slane %v1301, 5
      %v1304 = vor.u32 %v1300, %v1303
      %v1305 = vrot.slane %v1304, 4
      %v1307 = vshll.u32 %v305, 16
      %v1309 = vrot.slane %v1307, 5
      %v1310 = vsel %vm372, %v1305, %v1309
      %v1311 = vshrl.u32 %v305, 16
      %v1313 = vrot.slane %v1311, 4
      %v1314 = vor.u32 %v1313, %v1309
      %v1315 = vrot.slane %v1314, 4
      %v1317 = vshll.u32 %v306, 16
      %v1319 = vrot.slane %v1317, 5
      %v1320 = vsel %vm372, %v1315, %v1319
      %v1321 = vshrl.u32 %v306, 16
      %v1323 = vrot.slane %v1321, 4
      %v1324 = vor.u32 %v1323, %v1319
      %v1325 = vrot.slane %v1324, 4
      %v1327 = vshll.u32 %v307, 16
      %v1329 = vrot.slane %v1327, 5
      %v1330 = vsel %vm372, %v1325, %v1329
      %v1331 = vshrl.u32 %v307, 16
      %v1333 = vrot.slane %v1331, 4
      %v1334 = vor.u32 %v1333, %v1329
      %v1335 = vrot.slane %v1334, 4
      %v1337 = vshll.u32 %v308, 16
      %v1339 = vrot.slane %v1337, 5
      %v1340 = vsel %vm372, %v1335, %v1339
      %v1342 = vshrl.u32 %v309, 16
      %v1344 = vrot.slane %v1342, 4
      %v1345 = vshll.u32 %v309, 16
      %v1347 = vrot.slane %v1345, 5
      %v1348 = vor.u32 %v1344, %v1347
      %v1349 = vrot.slane %v1348, 4
      %v1351 = vshll.u32 %v310, 16
      %v1353 = vrot.slane %v1351, 5
      %v1354 = vsel %vm372, %v1349, %v1353
      %v1355 = vshrl.u32 %v310, 16
      %v1357 = vrot.slane %v1355, 4
      %v1358 = vor.u32 %v1357, %v1353
      %v1359 = vrot.slane %v1358, 4
      %v1361 = vshll.u32 %v311, 16
      %v1363 = vrot.slane %v1361, 5
      %v1364 = vsel %vm372, %v1359, %v1363
      %v1365 = vshrl.u32 %v311, 16
      %v1367 = vrot.slane %v1365, 4
      %v1368 = vor.u32 %v1367, %v1363
      %v1369 = vrot.slane %v1368, 4
      %v1371 = vshll.u32 %v312, 16
      %v1373 = vrot.slane %v1371, 5
      %v1374 = vsel %vm372, %v1369, %v1373
      %v1375 = vshrl.u32 %v312, 16
      %v1377 = vrot.slane %v1375, 4
      %v1378 = vor.u32 %v1377, %v1373
      %v1379 = vrot.slane %v1378, 4
      %v1381 = vshll.u32 %v313, 16
      %v1383 = vrot.slane %v1381, 5
      %v1384 = vsel %vm372, %v1379, %v1383
      %v1386 = vshrl.u32 %v314, 16
      %v1388 = vrot.slane %v1386, 4
      %v1389 = vshll.u32 %v314, 16
      %v1391 = vrot.slane %v1389, 5
      %v1392 = vor.u32 %v1388, %v1391
      %v1393 = vrot.slane %v1392, 4
      %v1395 = vshll.u32 %v315, 16
      %v1397 = vrot.slane %v1395, 5
      %v1398 = vsel %vm372, %v1393, %v1397
      %v1399 = vshrl.u32 %v315, 16
      %v1401 = vrot.slane %v1399, 4
      %v1402 = vor.u32 %v1401, %v1397
      %v1403 = vrot.slane %v1402, 4
      %v1405 = vshll.u32 %v316, 16
      %v1407 = vrot.slane %v1405, 5
      %v1408 = vsel %vm372, %v1403, %v1407
      %v1409 = vshrl.u32 %v316, 16
      %v1411 = vrot.slane %v1409, 4
      %v1412 = vor.u32 %v1411, %v1407
      %v1413 = vrot.slane %v1412, 4
      %v1415 = vshll.u32 %v317, 16
      %v1417 = vrot.slane %v1415, 5
      %v1418 = vsel %vm372, %v1413, %v1417
      %v1419 = vshrl.u32 %v317, 16
      %v1421 = vrot.slane %v1419, 4
      %v1422 = vor.u32 %v1421, %v1417
      %v1423 = vrot.slane %v1422, 4
      %v1425 = vshll.u32 %v318, 16
      %v1427 = vrot.slane %v1425, 5
      %v1428 = vsel %vm372, %v1423, %v1427
      %v1430 = vshrl.u32 %v319, 16
      %v1432 = vrot.slane %v1430, 4
      %v1433 = vshll.u32 %v319, 16
      %v1435 = vrot.slane %v1433, 5
      %v1436 = vor.u32 %v1432, %v1435
      %v1437 = vrot.slane %v1436, 4
      %v1439 = vshll.u32 %v320, 16
      %v1441 = vrot.slane %v1439, 5
      %v1442 = vsel %vm372, %v1437, %v1441
      %v1443 = vshrl.u32 %v320, 16
      %v1445 = vrot.slane %v1443, 4
      %v1446 = vor.u32 %v1445, %v1441
      %v1447 = vrot.slane %v1446, 4
      %v1449 = vshll.u32 %v321, 16
      %v1451 = vrot.slane %v1449, 5
      %v1452 = vsel %vm372, %v1447, %v1451
      %v1453 = vshrl.u32 %v321, 16
      %v1455 = vrot.slane %v1453, 4
      %v1456 = vor.u32 %v1455, %v1451
      %v1457 = vrot.slane %v1456, 4
      %v1459 = vshll.u32 %v322, 16
      %v1461 = vrot.slane %v1459, 5
      %v1462 = vsel %vm372, %v1457, %v1461
      %v1463 = vshrl.u32 %v322, 16
      %v1465 = vrot.slane %v1463, 4
      %v1466 = vor.u32 %v1465, %v1461
      %v1467 = vrot.slane %v1466, 4
      %v1469 = vshll.u32 %v323, 16
      %v1471 = vrot.slane %v1469, 5
      %v1472 = vsel %vm372, %v1467, %v1471
      %v1474 = vshrl.u32 %v324, 16
      %v1476 = vrot.slane %v1474, 4
      %v1477 = vshll.u32 %v324, 16
      %v1479 = vrot.slane %v1477, 5
      %v1480 = vor.u32 %v1476, %v1479
      %v1481 = vrot.slane %v1480, 4
      %v1483 = vshll.u32 %v325, 16
      %v1485 = vrot.slane %v1483, 5
      %v1486 = vsel %vm372, %v1481, %v1485
      %v1487 = vshrl.u32 %v325, 16
      %v1489 = vrot.slane %v1487, 4
      %v1490 = vor.u32 %v1489, %v1485
      %v1491 = vrot.slane %v1490, 4
      %v1493 = vshll.u32 %v326, 16
      %v1495 = vrot.slane %v1493, 5
      %v1496 = vsel %vm372, %v1491, %v1495
      %v1497 = vshrl.u32 %v326, 16
      %v1499 = vrot.slane %v1497, 4
      %v1500 = vor.u32 %v1499, %v1495
      %v1501 = vrot.slane %v1500, 4
      %v1503 = vshll.u32 %v327, 16
      %v1505 = vrot.slane %v1503, 5
      %v1506 = vsel %vm372, %v1501, %v1505
      %v1507 = vshrl.u32 %v327, 16
      %v1509 = vrot.slane %v1507, 4
      %v1510 = vor.u32 %v1509, %v1505
      %v1511 = vrot.slane %v1510, 4
      %v1513 = vshll.u32 %v328, 16
      %v1515 = vrot.slane %v1513, 5
      %v1516 = vsel %vm372, %v1511, %v1515
      %v1518 = vshrl.u32 %v329, 16
      %v1520 = vrot.slane %v1518, 4
      %v1521 = vshll.u32 %v329, 16
      %v1523 = vrot.slane %v1521, 5
      %v1524 = vor.u32 %v1520, %v1523
      %v1525 = vrot.slane %v1524, 4
      %v1527 = vshll.u32 %v330, 16
      %v1529 = vrot.slane %v1527, 5
      %v1530 = vsel %vm372, %v1525, %v1529
      %v1531 = vshrl.u32 %v330, 16
      %v1533 = vrot.slane %v1531, 4
      %v1534 = vor.u32 %v1533, %v1529
      %v1535 = vrot.slane %v1534, 4
      %v1537 = vshll.u32 %v331, 16
      %v1539 = vrot.slane %v1537, 5
      %v1540 = vsel %vm372, %v1535, %v1539
      %v1541 = vshrl.u32 %v331, 16
      %v1543 = vrot.slane %v1541, 4
      %v1544 = vor.u32 %v1543, %v1539
      %v1545 = vrot.slane %v1544, 4
      %v1547 = vshll.u32 %v332, 16
      %v1549 = vrot.slane %v1547, 5
      %v1550 = vsel %vm372, %v1545, %v1549
      %v1551 = vshrl.u32 %v332, 16
      %v1553 = vrot.slane %v1551, 4
      %v1554 = vor.u32 %v1553, %v1549
      %v1555 = vrot.slane %v1554, 4
      %v1557 = vshll.u32 %v333, 16
      %v1559 = vrot.slane %v1557, 5
      %v1560 = vsel %vm372, %v1555, %v1559
      %v1562 = vshrl.u32 %v334, 16
      %v1564 = vrot.slane %v1562, 4
      %v1565 = vshll.u32 %v334, 16
      %v1567 = vrot.slane %v1565, 5
      %v1568 = vor.u32 %v1564, %v1567
      %v1569 = vrot.slane %v1568, 4
      %v1571 = vshll.u32 %v335, 16
      %v1573 = vrot.slane %v1571, 5
      %v1574 = vsel %vm372, %v1569, %v1573
      %v1575 = vshrl.u32 %v335, 16
      %v1577 = vrot.slane %v1575, 4
      %v1578 = vor.u32 %v1577, %v1573
      %v1579 = vrot.slane %v1578, 4
      %v1581 = vshll.u32 %v336, 16
      %v1583 = vrot.slane %v1581, 5
      %v1584 = vsel %vm372, %v1579, %v1583
      %v1585 = vshrl.u32 %v336, 16
      %v1587 = vrot.slane %v1585, 4
      %v1588 = vor.u32 %v1587, %v1583
      %v1589 = vrot.slane %v1588, 4
      %v1591 = vshll.u32 %v337, 16
      %v1593 = vrot.slane %v1591, 5
      %v1594 = vsel %vm372, %v1589, %v1593
      %v1595 = vshrl.u32 %v337, 16
      %v1597 = vrot.slane %v1595, 4
      %v1598 = vor.u32 %v1597, %v1593
      %v1599 = vrot.slane %v1598, 4
      %v1601 = vshll.u32 %v338, 16
      %v1603 = vrot.slane %v1601, 5
      %v1604 = vsel %vm372, %v1599, %v1603
      %v1606 = vshrl.u32 %v339, 16
      %v1608 = vrot.slane %v1606, 4
      %v1609 = vshll.u32 %v339, 16
      %v1611 = vrot.slane %v1609, 5
      %v1612 = vor.u32 %v1608, %v1611
      %v1613 = vrot.slane %v1612, 4
      %v1615 = vshll.u32 %v340, 16
      %v1617 = vrot.slane %v1615, 5
      %v1618 = vsel %vm372, %v1613, %v1617
      %v1619 = vshrl.u32 %v340, 16
      %v1621 = vrot.slane %v1619, 4
      %v1622 = vor.u32 %v1621, %v1617
      %v1623 = vrot.slane %v1622, 4
      %v1625 = vshll.u32 %v341, 16
      %v1627 = vrot.slane %v1625, 5
      %v1628 = vsel %vm372, %v1623, %v1627
      %v1629 = vshrl.u32 %v341, 16
      %v1631 = vrot.slane %v1629, 4
      %v1632 = vor.u32 %v1631, %v1627
      %v1633 = vrot.slane %v1632, 4
      %v1635 = vshll.u32 %v342, 16
      %v1637 = vrot.slane %v1635, 5
      %v1638 = vsel %vm372, %v1633, %v1637
      %v1639 = vshrl.u32 %v342, 16
      %v1641 = vrot.slane %v1639, 4
      %v1642 = vor.u32 %v1641, %v1637
      %v1643 = vrot.slane %v1642, 4
      %v1645 = vshll.u32 %v343, 16
      %v1647 = vrot.slane %v1645, 5
      %v1648 = vsel %vm372, %v1643, %v1647
      %v1650 = vshrl.u32 %v344, 16
      %v1652 = vrot.slane %v1650, 4
      %v1653 = vshll.u32 %v344, 16
      %v1655 = vrot.slane %v1653, 5
      %v1656 = vor.u32 %v1652, %v1655
      %v1657 = vrot.slane %v1656, 4
      %v1659 = vshll.u32 %v345, 16
      %v1661 = vrot.slane %v1659, 5
      %v1662 = vsel %vm372, %v1657, %v1661
      %v1663 = vshrl.u32 %v345, 16
      %v1665 = vrot.slane %v1663, 4
      %v1666 = vor.u32 %v1665, %v1661
      %v1667 = vrot.slane %v1666, 4
      %v1669 = vshll.u32 %v346, 16
      %v1671 = vrot.slane %v1669, 5
      %v1672 = vsel %vm372, %v1667, %v1671
      %v1673 = vshrl.u32 %v346, 16
      %v1675 = vrot.slane %v1673, 4
      %v1676 = vor.u32 %v1675, %v1671
      %v1677 = vrot.slane %v1676, 4
      %v1679 = vshll.u32 %v347, 16
      %v1681 = vrot.slane %v1679, 5
      %v1682 = vsel %vm372, %v1677, %v1681
      %v1683 = vshrl.u32 %v347, 16
      %v1685 = vrot.slane %v1683, 4
      %v1686 = vor.u32 %v1685, %v1681
      %v1687 = vrot.slane %v1686, 4
      %v1689 = vshll.u32 %v348, 16
      %v1691 = vrot.slane %v1689, 5
      %v1692 = vsel %vm372, %v1687, %v1691
      %v1694 = vshrl.u32 %v349, 16
      %v1696 = vrot.slane %v1694, 4
      %v1697 = vshll.u32 %v349, 16
      %v1699 = vrot.slane %v1697, 5
      %v1700 = vor.u32 %v1696, %v1699
      %v1701 = vrot.slane %v1700, 4
      %v1703 = vshll.u32 %v350, 16
      %v1705 = vrot.slane %v1703, 5
      %v1706 = vsel %vm372, %v1701, %v1705
      %v1707 = vshrl.u32 %v350, 16
      %v1709 = vrot.slane %v1707, 4
      %v1710 = vor.u32 %v1709, %v1705
      %v1711 = vrot.slane %v1710, 4
      %v1713 = vshll.u32 %v351, 16
      %v1715 = vrot.slane %v1713, 5
      %v1716 = vsel %vm372, %v1711, %v1715
      %v1717 = vshrl.u32 %v351, 16
      %v1719 = vrot.slane %v1717, 4
      %v1720 = vor.u32 %v1719, %v1715
      %v1721 = vrot.slane %v1720, 4
      %v1723 = vshll.u32 %v352, 16
      %v1725 = vrot.slane %v1723, 5
      %v1726 = vsel %vm372, %v1721, %v1725
      %v1727 = vshrl.u32 %v352, 16
      %v1729 = vrot.slane %v1727, 4
      %v1730 = vor.u32 %v1729, %v1725
      %v1731 = vrot.slane %v1730, 4
      %v1733 = vshll.u32 %v353, 16
      %v1735 = vrot.slane %v1733, 5
      %v1736 = vsel %vm372, %v1731, %v1735
      %v1738 = vshrl.u32 %v354, 16
      %v1740 = vrot.slane %v1738, 4
      %v1741 = vshll.u32 %v354, 16
      %v1743 = vrot.slane %v1741, 5
      %v1744 = vor.u32 %v1740, %v1743
      %v1745 = vrot.slane %v1744, 4
      %v1747 = vshll.u32 %v355, 16
      %v1749 = vrot.slane %v1747, 5
      %v1750 = vsel %vm372, %v1745, %v1749
      %v1751 = vshrl.u32 %v355, 16
      %v1753 = vrot.slane %v1751, 4
      %v1754 = vor.u32 %v1753, %v1749
      %v1755 = vrot.slane %v1754, 4
      %v1757 = vshll.u32 %v356, 16
      %v1759 = vrot.slane %v1757, 5
      %v1760 = vsel %vm372, %v1755, %v1759
      %v1761 = vshrl.u32 %v356, 16
      %v1763 = vrot.slane %v1761, 4
      %v1764 = vor.u32 %v1763, %v1759
      %v1765 = vrot.slane %v1764, 4
      %v1767 = vshll.u32 %v357, 16
      %v1769 = vrot.slane %v1767, 5
      %v1770 = vsel %vm372, %v1765, %v1769
      %v1771 = vshrl.u32 %v357, 16
      %v1773 = vrot.slane %v1771, 4
      %v1774 = vor.u32 %v1773, %v1769
      %v1775 = vrot.slane %v1774, 4
      %v1777 = vshll.u32 %v358, 16
      %v1779 = vrot.slane %v1777, 5
      %v1780 = vsel %vm372, %v1775, %v1779
      %s1781 = scalar_lea.vmem %s1, 2
      %v1782 = vld [vmem:[%s1781] sm:$0x3]
      %v1783 = vunpack.c.l.b16 %v386
      %v1784 = vunpack.c.l.b16 %v396
      %v1785 = vunpack.c.l.b16 %v406
      %v1786 = vunpack.c.l.b16 %v416
      %v1787 = vunpack.c.l.b16 %v430
      %v1788 = vunpack.c.l.b16 %v440
      %v1789 = vunpack.c.l.b16 %v450
      %v1790 = vunpack.c.l.b16 %v460
      %v1791 = vunpack.c.l.b16 %v474
      %v1792 = vunpack.c.l.b16 %v484
      %v1793 = vunpack.c.l.b16 %v494
      %v1794 = vunpack.c.l.b16 %v504
      %v1795 = vunpack.c.l.b16 %v518
      %v1796 = vunpack.c.l.b16 %v528
      %v1797 = vunpack.c.l.b16 %v538
      %v1798 = vunpack.c.l.b16 %v548
      %v1799 = vunpack.c.l.b16 %v562
      %v1800 = vunpack.c.l.b16 %v572
      %v1801 = vunpack.c.l.b16 %v582
      %v1802 = vunpack.c.l.b16 %v592
      %v1803 = vunpack.c.l.b16 %v606
      %v1804 = vunpack.c.l.b16 %v616
      %v1805 = vunpack.c.l.b16 %v626
      %v1806 = vunpack.c.l.b16 %v636
      %v1807 = vunpack.c.l.b16 %v650
      %v1808 = vunpack.c.l.b16 %v660
      %v1809 = vunpack.c.l.b16 %v670
      %v1810 = vunpack.c.l.b16 %v680
      %v1811 = vunpack.c.l.b16 %v694
      %v1812 = vunpack.c.l.b16 %v704
      %v1813 = vunpack.c.l.b16 %v714
      %v1814 = vunpack.c.l.b16 %v724
      %v1815 = vunpack.c.l.b16 %v738
      %v1816 = vunpack.c.l.b16 %v748
      %v1817 = vunpack.c.l.b16 %v758
      %v1818 = vunpack.c.l.b16 %v768
      %v1819 = vunpack.c.l.b16 %v782
      %v1820 = vunpack.c.l.b16 %v792
      %v1821 = vunpack.c.l.b16 %v802
      %v1822 = vunpack.c.l.b16 %v812
      %v1823 = vunpack.c.l.b16 %v826
      %v1824 = vunpack.c.l.b16 %v836
      %v1825 = vunpack.c.l.b16 %v846
      %v1826 = vunpack.c.l.b16 %v856
      %v1827 = vunpack.c.l.b16 %v870
      %v1828 = vunpack.c.l.b16 %v880
      %v1829 = vunpack.c.l.b16 %v890
      %v1830 = vunpack.c.l.b16 %v900
      %v1831 = vunpack.c.l.b16 %v914
      %v1832 = vunpack.c.l.b16 %v924
      %v1833 = vunpack.c.l.b16 %v934
      %v1834 = vunpack.c.l.b16 %v944
      %v1835 = vunpack.c.l.b16 %v958
      %v1836 = vunpack.c.l.b16 %v968
      %v1837 = vunpack.c.l.b16 %v978
      %v1838 = vunpack.c.l.b16 %v988
      %v1839 = vunpack.c.l.b16 %v1002
      %v1840 = vunpack.c.l.b16 %v1012
      %v1841 = vunpack.c.l.b16 %v1022
      %v1842 = vunpack.c.l.b16 %v1032
      %v1843 = vunpack.c.l.b16 %v1046
      %v1844 = vunpack.c.l.b16 %v1056
      %v1845 = vunpack.c.l.b16 %v1066
      %v1846 = vunpack.c.l.b16 %v1076
      %v1847 = vunpack.c.l.b16 %v1090
      %v1848 = vunpack.c.l.b16 %v1100
      %v1849 = vunpack.c.l.b16 %v1110
      %v1850 = vunpack.c.l.b16 %v1120
      %v1851 = vunpack.c.l.b16 %v1134
      %v1852 = vunpack.c.l.b16 %v1144
      %v1853 = vunpack.c.l.b16 %v1154
      %v1854 = vunpack.c.l.b16 %v1164
      %v1855 = vunpack.c.l.b16 %v1178
      %v1856 = vunpack.c.l.b16 %v1188
      %v1857 = vunpack.c.l.b16 %v1198
      %v1858 = vunpack.c.l.b16 %v1208
      %v1859 = vunpack.c.l.b16 %v1222
      %v1860 = vunpack.c.l.b16 %v1232
      %v1861 = vunpack.c.l.b16 %v1242
      %v1862 = vunpack.c.l.b16 %v1252
      %v1863 = vunpack.c.l.b16 %v1266
      %v1864 = vunpack.c.l.b16 %v1276
      %v1865 = vunpack.c.l.b16 %v1286
      %v1866 = vunpack.c.l.b16 %v1296
      %v1867 = vunpack.c.l.b16 %v1310
      %v1868 = vunpack.c.l.b16 %v1320
      %v1869 = vunpack.c.l.b16 %v1330
      %v1870 = vunpack.c.l.b16 %v1340
      %v1871 = vunpack.c.l.b16 %v1354
      %v1872 = vunpack.c.l.b16 %v1364
      %v1873 = vunpack.c.l.b16 %v1374
      %v1874 = vunpack.c.l.b16 %v1384
      %v1875 = vunpack.c.l.b16 %v1398
      %v1876 = vunpack.c.l.b16 %v1408
      %v1877 = vunpack.c.l.b16 %v1418
      %v1878 = vunpack.c.l.b16 %v1428
      %v1879 = vunpack.c.l.b16 %v1442
      %v1880 = vunpack.c.l.b16 %v1452
      %v1881 = vunpack.c.l.b16 %v1462
      %v1882 = vunpack.c.l.b16 %v1472
      %v1883 = vunpack.c.l.b16 %v1486
      %v1884 = vunpack.c.l.b16 %v1496
      %v1885 = vunpack.c.l.b16 %v1506
      %v1886 = vunpack.c.l.b16 %v1516
      %v1887 = vunpack.c.l.b16 %v1530
      %v1888 = vunpack.c.l.b16 %v1540
      %v1889 = vunpack.c.l.b16 %v1550
      %v1890 = vunpack.c.l.b16 %v1560
      %v1891 = vunpack.c.l.b16 %v1574
      %v1892 = vunpack.c.l.b16 %v1584
      %v1893 = vunpack.c.l.b16 %v1594
      %v1894 = vunpack.c.l.b16 %v1604
      %v1895 = vunpack.c.l.b16 %v1618
      %v1896 = vunpack.c.l.b16 %v1628
      %v1897 = vunpack.c.l.b16 %v1638
      %v1898 = vunpack.c.l.b16 %v1648
      %v1899 = vunpack.c.l.b16 %v1662
      %v1900 = vunpack.c.l.b16 %v1672
      %v1901 = vunpack.c.l.b16 %v1682
      %v1902 = vunpack.c.l.b16 %v1692
      %v1903 = vunpack.c.l.b16 %v1706
      %v1904 = vunpack.c.l.b16 %v1716
      %v1905 = vunpack.c.l.b16 %v1726
      %v1906 = vunpack.c.l.b16 %v1736
      %v1907 = vunpack.c.l.b16 %v1750
      %v1908 = vunpack.c.l.b16 %v1760
      %v1909 = vunpack.c.l.b16 %v1770
      %v1910 = vunpack.c.l.b16 %v1780
      %v1911 = vpack.c.b16 %v1784, %v1783
      %v1912 = vpack.c.b16 %v1786, %v1785
      %v1913 = vpack.c.b16 %v1788, %v1787
      %v1914 = vpack.c.b16 %v1790, %v1789
      %v1915 = vpack.c.b16 %v1792, %v1791
      %v1916 = vpack.c.b16 %v1794, %v1793
      %v1917 = vpack.c.b16 %v1796, %v1795
      %v1918 = vpack.c.b16 %v1798, %v1797
      %v1919 = vpack.c.b16 %v1800, %v1799
      %v1920 = vpack.c.b16 %v1802, %v1801
      %v1921 = vpack.c.b16 %v1804, %v1803
      %v1922 = vpack.c.b16 %v1806, %v1805
      %v1923 = vpack.c.b16 %v1808, %v1807
      %v1924 = vpack.c.b16 %v1810, %v1809
      %v1925 = vpack.c.b16 %v1812, %v1811
      %v1926 = vpack.c.b16 %v1814, %v1813
      %v1927 = vpack.c.b16 %v1816, %v1815
      %v1928 = vpack.c.b16 %v1818, %v1817
      %v1929 = vpack.c.b16 %v1820, %v1819
      %v1930 = vpack.c.b16 %v1822, %v1821
      %v1931 = vpack.c.b16 %v1824, %v1823
      %v1932 = vpack.c.b16 %v1826, %v1825
      %v1933 = vpack.c.b16 %v1828, %v1827
      %v1934 = vpack.c.b16 %v1830, %v1829
      %v1935 = vpack.c.b16 %v1832, %v1831
      %v1936 = vpack.c.b16 %v1834, %v1833
      %v1937 = vpack.c.b16 %v1836, %v1835
      %v1938 = vpack.c.b16 %v1838, %v1837
      %v1939 = vpack.c.b16 %v1840, %v1839
      %v1940 = vpack.c.b16 %v1842, %v1841
      %v1941 = vpack.c.b16 %v1844, %v1843
      %v1942 = vpack.c.b16 %v1846, %v1845
      %v1943 = vpack.c.b16 %v1848, %v1847
      %v1944 = vpack.c.b16 %v1850, %v1849
      %v1945 = vpack.c.b16 %v1852, %v1851
      %v1946 = vpack.c.b16 %v1854, %v1853
      %v1947 = vpack.c.b16 %v1856, %v1855
      %v1948 = vpack.c.b16 %v1858, %v1857
      %v1949 = vpack.c.b16 %v1860, %v1859
      %v1950 = vpack.c.b16 %v1862, %v1861
      %v1951 = vpack.c.b16 %v1864, %v1863
      %v1952 = vpack.c.b16 %v1866, %v1865
      %v1953 = vpack.c.b16 %v1868, %v1867
      %v1954 = vpack.c.b16 %v1870, %v1869
      %v1955 = vpack.c.b16 %v1872, %v1871
      %v1956 = vpack.c.b16 %v1874, %v1873
      %v1957 = vpack.c.b16 %v1876, %v1875
      %v1958 = vpack.c.b16 %v1878, %v1877
      %v1959 = vpack.c.b16 %v1880, %v1879
      %v1960 = vpack.c.b16 %v1882, %v1881
      %v1961 = vpack.c.b16 %v1884, %v1883
      %v1962 = vpack.c.b16 %v1886, %v1885
      %v1963 = vpack.c.b16 %v1888, %v1887
      %v1964 = vpack.c.b16 %v1890, %v1889
      %v1965 = vpack.c.b16 %v1892, %v1891
      %v1966 = vpack.c.b16 %v1894, %v1893
      %v1967 = vpack.c.b16 %v1896, %v1895
      %v1968 = vpack.c.b16 %v1898, %v1897
      %v1969 = vpack.c.b16 %v1900, %v1899
      %v1970 = vpack.c.b16 %v1902, %v1901
      %v1971 = vpack.c.b16 %v1904, %v1903
      %v1972 = vpack.c.b16 %v1906, %v1905
      %v1973 = vpack.c.b16 %v1908, %v1907
      %v1974 = vpack.c.b16 %v1910, %v1909
      %vm1975 = vcmask 31744
      %v1977 = vsel %vm1975, %v1911, 0
      %v1980 = vsel %vm1975, %v1912, 0
      %v1983 = vsel %vm1975, %v1913, 0
      %v1986 = vsel %vm1975, %v1914, 0
      %v1989 = vsel %vm1975, %v1915, 0
      %v1992 = vsel %vm1975, %v1916, 0
      %v1995 = vsel %vm1975, %v1917, 0
      %v1998 = vsel %vm1975, %v1918, 0
      %v2001 = vsel %vm1975, %v1919, 0
      %v2004 = vsel %vm1975, %v1920, 0
      %v2007 = vsel %vm1975, %v1921, 0
      %v2010 = vsel %vm1975, %v1922, 0
      %v2013 = vsel %vm1975, %v1923, 0
      %v2016 = vsel %vm1975, %v1924, 0
      %v2019 = vsel %vm1975, %v1925, 0
      %v2022 = vsel %vm1975, %v1926, 0
      %v2025 = vsel %vm1975, %v1927, 0
      %v2028 = vsel %vm1975, %v1928, 0
      %v2031 = vsel %vm1975, %v1929, 0
      %v2034 = vsel %vm1975, %v1930, 0
      %v2037 = vsel %vm1975, %v1931, 0
      %v2040 = vsel %vm1975, %v1932, 0
      %v2043 = vsel %vm1975, %v1933, 0
      %v2046 = vsel %vm1975, %v1934, 0
      %v2049 = vsel %vm1975, %v1935, 0
      %v2052 = vsel %vm1975, %v1936, 0
      %v2055 = vsel %vm1975, %v1937, 0
      %v2058 = vsel %vm1975, %v1938, 0
      %v2061 = vsel %vm1975, %v1939, 0
      %v2064 = vsel %vm1975, %v1940, 0
      %v2067 = vsel %vm1975, %v1941, 0
      %v2070 = vsel %vm1975, %v1942, 0
      %v2073 = vsel %vm1975, %v1943, 0
      %v2076 = vsel %vm1975, %v1944, 0
      %v2079 = vsel %vm1975, %v1945, 0
      %v2082 = vsel %vm1975, %v1946, 0
      %v2085 = vsel %vm1975, %v1947, 0
      %v2088 = vsel %vm1975, %v1948, 0
      %v2091 = vsel %vm1975, %v1949, 0
      %v2094 = vsel %vm1975, %v1950, 0
      %v2097 = vsel %vm1975, %v1951, 0
      %v2100 = vsel %vm1975, %v1952, 0
      %v2103 = vsel %vm1975, %v1953, 0
      %v2106 = vsel %vm1975, %v1954, 0
      %v2109 = vsel %vm1975, %v1955, 0
      %v2112 = vsel %vm1975, %v1956, 0
      %v2115 = vsel %vm1975, %v1957, 0
      %v2118 = vsel %vm1975, %v1958, 0
      %v2121 = vsel %vm1975, %v1959, 0
      %v2124 = vsel %vm1975, %v1960, 0
      %v2127 = vsel %vm1975, %v1961, 0
      %v2130 = vsel %vm1975, %v1962, 0
      %v2133 = vsel %vm1975, %v1963, 0
      %v2136 = vsel %vm1975, %v1964, 0
      %v2139 = vsel %vm1975, %v1965, 0
      %v2142 = vsel %vm1975, %v1966, 0
      %v2145 = vsel %vm1975, %v1967, 0
      %v2148 = vsel %vm1975, %v1968, 0
      %v2151 = vsel %vm1975, %v1969, 0
      %v2154 = vsel %vm1975, %v1970, 0
      %v2157 = vsel %vm1975, %v1971, 0
      %v2160 = vsel %vm1975, %v1972, 0
      %v2163 = vsel %vm1975, %v1973, 0
      %v2166 = vsel %vm1975, %v1974, 0
      %vm2168 = vcmask 1041408
      %v2170 = vsel %vm2168, %v1782, 0
      %2172 = vmatprep.subr.bf16.mxu0 0
      %2173 = vmatpush1.bf16.msra.mxu0 %v2170
      %2174 = vmatprep.subr.bf16.mxu0 0
      %2175 = vmatpush1.bf16.msra.mxu0 0
      %2176 = vmatprep.subr.bf16.mxu0 0
      %2177 = vmatpush1.bf16.msra.mxu0 0
      %2178 = vmatprep.subr.bf16.mxu0 0
      %2179 = vmatpush1.bf16.msra.mxu0 0
      %2180 = vmatprep.subr.bf16.mxu0 0
      %2181 = vmatpush1.bf16.msra.mxu0 0
      %2182 = vmatprep.subr.bf16.mxu0 0
      %2183 = vmatpush1.bf16.msra.mxu0 0
      %2184 = vmatprep.subr.bf16.mxu0 0
      %2185 = vmatpush1.bf16.msra.mxu0 0
      %2186 = vmatprep.subr.bf16.mxu0 0
      %2187 = vmatpush1.bf16.msra.mxu0 0
      %2188 = vmatprep.subr.bf16.mxu0 0
      %2189 = vmatpush1.bf16.msra.mxu0 0
      %2190 = vmatprep.subr.bf16.mxu0 0
      %2191 = vmatpush1.bf16.msra.mxu0 0
      %2192 = vmatprep.subr.bf16.mxu0 0
      %2193 = vmatpush1.bf16.msra.mxu0 0
      %2194 = vmatprep.subr.bf16.mxu0 0
      %2195 = vmatpush1.bf16.msra.mxu0 0
      %2196 = vmatprep.subr.bf16.mxu0 0
      %2197 = vmatpush1.bf16.msra.mxu0 0
      %2198 = vmatprep.subr.bf16.mxu0 0
      %2199 = vmatpush1.bf16.msra.mxu0 0
      %2200 = vmatprep.subr.bf16.mxu0 0
      %2201 = vmatpush1.bf16.msra.mxu0 0
      %2202 = vmatprep.subr.bf16.mxu0 0
      %2203 = vmatpush1.bf16.msra.mxu0 0
      %2204 = vmatprep.mubr.bf16.mxu0 0
      %2205 = vmatmul.mubr.bf16.gmra.mrb[0].mxu0 %v1977
      %v2206 = vpop.f32.mrb[0].mxu0
      %v2207 = vadd.f32 0.0, %v2206
      %v2208 = vpop.f32.mrb[0].mxu0
      %v2209 = vpop.f32.mrb[0].mxu0
      %v2210 = vadd.f32 0.0, %v2209
      %v2211 = vpop.f32.mrb[0].mxu0
      %2212 = vmatprep.mubr.bf16.mxu0 0
      %2213 = vmatmul.mubr.bf16.gmra.mrb[0].mxu0 %v1980
      %v2214 = vpop.f32.mrb[0].mxu0
      %v2215 = vadd.f32 0.0, %v2214
      %v2216 = vpop.f32.mrb[0].mxu0
      %v2217 = vpop.f32.mrb[0].mxu0
      %v2218 = vadd.f32 0.0, %v2217
      %v2219 = vpop.f32.mrb[0].mxu0
      %2220 = vmatprep.mubr.bf16.mxu0 0
      %2221 = vmatmul.mubr.bf16.gmra.mrb[0].mxu0 %v1983
      %v2222 = vpop.f32.mrb[0].mxu0
      %v2223 = vadd.f32 0.0, %v2222
      %v2224 = vpop.f32.mrb[0].mxu0
      %v2225 = vpop.f32.mrb[0].mxu0
      %v2226 = vadd.f32 0.0, %v2225
      %v2227 = vpop.f32.mrb[0].mxu0
      %2228 = vmatprep.mubr.bf16.mxu0 0
      %2229 = vmatmul.mubr.bf16.gmra.mrb[0].mxu0 %v1986
      %v2230 = vpop.f32.mrb[0].mxu0
      %v2231 = vadd.f32 0.0, %v2230
      %v2232 = vpop.f32.mrb[0].mxu0
      %v2233 = vpop.f32.mrb[0].mxu0
      %v2234 = vadd.f32 0.0, %v2233
      %v2235 = vpop.f32.mrb[0].mxu0
      %2236 = vmatprep.mubr.bf16.mxu0 0
      %2237 = vmatmul.mubr.bf16.gmra.mrb[0].mxu0 %v1989
      %v2238 = vpop.f32.mrb[0].mxu0
      %v2239 = vadd.f32 0.0, %v2238
      %v2240 = vpop.f32.mrb[0].mxu0
      %v2241 = vpop.f32.mrb[0].mxu0
      %v2242 = vadd.f32 0.0, %v2241
      %v2243 = vpop.f32.mrb[0].mxu0
      %2244 = vmatprep.mubr.bf16.mxu0 0
      %2245 = vmatmul.mubr.bf16.gmra.mrb[0].mxu0 %v1992
      %v2246 = vpop.f32.mrb[0].mxu0
      %v2247 = vadd.f32 0.0, %v2246
      %v2248 = vpop.f32.mrb[0].mxu0
      %v2249 = vpop.f32.mrb[0].mxu0
      %v2250 = vadd.f32 0.0, %v2249
      %v2251 = vpop.f32.mrb[0].mxu0
      %2252 = vmatprep.mubr.bf16.mxu0 0
      %2253 = vmatmul.mubr.bf16.gmra.mrb[0].mxu0 %v1995
      %v2254 = vpop.f32.mrb[0].mxu0
      %v2255 = vadd.f32 0.0, %v2254
      %v2256 = vpop.f32.mrb[0].mxu0
      %v2257 = vpop.f32.mrb[0].mxu0
      %v2258 = vadd.f32 0.0, %v2257
      %v2259 = vpop.f32.mrb[0].mxu0
      %2260 = vmatprep.mubr.bf16.mxu0 0
      %2261 = vmatmul.mubr.bf16.gmra.mrb[0].mxu0 %v1998
      %v2262 = vpop.f32.mrb[0].mxu0
      %v2263 = vadd.f32 0.0, %v2262
      %v2264 = vpop.f32.mrb[0].mxu0
      %v2265 = vpop.f32.mrb[0].mxu0
      %v2266 = vadd.f32 0.0, %v2265
      %v2267 = vpop.f32.mrb[0].mxu0
      %2268 = vmatprep.mubr.bf16.mxu0 0
      %2269 = vmatmul.mubr.bf16.gmra.mrb[0].mxu0 %v2001
      %v2270 = vpop.f32.mrb[0].mxu0
      %v2271 = vadd.f32 0.0, %v2270
      %v2272 = vpop.f32.mrb[0].mxu0
      %v2273 = vpop.f32.mrb[0].mxu0
      %v2274 = vadd.f32 0.0, %v2273
      %v2275 = vpop.f32.mrb[0].mxu0
      %2276 = vmatprep.mubr.bf16.mxu0 0
      %2277 = vmatmul.mubr.bf16.gmra.mrb[0].mxu0 %v2004
      %v2278 = vpop.f32.mrb[0].mxu0
      %v2279 = vadd.f32 0.0, %v2278
      %v2280 = vpop.f32.mrb[0].mxu0
      %v2281 = vpop.f32.mrb[0].mxu0
      %v2282 = vadd.f32 0.0, %v2281
      %v2283 = vpop.f32.mrb[0].mxu0
      %2284 = vmatprep.mubr.bf16.mxu0 0
      %2285 = vmatmul.mubr.bf16.gmra.mrb[0].mxu0 %v2007
      %v2286 = vpop.f32.mrb[0].mxu0
      %v2287 = vadd.f32 0.0, %v2286
      %v2288 = vpop.f32.mrb[0].mxu0
      %v2289 = vpop.f32.mrb[0].mxu0
      %v2290 = vadd.f32 0.0, %v2289
      %v2291 = vpop.f32.mrb[0].mxu0
      %2292 = vmatprep.mubr.bf16.mxu0 0
      %2293 = vmatmul.mubr.bf16.gmra.mrb[0].mxu0 %v2010
      %v2294 = vpop.f32.mrb[0].mxu0
      %v2295 = vadd.f32 0.0, %v2294
      %v2296 = vpop.f32.mrb[0].mxu0
      %v2297 = vpop.f32.mrb[0].mxu0
      %v2298 = vadd.f32 0.0, %v2297
      %v2299 = vpop.f32.mrb[0].mxu0
      %2300 = vmatprep.mubr.bf16.mxu0 0
      %2301 = vmatmul.mubr.bf16.gmra.mrb[0].mxu0 %v2013
      %v2302 = vpop.f32.mrb[0].mxu0
      %v2303 = vadd.f32 0.0, %v2302
      %v2304 = vpop.f32.mrb[0].mxu0
      %v2305 = vpop.f32.mrb[0].mxu0
      %v2306 = vadd.f32 0.0, %v2305
      %v2307 = vpop.f32.mrb[0].mxu0
      %2308 = vmatprep.mubr.bf16.mxu0 0
      %2309 = vmatmul.mubr.bf16.gmra.mrb[0].mxu0 %v2016
      %v2310 = vpop.f32.mrb[0].mxu0
      %v2311 = vadd.f32 0.0, %v2310
      %v2312 = vpop.f32.mrb[0].mxu0
      %v2313 = vpop.f32.mrb[0].mxu0
      %v2314 = vadd.f32 0.0, %v2313
      %v2315 = vpop.f32.mrb[0].mxu0
      %2316 = vmatprep.mubr.bf16.mxu0 0
      %2317 = vmatmul.mubr.bf16.gmra.mrb[0].mxu0 %v2019
      %v2318 = vpop.f32.mrb[0].mxu0
      %v2319 = vadd.f32 0.0, %v2318
      %v2320 = vpop.f32.mrb[0].mxu0
      %v2321 = vpop.f32.mrb[0].mxu0
      %v2322 = vadd.f32 0.0, %v2321
      %v2323 = vpop.f32.mrb[0].mxu0
      %2324 = vmatprep.mubr.bf16.mxu0 0
      %2325 = vmatmul.mubr.bf16.gmra.mrb[0].mxu0 %v2022
      %v2326 = vpop.f32.mrb[0].mxu0
      %v2327 = vadd.f32 0.0, %v2326
      %v2328 = vpop.f32.mrb[0].mxu0
      %v2329 = vpop.f32.mrb[0].mxu0
      %v2330 = vadd.f32 0.0, %v2329
      %v2331 = vpop.f32.mrb[0].mxu0
      %2332 = vmatprep.mubr.bf16.mxu0 0
      %2333 = vmatmul.mubr.bf16.gmra.mrb[0].mxu0 %v2025
      %v2334 = vpop.f32.mrb[0].mxu0
      %v2335 = vadd.f32 0.0, %v2334
      %v2336 = vpop.f32.mrb[0].mxu0
      %v2337 = vpop.f32.mrb[0].mxu0
      %v2338 = vadd.f32 0.0, %v2337
      %v2339 = vpop.f32.mrb[0].mxu0
      %2340 = vmatprep.mubr.bf16.mxu0 0
      %2341 = vmatmul.mubr.bf16.gmra.mrb[0].mxu0 %v2028
      %v2342 = vpop.f32.mrb[0].mxu0
      %v2343 = vadd.f32 0.0, %v2342
      %v2344 = vpop.f32.mrb[0].mxu0
      %v2345 = vpop.f32.mrb[0].mxu0
      %v2346 = vadd.f32 0.0, %v2345
      %v2347 = vpop.f32.mrb[0].mxu0
      %2348 = vmatprep.mubr.bf16.mxu0 0
      %2349 = vmatmul.mubr.bf16.gmra.mrb[0].mxu0 %v2031
      %v2350 = vpop.f32.mrb[0].mxu0
      %v2351 = vadd.f32 0.0, %v2350
      %v2352 = vpop.f32.mrb[0].mxu0
      %v2353 = vpop.f32.mrb[0].mxu0
      %v2354 = vadd.f32 0.0, %v2353
      %v2355 = vpop.f32.mrb[0].mxu0
      %2356 = vmatprep.mubr.bf16.mxu0 0
      %2357 = vmatmul.mubr.bf16.gmra.mrb[0].mxu0 %v2034
      %v2358 = vpop.f32.mrb[0].mxu0
      %v2359 = vadd.f32 0.0, %v2358
      %v2360 = vpop.f32.mrb[0].mxu0
      %v2361 = vpop.f32.mrb[0].mxu0
      %v2362 = vadd.f32 0.0, %v2361
      %v2363 = vpop.f32.mrb[0].mxu0
      %2364 = vmatprep.mubr.bf16.mxu0 0
      %2365 = vmatmul.mubr.bf16.gmra.mrb[0].mxu0 %v2037
      %v2366 = vpop.f32.mrb[0].mxu0
      %v2367 = vadd.f32 0.0, %v2366
      %v2368 = vpop.f32.mrb[0].mxu0
      %v2369 = vpop.f32.mrb[0].mxu0
      %v2370 = vadd.f32 0.0, %v2369
      %v2371 = vpop.f32.mrb[0].mxu0
      %2372 = vmatprep.mubr.bf16.mxu0 0
      %2373 = vmatmul.mubr.bf16.gmra.mrb[0].mxu0 %v2040
      %v2374 = vpop.f32.mrb[0].mxu0
      %v2375 = vadd.f32 0.0, %v2374
      %v2376 = vpop.f32.mrb[0].mxu0
      %v2377 = vpop.f32.mrb[0].mxu0
      %v2378 = vadd.f32 0.0, %v2377
      %v2379 = vpop.f32.mrb[0].mxu0
      %2380 = vmatprep.mubr.bf16.mxu0 0
      %2381 = vmatmul.mubr.bf16.gmra.mrb[0].mxu0 %v2043
      %v2382 = vpop.f32.mrb[0].mxu0
      %v2383 = vadd.f32 0.0, %v2382
      %v2384 = vpop.f32.mrb[0].mxu0
      %v2385 = vpop.f32.mrb[0].mxu0
      %v2386 = vadd.f32 0.0, %v2385
      %v2387 = vpop.f32.mrb[0].mxu0
      %2388 = vmatprep.mubr.bf16.mxu0 0
      %2389 = vmatmul.mubr.bf16.gmra.mrb[0].mxu0 %v2046
      %v2390 = vpop.f32.mrb[0].mxu0
      %v2391 = vadd.f32 0.0, %v2390
      %v2392 = vpop.f32.mrb[0].mxu0
      %v2393 = vpop.f32.mrb[0].mxu0
      %v2394 = vadd.f32 0.0, %v2393
      %v2395 = vpop.f32.mrb[0].mxu0
      %2396 = vmatprep.mubr.bf16.mxu0 0
      %2397 = vmatmul.mubr.bf16.gmra.mrb[0].mxu0 %v2049
      %v2398 = vpop.f32.mrb[0].mxu0
      %v2399 = vadd.f32 0.0, %v2398
      %v2400 = vpop.f32.mrb[0].mxu0
      %v2401 = vpop.f32.mrb[0].mxu0
      %v2402 = vadd.f32 0.0, %v2401
      %v2403 = vpop.f32.mrb[0].mxu0
      %2404 = vmatprep.mubr.bf16.mxu0 0
      %2405 = vmatmul.mubr.bf16.gmra.mrb[0].mxu0 %v2052
      %v2406 = vpop.f32.mrb[0].mxu0
      %v2407 = vadd.f32 0.0, %v2406
      %v2408 = vpop.f32.mrb[0].mxu0
      %v2409 = vpop.f32.mrb[0].mxu0
      %v2410 = vadd.f32 0.0, %v2409
      %v2411 = vpop.f32.mrb[0].mxu0
      %2412 = vmatprep.mubr.bf16.mxu0 0
      %2413 = vmatmul.mubr.bf16.gmra.mrb[0].mxu0 %v2055
      %v2414 = vpop.f32.mrb[0].mxu0
      %v2415 = vadd.f32 0.0, %v2414
      %v2416 = vpop.f32.mrb[0].mxu0
      %v2417 = vpop.f32.mrb[0].mxu0
      %v2418 = vadd.f32 0.0, %v2417
      %v2419 = vpop.f32.mrb[0].mxu0
      %2420 = vmatprep.mubr.bf16.mxu0 0
      %2421 = vmatmul.mubr.bf16.gmra.mrb[0].mxu0 %v2058
      %v2422 = vpop.f32.mrb[0].mxu0
      %v2423 = vadd.f32 0.0, %v2422
      %v2424 = vpop.f32.mrb[0].mxu0
      %v2425 = vpop.f32.mrb[0].mxu0
      %v2426 = vadd.f32 0.0, %v2425
      %v2427 = vpop.f32.mrb[0].mxu0
      %2428 = vmatprep.mubr.bf16.mxu0 0
      %2429 = vmatmul.mubr.bf16.gmra.mrb[0].mxu0 %v2061
      %v2430 = vpop.f32.mrb[0].mxu0
      %v2431 = vadd.f32 0.0, %v2430
      %v2432 = vpop.f32.mrb[0].mxu0
      %v2433 = vpop.f32.mrb[0].mxu0
      %v2434 = vadd.f32 0.0, %v2433
      %v2435 = vpop.f32.mrb[0].mxu0
      %2436 = vmatprep.mubr.bf16.mxu0 0
      %2437 = vmatmul.mubr.bf16.gmra.mrb[0].mxu0 %v2064
      %v2438 = vpop.f32.mrb[0].mxu0
      %v2439 = vadd.f32 0.0, %v2438
      %v2440 = vpop.f32.mrb[0].mxu0
      %v2441 = vpop.f32.mrb[0].mxu0
      %v2442 = vadd.f32 0.0, %v2441
      %v2443 = vpop.f32.mrb[0].mxu0
      %2444 = vmatprep.mubr.bf16.mxu0 0
      %2445 = vmatmul.mubr.bf16.gmra.mrb[0].mxu0 %v2067
      %v2446 = vpop.f32.mrb[0].mxu0
      %v2447 = vadd.f32 0.0, %v2446
      %v2448 = vpop.f32.mrb[0].mxu0
      %v2449 = vpop.f32.mrb[0].mxu0
      %v2450 = vadd.f32 0.0, %v2449
      %v2451 = vpop.f32.mrb[0].mxu0
      %2452 = vmatprep.mubr.bf16.mxu0 0
      %2453 = vmatmul.mubr.bf16.gmra.mrb[0].mxu0 %v2070
      %v2454 = vpop.f32.mrb[0].mxu0
      %v2455 = vadd.f32 0.0, %v2454
      %v2456 = vpop.f32.mrb[0].mxu0
      %v2457 = vpop.f32.mrb[0].mxu0
      %v2458 = vadd.f32 0.0, %v2457
      %v2459 = vpop.f32.mrb[0].mxu0
      %2460 = vmatprep.mubr.bf16.mxu0 0
      %2461 = vmatmul.mubr.bf16.gmra.mrb[0].mxu0 %v2073
      %v2462 = vpop.f32.mrb[0].mxu0
      %v2463 = vadd.f32 0.0, %v2462
      %v2464 = vpop.f32.mrb[0].mxu0
      %v2465 = vpop.f32.mrb[0].mxu0
      %v2466 = vadd.f32 0.0, %v2465
      %v2467 = vpop.f32.mrb[0].mxu0
      %2468 = vmatprep.mubr.bf16.mxu0 0
      %2469 = vmatmul.mubr.bf16.gmra.mrb[0].mxu0 %v2076
      %v2470 = vpop.f32.mrb[0].mxu0
      %v2471 = vadd.f32 0.0, %v2470
      %v2472 = vpop.f32.mrb[0].mxu0
      %v2473 = vpop.f32.mrb[0].mxu0
      %v2474 = vadd.f32 0.0, %v2473
      %v2475 = vpop.f32.mrb[0].mxu0
      %2476 = vmatprep.mubr.bf16.mxu0 0
      %2477 = vmatmul.mubr.bf16.gmra.mrb[0].mxu0 %v2079
      %v2478 = vpop.f32.mrb[0].mxu0
      %v2479 = vadd.f32 0.0, %v2478
      %v2480 = vpop.f32.mrb[0].mxu0
      %v2481 = vpop.f32.mrb[0].mxu0
      %v2482 = vadd.f32 0.0, %v2481
      %v2483 = vpop.f32.mrb[0].mxu0
      %2484 = vmatprep.mubr.bf16.mxu0 0
      %2485 = vmatmul.mubr.bf16.gmra.mrb[0].mxu0 %v2082
      %v2486 = vpop.f32.mrb[0].mxu0
      %v2487 = vadd.f32 0.0, %v2486
      %v2488 = vpop.f32.mrb[0].mxu0
      %v2489 = vpop.f32.mrb[0].mxu0
      %v2490 = vadd.f32 0.0, %v2489
      %v2491 = vpop.f32.mrb[0].mxu0
      %2492 = vmatprep.mubr.bf16.mxu0 0
      %2493 = vmatmul.mubr.bf16.gmra.mrb[0].mxu0 %v2085
      %v2494 = vpop.f32.mrb[0].mxu0
      %v2495 = vadd.f32 0.0, %v2494
      %v2496 = vpop.f32.mrb[0].mxu0
      %v2497 = vpop.f32.mrb[0].mxu0
      %v2498 = vadd.f32 0.0, %v2497
      %v2499 = vpop.f32.mrb[0].mxu0
      %2500 = vmatprep.mubr.bf16.mxu0 0
      %2501 = vmatmul.mubr.bf16.gmra.mrb[0].mxu0 %v2088
      %v2502 = vpop.f32.mrb[0].mxu0
      %v2503 = vadd.f32 0.0, %v2502
      %v2504 = vpop.f32.mrb[0].mxu0
      %v2505 = vpop.f32.mrb[0].mxu0
      %v2506 = vadd.f32 0.0, %v2505
      %v2507 = vpop.f32.mrb[0].mxu0
      %2508 = vmatprep.mubr.bf16.mxu0 0
      %2509 = vmatmul.mubr.bf16.gmra.mrb[0].mxu0 %v2091
      %v2510 = vpop.f32.mrb[0].mxu0
      %v2511 = vadd.f32 0.0, %v2510
      %v2512 = vpop.f32.mrb[0].mxu0
      %v2513 = vpop.f32.mrb[0].mxu0
      %v2514 = vadd.f32 0.0, %v2513
      %v2515 = vpop.f32.mrb[0].mxu0
      %2516 = vmatprep.mubr.bf16.mxu0 0
      %2517 = vmatmul.mubr.bf16.gmra.mrb[0].mxu0 %v2094
      %v2518 = vpop.f32.mrb[0].mxu0
      %v2519 = vadd.f32 0.0, %v2518
      %v2520 = vpop.f32.mrb[0].mxu0
      %v2521 = vpop.f32.mrb[0].mxu0
      %v2522 = vadd.f32 0.0, %v2521
      %v2523 = vpop.f32.mrb[0].mxu0
      %2524 = vmatprep.mubr.bf16.mxu0 0
      %2525 = vmatmul.mubr.bf16.gmra.mrb[0].mxu0 %v2097
      %v2526 = vpop.f32.mrb[0].mxu0
      %v2527 = vadd.f32 0.0, %v2526
      %v2528 = vpop.f32.mrb[0].mxu0
      %v2529 = vpop.f32.mrb[0].mxu0
      %v2530 = vadd.f32 0.0, %v2529
      %v2531 = vpop.f32.mrb[0].mxu0
      %2532 = vmatprep.mubr.bf16.mxu0 0
      %2533 = vmatmul.mubr.bf16.gmra.mrb[0].mxu0 %v2100
      %v2534 = vpop.f32.mrb[0].mxu0
      %v2535 = vadd.f32 0.0, %v2534
      %v2536 = vpop.f32.mrb[0].mxu0
      %v2537 = vpop.f32.mrb[0].mxu0
      %v2538 = vadd.f32 0.0, %v2537
      %v2539 = vpop.f32.mrb[0].mxu0
      %2540 = vmatprep.mubr.bf16.mxu0 0
      %2541 = vmatmul.mubr.bf16.gmra.mrb[0].mxu0 %v2103
      %v2542 = vpop.f32.mrb[0].mxu0
      %v2543 = vadd.f32 0.0, %v2542
      %v2544 = vpop.f32.mrb[0].mxu0
      %v2545 = vpop.f32.mrb[0].mxu0
      %v2546 = vadd.f32 0.0, %v2545
      %v2547 = vpop.f32.mrb[0].mxu0
      %2548 = vmatprep.mubr.bf16.mxu0 0
      %2549 = vmatmul.mubr.bf16.gmra.mrb[0].mxu0 %v2106
      %v2550 = vpop.f32.mrb[0].mxu0
      %v2551 = vadd.f32 0.0, %v2550
      %v2552 = vpop.f32.mrb[0].mxu0
      %v2553 = vpop.f32.mrb[0].mxu0
      %v2554 = vadd.f32 0.0, %v2553
      %v2555 = vpop.f32.mrb[0].mxu0
      %2556 = vmatprep.mubr.bf16.mxu0 0
      %2557 = vmatmul.mubr.bf16.gmra.mrb[0].mxu0 %v2109
      %v2558 = vpop.f32.mrb[0].mxu0
      %v2559 = vadd.f32 0.0, %v2558
      %v2560 = vpop.f32.mrb[0].mxu0
      %v2561 = vpop.f32.mrb[0].mxu0
      %v2562 = vadd.f32 0.0, %v2561
      %v2563 = vpop.f32.mrb[0].mxu0
      %2564 = vmatprep.mubr.bf16.mxu0 0
      %2565 = vmatmul.mubr.bf16.gmra.mrb[0].mxu0 %v2112
      %v2566 = vpop.f32.mrb[0].mxu0
      %v2567 = vadd.f32 0.0, %v2566
      %v2568 = vpop.f32.mrb[0].mxu0
      %v2569 = vpop.f32.mrb[0].mxu0
      %v2570 = vadd.f32 0.0, %v2569
      %v2571 = vpop.f32.mrb[0].mxu0
      %2572 = vmatprep.mubr.bf16.mxu0 0
      %2573 = vmatmul.mubr.bf16.gmra.mrb[0].mxu0 %v2115
      %v2574 = vpop.f32.mrb[0].mxu0
      %v2575 = vadd.f32 0.0, %v2574
      %v2576 = vpop.f32.mrb[0].mxu0
      %v2577 = vpop.f32.mrb[0].mxu0
      %v2578 = vadd.f32 0.0, %v2577
      %v2579 = vpop.f32.mrb[0].mxu0
      %2580 = vmatprep.mubr.bf16.mxu0 0
      %2581 = vmatmul.mubr.bf16.gmra.mrb[0].mxu0 %v2118
      %v2582 = vpop.f32.mrb[0].mxu0
      %v2583 = vadd.f32 0.0, %v2582
      %v2584 = vpop.f32.mrb[0].mxu0
      %v2585 = vpop.f32.mrb[0].mxu0
      %v2586 = vadd.f32 0.0, %v2585
      %v2587 = vpop.f32.mrb[0].mxu0
      %2588 = vmatprep.mubr.bf16.mxu0 0
      %2589 = vmatmul.mubr.bf16.gmra.mrb[0].mxu0 %v2121
      %v2590 = vpop.f32.mrb[0].mxu0
      %v2591 = vadd.f32 0.0, %v2590
      %v2592 = vpop.f32.mrb[0].mxu0
      %v2593 = vpop.f32.mrb[0].mxu0
      %v2594 = vadd.f32 0.0, %v2593
      %v2595 = vpop.f32.mrb[0].mxu0
      %2596 = vmatprep.mubr.bf16.mxu0 0
      %2597 = vmatmul.mubr.bf16.gmra.mrb[0].mxu0 %v2124
      %v2598 = vpop.f32.mrb[0].mxu0
      %v2599 = vadd.f32 0.0, %v2598
      %v2600 = vpop.f32.mrb[0].mxu0
      %v2601 = vpop.f32.mrb[0].mxu0
      %v2602 = vadd.f32 0.0, %v2601
      %v2603 = vpop.f32.mrb[0].mxu0
      %2604 = vmatprep.mubr.bf16.mxu0 0
      %2605 = vmatmul.mubr.bf16.gmra.mrb[0].mxu0 %v2127
      %v2606 = vpop.f32.mrb[0].mxu0
      %v2607 = vadd.f32 0.0, %v2606
      %v2608 = vpop.f32.mrb[0].mxu0
      %v2609 = vpop.f32.mrb[0].mxu0
      %v2610 = vadd.f32 0.0, %v2609
      %v2611 = vpop.f32.mrb[0].mxu0
      %2612 = vmatprep.mubr.bf16.mxu0 0
      %2613 = vmatmul.mubr.bf16.gmra.mrb[0].mxu0 %v2130
      %v2614 = vpop.f32.mrb[0].mxu0
      %v2615 = vadd.f32 0.0, %v2614
      %v2616 = vpop.f32.mrb[0].mxu0
      %v2617 = vpop.f32.mrb[0].mxu0
      %v2618 = vadd.f32 0.0, %v2617
      %v2619 = vpop.f32.mrb[0].mxu0
      %2620 = vmatprep.mubr.bf16.mxu0 0
      %2621 = vmatmul.mubr.bf16.gmra.mrb[0].mxu0 %v2133
      %v2622 = vpop.f32.mrb[0].mxu0
      %v2623 = vadd.f32 0.0, %v2622
      %v2624 = vpop.f32.mrb[0].mxu0
      %v2625 = vpop.f32.mrb[0].mxu0
      %v2626 = vadd.f32 0.0, %v2625
      %v2627 = vpop.f32.mrb[0].mxu0
      %2628 = vmatprep.mubr.bf16.mxu0 0
      %2629 = vmatmul.mubr.bf16.gmra.mrb[0].mxu0 %v2136
      %v2630 = vpop.f32.mrb[0].mxu0
      %v2631 = vadd.f32 0.0, %v2630
      %v2632 = vpop.f32.mrb[0].mxu0
      %v2633 = vpop.f32.mrb[0].mxu0
      %v2634 = vadd.f32 0.0, %v2633
      %v2635 = vpop.f32.mrb[0].mxu0
      %2636 = vmatprep.mubr.bf16.mxu0 0
      %2637 = vmatmul.mubr.bf16.gmra.mrb[0].mxu0 %v2139
      %v2638 = vpop.f32.mrb[0].mxu0
      %v2639 = vadd.f32 0.0, %v2638
      %v2640 = vpop.f32.mrb[0].mxu0
      %v2641 = vpop.f32.mrb[0].mxu0
      %v2642 = vadd.f32 0.0, %v2641
      %v2643 = vpop.f32.mrb[0].mxu0
      %2644 = vmatprep.mubr.bf16.mxu0 0
      %2645 = vmatmul.mubr.bf16.gmra.mrb[0].mxu0 %v2142
      %v2646 = vpop.f32.mrb[0].mxu0
      %v2647 = vadd.f32 0.0, %v2646
      %v2648 = vpop.f32.mrb[0].mxu0
      %v2649 = vpop.f32.mrb[0].mxu0
      %v2650 = vadd.f32 0.0, %v2649
      %v2651 = vpop.f32.mrb[0].mxu0
      %2652 = vmatprep.mubr.bf16.mxu0 0
      %2653 = vmatmul.mubr.bf16.gmra.mrb[0].mxu0 %v2145
      %v2654 = vpop.f32.mrb[0].mxu0
      %v2655 = vadd.f32 0.0, %v2654
      %v2656 = vpop.f32.mrb[0].mxu0
      %v2657 = vpop.f32.mrb[0].mxu0
      %v2658 = vadd.f32 0.0, %v2657
      %v2659 = vpop.f32.mrb[0].mxu0
      %2660 = vmatprep.mubr.bf16.mxu0 0
      %2661 = vmatmul.mubr.bf16.gmra.mrb[0].mxu0 %v2148
      %v2662 = vpop.f32.mrb[0].mxu0
      %v2663 = vadd.f32 0.0, %v2662
      %v2664 = vpop.f32.mrb[0].mxu0
      %v2665 = vpop.f32.mrb[0].mxu0
      %v2666 = vadd.f32 0.0, %v2665
      %v2667 = vpop.f32.mrb[0].mxu0
      %2668 = vmatprep.mubr.bf16.mxu0 0
      %2669 = vmatmul.mubr.bf16.gmra.mrb[0].mxu0 %v2151
      %v2670 = vpop.f32.mrb[0].mxu0
      %v2671 = vadd.f32 0.0, %v2670
      %v2672 = vpop.f32.mrb[0].mxu0
      %v2673 = vpop.f32.mrb[0].mxu0
      %v2674 = vadd.f32 0.0, %v2673
      %v2675 = vpop.f32.mrb[0].mxu0
      %2676 = vmatprep.mubr.bf16.mxu0 0
      %2677 = vmatmul.mubr.bf16.gmra.mrb[0].mxu0 %v2154
      %v2678 = vpop.f32.mrb[0].mxu0
      %v2679 = vadd.f32 0.0, %v2678
      %v2680 = vpop.f32.mrb[0].mxu0
      %v2681 = vpop.f32.mrb[0].mxu0
      %v2682 = vadd.f32 0.0, %v2681
      %v2683 = vpop.f32.mrb[0].mxu0
      %2684 = vmatprep.mubr.bf16.mxu0 0
      %2685 = vmatmul.mubr.bf16.gmra.mrb[0].mxu0 %v2157
      %v2686 = vpop.f32.mrb[0].mxu0
      %v2687 = vadd.f32 0.0, %v2686
      %v2688 = vpop.f32.mrb[0].mxu0
      %v2689 = vpop.f32.mrb[0].mxu0
      %v2690 = vadd.f32 0.0, %v2689
      %v2691 = vpop.f32.mrb[0].mxu0
      %2692 = vmatprep.mubr.bf16.mxu0 0
      %2693 = vmatmul.mubr.bf16.gmra.mrb[0].mxu0 %v2160
      %v2694 = vpop.f32.mrb[0].mxu0
      %v2695 = vadd.f32 0.0, %v2694
      %v2696 = vpop.f32.mrb[0].mxu0
      %v2697 = vpop.f32.mrb[0].mxu0
      %v2698 = vadd.f32 0.0, %v2697
      %v2699 = vpop.f32.mrb[0].mxu0
      %2700 = vmatprep.mubr.bf16.mxu0 0
      %2701 = vmatmul.mubr.bf16.gmra.mrb[0].mxu0 %v2163
      %v2702 = vpop.f32.mrb[0].mxu0
      %v2703 = vadd.f32 0.0, %v2702
      %v2704 = vpop.f32.mrb[0].mxu0
      %v2705 = vpop.f32.mrb[0].mxu0
      %v2706 = vadd.f32 0.0, %v2705
      %v2707 = vpop.f32.mrb[0].mxu0
      %2708 = vmatprep.mubr.bf16.mxu0 0
      %2709 = vmatmul.mubr.bf16.gmra.mrb[0].mxu0 %v2166
      %v2710 = vpop.f32.mrb[0].mxu0
      %v2711 = vadd.f32 0.0, %v2710
      %v2712 = vpop.f32.mrb[0].mxu0
      %v2713 = vpop.f32.mrb[0].mxu0
      %v2714 = vadd.f32 0.0, %v2713
      %v2715 = vpop.f32.mrb[0].mxu0
      %2716 = vdwg.mxu0
      %v2845 = vunpack.c.l.b16 %v199
      %v2846 = vunpack.c.l.b16 %v200
      %v2847 = vunpack.c.l.b16 %v201
      %v2848 = vunpack.c.l.b16 %v202
      %v2849 = vunpack.c.l.b16 %v204
      %v2850 = vunpack.c.l.b16 %v205
      %v2851 = vunpack.c.l.b16 %v206
      %v2852 = vunpack.c.l.b16 %v207
      %v2853 = vunpack.c.l.b16 %v209
      %v2854 = vunpack.c.l.b16 %v210
      %v2855 = vunpack.c.l.b16 %v211
      %v2856 = vunpack.c.l.b16 %v212
      %v2857 = vunpack.c.l.b16 %v214
      %v2858 = vunpack.c.l.b16 %v215
      %v2859 = vunpack.c.l.b16 %v216
      %v2860 = vunpack.c.l.b16 %v217
      %v2861 = vunpack.c.l.b16 %v219
      %v2862 = vunpack.c.l.b16 %v220
      %v2863 = vunpack.c.l.b16 %v221
      %v2864 = vunpack.c.l.b16 %v222
      %v2865 = vunpack.c.l.b16 %v224
      %v2866 = vunpack.c.l.b16 %v225
      %v2867 = vunpack.c.l.b16 %v226
      %v2868 = vunpack.c.l.b16 %v227
      %v2869 = vunpack.c.l.b16 %v229
      %v2870 = vunpack.c.l.b16 %v230
      %v2871 = vunpack.c.l.b16 %v231
      %v2872 = vunpack.c.l.b16 %v232
      %v2873 = vunpack.c.l.b16 %v234
      %v2874 = vunpack.c.l.b16 %v235
      %v2875 = vunpack.c.l.b16 %v236
      %v2876 = vunpack.c.l.b16 %v237
      %v2877 = vunpack.c.l.b16 %v239
      %v2878 = vunpack.c.l.b16 %v240
      %v2879 = vunpack.c.l.b16 %v241
      %v2880 = vunpack.c.l.b16 %v242
      %v2881 = vunpack.c.l.b16 %v244
      %v2882 = vunpack.c.l.b16 %v245
      %v2883 = vunpack.c.l.b16 %v246
      %v2884 = vunpack.c.l.b16 %v247
      %v2885 = vunpack.c.l.b16 %v249
      %v2886 = vunpack.c.l.b16 %v250
      %v2887 = vunpack.c.l.b16 %v251
      %v2888 = vunpack.c.l.b16 %v252
      %v2889 = vunpack.c.l.b16 %v254
      %v2890 = vunpack.c.l.b16 %v255
      %v2891 = vunpack.c.l.b16 %v256
      %v2892 = vunpack.c.l.b16 %v257
      %v2893 = vunpack.c.l.b16 %v259
      %v2894 = vunpack.c.l.b16 %v260
      %v2895 = vunpack.c.l.b16 %v261
      %v2896 = vunpack.c.l.b16 %v262
      %v2897 = vunpack.c.l.b16 %v264
      %v2898 = vunpack.c.l.b16 %v265
      %v2899 = vunpack.c.l.b16 %v266
      %v2900 = vunpack.c.l.b16 %v267
      %v2901 = vunpack.c.l.b16 %v269
      %v2902 = vunpack.c.l.b16 %v270
      %v2903 = vunpack.c.l.b16 %v271
      %v2904 = vunpack.c.l.b16 %v272
      %v2905 = vunpack.c.l.b16 %v274
      %v2906 = vunpack.c.l.b16 %v275
      %v2907 = vunpack.c.l.b16 %v276
      %v2908 = vunpack.c.l.b16 %v277
      %v2909 = vunpack.c.l.b16 %v279
      %v2910 = vunpack.c.l.b16 %v280
      %v2911 = vunpack.c.l.b16 %v281
      %v2912 = vunpack.c.l.b16 %v282
      %v2913 = vunpack.c.l.b16 %v284
      %v2914 = vunpack.c.l.b16 %v285
      %v2915 = vunpack.c.l.b16 %v286
      %v2916 = vunpack.c.l.b16 %v287
      %v2917 = vunpack.c.l.b16 %v289
      %v2918 = vunpack.c.l.b16 %v290
      %v2919 = vunpack.c.l.b16 %v291
      %v2920 = vunpack.c.l.b16 %v292
      %v2921 = vunpack.c.l.b16 %v294
      %v2922 = vunpack.c.l.b16 %v295
      %v2923 = vunpack.c.l.b16 %v296
      %v2924 = vunpack.c.l.b16 %v297
      %v2925 = vunpack.c.l.b16 %v299
      %v2926 = vunpack.c.l.b16 %v300
      %v2927 = vunpack.c.l.b16 %v301
      %v2928 = vunpack.c.l.b16 %v302
      %v2929 = vunpack.c.l.b16 %v304
      %v2930 = vunpack.c.l.b16 %v305
      %v2931 = vunpack.c.l.b16 %v306
      %v2932 = vunpack.c.l.b16 %v307
      %v2933 = vunpack.c.l.b16 %v309
      %v2934 = vunpack.c.l.b16 %v310
      %v2935 = vunpack.c.l.b16 %v311
      %v2936 = vunpack.c.l.b16 %v312
      %v2937 = vunpack.c.l.b16 %v314
      %v2938 = vunpack.c.l.b16 %v315
      %v2939 = vunpack.c.l.b16 %v316
      %v2940 = vunpack.c.l.b16 %v317
      %v2941 = vunpack.c.l.b16 %v319
      %v2942 = vunpack.c.l.b16 %v320
      %v2943 = vunpack.c.l.b16 %v321
      %v2944 = vunpack.c.l.b16 %v322
      %v2945 = vunpack.c.l.b16 %v324
      %v2946 = vunpack.c.l.b16 %v325
      %v2947 = vunpack.c.l.b16 %v326
      %v2948 = vunpack.c.l.b16 %v327
      %v2949 = vunpack.c.l.b16 %v329
      %v2950 = vunpack.c.l.b16 %v330
      %v2951 = vunpack.c.l.b16 %v331
      %v2952 = vunpack.c.l.b16 %v332
      %v2953 = vunpack.c.l.b16 %v334
      %v2954 = vunpack.c.l.b16 %v335
      %v2955 = vunpack.c.l.b16 %v336
      %v2956 = vunpack.c.l.b16 %v337
      %v2957 = vunpack.c.l.b16 %v339
      %v2958 = vunpack.c.l.b16 %v340
      %v2959 = vunpack.c.l.b16 %v341
      %v2960 = vunpack.c.l.b16 %v342
      %v2961 = vunpack.c.l.b16 %v344
      %v2962 = vunpack.c.l.b16 %v345
      %v2963 = vunpack.c.l.b16 %v346
      %v2964 = vunpack.c.l.b16 %v347
      %v2965 = vunpack.c.l.b16 %v349
      %v2966 = vunpack.c.l.b16 %v350
      %v2967 = vunpack.c.l.b16 %v351
      %v2968 = vunpack.c.l.b16 %v352
      %v2969 = vunpack.c.l.b16 %v354
      %v2970 = vunpack.c.l.b16 %v355
      %v2971 = vunpack.c.l.b16 %v356
      %v2972 = vunpack.c.l.b16 %v357
      %v2973 = vpack.c.b16 %v2846, %v2845
      %v2974 = vpack.c.b16 %v2848, %v2847
      %v2975 = vpack.c.b16 %v2850, %v2849
      %v2976 = vpack.c.b16 %v2852, %v2851
      %v2977 = vpack.c.b16 %v2854, %v2853
      %v2978 = vpack.c.b16 %v2856, %v2855
      %v2979 = vpack.c.b16 %v2858, %v2857
      %v2980 = vpack.c.b16 %v2860, %v2859
      %v2981 = vpack.c.b16 %v2862, %v2861
      %v2982 = vpack.c.b16 %v2864, %v2863
      %v2983 = vpack.c.b16 %v2866, %v2865
      %v2984 = vpack.c.b16 %v2868, %v2867
      %v2985 = vpack.c.b16 %v2870, %v2869
      %v2986 = vpack.c.b16 %v2872, %v2871
      %v2987 = vpack.c.b16 %v2874, %v2873
      %v2988 = vpack.c.b16 %v2876, %v2875
      %v2989 = vpack.c.b16 %v2878, %v2877
      %v2990 = vpack.c.b16 %v2880, %v2879
      %v2991 = vpack.c.b16 %v2882, %v2881
      %v2992 = vpack.c.b16 %v2884, %v2883
      %v2993 = vpack.c.b16 %v2886, %v2885
      %v2994 = vpack.c.b16 %v2888, %v2887
      %v2995 = vpack.c.b16 %v2890, %v2889
      %v2996 = vpack.c.b16 %v2892, %v2891
      %v2997 = vpack.c.b16 %v2894, %v2893
      %v2998 = vpack.c.b16 %v2896, %v2895
      %v2999 = vpack.c.b16 %v2898, %v2897
      %v3000 = vpack.c.b16 %v2900, %v2899
      %v3001 = vpack.c.b16 %v2902, %v2901
      %v3002 = vpack.c.b16 %v2904, %v2903
      %v3003 = vpack.c.b16 %v2906, %v2905
      %v3004 = vpack.c.b16 %v2908, %v2907
      %v3005 = vpack.c.b16 %v2910, %v2909
      %v3006 = vpack.c.b16 %v2912, %v2911
      %v3007 = vpack.c.b16 %v2914, %v2913
      %v3008 = vpack.c.b16 %v2916, %v2915
      %v3009 = vpack.c.b16 %v2918, %v2917
      %v3010 = vpack.c.b16 %v2920, %v2919
      %v3011 = vpack.c.b16 %v2922, %v2921
      %v3012 = vpack.c.b16 %v2924, %v2923
      %v3013 = vpack.c.b16 %v2926, %v2925
      %v3014 = vpack.c.b16 %v2928, %v2927
      %v3015 = vpack.c.b16 %v2930, %v2929
      %v3016 = vpack.c.b16 %v2932, %v2931
      %v3017 = vpack.c.b16 %v2934, %v2933
      %v3018 = vpack.c.b16 %v2936, %v2935
      %v3019 = vpack.c.b16 %v2938, %v2937
      %v3020 = vpack.c.b16 %v2940, %v2939
      %v3021 = vpack.c.b16 %v2942, %v2941
      %v3022 = vpack.c.b16 %v2944, %v2943
      %v3023 = vpack.c.b16 %v2946, %v2945
      %v3024 = vpack.c.b16 %v2948, %v2947
      %v3025 = vpack.c.b16 %v2950, %v2949
      %v3026 = vpack.c.b16 %v2952, %v2951
      %v3027 = vpack.c.b16 %v2954, %v2953
      %v3028 = vpack.c.b16 %v2956, %v2955
      %v3029 = vpack.c.b16 %v2958, %v2957
      %v3030 = vpack.c.b16 %v2960, %v2959
      %v3031 = vpack.c.b16 %v2962, %v2961
      %v3032 = vpack.c.b16 %v2964, %v2963
      %v3033 = vpack.c.b16 %v2966, %v2965
      %v3034 = vpack.c.b16 %v2968, %v2967
      %v3035 = vpack.c.b16 %v2970, %v2969
      %v3036 = vpack.c.b16 %v2972, %v2971
      %v3038 = vsel %vm1975, %v2973, 0
      %v3041 = vsel %vm1975, %v2974, 0
      %v3044 = vsel %vm1975, %v2975, 0
      %v3047 = vsel %vm1975, %v2976, 0
      %v3050 = vsel %vm1975, %v2977, 0
      %v3053 = vsel %vm1975, %v2978, 0
      %v3056 = vsel %vm1975, %v2979, 0
      %v3059 = vsel %vm1975, %v2980, 0
      %v3062 = vsel %vm1975, %v2981, 0
      %v3065 = vsel %vm1975, %v2982, 0
      %v3068 = vsel %vm1975, %v2983, 0
      %v3071 = vsel %vm1975, %v2984, 0
      %v3074 = vsel %vm1975, %v2985, 0
      %v3077 = vsel %vm1975, %v2986, 0
      %v3080 = vsel %vm1975, %v2987, 0
      %v3083 = vsel %vm1975, %v2988, 0
      %v3086 = vsel %vm1975, %v2989, 0
      %v3089 = vsel %vm1975, %v2990, 0
      %v3092 = vsel %vm1975, %v2991, 0
      %v3095 = vsel %vm1975, %v2992, 0
      %v3098 = vsel %vm1975, %v2993, 0
      %v3101 = vsel %vm1975, %v2994, 0
      %v3104 = vsel %vm1975, %v2995, 0
      %v3107 = vsel %vm1975, %v2996, 0
      %v3110 = vsel %vm1975, %v2997, 0
      %v3113 = vsel %vm1975, %v2998, 0
      %v3116 = vsel %vm1975, %v2999, 0
      %v3119 = vsel %vm1975, %v3000, 0
      %v3122 = vsel %vm1975, %v3001, 0
      %v3125 = vsel %vm1975, %v3002, 0
      %v3128 = vsel %vm1975, %v3003, 0
      %v3131 = vsel %vm1975, %v3004, 0
      %v3134 = vsel %vm1975, %v3005, 0
      %v3137 = vsel %vm1975, %v3006, 0
      %v3140 = vsel %vm1975, %v3007, 0
      %v3143 = vsel %vm1975, %v3008, 0
      %v3146 = vsel %vm1975, %v3009, 0
      %v3149 = vsel %vm1975, %v3010, 0
      %v3152 = vsel %vm1975, %v3011, 0
      %v3155 = vsel %vm1975, %v3012, 0
      %v3158 = vsel %vm1975, %v3013, 0
      %v3161 = vsel %vm1975, %v3014, 0
      %v3164 = vsel %vm1975, %v3015, 0
      %v3167 = vsel %vm1975, %v3016, 0
      %v3170 = vsel %vm1975, %v3017, 0
      %v3173 = vsel %vm1975, %v3018, 0
      %v3176 = vsel %vm1975, %v3019, 0
      %v3179 = vsel %vm1975, %v3020, 0
      %v3182 = vsel %vm1975, %v3021, 0
      %v3185 = vsel %vm1975, %v3022, 0
      %v3188 = vsel %vm1975, %v3023, 0
      %v3191 = vsel %vm1975, %v3024, 0
      %v3194 = vsel %vm1975, %v3025, 0
      %v3197 = vsel %vm1975, %v3026, 0
      %v3200 = vsel %vm1975, %v3027, 0
      %v3203 = vsel %vm1975, %v3028, 0
      %v3206 = vsel %vm1975, %v3029, 0
      %v3209 = vsel %vm1975, %v3030, 0
      %v3212 = vsel %vm1975, %v3031, 0
      %v3215 = vsel %vm1975, %v3032, 0
      %v3218 = vsel %vm1975, %v3033, 0
      %v3221 = vsel %vm1975, %v3034, 0
      %v3224 = vsel %vm1975, %v3035, 0
      %v3227 = vsel %vm1975, %v3036, 0
      %v3230 = vsel %vm2168, %v369, 0
      %3232 = vmatprep.subr.bf16.mxu0 0
      %3233 = vmatpush1.bf16.msra.mxu0 %v3230
      %3234 = vmatprep.subr.bf16.mxu0 0
      %3235 = vmatpush1.bf16.msra.mxu0 0
      %3236 = vmatprep.subr.bf16.mxu0 0
      %3237 = vmatpush1.bf16.msra.mxu0 0
      %3238 = vmatprep.subr.bf16.mxu0 0
      %3239 = vmatpush1.bf16.msra.mxu0 0
      %3240 = vmatprep.subr.bf16.mxu0 0
      %3241 = vmatpush1.bf16.msra.mxu0 0
      %3242 = vmatprep.subr.bf16.mxu0 0
      %3243 = vmatpush1.bf16.msra.mxu0 0
      %3244 = vmatprep.subr.bf16.mxu0 0
      %3245 = vmatpush1.bf16.msra.mxu0 0
      %3246 = vmatprep.subr.bf16.mxu0 0
      %3247 = vmatpush1.bf16.msra.mxu0 0
      %3248 = vmatprep.subr.bf16.mxu0 0
      %3249 = vmatpush1.bf16.msra.mxu0 0
      %3250 = vmatprep.subr.bf16.mxu0 0
      %3251 = vmatpush1.bf16.msra.mxu0 0
      %3252 = vmatprep.subr.bf16.mxu0 0
      %3253 = vmatpush1.bf16.msra.mxu0 0
      %3254 = vmatprep.subr.bf16.mxu0 0
      %3255 = vmatpush1.bf16.msra.mxu0 0
      %3256 = vmatprep.subr.bf16.mxu0 0
      %3257 = vmatpush1.bf16.msra.mxu0 0
      %3258 = vmatprep.subr.bf16.mxu0 0
      %3259 = vmatpush1.bf16.msra.mxu0 0
      %3260 = vmatprep.subr.bf16.mxu0 0
      %3261 = vmatpush1.bf16.msra.mxu0 0
      %3262 = vmatprep.subr.bf16.mxu0 0
      %3263 = vmatpush1.bf16.msra.mxu0 0
      %3264 = vmatprep.mubr.bf16.mxu0 0
      %3265 = vmatmul.mubr.bf16.gmra.mrb[0].mxu0 %v3038
      %v3266 = vpop.f32.mrb[0].mxu0
      %v3267 = vadd.f32 %v2207, %v3266
      %v3268 = vpop.f32.mrb[0].mxu0
      %v3269 = vpop.f32.mrb[0].mxu0
      %v3270 = vadd.f32 %v2210, %v3269
      %v3271 = vpop.f32.mrb[0].mxu0
      %3272 = vmatprep.mubr.bf16.mxu0 0
      %3273 = vmatmul.mubr.bf16.gmra.mrb[0].mxu0 %v3041
      %v3274 = vpop.f32.mrb[0].mxu0
      %v3275 = vadd.f32 %v2215, %v3274
      %v3276 = vpop.f32.mrb[0].mxu0
      %v3277 = vpop.f32.mrb[0].mxu0
      %v3278 = vadd.f32 %v2218, %v3277
      %v3279 = vpop.f32.mrb[0].mxu0
      %3280 = vmatprep.mubr.bf16.mxu0 0
      %3281 = vmatmul.mubr.bf16.gmra.mrb[0].mxu0 %v3044
      %v3282 = vpop.f32.mrb[0].mxu0
      %v3283 = vadd.f32 %v2223, %v3282
      %v3284 = vpop.f32.mrb[0].mxu0
      %v3285 = vpop.f32.mrb[0].mxu0
      %v3286 = vadd.f32 %v2226, %v3285
      %v3287 = vpop.f32.mrb[0].mxu0
      %3288 = vmatprep.mubr.bf16.mxu0 0
      %3289 = vmatmul.mubr.bf16.gmra.mrb[0].mxu0 %v3047
      %v3290 = vpop.f32.mrb[0].mxu0
      %v3291 = vadd.f32 %v2231, %v3290
      %v3292 = vpop.f32.mrb[0].mxu0
      %v3293 = vpop.f32.mrb[0].mxu0
      %v3294 = vadd.f32 %v2234, %v3293
      %v3295 = vpop.f32.mrb[0].mxu0
      %3296 = vmatprep.mubr.bf16.mxu0 0
      %3297 = vmatmul.mubr.bf16.gmra.mrb[0].mxu0 %v3050
      %v3298 = vpop.f32.mrb[0].mxu0
      %v3299 = vadd.f32 %v2239, %v3298
      %v3300 = vpop.f32.mrb[0].mxu0
      %v3301 = vpop.f32.mrb[0].mxu0
      %v3302 = vadd.f32 %v2242, %v3301
      %v3303 = vpop.f32.mrb[0].mxu0
      %3304 = vmatprep.mubr.bf16.mxu0 0
      %3305 = vmatmul.mubr.bf16.gmra.mrb[0].mxu0 %v3053
      %v3306 = vpop.f32.mrb[0].mxu0
      %v3307 = vadd.f32 %v2247, %v3306
      %v3308 = vpop.f32.mrb[0].mxu0
      %v3309 = vpop.f32.mrb[0].mxu0
      %v3310 = vadd.f32 %v2250, %v3309
      %v3311 = vpop.f32.mrb[0].mxu0
      %3312 = vmatprep.mubr.bf16.mxu0 0
      %3313 = vmatmul.mubr.bf16.gmra.mrb[0].mxu0 %v3056
      %v3314 = vpop.f32.mrb[0].mxu0
      %v3315 = vadd.f32 %v2255, %v3314
      %v3316 = vpop.f32.mrb[0].mxu0
      %v3317 = vpop.f32.mrb[0].mxu0
      %v3318 = vadd.f32 %v2258, %v3317
      %v3319 = vpop.f32.mrb[0].mxu0
      %3320 = vmatprep.mubr.bf16.mxu0 0
      %3321 = vmatmul.mubr.bf16.gmra.mrb[0].mxu0 %v3059
      %v3322 = vpop.f32.mrb[0].mxu0
      %v3323 = vadd.f32 %v2263, %v3322
      %v3324 = vpop.f32.mrb[0].mxu0
      %v3325 = vpop.f32.mrb[0].mxu0
      %v3326 = vadd.f32 %v2266, %v3325
      %v3327 = vpop.f32.mrb[0].mxu0
      %3328 = vmatprep.mubr.bf16.mxu0 0
      %3329 = vmatmul.mubr.bf16.gmra.mrb[0].mxu0 %v3062
      %v3330 = vpop.f32.mrb[0].mxu0
      %v3331 = vadd.f32 %v2271, %v3330
      %v3332 = vpop.f32.mrb[0].mxu0
      %v3333 = vpop.f32.mrb[0].mxu0
      %v3334 = vadd.f32 %v2274, %v3333
      %v3335 = vpop.f32.mrb[0].mxu0
      %3336 = vmatprep.mubr.bf16.mxu0 0
      %3337 = vmatmul.mubr.bf16.gmra.mrb[0].mxu0 %v3065
      %v3338 = vpop.f32.mrb[0].mxu0
      %v3339 = vadd.f32 %v2279, %v3338
      %v3340 = vpop.f32.mrb[0].mxu0
      %v3341 = vpop.f32.mrb[0].mxu0
      %v3342 = vadd.f32 %v2282, %v3341
      %v3343 = vpop.f32.mrb[0].mxu0
      %3344 = vmatprep.mubr.bf16.mxu0 0
      %3345 = vmatmul.mubr.bf16.gmra.mrb[0].mxu0 %v3068
      %v3346 = vpop.f32.mrb[0].mxu0
      %v3347 = vadd.f32 %v2287, %v3346
      %v3348 = vpop.f32.mrb[0].mxu0
      %v3349 = vpop.f32.mrb[0].mxu0
      %v3350 = vadd.f32 %v2290, %v3349
      %v3351 = vpop.f32.mrb[0].mxu0
      %3352 = vmatprep.mubr.bf16.mxu0 0
      %3353 = vmatmul.mubr.bf16.gmra.mrb[0].mxu0 %v3071
      %v3354 = vpop.f32.mrb[0].mxu0
      %v3355 = vadd.f32 %v2295, %v3354
      %v3356 = vpop.f32.mrb[0].mxu0
      %v3357 = vpop.f32.mrb[0].mxu0
      %v3358 = vadd.f32 %v2298, %v3357
      %v3359 = vpop.f32.mrb[0].mxu0
      %3360 = vmatprep.mubr.bf16.mxu0 0
      %3361 = vmatmul.mubr.bf16.gmra.mrb[0].mxu0 %v3074
      %v3362 = vpop.f32.mrb[0].mxu0
      %v3363 = vadd.f32 %v2303, %v3362
      %v3364 = vpop.f32.mrb[0].mxu0
      %v3365 = vpop.f32.mrb[0].mxu0
      %v3366 = vadd.f32 %v2306, %v3365
      %v3367 = vpop.f32.mrb[0].mxu0
      %3368 = vmatprep.mubr.bf16.mxu0 0
      %3369 = vmatmul.mubr.bf16.gmra.mrb[0].mxu0 %v3077
      %v3370 = vpop.f32.mrb[0].mxu0
      %v3371 = vadd.f32 %v2311, %v3370
      %v3372 = vpop.f32.mrb[0].mxu0
      %v3373 = vpop.f32.mrb[0].mxu0
      %v3374 = vadd.f32 %v2314, %v3373
      %v3375 = vpop.f32.mrb[0].mxu0
      %3376 = vmatprep.mubr.bf16.mxu0 0
      %3377 = vmatmul.mubr.bf16.gmra.mrb[0].mxu0 %v3080
      %v3378 = vpop.f32.mrb[0].mxu0
      %v3379 = vadd.f32 %v2319, %v3378
      %v3380 = vpop.f32.mrb[0].mxu0
      %v3381 = vpop.f32.mrb[0].mxu0
      %v3382 = vadd.f32 %v2322, %v3381
      %v3383 = vpop.f32.mrb[0].mxu0
      %3384 = vmatprep.mubr.bf16.mxu0 0
      %3385 = vmatmul.mubr.bf16.gmra.mrb[0].mxu0 %v3083
      %v3386 = vpop.f32.mrb[0].mxu0
      %v3387 = vadd.f32 %v2327, %v3386
      %v3388 = vpop.f32.mrb[0].mxu0
      %v3389 = vpop.f32.mrb[0].mxu0
      %v3390 = vadd.f32 %v2330, %v3389
      %v3391 = vpop.f32.mrb[0].mxu0
      %3392 = vmatprep.mubr.bf16.mxu0 0
      %3393 = vmatmul.mubr.bf16.gmra.mrb[0].mxu0 %v3086
      %v3394 = vpop.f32.mrb[0].mxu0
      %v3395 = vadd.f32 %v2335, %v3394
      %v3396 = vpop.f32.mrb[0].mxu0
      %v3397 = vpop.f32.mrb[0].mxu0
      %v3398 = vadd.f32 %v2338, %v3397
      %v3399 = vpop.f32.mrb[0].mxu0
      %3400 = vmatprep.mubr.bf16.mxu0 0
      %3401 = vmatmul.mubr.bf16.gmra.mrb[0].mxu0 %v3089
      %v3402 = vpop.f32.mrb[0].mxu0
      %v3403 = vadd.f32 %v2343, %v3402
      %v3404 = vpop.f32.mrb[0].mxu0
      %v3405 = vpop.f32.mrb[0].mxu0
      %v3406 = vadd.f32 %v2346, %v3405
      %v3407 = vpop.f32.mrb[0].mxu0
      %3408 = vmatprep.mubr.bf16.mxu0 0
      %3409 = vmatmul.mubr.bf16.gmra.mrb[0].mxu0 %v3092
      %v3410 = vpop.f32.mrb[0].mxu0
      %v3411 = vadd.f32 %v2351, %v3410
      %v3412 = vpop.f32.mrb[0].mxu0
      %v3413 = vpop.f32.mrb[0].mxu0
      %v3414 = vadd.f32 %v2354, %v3413
      %v3415 = vpop.f32.mrb[0].mxu0
      %3416 = vmatprep.mubr.bf16.mxu0 0
      %3417 = vmatmul.mubr.bf16.gmra.mrb[0].mxu0 %v3095
      %v3418 = vpop.f32.mrb[0].mxu0
      %v3419 = vadd.f32 %v2359, %v3418
      %v3420 = vpop.f32.mrb[0].mxu0
      %v3421 = vpop.f32.mrb[0].mxu0
      %v3422 = vadd.f32 %v2362, %v3421
      %v3423 = vpop.f32.mrb[0].mxu0
      %3424 = vmatprep.mubr.bf16.mxu0 0
      %3425 = vmatmul.mubr.bf16.gmra.mrb[0].mxu0 %v3098
      %v3426 = vpop.f32.mrb[0].mxu0
      %v3427 = vadd.f32 %v2367, %v3426
      %v3428 = vpop.f32.mrb[0].mxu0
      %v3429 = vpop.f32.mrb[0].mxu0
      %v3430 = vadd.f32 %v2370, %v3429
      %v3431 = vpop.f32.mrb[0].mxu0
      %3432 = vmatprep.mubr.bf16.mxu0 0
      %3433 = vmatmul.mubr.bf16.gmra.mrb[0].mxu0 %v3101
      %v3434 = vpop.f32.mrb[0].mxu0
      %v3435 = vadd.f32 %v2375, %v3434
      %v3436 = vpop.f32.mrb[0].mxu0
      %v3437 = vpop.f32.mrb[0].mxu0
      %v3438 = vadd.f32 %v2378, %v3437
      %v3439 = vpop.f32.mrb[0].mxu0
      %3440 = vmatprep.mubr.bf16.mxu0 0
      %3441 = vmatmul.mubr.bf16.gmra.mrb[0].mxu0 %v3104
      %v3442 = vpop.f32.mrb[0].mxu0
      %v3443 = vadd.f32 %v2383, %v3442
      %v3444 = vpop.f32.mrb[0].mxu0
      %v3445 = vpop.f32.mrb[0].mxu0
      %v3446 = vadd.f32 %v2386, %v3445
      %v3447 = vpop.f32.mrb[0].mxu0
      %3448 = vmatprep.mubr.bf16.mxu0 0
      %3449 = vmatmul.mubr.bf16.gmra.mrb[0].mxu0 %v3107
      %v3450 = vpop.f32.mrb[0].mxu0
      %v3451 = vadd.f32 %v2391, %v3450
      %v3452 = vpop.f32.mrb[0].mxu0
      %v3453 = vpop.f32.mrb[0].mxu0
      %v3454 = vadd.f32 %v2394, %v3453
      %v3455 = vpop.f32.mrb[0].mxu0
      %3456 = vmatprep.mubr.bf16.mxu0 0
      %3457 = vmatmul.mubr.bf16.gmra.mrb[0].mxu0 %v3110
      %v3458 = vpop.f32.mrb[0].mxu0
      %v3459 = vadd.f32 %v2399, %v3458
      %v3460 = vpop.f32.mrb[0].mxu0
      %v3461 = vpop.f32.mrb[0].mxu0
      %v3462 = vadd.f32 %v2402, %v3461
      %v3463 = vpop.f32.mrb[0].mxu0
      %3464 = vmatprep.mubr.bf16.mxu0 0
      %3465 = vmatmul.mubr.bf16.gmra.mrb[0].mxu0 %v3113
      %v3466 = vpop.f32.mrb[0].mxu0
      %v3467 = vadd.f32 %v2407, %v3466
      %v3468 = vpop.f32.mrb[0].mxu0
      %v3469 = vpop.f32.mrb[0].mxu0
      %v3470 = vadd.f32 %v2410, %v3469
      %v3471 = vpop.f32.mrb[0].mxu0
      %3472 = vmatprep.mubr.bf16.mxu0 0
      %3473 = vmatmul.mubr.bf16.gmra.mrb[0].mxu0 %v3116
      %v3474 = vpop.f32.mrb[0].mxu0
      %v3475 = vadd.f32 %v2415, %v3474
      %v3476 = vpop.f32.mrb[0].mxu0
      %v3477 = vpop.f32.mrb[0].mxu0
      %v3478 = vadd.f32 %v2418, %v3477
      %v3479 = vpop.f32.mrb[0].mxu0
      %3480 = vmatprep.mubr.bf16.mxu0 0
      %3481 = vmatmul.mubr.bf16.gmra.mrb[0].mxu0 %v3119
      %v3482 = vpop.f32.mrb[0].mxu0
      %v3483 = vadd.f32 %v2423, %v3482
      %v3484 = vpop.f32.mrb[0].mxu0
      %v3485 = vpop.f32.mrb[0].mxu0
      %v3486 = vadd.f32 %v2426, %v3485
      %v3487 = vpop.f32.mrb[0].mxu0
      %3488 = vmatprep.mubr.bf16.mxu0 0
      %3489 = vmatmul.mubr.bf16.gmra.mrb[0].mxu0 %v3122
      %v3490 = vpop.f32.mrb[0].mxu0
      %v3491 = vadd.f32 %v2431, %v3490
      %v3492 = vpop.f32.mrb[0].mxu0
      %v3493 = vpop.f32.mrb[0].mxu0
      %v3494 = vadd.f32 %v2434, %v3493
      %v3495 = vpop.f32.mrb[0].mxu0
      %3496 = vmatprep.mubr.bf16.mxu0 0
      %3497 = vmatmul.mubr.bf16.gmra.mrb[0].mxu0 %v3125
      %v3498 = vpop.f32.mrb[0].mxu0
      %v3499 = vadd.f32 %v2439, %v3498
      %v3500 = vpop.f32.mrb[0].mxu0
      %v3501 = vpop.f32.mrb[0].mxu0
      %v3502 = vadd.f32 %v2442, %v3501
      %v3503 = vpop.f32.mrb[0].mxu0
      %3504 = vmatprep.mubr.bf16.mxu0 0
      %3505 = vmatmul.mubr.bf16.gmra.mrb[0].mxu0 %v3128
      %v3506 = vpop.f32.mrb[0].mxu0
      %v3507 = vadd.f32 %v2447, %v3506
      %v3508 = vpop.f32.mrb[0].mxu0
      %v3509 = vpop.f32.mrb[0].mxu0
      %v3510 = vadd.f32 %v2450, %v3509
      %v3511 = vpop.f32.mrb[0].mxu0
      %3512 = vmatprep.mubr.bf16.mxu0 0
      %3513 = vmatmul.mubr.bf16.gmra.mrb[0].mxu0 %v3131
      %v3514 = vpop.f32.mrb[0].mxu0
      %v3515 = vadd.f32 %v2455, %v3514
      %v3516 = vpop.f32.mrb[0].mxu0
      %v3517 = vpop.f32.mrb[0].mxu0
      %v3518 = vadd.f32 %v2458, %v3517
      %v3519 = vpop.f32.mrb[0].mxu0
      %3520 = vmatprep.mubr.bf16.mxu0 0
      %3521 = vmatmul.mubr.bf16.gmra.mrb[0].mxu0 %v3134
      %v3522 = vpop.f32.mrb[0].mxu0
      %v3523 = vadd.f32 %v2463, %v3522
      %v3524 = vpop.f32.mrb[0].mxu0
      %v3525 = vpop.f32.mrb[0].mxu0
      %v3526 = vadd.f32 %v2466, %v3525
      %v3527 = vpop.f32.mrb[0].mxu0
      %3528 = vmatprep.mubr.bf16.mxu0 0
      %3529 = vmatmul.mubr.bf16.gmra.mrb[0].mxu0 %v3137
      %v3530 = vpop.f32.mrb[0].mxu0
      %v3531 = vadd.f32 %v2471, %v3530
      %v3532 = vpop.f32.mrb[0].mxu0
      %v3533 = vpop.f32.mrb[0].mxu0
      %v3534 = vadd.f32 %v2474, %v3533
      %v3535 = vpop.f32.mrb[0].mxu0
      %3536 = vmatprep.mubr.bf16.mxu0 0
      %3537 = vmatmul.mubr.bf16.gmra.mrb[0].mxu0 %v3140
      %v3538 = vpop.f32.mrb[0].mxu0
      %v3539 = vadd.f32 %v2479, %v3538
      %v3540 = vpop.f32.mrb[0].mxu0
      %v3541 = vpop.f32.mrb[0].mxu0
      %v3542 = vadd.f32 %v2482, %v3541
      %v3543 = vpop.f32.mrb[0].mxu0
      %3544 = vmatprep.mubr.bf16.mxu0 0
      %3545 = vmatmul.mubr.bf16.gmra.mrb[0].mxu0 %v3143
      %v3546 = vpop.f32.mrb[0].mxu0
      %v3547 = vadd.f32 %v2487, %v3546
      %v3548 = vpop.f32.mrb[0].mxu0
      %v3549 = vpop.f32.mrb[0].mxu0
      %v3550 = vadd.f32 %v2490, %v3549
      %v3551 = vpop.f32.mrb[0].mxu0
      %3552 = vmatprep.mubr.bf16.mxu0 0
      %3553 = vmatmul.mubr.bf16.gmra.mrb[0].mxu0 %v3146
      %v3554 = vpop.f32.mrb[0].mxu0
      %v3555 = vadd.f32 %v2495, %v3554
      %v3556 = vpop.f32.mrb[0].mxu0
      %v3557 = vpop.f32.mrb[0].mxu0
      %v3558 = vadd.f32 %v2498, %v3557
      %v3559 = vpop.f32.mrb[0].mxu0
      %3560 = vmatprep.mubr.bf16.mxu0 0
      %3561 = vmatmul.mubr.bf16.gmra.mrb[0].mxu0 %v3149
      %v3562 = vpop.f32.mrb[0].mxu0
      %v3563 = vadd.f32 %v2503, %v3562
      %v3564 = vpop.f32.mrb[0].mxu0
      %v3565 = vpop.f32.mrb[0].mxu0
      %v3566 = vadd.f32 %v2506, %v3565
      %v3567 = vpop.f32.mrb[0].mxu0
      %3568 = vmatprep.mubr.bf16.mxu0 0
      %3569 = vmatmul.mubr.bf16.gmra.mrb[0].mxu0 %v3152
      %v3570 = vpop.f32.mrb[0].mxu0
      %v3571 = vadd.f32 %v2511, %v3570
      %v3572 = vpop.f32.mrb[0].mxu0
      %v3573 = vpop.f32.mrb[0].mxu0
      %v3574 = vadd.f32 %v2514, %v3573
      %v3575 = vpop.f32.mrb[0].mxu0
      %3576 = vmatprep.mubr.bf16.mxu0 0
      %3577 = vmatmul.mubr.bf16.gmra.mrb[0].mxu0 %v3155
      %v3578 = vpop.f32.mrb[0].mxu0
      %v3579 = vadd.f32 %v2519, %v3578
      %v3580 = vpop.f32.mrb[0].mxu0
      %v3581 = vpop.f32.mrb[0].mxu0
      %v3582 = vadd.f32 %v2522, %v3581
      %v3583 = vpop.f32.mrb[0].mxu0
      %3584 = vmatprep.mubr.bf16.mxu0 0
      %3585 = vmatmul.mubr.bf16.gmra.mrb[0].mxu0 %v3158
      %v3586 = vpop.f32.mrb[0].mxu0
      %v3587 = vadd.f32 %v2527, %v3586
      %v3588 = vpop.f32.mrb[0].mxu0
      %v3589 = vpop.f32.mrb[0].mxu0
      %v3590 = vadd.f32 %v2530, %v3589
      %v3591 = vpop.f32.mrb[0].mxu0
      %3592 = vmatprep.mubr.bf16.mxu0 0
      %3593 = vmatmul.mubr.bf16.gmra.mrb[0].mxu0 %v3161
      %v3594 = vpop.f32.mrb[0].mxu0
      %v3595 = vadd.f32 %v2535, %v3594
      %v3596 = vpop.f32.mrb[0].mxu0
      %v3597 = vpop.f32.mrb[0].mxu0
      %v3598 = vadd.f32 %v2538, %v3597
      %v3599 = vpop.f32.mrb[0].mxu0
      %3600 = vmatprep.mubr.bf16.mxu0 0
      %3601 = vmatmul.mubr.bf16.gmra.mrb[0].mxu0 %v3164
      %v3602 = vpop.f32.mrb[0].mxu0
      %v3603 = vadd.f32 %v2543, %v3602
      %v3604 = vpop.f32.mrb[0].mxu0
      %v3605 = vpop.f32.mrb[0].mxu0
      %v3606 = vadd.f32 %v2546, %v3605
      %v3607 = vpop.f32.mrb[0].mxu0
      %3608 = vmatprep.mubr.bf16.mxu0 0
      %3609 = vmatmul.mubr.bf16.gmra.mrb[0].mxu0 %v3167
      %v3610 = vpop.f32.mrb[0].mxu0
      %v3611 = vadd.f32 %v2551, %v3610
      %v3612 = vpop.f32.mrb[0].mxu0
      %v3613 = vpop.f32.mrb[0].mxu0
      %v3614 = vadd.f32 %v2554, %v3613
      %v3615 = vpop.f32.mrb[0].mxu0
      %3616 = vmatprep.mubr.bf16.mxu0 0
      %3617 = vmatmul.mubr.bf16.gmra.mrb[0].mxu0 %v3170
      %v3618 = vpop.f32.mrb[0].mxu0
      %v3619 = vadd.f32 %v2559, %v3618
      %v3620 = vpop.f32.mrb[0].mxu0
      %v3621 = vpop.f32.mrb[0].mxu0
      %v3622 = vadd.f32 %v2562, %v3621
      %v3623 = vpop.f32.mrb[0].mxu0
      %3624 = vmatprep.mubr.bf16.mxu0 0
      %3625 = vmatmul.mubr.bf16.gmra.mrb[0].mxu0 %v3173
      %v3626 = vpop.f32.mrb[0].mxu0
      %v3627 = vadd.f32 %v2567, %v3626
      %v3628 = vpop.f32.mrb[0].mxu0
      %v3629 = vpop.f32.mrb[0].mxu0
      %v3630 = vadd.f32 %v2570, %v3629
      %v3631 = vpop.f32.mrb[0].mxu0
      %3632 = vmatprep.mubr.bf16.mxu0 0
      %3633 = vmatmul.mubr.bf16.gmra.mrb[0].mxu0 %v3176
      %v3634 = vpop.f32.mrb[0].mxu0
      %v3635 = vadd.f32 %v2575, %v3634
      %v3636 = vpop.f32.mrb[0].mxu0
      %v3637 = vpop.f32.mrb[0].mxu0
      %v3638 = vadd.f32 %v2578, %v3637
      %v3639 = vpop.f32.mrb[0].mxu0
      %3640 = vmatprep.mubr.bf16.mxu0 0
      %3641 = vmatmul.mubr.bf16.gmra.mrb[0].mxu0 %v3179
      %v3642 = vpop.f32.mrb[0].mxu0
      %v3643 = vadd.f32 %v2583, %v3642
      %v3644 = vpop.f32.mrb[0].mxu0
      %v3645 = vpop.f32.mrb[0].mxu0
      %v3646 = vadd.f32 %v2586, %v3645
      %v3647 = vpop.f32.mrb[0].mxu0
      %3648 = vmatprep.mubr.bf16.mxu0 0
      %3649 = vmatmul.mubr.bf16.gmra.mrb[0].mxu0 %v3182
      %v3650 = vpop.f32.mrb[0].mxu0
      %v3651 = vadd.f32 %v2591, %v3650
      %v3652 = vpop.f32.mrb[0].mxu0
      %v3653 = vpop.f32.mrb[0].mxu0
      %v3654 = vadd.f32 %v2594, %v3653
      %v3655 = vpop.f32.mrb[0].mxu0
      %3656 = vmatprep.mubr.bf16.mxu0 0
      %3657 = vmatmul.mubr.bf16.gmra.mrb[0].mxu0 %v3185
      %v3658 = vpop.f32.mrb[0].mxu0
      %v3659 = vadd.f32 %v2599, %v3658
      %v3660 = vpop.f32.mrb[0].mxu0
      %v3661 = vpop.f32.mrb[0].mxu0
      %v3662 = vadd.f32 %v2602, %v3661
      %v3663 = vpop.f32.mrb[0].mxu0
      %3664 = vmatprep.mubr.bf16.mxu0 0
      %3665 = vmatmul.mubr.bf16.gmra.mrb[0].mxu0 %v3188
      %v3666 = vpop.f32.mrb[0].mxu0
      %v3667 = vadd.f32 %v2607, %v3666
      %v3668 = vpop.f32.mrb[0].mxu0
      %v3669 = vpop.f32.mrb[0].mxu0
      %v3670 = vadd.f32 %v2610, %v3669
      %v3671 = vpop.f32.mrb[0].mxu0
      %3672 = vmatprep.mubr.bf16.mxu0 0
      %3673 = vmatmul.mubr.bf16.gmra.mrb[0].mxu0 %v3191
      %v3674 = vpop.f32.mrb[0].mxu0
      %v3675 = vadd.f32 %v2615, %v3674
      %v3676 = vpop.f32.mrb[0].mxu0
      %v3677 = vpop.f32.mrb[0].mxu0
      %v3678 = vadd.f32 %v2618, %v3677
      %v3679 = vpop.f32.mrb[0].mxu0
      %3680 = vmatprep.mubr.bf16.mxu0 0
      %3681 = vmatmul.mubr.bf16.gmra.mrb[0].mxu0 %v3194
      %v3682 = vpop.f32.mrb[0].mxu0
      %v3683 = vadd.f32 %v2623, %v3682
      %v3684 = vpop.f32.mrb[0].mxu0
      %v3685 = vpop.f32.mrb[0].mxu0
      %v3686 = vadd.f32 %v2626, %v3685
      %v3687 = vpop.f32.mrb[0].mxu0
      %3688 = vmatprep.mubr.bf16.mxu0 0
      %3689 = vmatmul.mubr.bf16.gmra.mrb[0].mxu0 %v3197
      %v3690 = vpop.f32.mrb[0].mxu0
      %v3691 = vadd.f32 %v2631, %v3690
      %v3692 = vpop.f32.mrb[0].mxu0
      %v3693 = vpop.f32.mrb[0].mxu0
      %v3694 = vadd.f32 %v2634, %v3693
      %v3695 = vpop.f32.mrb[0].mxu0
      %3696 = vmatprep.mubr.bf16.mxu0 0
      %3697 = vmatmul.mubr.bf16.gmra.mrb[0].mxu0 %v3200
      %v3698 = vpop.f32.mrb[0].mxu0
      %v3699 = vadd.f32 %v2639, %v3698
      %v3700 = vpop.f32.mrb[0].mxu0
      %v3701 = vpop.f32.mrb[0].mxu0
      %v3702 = vadd.f32 %v2642, %v3701
      %v3703 = vpop.f32.mrb[0].mxu0
      %3704 = vmatprep.mubr.bf16.mxu0 0
      %3705 = vmatmul.mubr.bf16.gmra.mrb[0].mxu0 %v3203
      %v3706 = vpop.f32.mrb[0].mxu0
      %v3707 = vadd.f32 %v2647, %v3706
      %v3708 = vpop.f32.mrb[0].mxu0
      %v3709 = vpop.f32.mrb[0].mxu0
      %v3710 = vadd.f32 %v2650, %v3709
      %v3711 = vpop.f32.mrb[0].mxu0
      %3712 = vmatprep.mubr.bf16.mxu0 0
      %3713 = vmatmul.mubr.bf16.gmra.mrb[0].mxu0 %v3206
      %v3714 = vpop.f32.mrb[0].mxu0
      %v3715 = vadd.f32 %v2655, %v3714
      %v3716 = vpop.f32.mrb[0].mxu0
      %v3717 = vpop.f32.mrb[0].mxu0
      %v3718 = vadd.f32 %v2658, %v3717
      %v3719 = vpop.f32.mrb[0].mxu0
      %3720 = vmatprep.mubr.bf16.mxu0 0
      %3721 = vmatmul.mubr.bf16.gmra.mrb[0].mxu0 %v3209
      %v3722 = vpop.f32.mrb[0].mxu0
      %v3723 = vadd.f32 %v2663, %v3722
      %v3724 = vpop.f32.mrb[0].mxu0
      %v3725 = vpop.f32.mrb[0].mxu0
      %v3726 = vadd.f32 %v2666, %v3725
      %v3727 = vpop.f32.mrb[0].mxu0
      %3728 = vmatprep.mubr.bf16.mxu0 0
      %3729 = vmatmul.mubr.bf16.gmra.mrb[0].mxu0 %v3212
      %v3730 = vpop.f32.mrb[0].mxu0
      %v3731 = vadd.f32 %v2671, %v3730
      %v3732 = vpop.f32.mrb[0].mxu0
      %v3733 = vpop.f32.mrb[0].mxu0
      %v3734 = vadd.f32 %v2674, %v3733
      %v3735 = vpop.f32.mrb[0].mxu0
      %3736 = vmatprep.mubr.bf16.mxu0 0
      %3737 = vmatmul.mubr.bf16.gmra.mrb[0].mxu0 %v3215
      %v3738 = vpop.f32.mrb[0].mxu0
      %v3739 = vadd.f32 %v2679, %v3738
      %v3740 = vpop.f32.mrb[0].mxu0
      %v3741 = vpop.f32.mrb[0].mxu0
      %v3742 = vadd.f32 %v2682, %v3741
      %v3743 = vpop.f32.mrb[0].mxu0
      %3744 = vmatprep.mubr.bf16.mxu0 0
      %3745 = vmatmul.mubr.bf16.gmra.mrb[0].mxu0 %v3218
      %v3746 = vpop.f32.mrb[0].mxu0
      %v3747 = vadd.f32 %v2687, %v3746
      %v3748 = vpop.f32.mrb[0].mxu0
      %v3749 = vpop.f32.mrb[0].mxu0
      %v3750 = vadd.f32 %v2690, %v3749
      %v3751 = vpop.f32.mrb[0].mxu0
      %3752 = vmatprep.mubr.bf16.mxu0 0
      %3753 = vmatmul.mubr.bf16.gmra.mrb[0].mxu0 %v3221
      %v3754 = vpop.f32.mrb[0].mxu0
      %v3755 = vadd.f32 %v2695, %v3754
      %v3756 = vpop.f32.mrb[0].mxu0
      %v3757 = vpop.f32.mrb[0].mxu0
      %v3758 = vadd.f32 %v2698, %v3757
      %v3759 = vpop.f32.mrb[0].mxu0
      %3760 = vmatprep.mubr.bf16.mxu0 0
      %3761 = vmatmul.mubr.bf16.gmra.mrb[0].mxu0 %v3224
      %v3762 = vpop.f32.mrb[0].mxu0
      %v3763 = vadd.f32 %v2703, %v3762
      %v3764 = vpop.f32.mrb[0].mxu0
      %v3765 = vpop.f32.mrb[0].mxu0
      %v3766 = vadd.f32 %v2706, %v3765
      %v3767 = vpop.f32.mrb[0].mxu0
      %3768 = vmatprep.mubr.bf16.mxu0 0
      %3769 = vmatmul.mubr.bf16.gmra.mrb[0].mxu0 %v3227
      %v3770 = vpop.f32.mrb[0].mxu0
      %v3771 = vadd.f32 %v2711, %v3770
      %v3772 = vpop.f32.mrb[0].mxu0
      %v3773 = vpop.f32.mrb[0].mxu0
      %v3774 = vadd.f32 %v2714, %v3773
      %v3775 = vpop.f32.mrb[0].mxu0
      %3776 = vdwg.mxu0
      %vm3809 = vcmask 1042432
      %vm3810 = vcmask 1046532
      %vm3811 = vmor %vm3809, %vm3810
      %v3812 = vrot.slane %v199, 5
      %v3813 = vrot.slane %v3812, 4
      %v3814 = vrot.slane %v200, 5
      %v3815 = vsel %vm3811, %v3813, %v3814
      %v3816 = vrot.slane %v3814, 4
      %v3817 = vrot.slane %v201, 5
      %v3818 = vsel %vm3811, %v3816, %v3817
      %v3819 = vrot.slane %v3817, 4
      %v3820 = vrot.slane %v202, 5
      %v3821 = vsel %vm3811, %v3819, %v3820
      %v3822 = vrot.slane %v3820, 4
      %v3823 = vrot.slane %v203, 5
      %v3824 = vsel %vm3811, %v3822, %v3823
      %v3825 = vrot.slane %v204, 5
      %v3826 = vrot.slane %v3825, 4
      %v3827 = vrot.slane %v205, 5
      %v3828 = vsel %vm3811, %v3826, %v3827
      %v3829 = vrot.slane %v3827, 4
      %v3830 = vrot.slane %v206, 5
      %v3831 = vsel %vm3811, %v3829, %v3830
      %v3832 = vrot.slane %v3830, 4
      %v3833 = vrot.slane %v207, 5
      %v3834 = vsel %vm3811, %v3832, %v3833
      %v3835 = vrot.slane %v3833, 4
      %v3836 = vrot.slane %v208, 5
      %v3837 = vsel %vm3811, %v3835, %v3836
      %v3838 = vrot.slane %v209, 5
      %v3839 = vrot.slane %v3838, 4
      %v3840 = vrot.slane %v210, 5
      %v3841 = vsel %vm3811, %v3839, %v3840
      %v3842 = vrot.slane %v3840, 4
      %v3843 = vrot.slane %v211, 5
      %v3844 = vsel %vm3811, %v3842, %v3843
      %v3845 = vrot.slane %v3843, 4
      %v3846 = vrot.slane %v212, 5
      %v3847 = vsel %vm3811, %v3845, %v3846
      %v3848 = vrot.slane %v3846, 4
      %v3849 = vrot.slane %v213, 5
      %v3850 = vsel %vm3811, %v3848, %v3849
      %v3851 = vrot.slane %v214, 5
      %v3852 = vrot.slane %v3851, 4
      %v3853 = vrot.slane %v215, 5
      %v3854 = vsel %vm3811, %v3852, %v3853
      %v3855 = vrot.slane %v3853, 4
      %v3856 = vrot.slane %v216, 5
      %v3857 = vsel %vm3811, %v3855, %v3856
      %v3858 = vrot.slane %v3856, 4
      %v3859 = vrot.slane %v217, 5
      %v3860 = vsel %vm3811, %v3858, %v3859
      %v3861 = vrot.slane %v3859, 4
      %v3862 = vrot.slane %v218, 5
      %v3863 = vsel %vm3811, %v3861, %v3862
      %v3864 = vrot.slane %v219, 5
      %v3865 = vrot.slane %v3864, 4
      %v3866 = vrot.slane %v220, 5
      %v3867 = vsel %vm3811, %v3865, %v3866
      %v3868 = vrot.slane %v3866, 4
      %v3869 = vrot.slane %v221, 5
      %v3870 = vsel %vm3811, %v3868, %v3869
      %v3871 = vrot.slane %v3869, 4
      %v3872 = vrot.slane %v222, 5
      %v3873 = vsel %vm3811, %v3871, %v3872
      %v3874 = vrot.slane %v3872, 4
      %v3875 = vrot.slane %v223, 5
      %v3876 = vsel %vm3811, %v3874, %v3875
      %v3877 = vrot.slane %v224, 5
      %v3878 = vrot.slane %v3877, 4
      %v3879 = vrot.slane %v225, 5
      %v3880 = vsel %vm3811, %v3878, %v3879
      %v3881 = vrot.slane %v3879, 4
      %v3882 = vrot.slane %v226, 5
      %v3883 = vsel %vm3811, %v3881, %v3882
      %v3884 = vrot.slane %v3882, 4
      %v3885 = vrot.slane %v227, 5
      %v3886 = vsel %vm3811, %v3884, %v3885
      %v3887 = vrot.slane %v3885, 4
      %v3888 = vrot.slane %v228, 5
      %v3889 = vsel %vm3811, %v3887, %v3888
      %v3890 = vrot.slane %v229, 5
      %v3891 = vrot.slane %v3890, 4
      %v3892 = vrot.slane %v230, 5
      %v3893 = vsel %vm3811, %v3891, %v3892
      %v3894 = vrot.slane %v3892, 4
      %v3895 = vrot.slane %v231, 5
      %v3896 = vsel %vm3811, %v3894, %v3895
      %v3897 = vrot.slane %v3895, 4
      %v3898 = vrot.slane %v232, 5
      %v3899 = vsel %vm3811, %v3897, %v3898
      %v3900 = vrot.slane %v3898, 4
      %v3901 = vrot.slane %v233, 5
      %v3902 = vsel %vm3811, %v3900, %v3901
      %v3903 = vrot.slane %v234, 5
      %v3904 = vrot.slane %v3903, 4
      %v3905 = vrot.slane %v235, 5
      %v3906 = vsel %vm3811, %v3904, %v3905
      %v3907 = vrot.slane %v3905, 4
      %v3908 = vrot.slane %v236, 5
      %v3909 = vsel %vm3811, %v3907, %v3908
      %v3910 = vrot.slane %v3908, 4
      %v3911 = vrot.slane %v237, 5
      %v3912 = vsel %vm3811, %v3910, %v3911
      %v3913 = vrot.slane %v3911, 4
      %v3914 = vrot.slane %v238, 5
      %v3915 = vsel %vm3811, %v3913, %v3914
      %v3916 = vrot.slane %v239, 5
      %v3917 = vrot.slane %v3916, 4
      %v3918 = vrot.slane %v240, 5
      %v3919 = vsel %vm3811, %v3917, %v3918
      %v3920 = vrot.slane %v3918, 4
      %v3921 = vrot.slane %v241, 5
      %v3922 = vsel %vm3811, %v3920, %v3921
      %v3923 = vrot.slane %v3921, 4
      %v3924 = vrot.slane %v242, 5
      %v3925 = vsel %vm3811, %v3923, %v3924
      %v3926 = vrot.slane %v3924, 4
      %v3927 = vrot.slane %v243, 5
      %v3928 = vsel %vm3811, %v3926, %v3927
      %v3929 = vrot.slane %v244, 5
      %v3930 = vrot.slane %v3929, 4
      %v3931 = vrot.slane %v245, 5
      %v3932 = vsel %vm3811, %v3930, %v3931
      %v3933 = vrot.slane %v3931, 4
      %v3934 = vrot.slane %v246, 5
      %v3935 = vsel %vm3811, %v3933, %v3934
      %v3936 = vrot.slane %v3934, 4
      %v3937 = vrot.slane %v247, 5
      %v3938 = vsel %vm3811, %v3936, %v3937
      %v3939 = vrot.slane %v3937, 4
      %v3940 = vrot.slane %v248, 5
      %v3941 = vsel %vm3811, %v3939, %v3940
      %v3942 = vrot.slane %v249, 5
      %v3943 = vrot.slane %v3942, 4
      %v3944 = vrot.slane %v250, 5
      %v3945 = vsel %vm3811, %v3943, %v3944
      %v3946 = vrot.slane %v3944, 4
      %v3947 = vrot.slane %v251, 5
      %v3948 = vsel %vm3811, %v3946, %v3947
      %v3949 = vrot.slane %v3947, 4
      %v3950 = vrot.slane %v252, 5
      %v3951 = vsel %vm3811, %v3949, %v3950
      %v3952 = vrot.slane %v3950, 4
      %v3953 = vrot.slane %v253, 5
      %v3954 = vsel %vm3811, %v3952, %v3953
      %v3955 = vrot.slane %v254, 5
      %v3956 = vrot.slane %v3955, 4
      %v3957 = vrot.slane %v255, 5
      %v3958 = vsel %vm3811, %v3956, %v3957
      %v3959 = vrot.slane %v3957, 4
      %v3960 = vrot.slane %v256, 5
      %v3961 = vsel %vm3811, %v3959, %v3960
      %v3962 = vrot.slane %v3960, 4
      %v3963 = vrot.slane %v257, 5
      %v3964 = vsel %vm3811, %v3962, %v3963
      %v3965 = vrot.slane %v3963, 4
      %v3966 = vrot.slane %v258, 5
      %v3967 = vsel %vm3811, %v3965, %v3966
      %v3968 = vrot.slane %v259, 5
      %v3969 = vrot.slane %v3968, 4
      %v3970 = vrot.slane %v260, 5
      %v3971 = vsel %vm3811, %v3969, %v3970
      %v3972 = vrot.slane %v3970, 4
      %v3973 = vrot.slane %v261, 5
      %v3974 = vsel %vm3811, %v3972, %v3973
      %v3975 = vrot.slane %v3973, 4
      %v3976 = vrot.slane %v262, 5
      %v3977 = vsel %vm3811, %v3975, %v3976
      %v3978 = vrot.slane %v3976, 4
      %v3979 = vrot.slane %v263, 5
      %v3980 = vsel %vm3811, %v3978, %v3979
      %v3981 = vrot.slane %v264, 5
      %v3982 = vrot.slane %v3981, 4
      %v3983 = vrot.slane %v265, 5
      %v3984 = vsel %vm3811, %v3982, %v3983
      %v3985 = vrot.slane %v3983, 4
      %v3986 = vrot.slane %v266, 5
      %v3987 = vsel %vm3811, %v3985, %v3986
      %v3988 = vrot.slane %v3986, 4
      %v3989 = vrot.slane %v267, 5
      %v3990 = vsel %vm3811, %v3988, %v3989
      %v3991 = vrot.slane %v3989, 4
      %v3992 = vrot.slane %v268, 5
      %v3993 = vsel %vm3811, %v3991, %v3992
      %v3994 = vrot.slane %v269, 5
      %v3995 = vrot.slane %v3994, 4
      %v3996 = vrot.slane %v270, 5
      %v3997 = vsel %vm3811, %v3995, %v3996
      %v3998 = vrot.slane %v3996, 4
      %v3999 = vrot.slane %v271, 5
      %v4000 = vsel %vm3811, %v3998, %v3999
      %v4001 = vrot.slane %v3999, 4
      %v4002 = vrot.slane %v272, 5
      %v4003 = vsel %vm3811, %v4001, %v4002
      %v4004 = vrot.slane %v4002, 4
      %v4005 = vrot.slane %v273, 5
      %v4006 = vsel %vm3811, %v4004, %v4005
      %v4007 = vrot.slane %v274, 5
      %v4008 = vrot.slane %v4007, 4
      %v4009 = vrot.slane %v275, 5
      %v4010 = vsel %vm3811, %v4008, %v4009
      %v4011 = vrot.slane %v4009, 4
      %v4012 = vrot.slane %v276, 5
      %v4013 = vsel %vm3811, %v4011, %v4012
      %v4014 = vrot.slane %v4012, 4
      %v4015 = vrot.slane %v277, 5
      %v4016 = vsel %vm3811, %v4014, %v4015
      %v4017 = vrot.slane %v4015, 4
      %v4018 = vrot.slane %v278, 5
      %v4019 = vsel %vm3811, %v4017, %v4018
      %v4020 = vrot.slane %v279, 5
      %v4021 = vrot.slane %v4020, 4
      %v4022 = vrot.slane %v280, 5
      %v4023 = vsel %vm3811, %v4021, %v4022
      %v4024 = vrot.slane %v4022, 4
      %v4025 = vrot.slane %v281, 5
      %v4026 = vsel %vm3811, %v4024, %v4025
      %v4027 = vrot.slane %v4025, 4
      %v4028 = vrot.slane %v282, 5
      %v4029 = vsel %vm3811, %v4027, %v4028
      %v4030 = vrot.slane %v4028, 4
      %v4031 = vrot.slane %v283, 5
      %v4032 = vsel %vm3811, %v4030, %v4031
      %v4033 = vrot.slane %v284, 5
      %v4034 = vrot.slane %v4033, 4
      %v4035 = vrot.slane %v285, 5
      %v4036 = vsel %vm3811, %v4034, %v4035
      %v4037 = vrot.slane %v4035, 4
      %v4038 = vrot.slane %v286, 5
      %v4039 = vsel %vm3811, %v4037, %v4038
      %v4040 = vrot.slane %v4038, 4
      %v4041 = vrot.slane %v287, 5
      %v4042 = vsel %vm3811, %v4040, %v4041
      %v4043 = vrot.slane %v4041, 4
      %v4044 = vrot.slane %v288, 5
      %v4045 = vsel %vm3811, %v4043, %v4044
      %v4046 = vrot.slane %v289, 5
      %v4047 = vrot.slane %v4046, 4
      %v4048 = vrot.slane %v290, 5
      %v4049 = vsel %vm3811, %v4047, %v4048
      %v4050 = vrot.slane %v4048, 4
      %v4051 = vrot.slane %v291, 5
      %v4052 = vsel %vm3811, %v4050, %v4051
      %v4053 = vrot.slane %v4051, 4
      %v4054 = vrot.slane %v292, 5
      %v4055 = vsel %vm3811, %v4053, %v4054
      %v4056 = vrot.slane %v4054, 4
      %v4057 = vrot.slane %v293, 5
      %v4058 = vsel %vm3811, %v4056, %v4057
      %v4059 = vrot.slane %v294, 5
      %v4060 = vrot.slane %v4059, 4
      %v4061 = vrot.slane %v295, 5
      %v4062 = vsel %vm3811, %v4060, %v4061
      %v4063 = vrot.slane %v4061, 4
      %v4064 = vrot.slane %v296, 5
      %v4065 = vsel %vm3811, %v4063, %v4064
      %v4066 = vrot.slane %v4064, 4
      %v4067 = vrot.slane %v297, 5
      %v4068 = vsel %vm3811, %v4066, %v4067
      %v4069 = vrot.slane %v4067, 4
      %v4070 = vrot.slane %v298, 5
      %v4071 = vsel %vm3811, %v4069, %v4070
      %v4072 = vrot.slane %v299, 5
      %v4073 = vrot.slane %v4072, 4
      %v4074 = vrot.slane %v300, 5
      %v4075 = vsel %vm3811, %v4073, %v4074
      %v4076 = vrot.slane %v4074, 4
      %v4077 = vrot.slane %v301, 5
      %v4078 = vsel %vm3811, %v4076, %v4077
      %v4079 = vrot.slane %v4077, 4
      %v4080 = vrot.slane %v302, 5
      %v4081 = vsel %vm3811, %v4079, %v4080
      %v4082 = vrot.slane %v4080, 4
      %v4083 = vrot.slane %v303, 5
      %v4084 = vsel %vm3811, %v4082, %v4083
      %v4085 = vrot.slane %v304, 5
      %v4086 = vrot.slane %v4085, 4
      %v4087 = vrot.slane %v305, 5
      %v4088 = vsel %vm3811, %v4086, %v4087
      %v4089 = vrot.slane %v4087, 4
      %v4090 = vrot.slane %v306, 5
      %v4091 = vsel %vm3811, %v4089, %v4090
      %v4092 = vrot.slane %v4090, 4
      %v4093 = vrot.slane %v307, 5
      %v4094 = vsel %vm3811, %v4092, %v4093
      %v4095 = vrot.slane %v4093, 4
      %v4096 = vrot.slane %v308, 5
      %v4097 = vsel %vm3811, %v4095, %v4096
      %v4098 = vrot.slane %v309, 5
      %v4099 = vrot.slane %v4098, 4
      %v4100 = vrot.slane %v310, 5
      %v4101 = vsel %vm3811, %v4099, %v4100
      %v4102 = vrot.slane %v4100, 4
      %v4103 = vrot.slane %v311, 5
      %v4104 = vsel %vm3811, %v4102, %v4103
      %v4105 = vrot.slane %v4103, 4
      %v4106 = vrot.slane %v312, 5
      %v4107 = vsel %vm3811, %v4105, %v4106
      %v4108 = vrot.slane %v4106, 4
      %v4109 = vrot.slane %v313, 5
      %v4110 = vsel %vm3811, %v4108, %v4109
      %v4111 = vrot.slane %v314, 5
      %v4112 = vrot.slane %v4111, 4
      %v4113 = vrot.slane %v315, 5
      %v4114 = vsel %vm3811, %v4112, %v4113
      %v4115 = vrot.slane %v4113, 4
      %v4116 = vrot.slane %v316, 5
      %v4117 = vsel %vm3811, %v4115, %v4116
      %v4118 = vrot.slane %v4116, 4
      %v4119 = vrot.slane %v317, 5
      %v4120 = vsel %vm3811, %v4118, %v4119
      %v4121 = vrot.slane %v4119, 4
      %v4122 = vrot.slane %v318, 5
      %v4123 = vsel %vm3811, %v4121, %v4122
      %v4124 = vrot.slane %v319, 5
      %v4125 = vrot.slane %v4124, 4
      %v4126 = vrot.slane %v320, 5
      %v4127 = vsel %vm3811, %v4125, %v4126
      %v4128 = vrot.slane %v4126, 4
      %v4129 = vrot.slane %v321, 5
      %v4130 = vsel %vm3811, %v4128, %v4129
      %v4131 = vrot.slane %v4129, 4
      %v4132 = vrot.slane %v322, 5
      %v4133 = vsel %vm3811, %v4131, %v4132
      %v4134 = vrot.slane %v4132, 4
      %v4135 = vrot.slane %v323, 5
      %v4136 = vsel %vm3811, %v4134, %v4135
      %v4137 = vrot.slane %v324, 5
      %v4138 = vrot.slane %v4137, 4
      %v4139 = vrot.slane %v325, 5
      %v4140 = vsel %vm3811, %v4138, %v4139
      %v4141 = vrot.slane %v4139, 4
      %v4142 = vrot.slane %v326, 5
      %v4143 = vsel %vm3811, %v4141, %v4142
      %v4144 = vrot.slane %v4142, 4
      %v4145 = vrot.slane %v327, 5
      %v4146 = vsel %vm3811, %v4144, %v4145
      %v4147 = vrot.slane %v4145, 4
      %v4148 = vrot.slane %v328, 5
      %v4149 = vsel %vm3811, %v4147, %v4148
      %v4150 = vrot.slane %v329, 5
      %v4151 = vrot.slane %v4150, 4
      %v4152 = vrot.slane %v330, 5
      %v4153 = vsel %vm3811, %v4151, %v4152
      %v4154 = vrot.slane %v4152, 4
      %v4155 = vrot.slane %v331, 5
      %v4156 = vsel %vm3811, %v4154, %v4155
      %v4157 = vrot.slane %v4155, 4
      %v4158 = vrot.slane %v332, 5
      %v4159 = vsel %vm3811, %v4157, %v4158
      %v4160 = vrot.slane %v4158, 4
      %v4161 = vrot.slane %v333, 5
      %v4162 = vsel %vm3811, %v4160, %v4161
      %v4163 = vrot.slane %v334, 5
      %v4164 = vrot.slane %v4163, 4
      %v4165 = vrot.slane %v335, 5
      %v4166 = vsel %vm3811, %v4164, %v4165
      %v4167 = vrot.slane %v4165, 4
      %v4168 = vrot.slane %v336, 5
      %v4169 = vsel %vm3811, %v4167, %v4168
      %v4170 = vrot.slane %v4168, 4
      %v4171 = vrot.slane %v337, 5
      %v4172 = vsel %vm3811, %v4170, %v4171
      %v4173 = vrot.slane %v4171, 4
      %v4174 = vrot.slane %v338, 5
      %v4175 = vsel %vm3811, %v4173, %v4174
      %v4176 = vrot.slane %v339, 5
      %v4177 = vrot.slane %v4176, 4
      %v4178 = vrot.slane %v340, 5
      %v4179 = vsel %vm3811, %v4177, %v4178
      %v4180 = vrot.slane %v4178, 4
      %v4181 = vrot.slane %v341, 5
      %v4182 = vsel %vm3811, %v4180, %v4181
      %v4183 = vrot.slane %v4181, 4
      %v4184 = vrot.slane %v342, 5
      %v4185 = vsel %vm3811, %v4183, %v4184
      %v4186 = vrot.slane %v4184, 4
      %v4187 = vrot.slane %v343, 5
      %v4188 = vsel %vm3811, %v4186, %v4187
      %v4189 = vrot.slane %v344, 5
      %v4190 = vrot.slane %v4189, 4
      %v4191 = vrot.slane %v345, 5
      %v4192 = vsel %vm3811, %v4190, %v4191
      %v4193 = vrot.slane %v4191, 4
      %v4194 = vrot.slane %v346, 5
      %v4195 = vsel %vm3811, %v4193, %v4194
      %v4196 = vrot.slane %v4194, 4
      %v4197 = vrot.slane %v347, 5
      %v4198 = vsel %vm3811, %v4196, %v4197
      %v4199 = vrot.slane %v4197, 4
      %v4200 = vrot.slane %v348, 5
      %v4201 = vsel %vm3811, %v4199, %v4200
      %v4202 = vrot.slane %v349, 5
      %v4203 = vrot.slane %v4202, 4
      %v4204 = vrot.slane %v350, 5
      %v4205 = vsel %vm3811, %v4203, %v4204
      %v4206 = vrot.slane %v4204, 4
      %v4207 = vrot.slane %v351, 5
      %v4208 = vsel %vm3811, %v4206, %v4207
      %v4209 = vrot.slane %v4207, 4
      %v4210 = vrot.slane %v352, 5
      %v4211 = vsel %vm3811, %v4209, %v4210
      %v4212 = vrot.slane %v4210, 4
      %v4213 = vrot.slane %v353, 5
      %v4214 = vsel %vm3811, %v4212, %v4213
      %v4215 = vrot.slane %v354, 5
      %v4216 = vrot.slane %v4215, 4
      %v4217 = vrot.slane %v355, 5
      %v4218 = vsel %vm3811, %v4216, %v4217
      %v4219 = vrot.slane %v4217, 4
      %v4220 = vrot.slane %v356, 5
      %v4221 = vsel %vm3811, %v4219, %v4220
      %v4222 = vrot.slane %v4220, 4
      %v4223 = vrot.slane %v357, 5
      %v4224 = vsel %vm3811, %v4222, %v4223
      %v4225 = vrot.slane %v4223, 4
      %v4226 = vrot.slane %v358, 5
      %v4227 = vsel %vm3811, %v4225, %v4226
      %s4228 = scalar_lea.vmem %s1, 4
      %v4229 = vld [vmem:[%s4228] sm:$0x3]
      %v4230 = vunpack.c.l.b16 %v3815
      %v4231 = vunpack.c.l.b16 %v3818
      %v4232 = vunpack.c.l.b16 %v3821
      %v4233 = vunpack.c.l.b16 %v3824
      %v4234 = vunpack.c.l.b16 %v3828
      %v4235 = vunpack.c.l.b16 %v3831
      %v4236 = vunpack.c.l.b16 %v3834
      %v4237 = vunpack.c.l.b16 %v3837
      %v4238 = vunpack.c.l.b16 %v3841
      %v4239 = vunpack.c.l.b16 %v3844
      %v4240 = vunpack.c.l.b16 %v3847
      %v4241 = vunpack.c.l.b16 %v3850
      %v4242 = vunpack.c.l.b16 %v3854
      %v4243 = vunpack.c.l.b16 %v3857
      %v4244 = vunpack.c.l.b16 %v3860
      %v4245 = vunpack.c.l.b16 %v3863
      %v4246 = vunpack.c.l.b16 %v3867
      %v4247 = vunpack.c.l.b16 %v3870
      %v4248 = vunpack.c.l.b16 %v3873
      %v4249 = vunpack.c.l.b16 %v3876
      %v4250 = vunpack.c.l.b16 %v3880
      %v4251 = vunpack.c.l.b16 %v3883
      %v4252 = vunpack.c.l.b16 %v3886
      %v4253 = vunpack.c.l.b16 %v3889
      %v4254 = vunpack.c.l.b16 %v3893
      %v4255 = vunpack.c.l.b16 %v3896
      %v4256 = vunpack.c.l.b16 %v3899
      %v4257 = vunpack.c.l.b16 %v3902
      %v4258 = vunpack.c.l.b16 %v3906
      %v4259 = vunpack.c.l.b16 %v3909
      %v4260 = vunpack.c.l.b16 %v3912
      %v4261 = vunpack.c.l.b16 %v3915
      %v4262 = vunpack.c.l.b16 %v3919
      %v4263 = vunpack.c.l.b16 %v3922
      %v4264 = vunpack.c.l.b16 %v3925
      %v4265 = vunpack.c.l.b16 %v3928
      %v4266 = vunpack.c.l.b16 %v3932
      %v4267 = vunpack.c.l.b16 %v3935
      %v4268 = vunpack.c.l.b16 %v3938
      %v4269 = vunpack.c.l.b16 %v3941
      %v4270 = vunpack.c.l.b16 %v3945
      %v4271 = vunpack.c.l.b16 %v3948
      %v4272 = vunpack.c.l.b16 %v3951
      %v4273 = vunpack.c.l.b16 %v3954
      %v4274 = vunpack.c.l.b16 %v3958
      %v4275 = vunpack.c.l.b16 %v3961
      %v4276 = vunpack.c.l.b16 %v3964
      %v4277 = vunpack.c.l.b16 %v3967
      %v4278 = vunpack.c.l.b16 %v3971
      %v4279 = vunpack.c.l.b16 %v3974
      %v4280 = vunpack.c.l.b16 %v3977
      %v4281 = vunpack.c.l.b16 %v3980
      %v4282 = vunpack.c.l.b16 %v3984
      %v4283 = vunpack.c.l.b16 %v3987
      %v4284 = vunpack.c.l.b16 %v3990
      %v4285 = vunpack.c.l.b16 %v3993
      %v4286 = vunpack.c.l.b16 %v3997
      %v4287 = vunpack.c.l.b16 %v4000
      %v4288 = vunpack.c.l.b16 %v4003
      %v4289 = vunpack.c.l.b16 %v4006
      %v4290 = vunpack.c.l.b16 %v4010
      %v4291 = vunpack.c.l.b16 %v4013
      %v4292 = vunpack.c.l.b16 %v4016
      %v4293 = vunpack.c.l.b16 %v4019
      %v4294 = vunpack.c.l.b16 %v4023
      %v4295 = vunpack.c.l.b16 %v4026
      %v4296 = vunpack.c.l.b16 %v4029
      %v4297 = vunpack.c.l.b16 %v4032
      %v4298 = vunpack.c.l.b16 %v4036
      %v4299 = vunpack.c.l.b16 %v4039
      %v4300 = vunpack.c.l.b16 %v4042
      %v4301 = vunpack.c.l.b16 %v4045
      %v4302 = vunpack.c.l.b16 %v4049
      %v4303 = vunpack.c.l.b16 %v4052
      %v4304 = vunpack.c.l.b16 %v4055
      %v4305 = vunpack.c.l.b16 %v4058
      %v4306 = vunpack.c.l.b16 %v4062
      %v4307 = vunpack.c.l.b16 %v4065
      %v4308 = vunpack.c.l.b16 %v4068
      %v4309 = vunpack.c.l.b16 %v4071
      %v4310 = vunpack.c.l.b16 %v4075
      %v4311 = vunpack.c.l.b16 %v4078
      %v4312 = vunpack.c.l.b16 %v4081
      %v4313 = vunpack.c.l.b16 %v4084
      %v4314 = vunpack.c.l.b16 %v4088
      %v4315 = vunpack.c.l.b16 %v4091
      %v4316 = vunpack.c.l.b16 %v4094
      %v4317 = vunpack.c.l.b16 %v4097
      %v4318 = vunpack.c.l.b16 %v4101
      %v4319 = vunpack.c.l.b16 %v4104
      %v4320 = vunpack.c.l.b16 %v4107
      %v4321 = vunpack.c.l.b16 %v4110
      %v4322 = vunpack.c.l.b16 %v4114
      %v4323 = vunpack.c.l.b16 %v4117
      %v4324 = vunpack.c.l.b16 %v4120
      %v4325 = vunpack.c.l.b16 %v4123
      %v4326 = vunpack.c.l.b16 %v4127
      %v4327 = vunpack.c.l.b16 %v4130
      %v4328 = vunpack.c.l.b16 %v4133
      %v4329 = vunpack.c.l.b16 %v4136
      %v4330 = vunpack.c.l.b16 %v4140
      %v4331 = vunpack.c.l.b16 %v4143
      %v4332 = vunpack.c.l.b16 %v4146
      %v4333 = vunpack.c.l.b16 %v4149
      %v4334 = vunpack.c.l.b16 %v4153
      %v4335 = vunpack.c.l.b16 %v4156
      %v4336 = vunpack.c.l.b16 %v4159
      %v4337 = vunpack.c.l.b16 %v4162
      %v4338 = vunpack.c.l.b16 %v4166
      %v4339 = vunpack.c.l.b16 %v4169
      %v4340 = vunpack.c.l.b16 %v4172
      %v4341 = vunpack.c.l.b16 %v4175
      %v4342 = vunpack.c.l.b16 %v4179
      %v4343 = vunpack.c.l.b16 %v4182
      %v4344 = vunpack.c.l.b16 %v4185
      %v4345 = vunpack.c.l.b16 %v4188
      %v4346 = vunpack.c.l.b16 %v4192
      %v4347 = vunpack.c.l.b16 %v4195
      %v4348 = vunpack.c.l.b16 %v4198
      %v4349 = vunpack.c.l.b16 %v4201
      %v4350 = vunpack.c.l.b16 %v4205
      %v4351 = vunpack.c.l.b16 %v4208
      %v4352 = vunpack.c.l.b16 %v4211
      %v4353 = vunpack.c.l.b16 %v4214
      %v4354 = vunpack.c.l.b16 %v4218
      %v4355 = vunpack.c.l.b16 %v4221
      %v4356 = vunpack.c.l.b16 %v4224
      %v4357 = vunpack.c.l.b16 %v4227
      %v4358 = vpack.c.b16 %v4231, %v4230
      %v4359 = vpack.c.b16 %v4233, %v4232
      %v4360 = vpack.c.b16 %v4235, %v4234
      %v4361 = vpack.c.b16 %v4237, %v4236
      %v4362 = vpack.c.b16 %v4239, %v4238
      %v4363 = vpack.c.b16 %v4241, %v4240
      %v4364 = vpack.c.b16 %v4243, %v4242
      %v4365 = vpack.c.b16 %v4245, %v4244
      %v4366 = vpack.c.b16 %v4247, %v4246
      %v4367 = vpack.c.b16 %v4249, %v4248
      %v4368 = vpack.c.b16 %v4251, %v4250
      %v4369 = vpack.c.b16 %v4253, %v4252
      %v4370 = vpack.c.b16 %v4255, %v4254
      %v4371 = vpack.c.b16 %v4257, %v4256
      %v4372 = vpack.c.b16 %v4259, %v4258
      %v4373 = vpack.c.b16 %v4261, %v4260
      %v4374 = vpack.c.b16 %v4263, %v4262
      %v4375 = vpack.c.b16 %v4265, %v4264
      %v4376 = vpack.c.b16 %v4267, %v4266
      %v4377 = vpack.c.b16 %v4269, %v4268
      %v4378 = vpack.c.b16 %v4271, %v4270
      %v4379 = vpack.c.b16 %v4273, %v4272
      %v4380 = vpack.c.b16 %v4275, %v4274
      %v4381 = vpack.c.b16 %v4277, %v4276
      %v4382 = vpack.c.b16 %v4279, %v4278
      %v4383 = vpack.c.b16 %v4281, %v4280
      %v4384 = vpack.c.b16 %v4283, %v4282
      %v4385 = vpack.c.b16 %v4285, %v4284
      %v4386 = vpack.c.b16 %v4287, %v4286
      %v4387 = vpack.c.b16 %v4289, %v4288
      %v4388 = vpack.c.b16 %v4291, %v4290
      %v4389 = vpack.c.b16 %v4293, %v4292
      %v4390 = vpack.c.b16 %v4295, %v4294
      %v4391 = vpack.c.b16 %v4297, %v4296
      %v4392 = vpack.c.b16 %v4299, %v4298
      %v4393 = vpack.c.b16 %v4301, %v4300
      %v4394 = vpack.c.b16 %v4303, %v4302
      %v4395 = vpack.c.b16 %v4305, %v4304
      %v4396 = vpack.c.b16 %v4307, %v4306
      %v4397 = vpack.c.b16 %v4309, %v4308
      %v4398 = vpack.c.b16 %v4311, %v4310
      %v4399 = vpack.c.b16 %v4313, %v4312
      %v4400 = vpack.c.b16 %v4315, %v4314
      %v4401 = vpack.c.b16 %v4317, %v4316
      %v4402 = vpack.c.b16 %v4319, %v4318
      %v4403 = vpack.c.b16 %v4321, %v4320
      %v4404 = vpack.c.b16 %v4323, %v4322
      %v4405 = vpack.c.b16 %v4325, %v4324
      %v4406 = vpack.c.b16 %v4327, %v4326
      %v4407 = vpack.c.b16 %v4329, %v4328
      %v4408 = vpack.c.b16 %v4331, %v4330
      %v4409 = vpack.c.b16 %v4333, %v4332
      %v4410 = vpack.c.b16 %v4335, %v4334
      %v4411 = vpack.c.b16 %v4337, %v4336
      %v4412 = vpack.c.b16 %v4339, %v4338
      %v4413 = vpack.c.b16 %v4341, %v4340
      %v4414 = vpack.c.b16 %v4343, %v4342
      %v4415 = vpack.c.b16 %v4345, %v4344
      %v4416 = vpack.c.b16 %v4347, %v4346
      %v4417 = vpack.c.b16 %v4349, %v4348
      %v4418 = vpack.c.b16 %v4351, %v4350
      %v4419 = vpack.c.b16 %v4353, %v4352
      %v4420 = vpack.c.b16 %v4355, %v4354
      %v4421 = vpack.c.b16 %v4357, %v4356
      %v4423 = vsel %vm1975, %v4358, 0
      %v4426 = vsel %vm1975, %v4359, 0
      %v4429 = vsel %vm1975, %v4360, 0
      %v4432 = vsel %vm1975, %v4361, 0
      %v4435 = vsel %vm1975, %v4362, 0
      %v4438 = vsel %vm1975, %v4363, 0
      %v4441 = vsel %vm1975, %v4364, 0
      %v4444 = vsel %vm1975, %v4365, 0
      %v4447 = vsel %vm1975, %v4366, 0
      %v4450 = vsel %vm1975, %v4367, 0
      %v4453 = vsel %vm1975, %v4368, 0
      %v4456 = vsel %vm1975, %v4369, 0
      %v4459 = vsel %vm1975, %v4370, 0
      %v4462 = vsel %vm1975, %v4371, 0
      %v4465 = vsel %vm1975, %v4372, 0
      %v4468 = vsel %vm1975, %v4373, 0
      %v4471 = vsel %vm1975, %v4374, 0
      %v4474 = vsel %vm1975, %v4375, 0
      %v4477 = vsel %vm1975, %v4376, 0
      %v4480 = vsel %vm1975, %v4377, 0
      %v4483 = vsel %vm1975, %v4378, 0
      %v4486 = vsel %vm1975, %v4379, 0
      %v4489 = vsel %vm1975, %v4380, 0
      %v4492 = vsel %vm1975, %v4381, 0
      %v4495 = vsel %vm1975, %v4382, 0
      %v4498 = vsel %vm1975, %v4383, 0
      %v4501 = vsel %vm1975, %v4384, 0
      %v4504 = vsel %vm1975, %v4385, 0
      %v4507 = vsel %vm1975, %v4386, 0
      %v4510 = vsel %vm1975, %v4387, 0
      %v4513 = vsel %vm1975, %v4388, 0
      %v4516 = vsel %vm1975, %v4389, 0
      %v4519 = vsel %vm1975, %v4390, 0
      %v4522 = vsel %vm1975, %v4391, 0
      %v4525 = vsel %vm1975, %v4392, 0
      %v4528 = vsel %vm1975, %v4393, 0
      %v4531 = vsel %vm1975, %v4394, 0
      %v4534 = vsel %vm1975, %v4395, 0
      %v4537 = vsel %vm1975, %v4396, 0
      %v4540 = vsel %vm1975, %v4397, 0
      %v4543 = vsel %vm1975, %v4398, 0
      %v4546 = vsel %vm1975, %v4399, 0
      %v4549 = vsel %vm1975, %v4400, 0
      %v4552 = vsel %vm1975, %v4401, 0
      %v4555 = vsel %vm1975, %v4402, 0
      %v4558 = vsel %vm1975, %v4403, 0
      %v4561 = vsel %vm1975, %v4404, 0
      %v4564 = vsel %vm1975, %v4405, 0
      %v4567 = vsel %vm1975, %v4406, 0
      %v4570 = vsel %vm1975, %v4407, 0
      %v4573 = vsel %vm1975, %v4408, 0
      %v4576 = vsel %vm1975, %v4409, 0
      %v4579 = vsel %vm1975, %v4410, 0
      %v4582 = vsel %vm1975, %v4411, 0
      %v4585 = vsel %vm1975, %v4412, 0
      %v4588 = vsel %vm1975, %v4413, 0
      %v4591 = vsel %vm1975, %v4414, 0
      %v4594 = vsel %vm1975, %v4415, 0
      %v4597 = vsel %vm1975, %v4416, 0
      %v4600 = vsel %vm1975, %v4417, 0
      %v4603 = vsel %vm1975, %v4418, 0
      %v4606 = vsel %vm1975, %v4419, 0
      %v4609 = vsel %vm1975, %v4420, 0
      %v4612 = vsel %vm1975, %v4421, 0
      %v4615 = vsel %vm2168, %v4229, 0
      %4617 = vmatprep.subr.bf16.mxu0 0
      %4618 = vmatpush1.bf16.msra.mxu0 %v4615
      %4619 = vmatprep.subr.bf16.mxu0 0
      %4620 = vmatpush1.bf16.msra.mxu0 0
      %4621 = vmatprep.subr.bf16.mxu0 0
      %4622 = vmatpush1.bf16.msra.mxu0 0
      %4623 = vmatprep.subr.bf16.mxu0 0
      %4624 = vmatpush1.bf16.msra.mxu0 0
      %4625 = vmatprep.subr.bf16.mxu0 0
      %4626 = vmatpush1.bf16.msra.mxu0 0
      %4627 = vmatprep.subr.bf16.mxu0 0
      %4628 = vmatpush1.bf16.msra.mxu0 0
      %4629 = vmatprep.subr.bf16.mxu0 0
      %4630 = vmatpush1.bf16.msra.mxu0 0
      %4631 = vmatprep.subr.bf16.mxu0 0
      %4632 = vmatpush1.bf16.msra.mxu0 0
      %4633 = vmatprep.subr.bf16.mxu0 0
      %4634 = vmatpush1.bf16.msra.mxu0 0
      %4635 = vmatprep.subr.bf16.mxu0 0
      %4636 = vmatpush1.bf16.msra.mxu0 0
      %4637 = vmatprep.subr.bf16.mxu0 0
      %4638 = vmatpush1.bf16.msra.mxu0 0
      %4639 = vmatprep.subr.bf16.mxu0 0
      %4640 = vmatpush1.bf16.msra.mxu0 0
      %4641 = vmatprep.subr.bf16.mxu0 0
      %4642 = vmatpush1.bf16.msra.mxu0 0
      %4643 = vmatprep.subr.bf16.mxu0 0
      %4644 = vmatpush1.bf16.msra.mxu0 0
      %4645 = vmatprep.subr.bf16.mxu0 0
      %4646 = vmatpush1.bf16.msra.mxu0 0
      %4647 = vmatprep.subr.bf16.mxu0 0
      %4648 = vmatpush1.bf16.msra.mxu0 0
      %4649 = vmatprep.mubr.bf16.mxu0 0
      %4650 = vmatmul.mubr.bf16.gmra.mrb[0].mxu0 %v4423
      %v4651 = vpop.f32.mrb[0].mxu0
      %v4652 = vadd.f32 0.0, %v4651
      %v4653 = vpop.f32.mrb[0].mxu0
      %v4654 = vpop.f32.mrb[0].mxu0
      %v4655 = vadd.f32 0.0, %v4654
      %v4656 = vpop.f32.mrb[0].mxu0
      %4657 = vmatprep.mubr.bf16.mxu0 0
      %4658 = vmatmul.mubr.bf16.gmra.mrb[0].mxu0 %v4426
      %v4659 = vpop.f32.mrb[0].mxu0
      %v4660 = vadd.f32 0.0, %v4659
      %v4661 = vpop.f32.mrb[0].mxu0
      %v4662 = vpop.f32.mrb[0].mxu0
      %v4663 = vadd.f32 0.0, %v4662
      %v4664 = vpop.f32.mrb[0].mxu0
      %4665 = vmatprep.mubr.bf16.mxu0 0
      %4666 = vmatmul.mubr.bf16.gmra.mrb[0].mxu0 %v4429
      %v4667 = vpop.f32.mrb[0].mxu0
      %v4668 = vadd.f32 0.0, %v4667
      %v4669 = vpop.f32.mrb[0].mxu0
      %v4670 = vpop.f32.mrb[0].mxu0
      %v4671 = vadd.f32 0.0, %v4670
      %v4672 = vpop.f32.mrb[0].mxu0
      %4673 = vmatprep.mubr.bf16.mxu0 0
      %4674 = vmatmul.mubr.bf16.gmra.mrb[0].mxu0 %v4432
      %v4675 = vpop.f32.mrb[0].mxu0
      %v4676 = vadd.f32 0.0, %v4675
      %v4677 = vpop.f32.mrb[0].mxu0
      %v4678 = vpop.f32.mrb[0].mxu0
      %v4679 = vadd.f32 0.0, %v4678
      %v4680 = vpop.f32.mrb[0].mxu0
      %4681 = vmatprep.mubr.bf16.mxu0 0
      %4682 = vmatmul.mubr.bf16.gmra.mrb[0].mxu0 %v4435
      %v4683 = vpop.f32.mrb[0].mxu0
      %v4684 = vadd.f32 0.0, %v4683
      %v4685 = vpop.f32.mrb[0].mxu0
      %v4686 = vpop.f32.mrb[0].mxu0
      %v4687 = vadd.f32 0.0, %v4686
      %v4688 = vpop.f32.mrb[0].mxu0
      %4689 = vmatprep.mubr.bf16.mxu0 0
      %4690 = vmatmul.mubr.bf16.gmra.mrb[0].mxu0 %v4438
      %v4691 = vpop.f32.mrb[0].mxu0
      %v4692 = vadd.f32 0.0, %v4691
      %v4693 = vpop.f32.mrb[0].mxu0
      %v4694 = vpop.f32.mrb[0].mxu0
      %v4695 = vadd.f32 0.0, %v4694
      %v4696 = vpop.f32.mrb[0].mxu0
      %4697 = vmatprep.mubr.bf16.mxu0 0
      %4698 = vmatmul.mubr.bf16.gmra.mrb[0].mxu0 %v4441
      %v4699 = vpop.f32.mrb[0].mxu0
      %v4700 = vadd.f32 0.0, %v4699
      %v4701 = vpop.f32.mrb[0].mxu0
      %v4702 = vpop.f32.mrb[0].mxu0
      %v4703 = vadd.f32 0.0, %v4702
      %v4704 = vpop.f32.mrb[0].mxu0
      %4705 = vmatprep.mubr.bf16.mxu0 0
      %4706 = vmatmul.mubr.bf16.gmra.mrb[0].mxu0 %v4444
      %v4707 = vpop.f32.mrb[0].mxu0
      %v4708 = vadd.f32 0.0, %v4707
      %v4709 = vpop.f32.mrb[0].mxu0
      %v4710 = vpop.f32.mrb[0].mxu0
      %v4711 = vadd.f32 0.0, %v4710
      %v4712 = vpop.f32.mrb[0].mxu0
      %4713 = vmatprep.mubr.bf16.mxu0 0
      %4714 = vmatmul.mubr.bf16.gmra.mrb[0].mxu0 %v4447
      %v4715 = vpop.f32.mrb[0].mxu0
      %v4716 = vadd.f32 0.0, %v4715
      %v4717 = vpop.f32.mrb[0].mxu0
      %v4718 = vpop.f32.mrb[0].mxu0
      %v4719 = vadd.f32 0.0, %v4718
      %v4720 = vpop.f32.mrb[0].mxu0
      %4721 = vmatprep.mubr.bf16.mxu0 0
      %4722 = vmatmul.mubr.bf16.gmra.mrb[0].mxu0 %v4450
      %v4723 = vpop.f32.mrb[0].mxu0
      %v4724 = vadd.f32 0.0, %v4723
      %v4725 = vpop.f32.mrb[0].mxu0
      %v4726 = vpop.f32.mrb[0].mxu0
      %v4727 = vadd.f32 0.0, %v4726
      %v4728 = vpop.f32.mrb[0].mxu0
      %4729 = vmatprep.mubr.bf16.mxu0 0
      %4730 = vmatmul.mubr.bf16.gmra.mrb[0].mxu0 %v4453
      %v4731 = vpop.f32.mrb[0].mxu0
      %v4732 = vadd.f32 0.0, %v4731
      %v4733 = vpop.f32.mrb[0].mxu0
      %v4734 = vpop.f32.mrb[0].mxu0
      %v4735 = vadd.f32 0.0, %v4734
      %v4736 = vpop.f32.mrb[0].mxu0
      %4737 = vmatprep.mubr.bf16.mxu0 0
      %4738 = vmatmul.mubr.bf16.gmra.mrb[0].mxu0 %v4456
      %v4739 = vpop.f32.mrb[0].mxu0
      %v4740 = vadd.f32 0.0, %v4739
      %v4741 = vpop.f32.mrb[0].mxu0
      %v4742 = vpop.f32.mrb[0].mxu0
      %v4743 = vadd.f32 0.0, %v4742
      %v4744 = vpop.f32.mrb[0].mxu0
      %4745 = vmatprep.mubr.bf16.mxu0 0
      %4746 = vmatmul.mubr.bf16.gmra.mrb[0].mxu0 %v4459
      %v4747 = vpop.f32.mrb[0].mxu0
      %v4748 = vadd.f32 0.0, %v4747
      %v4749 = vpop.f32.mrb[0].mxu0
      %v4750 = vpop.f32.mrb[0].mxu0
      %v4751 = vadd.f32 0.0, %v4750
      %v4752 = vpop.f32.mrb[0].mxu0
      %4753 = vmatprep.mubr.bf16.mxu0 0
      %4754 = vmatmul.mubr.bf16.gmra.mrb[0].mxu0 %v4462
      %v4755 = vpop.f32.mrb[0].mxu0
      %v4756 = vadd.f32 0.0, %v4755
      %v4757 = vpop.f32.mrb[0].mxu0
      %v4758 = vpop.f32.mrb[0].mxu0
      %v4759 = vadd.f32 0.0, %v4758
      %v4760 = vpop.f32.mrb[0].mxu0
      %4761 = vmatprep.mubr.bf16.mxu0 0
      %4762 = vmatmul.mubr.bf16.gmra.mrb[0].mxu0 %v4465
      %v4763 = vpop.f32.mrb[0].mxu0
      %v4764 = vadd.f32 0.0, %v4763
      %v4765 = vpop.f32.mrb[0].mxu0
      %v4766 = vpop.f32.mrb[0].mxu0
      %v4767 = vadd.f32 0.0, %v4766
      %v4768 = vpop.f32.mrb[0].mxu0
      %4769 = vmatprep.mubr.bf16.mxu0 0
      %4770 = vmatmul.mubr.bf16.gmra.mrb[0].mxu0 %v4468
      %v4771 = vpop.f32.mrb[0].mxu0
      %v4772 = vadd.f32 0.0, %v4771
      %v4773 = vpop.f32.mrb[0].mxu0
      %v4774 = vpop.f32.mrb[0].mxu0
      %v4775 = vadd.f32 0.0, %v4774
      %v4776 = vpop.f32.mrb[0].mxu0
      %4777 = vmatprep.mubr.bf16.mxu0 0
      %4778 = vmatmul.mubr.bf16.gmra.mrb[0].mxu0 %v4471
      %v4779 = vpop.f32.mrb[0].mxu0
      %v4780 = vadd.f32 0.0, %v4779
      %v4781 = vpop.f32.mrb[0].mxu0
      %v4782 = vpop.f32.mrb[0].mxu0
      %v4783 = vadd.f32 0.0, %v4782
      %v4784 = vpop.f32.mrb[0].mxu0
      %4785 = vmatprep.mubr.bf16.mxu0 0
      %4786 = vmatmul.mubr.bf16.gmra.mrb[0].mxu0 %v4474
      %v4787 = vpop.f32.mrb[0].mxu0
      %v4788 = vadd.f32 0.0, %v4787
      %v4789 = vpop.f32.mrb[0].mxu0
      %v4790 = vpop.f32.mrb[0].mxu0
      %v4791 = vadd.f32 0.0, %v4790
      %v4792 = vpop.f32.mrb[0].mxu0
      %4793 = vmatprep.mubr.bf16.mxu0 0
      %4794 = vmatmul.mubr.bf16.gmra.mrb[0].mxu0 %v4477
      %v4795 = vpop.f32.mrb[0].mxu0
      %v4796 = vadd.f32 0.0, %v4795
      %v4797 = vpop.f32.mrb[0].mxu0
      %v4798 = vpop.f32.mrb[0].mxu0
      %v4799 = vadd.f32 0.0, %v4798
      %v4800 = vpop.f32.mrb[0].mxu0
      %4801 = vmatprep.mubr.bf16.mxu0 0
      %4802 = vmatmul.mubr.bf16.gmra.mrb[0].mxu0 %v4480
      %v4803 = vpop.f32.mrb[0].mxu0
      %v4804 = vadd.f32 0.0, %v4803
      %v4805 = vpop.f32.mrb[0].mxu0
      %v4806 = vpop.f32.mrb[0].mxu0
      %v4807 = vadd.f32 0.0, %v4806
      %v4808 = vpop.f32.mrb[0].mxu0
      %4809 = vmatprep.mubr.bf16.mxu0 0
      %4810 = vmatmul.mubr.bf16.gmra.mrb[0].mxu0 %v4483
      %v4811 = vpop.f32.mrb[0].mxu0
      %v4812 = vadd.f32 0.0, %v4811
      %v4813 = vpop.f32.mrb[0].mxu0
      %v4814 = vpop.f32.mrb[0].mxu0
      %v4815 = vadd.f32 0.0, %v4814
      %v4816 = vpop.f32.mrb[0].mxu0
      %4817 = vmatprep.mubr.bf16.mxu0 0
      %4818 = vmatmul.mubr.bf16.gmra.mrb[0].mxu0 %v4486
      %v4819 = vpop.f32.mrb[0].mxu0
      %v4820 = vadd.f32 0.0, %v4819
      %v4821 = vpop.f32.mrb[0].mxu0
      %v4822 = vpop.f32.mrb[0].mxu0
      %v4823 = vadd.f32 0.0, %v4822
      %v4824 = vpop.f32.mrb[0].mxu0
      %4825 = vmatprep.mubr.bf16.mxu0 0
      %4826 = vmatmul.mubr.bf16.gmra.mrb[0].mxu0 %v4489
      %v4827 = vpop.f32.mrb[0].mxu0
      %v4828 = vadd.f32 0.0, %v4827
      %v4829 = vpop.f32.mrb[0].mxu0
      %v4830 = vpop.f32.mrb[0].mxu0
      %v4831 = vadd.f32 0.0, %v4830
      %v4832 = vpop.f32.mrb[0].mxu0
      %4833 = vmatprep.mubr.bf16.mxu0 0
      %4834 = vmatmul.mubr.bf16.gmra.mrb[0].mxu0 %v4492
      %v4835 = vpop.f32.mrb[0].mxu0
      %v4836 = vadd.f32 0.0, %v4835
      %v4837 = vpop.f32.mrb[0].mxu0
      %v4838 = vpop.f32.mrb[0].mxu0
      %v4839 = vadd.f32 0.0, %v4838
      %v4840 = vpop.f32.mrb[0].mxu0
      %4841 = vmatprep.mubr.bf16.mxu0 0
      %4842 = vmatmul.mubr.bf16.gmra.mrb[0].mxu0 %v4495
      %v4843 = vpop.f32.mrb[0].mxu0
      %v4844 = vadd.f32 0.0, %v4843
      %v4845 = vpop.f32.mrb[0].mxu0
      %v4846 = vpop.f32.mrb[0].mxu0
      %v4847 = vadd.f32 0.0, %v4846
      %v4848 = vpop.f32.mrb[0].mxu0
      %4849 = vmatprep.mubr.bf16.mxu0 0
      %4850 = vmatmul.mubr.bf16.gmra.mrb[0].mxu0 %v4498
      %v4851 = vpop.f32.mrb[0].mxu0
      %v4852 = vadd.f32 0.0, %v4851
      %v4853 = vpop.f32.mrb[0].mxu0
      %v4854 = vpop.f32.mrb[0].mxu0
      %v4855 = vadd.f32 0.0, %v4854
      %v4856 = vpop.f32.mrb[0].mxu0
      %4857 = vmatprep.mubr.bf16.mxu0 0
      %4858 = vmatmul.mubr.bf16.gmra.mrb[0].mxu0 %v4501
      %v4859 = vpop.f32.mrb[0].mxu0
      %v4860 = vadd.f32 0.0, %v4859
      %v4861 = vpop.f32.mrb[0].mxu0
      %v4862 = vpop.f32.mrb[0].mxu0
      %v4863 = vadd.f32 0.0, %v4862
      %v4864 = vpop.f32.mrb[0].mxu0
      %4865 = vmatprep.mubr.bf16.mxu0 0
      %4866 = vmatmul.mubr.bf16.gmra.mrb[0].mxu0 %v4504
      %v4867 = vpop.f32.mrb[0].mxu0
      %v4868 = vadd.f32 0.0, %v4867
      %v4869 = vpop.f32.mrb[0].mxu0
      %v4870 = vpop.f32.mrb[0].mxu0
      %v4871 = vadd.f32 0.0, %v4870
      %v4872 = vpop.f32.mrb[0].mxu0
      %4873 = vmatprep.mubr.bf16.mxu0 0
      %4874 = vmatmul.mubr.bf16.gmra.mrb[0].mxu0 %v4507
      %v4875 = vpop.f32.mrb[0].mxu0
      %v4876 = vadd.f32 0.0, %v4875
      %v4877 = vpop.f32.mrb[0].mxu0
      %v4878 = vpop.f32.mrb[0].mxu0
      %v4879 = vadd.f32 0.0, %v4878
      %v4880 = vpop.f32.mrb[0].mxu0
      %4881 = vmatprep.mubr.bf16.mxu0 0
      %4882 = vmatmul.mubr.bf16.gmra.mrb[0].mxu0 %v4510
      %v4883 = vpop.f32.mrb[0].mxu0
      %v4884 = vadd.f32 0.0, %v4883
      %v4885 = vpop.f32.mrb[0].mxu0
      %v4886 = vpop.f32.mrb[0].mxu0
      %v4887 = vadd.f32 0.0, %v4886
      %v4888 = vpop.f32.mrb[0].mxu0
      %4889 = vmatprep.mubr.bf16.mxu0 0
      %4890 = vmatmul.mubr.bf16.gmra.mrb[0].mxu0 %v4513
      %v4891 = vpop.f32.mrb[0].mxu0
      %v4892 = vadd.f32 0.0, %v4891
      %v4893 = vpop.f32.mrb[0].mxu0
      %v4894 = vpop.f32.mrb[0].mxu0
      %v4895 = vadd.f32 0.0, %v4894
      %v4896 = vpop.f32.mrb[0].mxu0
      %4897 = vmatprep.mubr.bf16.mxu0 0
      %4898 = vmatmul.mubr.bf16.gmra.mrb[0].mxu0 %v4516
      %v4899 = vpop.f32.mrb[0].mxu0
      %v4900 = vadd.f32 0.0, %v4899
      %v4901 = vpop.f32.mrb[0].mxu0
      %v4902 = vpop.f32.mrb[0].mxu0
      %v4903 = vadd.f32 0.0, %v4902
      %v4904 = vpop.f32.mrb[0].mxu0
      %4905 = vmatprep.mubr.bf16.mxu0 0
      %4906 = vmatmul.mubr.bf16.gmra.mrb[0].mxu0 %v4519
      %v4907 = vpop.f32.mrb[0].mxu0
      %v4908 = vadd.f32 0.0, %v4907
      %v4909 = vpop.f32.mrb[0].mxu0
      %v4910 = vpop.f32.mrb[0].mxu0
      %v4911 = vadd.f32 0.0, %v4910
      %v4912 = vpop.f32.mrb[0].mxu0
      %4913 = vmatprep.mubr.bf16.mxu0 0
      %4914 = vmatmul.mubr.bf16.gmra.mrb[0].mxu0 %v4522
      %v4915 = vpop.f32.mrb[0].mxu0
      %v4916 = vadd.f32 0.0, %v4915
      %v4917 = vpop.f32.mrb[0].mxu0
      %v4918 = vpop.f32.mrb[0].mxu0
      %v4919 = vadd.f32 0.0, %v4918
      %v4920 = vpop.f32.mrb[0].mxu0
      %4921 = vmatprep.mubr.bf16.mxu0 0
      %4922 = vmatmul.mubr.bf16.gmra.mrb[0].mxu0 %v4525
      %v4923 = vpop.f32.mrb[0].mxu0
      %v4924 = vadd.f32 0.0, %v4923
      %v4925 = vpop.f32.mrb[0].mxu0
      %v4926 = vpop.f32.mrb[0].mxu0
      %v4927 = vadd.f32 0.0, %v4926
      %v4928 = vpop.f32.mrb[0].mxu0
      %4929 = vmatprep.mubr.bf16.mxu0 0
      %4930 = vmatmul.mubr.bf16.gmra.mrb[0].mxu0 %v4528
      %v4931 = vpop.f32.mrb[0].mxu0
      %v4932 = vadd.f32 0.0, %v4931
      %v4933 = vpop.f32.mrb[0].mxu0
      %v4934 = vpop.f32.mrb[0].mxu0
      %v4935 = vadd.f32 0.0, %v4934
      %v4936 = vpop.f32.mrb[0].mxu0
      %4937 = vmatprep.mubr.bf16.mxu0 0
      %4938 = vmatmul.mubr.bf16.gmra.mrb[0].mxu0 %v4531
      %v4939 = vpop.f32.mrb[0].mxu0
      %v4940 = vadd.f32 0.0, %v4939
      %v4941 = vpop.f32.mrb[0].mxu0
      %v4942 = vpop.f32.mrb[0].mxu0
      %v4943 = vadd.f32 0.0, %v4942
      %v4944 = vpop.f32.mrb[0].mxu0
      %4945 = vmatprep.mubr.bf16.mxu0 0
      %4946 = vmatmul.mubr.bf16.gmra.mrb[0].mxu0 %v4534
      %v4947 = vpop.f32.mrb[0].mxu0
      %v4948 = vadd.f32 0.0, %v4947
      %v4949 = vpop.f32.mrb[0].mxu0
      %v4950 = vpop.f32.mrb[0].mxu0
      %v4951 = vadd.f32 0.0, %v4950
      %v4952 = vpop.f32.mrb[0].mxu0
      %4953 = vmatprep.mubr.bf16.mxu0 0
      %4954 = vmatmul.mubr.bf16.gmra.mrb[0].mxu0 %v4537
      %v4955 = vpop.f32.mrb[0].mxu0
      %v4956 = vadd.f32 0.0, %v4955
      %v4957 = vpop.f32.mrb[0].mxu0
      %v4958 = vpop.f32.mrb[0].mxu0
      %v4959 = vadd.f32 0.0, %v4958
      %v4960 = vpop.f32.mrb[0].mxu0
      %4961 = vmatprep.mubr.bf16.mxu0 0
      %4962 = vmatmul.mubr.bf16.gmra.mrb[0].mxu0 %v4540
      %v4963 = vpop.f32.mrb[0].mxu0
      %v4964 = vadd.f32 0.0, %v4963
      %v4965 = vpop.f32.mrb[0].mxu0
      %v4966 = vpop.f32.mrb[0].mxu0
      %v4967 = vadd.f32 0.0, %v4966
      %v4968 = vpop.f32.mrb[0].mxu0
      %4969 = vmatprep.mubr.bf16.mxu0 0
      %4970 = vmatmul.mubr.bf16.gmra.mrb[0].mxu0 %v4543
      %v4971 = vpop.f32.mrb[0].mxu0
      %v4972 = vadd.f32 0.0, %v4971
      %v4973 = vpop.f32.mrb[0].mxu0
      %v4974 = vpop.f32.mrb[0].mxu0
      %v4975 = vadd.f32 0.0, %v4974
      %v4976 = vpop.f32.mrb[0].mxu0
      %4977 = vmatprep.mubr.bf16.mxu0 0
      %4978 = vmatmul.mubr.bf16.gmra.mrb[0].mxu0 %v4546
      %v4979 = vpop.f32.mrb[0].mxu0
      %v4980 = vadd.f32 0.0, %v4979
      %v4981 = vpop.f32.mrb[0].mxu0
      %v4982 = vpop.f32.mrb[0].mxu0
      %v4983 = vadd.f32 0.0, %v4982
      %v4984 = vpop.f32.mrb[0].mxu0
      %4985 = vmatprep.mubr.bf16.mxu0 0
      %4986 = vmatmul.mubr.bf16.gmra.mrb[0].mxu0 %v4549
      %v4987 = vpop.f32.mrb[0].mxu0
      %v4988 = vadd.f32 0.0, %v4987
      %v4989 = vpop.f32.mrb[0].mxu0
      %v4990 = vpop.f32.mrb[0].mxu0
      %v4991 = vadd.f32 0.0, %v4990
      %v4992 = vpop.f32.mrb[0].mxu0
      %4993 = vmatprep.mubr.bf16.mxu0 0
      %4994 = vmatmul.mubr.bf16.gmra.mrb[0].mxu0 %v4552
      %v4995 = vpop.f32.mrb[0].mxu0
      %v4996 = vadd.f32 0.0, %v4995
      %v4997 = vpop.f32.mrb[0].mxu0
      %v4998 = vpop.f32.mrb[0].mxu0
      %v4999 = vadd.f32 0.0, %v4998
      %v5000 = vpop.f32.mrb[0].mxu0
      %5001 = vmatprep.mubr.bf16.mxu0 0
      %5002 = vmatmul.mubr.bf16.gmra.mrb[0].mxu0 %v4555
      %v5003 = vpop.f32.mrb[0].mxu0
      %v5004 = vadd.f32 0.0, %v5003
      %v5005 = vpop.f32.mrb[0].mxu0
      %v5006 = vpop.f32.mrb[0].mxu0
      %v5007 = vadd.f32 0.0, %v5006
      %v5008 = vpop.f32.mrb[0].mxu0
      %5009 = vmatprep.mubr.bf16.mxu0 0
      %5010 = vmatmul.mubr.bf16.gmra.mrb[0].mxu0 %v4558
      %v5011 = vpop.f32.mrb[0].mxu0
      %v5012 = vadd.f32 0.0, %v5011
      %v5013 = vpop.f32.mrb[0].mxu0
      %v5014 = vpop.f32.mrb[0].mxu0
      %v5015 = vadd.f32 0.0, %v5014
      %v5016 = vpop.f32.mrb[0].mxu0
      %5017 = vmatprep.mubr.bf16.mxu0 0
      %5018 = vmatmul.mubr.bf16.gmra.mrb[0].mxu0 %v4561
      %v5019 = vpop.f32.mrb[0].mxu0
      %v5020 = vadd.f32 0.0, %v5019
      %v5021 = vpop.f32.mrb[0].mxu0
      %v5022 = vpop.f32.mrb[0].mxu0
      %v5023 = vadd.f32 0.0, %v5022
      %v5024 = vpop.f32.mrb[0].mxu0
      %5025 = vmatprep.mubr.bf16.mxu0 0
      %5026 = vmatmul.mubr.bf16.gmra.mrb[0].mxu0 %v4564
      %v5027 = vpop.f32.mrb[0].mxu0
      %v5028 = vadd.f32 0.0, %v5027
      %v5029 = vpop.f32.mrb[0].mxu0
      %v5030 = vpop.f32.mrb[0].mxu0
      %v5031 = vadd.f32 0.0, %v5030
      %v5032 = vpop.f32.mrb[0].mxu0
      %5033 = vmatprep.mubr.bf16.mxu0 0
      %5034 = vmatmul.mubr.bf16.gmra.mrb[0].mxu0 %v4567
      %v5035 = vpop.f32.mrb[0].mxu0
      %v5036 = vadd.f32 0.0, %v5035
      %v5037 = vpop.f32.mrb[0].mxu0
      %v5038 = vpop.f32.mrb[0].mxu0
      %v5039 = vadd.f32 0.0, %v5038
      %v5040 = vpop.f32.mrb[0].mxu0
      %5041 = vmatprep.mubr.bf16.mxu0 0
      %5042 = vmatmul.mubr.bf16.gmra.mrb[0].mxu0 %v4570
      %v5043 = vpop.f32.mrb[0].mxu0
      %v5044 = vadd.f32 0.0, %v5043
      %v5045 = vpop.f32.mrb[0].mxu0
      %v5046 = vpop.f32.mrb[0].mxu0
      %v5047 = vadd.f32 0.0, %v5046
      %v5048 = vpop.f32.mrb[0].mxu0
      %5049 = vmatprep.mubr.bf16.mxu0 0
      %5050 = vmatmul.mubr.bf16.gmra.mrb[0].mxu0 %v4573
      %v5051 = vpop.f32.mrb[0].mxu0
      %v5052 = vadd.f32 0.0, %v5051
      %v5053 = vpop.f32.mrb[0].mxu0
      %v5054 = vpop.f32.mrb[0].mxu0
      %v5055 = vadd.f32 0.0, %v5054
      %v5056 = vpop.f32.mrb[0].mxu0
      %5057 = vmatprep.mubr.bf16.mxu0 0
      %5058 = vmatmul.mubr.bf16.gmra.mrb[0].mxu0 %v4576
      %v5059 = vpop.f32.mrb[0].mxu0
      %v5060 = vadd.f32 0.0, %v5059
      %v5061 = vpop.f32.mrb[0].mxu0
      %v5062 = vpop.f32.mrb[0].mxu0
      %v5063 = vadd.f32 0.0, %v5062
      %v5064 = vpop.f32.mrb[0].mxu0
      %5065 = vmatprep.mubr.bf16.mxu0 0
      %5066 = vmatmul.mubr.bf16.gmra.mrb[0].mxu0 %v4579
      %v5067 = vpop.f32.mrb[0].mxu0
      %v5068 = vadd.f32 0.0, %v5067
      %v5069 = vpop.f32.mrb[0].mxu0
      %v5070 = vpop.f32.mrb[0].mxu0
      %v5071 = vadd.f32 0.0, %v5070
      %v5072 = vpop.f32.mrb[0].mxu0
      %5073 = vmatprep.mubr.bf16.mxu0 0
      %5074 = vmatmul.mubr.bf16.gmra.mrb[0].mxu0 %v4582
      %v5075 = vpop.f32.mrb[0].mxu0
      %v5076 = vadd.f32 0.0, %v5075
      %v5077 = vpop.f32.mrb[0].mxu0
      %v5078 = vpop.f32.mrb[0].mxu0
      %v5079 = vadd.f32 0.0, %v5078
      %v5080 = vpop.f32.mrb[0].mxu0
      %5081 = vmatprep.mubr.bf16.mxu0 0
      %5082 = vmatmul.mubr.bf16.gmra.mrb[0].mxu0 %v4585
      %v5083 = vpop.f32.mrb[0].mxu0
      %v5084 = vadd.f32 0.0, %v5083
      %v5085 = vpop.f32.mrb[0].mxu0
      %v5086 = vpop.f32.mrb[0].mxu0
      %v5087 = vadd.f32 0.0, %v5086
      %v5088 = vpop.f32.mrb[0].mxu0
      %5089 = vmatprep.mubr.bf16.mxu0 0
      %5090 = vmatmul.mubr.bf16.gmra.mrb[0].mxu0 %v4588
      %v5091 = vpop.f32.mrb[0].mxu0
      %v5092 = vadd.f32 0.0, %v5091
      %v5093 = vpop.f32.mrb[0].mxu0
      %v5094 = vpop.f32.mrb[0].mxu0
      %v5095 = vadd.f32 0.0, %v5094
      %v5096 = vpop.f32.mrb[0].mxu0
      %5097 = vmatprep.mubr.bf16.mxu0 0
      %5098 = vmatmul.mubr.bf16.gmra.mrb[0].mxu0 %v4591
      %v5099 = vpop.f32.mrb[0].mxu0
      %v5100 = vadd.f32 0.0, %v5099
      %v5101 = vpop.f32.mrb[0].mxu0
      %v5102 = vpop.f32.mrb[0].mxu0
      %v5103 = vadd.f32 0.0, %v5102
      %v5104 = vpop.f32.mrb[0].mxu0
      %5105 = vmatprep.mubr.bf16.mxu0 0
      %5106 = vmatmul.mubr.bf16.gmra.mrb[0].mxu0 %v4594
      %v5107 = vpop.f32.mrb[0].mxu0
      %v5108 = vadd.f32 0.0, %v5107
      %v5109 = vpop.f32.mrb[0].mxu0
      %v5110 = vpop.f32.mrb[0].mxu0
      %v5111 = vadd.f32 0.0, %v5110
      %v5112 = vpop.f32.mrb[0].mxu0
      %5113 = vmatprep.mubr.bf16.mxu0 0
      %5114 = vmatmul.mubr.bf16.gmra.mrb[0].mxu0 %v4597
      %v5115 = vpop.f32.mrb[0].mxu0
      %v5116 = vadd.f32 0.0, %v5115
      %v5117 = vpop.f32.mrb[0].mxu0
      %v5118 = vpop.f32.mrb[0].mxu0
      %v5119 = vadd.f32 0.0, %v5118
      %v5120 = vpop.f32.mrb[0].mxu0
      %5121 = vmatprep.mubr.bf16.mxu0 0
      %5122 = vmatmul.mubr.bf16.gmra.mrb[0].mxu0 %v4600
      %v5123 = vpop.f32.mrb[0].mxu0
      %v5124 = vadd.f32 0.0, %v5123
      %v5125 = vpop.f32.mrb[0].mxu0
      %v5126 = vpop.f32.mrb[0].mxu0
      %v5127 = vadd.f32 0.0, %v5126
      %v5128 = vpop.f32.mrb[0].mxu0
      %5129 = vmatprep.mubr.bf16.mxu0 0
      %5130 = vmatmul.mubr.bf16.gmra.mrb[0].mxu0 %v4603
      %v5131 = vpop.f32.mrb[0].mxu0
      %v5132 = vadd.f32 0.0, %v5131
      %v5133 = vpop.f32.mrb[0].mxu0
      %v5134 = vpop.f32.mrb[0].mxu0
      %v5135 = vadd.f32 0.0, %v5134
      %v5136 = vpop.f32.mrb[0].mxu0
      %5137 = vmatprep.mubr.bf16.mxu0 0
      %5138 = vmatmul.mubr.bf16.gmra.mrb[0].mxu0 %v4606
      %v5139 = vpop.f32.mrb[0].mxu0
      %v5140 = vadd.f32 0.0, %v5139
      %v5141 = vpop.f32.mrb[0].mxu0
      %v5142 = vpop.f32.mrb[0].mxu0
      %v5143 = vadd.f32 0.0, %v5142
      %v5144 = vpop.f32.mrb[0].mxu0
      %5145 = vmatprep.mubr.bf16.mxu0 0
      %5146 = vmatmul.mubr.bf16.gmra.mrb[0].mxu0 %v4609
      %v5147 = vpop.f32.mrb[0].mxu0
      %v5148 = vadd.f32 0.0, %v5147
      %v5149 = vpop.f32.mrb[0].mxu0
      %v5150 = vpop.f32.mrb[0].mxu0
      %v5151 = vadd.f32 0.0, %v5150
      %v5152 = vpop.f32.mrb[0].mxu0
      %5153 = vmatprep.mubr.bf16.mxu0 0
      %5154 = vmatmul.mubr.bf16.gmra.mrb[0].mxu0 %v4612
      %v5155 = vpop.f32.mrb[0].mxu0
      %v5156 = vadd.f32 0.0, %v5155
      %v5157 = vpop.f32.mrb[0].mxu0
      %v5158 = vpop.f32.mrb[0].mxu0
      %v5159 = vadd.f32 0.0, %v5158
      %v5160 = vpop.f32.mrb[0].mxu0
      %5161 = vdwg.mxu0
      %v5162 = vadd.f32 %v3267, %v4652
      %v5163 = vadd.f32 %v3270, %v4655
      %v5164 = vadd.f32 %v3275, %v4660
      %v5165 = vadd.f32 %v3278, %v4663
      %v5166 = vadd.f32 %v3283, %v4668
      %v5167 = vadd.f32 %v3286, %v4671
      %v5168 = vadd.f32 %v3291, %v4676
      %v5169 = vadd.f32 %v3294, %v4679
      %v5170 = vadd.f32 %v3299, %v4684
      %v5171 = vadd.f32 %v3302, %v4687
      %v5172 = vadd.f32 %v3307, %v4692
      %v5173 = vadd.f32 %v3310, %v4695
      %v5174 = vadd.f32 %v3315, %v4700
      %v5175 = vadd.f32 %v3318, %v4703
      %v5176 = vadd.f32 %v3323, %v4708
      %v5177 = vadd.f32 %v3326, %v4711
      %v5178 = vadd.f32 %v3331, %v4716
      %v5179 = vadd.f32 %v3334, %v4719
      %v5180 = vadd.f32 %v3339, %v4724
      %v5181 = vadd.f32 %v3342, %v4727
      %v5182 = vadd.f32 %v3347, %v4732
      %v5183 = vadd.f32 %v3350, %v4735
      %v5184 = vadd.f32 %v3355, %v4740
      %v5185 = vadd.f32 %v3358, %v4743
      %v5186 = vadd.f32 %v3363, %v4748
      %v5187 = vadd.f32 %v3366, %v4751
      %v5188 = vadd.f32 %v3371, %v4756
      %v5189 = vadd.f32 %v3374, %v4759
      %v5190 = vadd.f32 %v3379, %v4764
      %v5191 = vadd.f32 %v3382, %v4767
      %v5192 = vadd.f32 %v3387, %v4772
      %v5193 = vadd.f32 %v3390, %v4775
      %v5194 = vadd.f32 %v3395, %v4780
      %v5195 = vadd.f32 %v3398, %v4783
      %v5196 = vadd.f32 %v3403, %v4788
      %v5197 = vadd.f32 %v3406, %v4791
      %v5198 = vadd.f32 %v3411, %v4796
      %v5199 = vadd.f32 %v3414, %v4799
      %v5200 = vadd.f32 %v3419, %v4804
      %v5201 = vadd.f32 %v3422, %v4807
      %v5202 = vadd.f32 %v3427, %v4812
      %v5203 = vadd.f32 %v3430, %v4815
      %v5204 = vadd.f32 %v3435, %v4820
      %v5205 = vadd.f32 %v3438, %v4823
      %v5206 = vadd.f32 %v3443, %v4828
      %v5207 = vadd.f32 %v3446, %v4831
      %v5208 = vadd.f32 %v3451, %v4836
      %v5209 = vadd.f32 %v3454, %v4839
      %v5210 = vadd.f32 %v3459, %v4844
      %v5211 = vadd.f32 %v3462, %v4847
      %v5212 = vadd.f32 %v3467, %v4852
      %v5213 = vadd.f32 %v3470, %v4855
      %v5214 = vadd.f32 %v3475, %v4860
      %v5215 = vadd.f32 %v3478, %v4863
      %v5216 = vadd.f32 %v3483, %v4868
      %v5217 = vadd.f32 %v3486, %v4871
      %v5218 = vadd.f32 %v3491, %v4876
      %v5219 = vadd.f32 %v3494, %v4879
      %v5220 = vadd.f32 %v3499, %v4884
      %v5221 = vadd.f32 %v3502, %v4887
      %v5222 = vadd.f32 %v3507, %v4892
      %v5223 = vadd.f32 %v3510, %v4895
      %v5224 = vadd.f32 %v3515, %v4900
      %v5225 = vadd.f32 %v3518, %v4903
      %v5226 = vadd.f32 %v3523, %v4908
      %v5227 = vadd.f32 %v3526, %v4911
      %v5228 = vadd.f32 %v3531, %v4916
      %v5229 = vadd.f32 %v3534, %v4919
      %v5230 = vadd.f32 %v3539, %v4924
      %v5231 = vadd.f32 %v3542, %v4927
      %v5232 = vadd.f32 %v3547, %v4932
      %v5233 = vadd.f32 %v3550, %v4935
      %v5234 = vadd.f32 %v3555, %v4940
      %v5235 = vadd.f32 %v3558, %v4943
      %v5236 = vadd.f32 %v3563, %v4948
      %v5237 = vadd.f32 %v3566, %v4951
      %v5238 = vadd.f32 %v3571, %v4956
      %v5239 = vadd.f32 %v3574, %v4959
      %v5240 = vadd.f32 %v3579, %v4964
      %v5241 = vadd.f32 %v3582, %v4967
      %v5242 = vadd.f32 %v3587, %v4972
      %v5243 = vadd.f32 %v3590, %v4975
      %v5244 = vadd.f32 %v3595, %v4980
      %v5245 = vadd.f32 %v3598, %v4983
      %v5246 = vadd.f32 %v3603, %v4988
      %v5247 = vadd.f32 %v3606, %v4991
      %v5248 = vadd.f32 %v3611, %v4996
      %v5249 = vadd.f32 %v3614, %v4999
      %v5250 = vadd.f32 %v3619, %v5004
      %v5251 = vadd.f32 %v3622, %v5007
      %v5252 = vadd.f32 %v3627, %v5012
      %v5253 = vadd.f32 %v3630, %v5015
      %v5254 = vadd.f32 %v3635, %v5020
      %v5255 = vadd.f32 %v3638, %v5023
      %v5256 = vadd.f32 %v3643, %v5028
      %v5257 = vadd.f32 %v3646, %v5031
      %v5258 = vadd.f32 %v3651, %v5036
      %v5259 = vadd.f32 %v3654, %v5039
      %v5260 = vadd.f32 %v3659, %v5044
      %v5261 = vadd.f32 %v3662, %v5047
      %v5262 = vadd.f32 %v3667, %v5052
      %v5263 = vadd.f32 %v3670, %v5055
      %v5264 = vadd.f32 %v3675, %v5060
      %v5265 = vadd.f32 %v3678, %v5063
      %v5266 = vadd.f32 %v3683, %v5068
      %v5267 = vadd.f32 %v3686, %v5071
      %v5268 = vadd.f32 %v3691, %v5076
      %v5269 = vadd.f32 %v3694, %v5079
      %v5270 = vadd.f32 %v3699, %v5084
      %v5271 = vadd.f32 %v3702, %v5087
      %v5272 = vadd.f32 %v3707, %v5092
      %v5273 = vadd.f32 %v3710, %v5095
      %v5274 = vadd.f32 %v3715, %v5100
      %v5275 = vadd.f32 %v3718, %v5103
      %v5276 = vadd.f32 %v3723, %v5108
      %v5277 = vadd.f32 %v3726, %v5111
      %v5278 = vadd.f32 %v3731, %v5116
      %v5279 = vadd.f32 %v3734, %v5119
      %v5280 = vadd.f32 %v3739, %v5124
      %v5281 = vadd.f32 %v3742, %v5127
      %v5282 = vadd.f32 %v3747, %v5132
      %v5283 = vadd.f32 %v3750, %v5135
      %v5284 = vadd.f32 %v3755, %v5140
      %v5285 = vadd.f32 %v3758, %v5143
      %v5286 = vadd.f32 %v3763, %v5148
      %v5287 = vadd.f32 %v3766, %v5151
      %v5288 = vadd.f32 %v3771, %v5156
      %v5289 = vadd.f32 %v3774, %v5159
      %s5290 = scalar_lea.vmem %s1, 6
      %v5291 = vld [vmem:[%s5290] sm:$0x3]
      %v5296 = vunpack.c.l.b16 %v359
      %v5297 = vunpack.c.l.b16 %v360
      %v5298 = vunpack.c.l.b16 %v361
      %v5299 = vunpack.c.l.b16 %v362
      %v5300 = vpack.c.b16 %v5297, %v5296
      %v5301 = vpack.c.b16 %v5299, %v5298
      %v5303 = vsel %vm1975, %v5300, 0
      %v5306 = vsel %vm1975, %v5301, 0
      %v5309 = vsel %vm2168, %v5291, 0
      %5311 = vmatprep.subr.bf16.mxu0 0
      %5312 = vmatpush1.bf16.msra.mxu0 %v5309
      %5313 = vmatprep.subr.bf16.mxu0 0
      %5314 = vmatpush1.bf16.msra.mxu0 0
      %5315 = vmatprep.subr.bf16.mxu0 0
      %5316 = vmatpush1.bf16.msra.mxu0 0
      %5317 = vmatprep.subr.bf16.mxu0 0
      %5318 = vmatpush1.bf16.msra.mxu0 0
      %5319 = vmatprep.subr.bf16.mxu0 0
      %5320 = vmatpush1.bf16.msra.mxu0 0
      %5321 = vmatprep.subr.bf16.mxu0 0
      %5322 = vmatpush1.bf16.msra.mxu0 0
      %5323 = vmatprep.subr.bf16.mxu0 0
      %5324 = vmatpush1.bf16.msra.mxu0 0
      %5325 = vmatprep.subr.bf16.mxu0 0
      %5326 = vmatpush1.bf16.msra.mxu0 0
      %5327 = vmatprep.subr.bf16.mxu0 0
      %5328 = vmatpush1.bf16.msra.mxu0 0
      %5329 = vmatprep.subr.bf16.mxu0 0
      %5330 = vmatpush1.bf16.msra.mxu0 0
      %5331 = vmatprep.subr.bf16.mxu0 0
      %5332 = vmatpush1.bf16.msra.mxu0 0
      %5333 = vmatprep.subr.bf16.mxu0 0
      %5334 = vmatpush1.bf16.msra.mxu0 0
      %5335 = vmatprep.subr.bf16.mxu0 0
      %5336 = vmatpush1.bf16.msra.mxu0 0
      %5337 = vmatprep.subr.bf16.mxu0 0
      %5338 = vmatpush1.bf16.msra.mxu0 0
      %5339 = vmatprep.subr.bf16.mxu0 0
      %5340 = vmatpush1.bf16.msra.mxu0 0
      %5341 = vmatprep.subr.bf16.mxu0 0
      %5342 = vmatpush1.bf16.msra.mxu0 0
      %5343 = vmatprep.mubr.bf16.mxu0 0
      %5344 = vmatmul.mubr.bf16.gmra.mrb[0].mxu0 %v3044
      %v5345 = vpop.f32.mrb[0].mxu0
      %v5346 = vadd.f32 0.0, %v5345
      %v5347 = vpop.f32.mrb[0].mxu0
      %v5348 = vpop.f32.mrb[0].mxu0
      %v5349 = vadd.f32 0.0, %v5348
      %v5350 = vpop.f32.mrb[0].mxu0
      %5351 = vmatprep.mubr.bf16.mxu0 0
      %5352 = vmatmul.mubr.bf16.gmra.mrb[0].mxu0 %v3047
      %v5353 = vpop.f32.mrb[0].mxu0
      %v5354 = vadd.f32 0.0, %v5353
      %v5355 = vpop.f32.mrb[0].mxu0
      %v5356 = vpop.f32.mrb[0].mxu0
      %v5357 = vadd.f32 0.0, %v5356
      %v5358 = vpop.f32.mrb[0].mxu0
      %5359 = vmatprep.mubr.bf16.mxu0 0
      %5360 = vmatmul.mubr.bf16.gmra.mrb[0].mxu0 %v3050
      %v5361 = vpop.f32.mrb[0].mxu0
      %v5362 = vadd.f32 0.0, %v5361
      %v5363 = vpop.f32.mrb[0].mxu0
      %v5364 = vpop.f32.mrb[0].mxu0
      %v5365 = vadd.f32 0.0, %v5364
      %v5366 = vpop.f32.mrb[0].mxu0
      %5367 = vmatprep.mubr.bf16.mxu0 0
      %5368 = vmatmul.mubr.bf16.gmra.mrb[0].mxu0 %v3053
      %v5369 = vpop.f32.mrb[0].mxu0
      %v5370 = vadd.f32 0.0, %v5369
      %v5371 = vpop.f32.mrb[0].mxu0
      %v5372 = vpop.f32.mrb[0].mxu0
      %v5373 = vadd.f32 0.0, %v5372
      %v5374 = vpop.f32.mrb[0].mxu0
      %5375 = vmatprep.mubr.bf16.mxu0 0
      %5376 = vmatmul.mubr.bf16.gmra.mrb[0].mxu0 %v3056
      %v5377 = vpop.f32.mrb[0].mxu0
      %v5378 = vadd.f32 0.0, %v5377
      %v5379 = vpop.f32.mrb[0].mxu0
      %v5380 = vpop.f32.mrb[0].mxu0
      %v5381 = vadd.f32 0.0, %v5380
      %v5382 = vpop.f32.mrb[0].mxu0
      %5383 = vmatprep.mubr.bf16.mxu0 0
      %5384 = vmatmul.mubr.bf16.gmra.mrb[0].mxu0 %v3059
      %v5385 = vpop.f32.mrb[0].mxu0
      %v5386 = vadd.f32 0.0, %v5385
      %v5387 = vpop.f32.mrb[0].mxu0
      %v5388 = vpop.f32.mrb[0].mxu0
      %v5389 = vadd.f32 0.0, %v5388
      %v5390 = vpop.f32.mrb[0].mxu0
      %5391 = vmatprep.mubr.bf16.mxu0 0
      %5392 = vmatmul.mubr.bf16.gmra.mrb[0].mxu0 %v3062
      %v5393 = vpop.f32.mrb[0].mxu0
      %v5394 = vadd.f32 0.0, %v5393
      %v5395 = vpop.f32.mrb[0].mxu0
      %v5396 = vpop.f32.mrb[0].mxu0
      %v5397 = vadd.f32 0.0, %v5396
      %v5398 = vpop.f32.mrb[0].mxu0
      %5399 = vmatprep.mubr.bf16.mxu0 0
      %5400 = vmatmul.mubr.bf16.gmra.mrb[0].mxu0 %v3065
      %v5401 = vpop.f32.mrb[0].mxu0
      %v5402 = vadd.f32 0.0, %v5401
      %v5403 = vpop.f32.mrb[0].mxu0
      %v5404 = vpop.f32.mrb[0].mxu0
      %v5405 = vadd.f32 0.0, %v5404
      %v5406 = vpop.f32.mrb[0].mxu0
      %5407 = vmatprep.mubr.bf16.mxu0 0
      %5408 = vmatmul.mubr.bf16.gmra.mrb[0].mxu0 %v3068
      %v5409 = vpop.f32.mrb[0].mxu0
      %v5410 = vadd.f32 0.0, %v5409
      %v5411 = vpop.f32.mrb[0].mxu0
      %v5412 = vpop.f32.mrb[0].mxu0
      %v5413 = vadd.f32 0.0, %v5412
      %v5414 = vpop.f32.mrb[0].mxu0
      %5415 = vmatprep.mubr.bf16.mxu0 0
      %5416 = vmatmul.mubr.bf16.gmra.mrb[0].mxu0 %v3071
      %v5417 = vpop.f32.mrb[0].mxu0
      %v5418 = vadd.f32 0.0, %v5417
      %v5419 = vpop.f32.mrb[0].mxu0
      %v5420 = vpop.f32.mrb[0].mxu0
      %v5421 = vadd.f32 0.0, %v5420
      %v5422 = vpop.f32.mrb[0].mxu0
      %5423 = vmatprep.mubr.bf16.mxu0 0
      %5424 = vmatmul.mubr.bf16.gmra.mrb[0].mxu0 %v3074
      %v5425 = vpop.f32.mrb[0].mxu0
      %v5426 = vadd.f32 0.0, %v5425
      %v5427 = vpop.f32.mrb[0].mxu0
      %v5428 = vpop.f32.mrb[0].mxu0
      %v5429 = vadd.f32 0.0, %v5428
      %v5430 = vpop.f32.mrb[0].mxu0
      %5431 = vmatprep.mubr.bf16.mxu0 0
      %5432 = vmatmul.mubr.bf16.gmra.mrb[0].mxu0 %v3077
      %v5433 = vpop.f32.mrb[0].mxu0
      %v5434 = vadd.f32 0.0, %v5433
      %v5435 = vpop.f32.mrb[0].mxu0
      %v5436 = vpop.f32.mrb[0].mxu0
      %v5437 = vadd.f32 0.0, %v5436
      %v5438 = vpop.f32.mrb[0].mxu0
      %5439 = vmatprep.mubr.bf16.mxu0 0
      %5440 = vmatmul.mubr.bf16.gmra.mrb[0].mxu0 %v3080
      %v5441 = vpop.f32.mrb[0].mxu0
      %v5442 = vadd.f32 0.0, %v5441
      %v5443 = vpop.f32.mrb[0].mxu0
      %v5444 = vpop.f32.mrb[0].mxu0
      %v5445 = vadd.f32 0.0, %v5444
      %v5446 = vpop.f32.mrb[0].mxu0
      %5447 = vmatprep.mubr.bf16.mxu0 0
      %5448 = vmatmul.mubr.bf16.gmra.mrb[0].mxu0 %v3083
      %v5449 = vpop.f32.mrb[0].mxu0
      %v5450 = vadd.f32 0.0, %v5449
      %v5451 = vpop.f32.mrb[0].mxu0
      %v5452 = vpop.f32.mrb[0].mxu0
      %v5453 = vadd.f32 0.0, %v5452
      %v5454 = vpop.f32.mrb[0].mxu0
      %5455 = vmatprep.mubr.bf16.mxu0 0
      %5456 = vmatmul.mubr.bf16.gmra.mrb[0].mxu0 %v3086
      %v5457 = vpop.f32.mrb[0].mxu0
      %v5458 = vadd.f32 0.0, %v5457
      %v5459 = vpop.f32.mrb[0].mxu0
      %v5460 = vpop.f32.mrb[0].mxu0
      %v5461 = vadd.f32 0.0, %v5460
      %v5462 = vpop.f32.mrb[0].mxu0
      %5463 = vmatprep.mubr.bf16.mxu0 0
      %5464 = vmatmul.mubr.bf16.gmra.mrb[0].mxu0 %v3089
      %v5465 = vpop.f32.mrb[0].mxu0
      %v5466 = vadd.f32 0.0, %v5465
      %v5467 = vpop.f32.mrb[0].mxu0
      %v5468 = vpop.f32.mrb[0].mxu0
      %v5469 = vadd.f32 0.0, %v5468
      %v5470 = vpop.f32.mrb[0].mxu0
      %5471 = vmatprep.mubr.bf16.mxu0 0
      %5472 = vmatmul.mubr.bf16.gmra.mrb[0].mxu0 %v3092
      %v5473 = vpop.f32.mrb[0].mxu0
      %v5474 = vadd.f32 0.0, %v5473
      %v5475 = vpop.f32.mrb[0].mxu0
      %v5476 = vpop.f32.mrb[0].mxu0
      %v5477 = vadd.f32 0.0, %v5476
      %v5478 = vpop.f32.mrb[0].mxu0
      %5479 = vmatprep.mubr.bf16.mxu0 0
      %5480 = vmatmul.mubr.bf16.gmra.mrb[0].mxu0 %v3095
      %v5481 = vpop.f32.mrb[0].mxu0
      %v5482 = vadd.f32 0.0, %v5481
      %v5483 = vpop.f32.mrb[0].mxu0
      %v5484 = vpop.f32.mrb[0].mxu0
      %v5485 = vadd.f32 0.0, %v5484
      %v5486 = vpop.f32.mrb[0].mxu0
      %5487 = vmatprep.mubr.bf16.mxu0 0
      %5488 = vmatmul.mubr.bf16.gmra.mrb[0].mxu0 %v3098
      %v5489 = vpop.f32.mrb[0].mxu0
      %v5490 = vadd.f32 0.0, %v5489
      %v5491 = vpop.f32.mrb[0].mxu0
      %v5492 = vpop.f32.mrb[0].mxu0
      %v5493 = vadd.f32 0.0, %v5492
      %v5494 = vpop.f32.mrb[0].mxu0
      %5495 = vmatprep.mubr.bf16.mxu0 0
      %5496 = vmatmul.mubr.bf16.gmra.mrb[0].mxu0 %v3101
      %v5497 = vpop.f32.mrb[0].mxu0
      %v5498 = vadd.f32 0.0, %v5497
      %v5499 = vpop.f32.mrb[0].mxu0
      %v5500 = vpop.f32.mrb[0].mxu0
      %v5501 = vadd.f32 0.0, %v5500
      %v5502 = vpop.f32.mrb[0].mxu0
      %5503 = vmatprep.mubr.bf16.mxu0 0
      %5504 = vmatmul.mubr.bf16.gmra.mrb[0].mxu0 %v3104
      %v5505 = vpop.f32.mrb[0].mxu0
      %v5506 = vadd.f32 0.0, %v5505
      %v5507 = vpop.f32.mrb[0].mxu0
      %v5508 = vpop.f32.mrb[0].mxu0
      %v5509 = vadd.f32 0.0, %v5508
      %v5510 = vpop.f32.mrb[0].mxu0
      %5511 = vmatprep.mubr.bf16.mxu0 0
      %5512 = vmatmul.mubr.bf16.gmra.mrb[0].mxu0 %v3107
      %v5513 = vpop.f32.mrb[0].mxu0
      %v5514 = vadd.f32 0.0, %v5513
      %v5515 = vpop.f32.mrb[0].mxu0
      %v5516 = vpop.f32.mrb[0].mxu0
      %v5517 = vadd.f32 0.0, %v5516
      %v5518 = vpop.f32.mrb[0].mxu0
      %5519 = vmatprep.mubr.bf16.mxu0 0
      %5520 = vmatmul.mubr.bf16.gmra.mrb[0].mxu0 %v3110
      %v5521 = vpop.f32.mrb[0].mxu0
      %v5522 = vadd.f32 0.0, %v5521
      %v5523 = vpop.f32.mrb[0].mxu0
      %v5524 = vpop.f32.mrb[0].mxu0
      %v5525 = vadd.f32 0.0, %v5524
      %v5526 = vpop.f32.mrb[0].mxu0
      %5527 = vmatprep.mubr.bf16.mxu0 0
      %5528 = vmatmul.mubr.bf16.gmra.mrb[0].mxu0 %v3113
      %v5529 = vpop.f32.mrb[0].mxu0
      %v5530 = vadd.f32 0.0, %v5529
      %v5531 = vpop.f32.mrb[0].mxu0
      %v5532 = vpop.f32.mrb[0].mxu0
      %v5533 = vadd.f32 0.0, %v5532
      %v5534 = vpop.f32.mrb[0].mxu0
      %5535 = vmatprep.mubr.bf16.mxu0 0
      %5536 = vmatmul.mubr.bf16.gmra.mrb[0].mxu0 %v3116
      %v5537 = vpop.f32.mrb[0].mxu0
      %v5538 = vadd.f32 0.0, %v5537
      %v5539 = vpop.f32.mrb[0].mxu0
      %v5540 = vpop.f32.mrb[0].mxu0
      %v5541 = vadd.f32 0.0, %v5540
      %v5542 = vpop.f32.mrb[0].mxu0
      %5543 = vmatprep.mubr.bf16.mxu0 0
      %5544 = vmatmul.mubr.bf16.gmra.mrb[0].mxu0 %v3119
      %v5545 = vpop.f32.mrb[0].mxu0
      %v5546 = vadd.f32 0.0, %v5545
      %v5547 = vpop.f32.mrb[0].mxu0
      %v5548 = vpop.f32.mrb[0].mxu0
      %v5549 = vadd.f32 0.0, %v5548
      %v5550 = vpop.f32.mrb[0].mxu0
      %5551 = vmatprep.mubr.bf16.mxu0 0
      %5552 = vmatmul.mubr.bf16.gmra.mrb[0].mxu0 %v3122
      %v5553 = vpop.f32.mrb[0].mxu0
      %v5554 = vadd.f32 0.0, %v5553
      %v5555 = vpop.f32.mrb[0].mxu0
      %v5556 = vpop.f32.mrb[0].mxu0
      %v5557 = vadd.f32 0.0, %v5556
      %v5558 = vpop.f32.mrb[0].mxu0
      %5559 = vmatprep.mubr.bf16.mxu0 0
      %5560 = vmatmul.mubr.bf16.gmra.mrb[0].mxu0 %v3125
      %v5561 = vpop.f32.mrb[0].mxu0
      %v5562 = vadd.f32 0.0, %v5561
      %v5563 = vpop.f32.mrb[0].mxu0
      %v5564 = vpop.f32.mrb[0].mxu0
      %v5565 = vadd.f32 0.0, %v5564
      %v5566 = vpop.f32.mrb[0].mxu0
      %5567 = vmatprep.mubr.bf16.mxu0 0
      %5568 = vmatmul.mubr.bf16.gmra.mrb[0].mxu0 %v3128
      %v5569 = vpop.f32.mrb[0].mxu0
      %v5570 = vadd.f32 0.0, %v5569
      %v5571 = vpop.f32.mrb[0].mxu0
      %v5572 = vpop.f32.mrb[0].mxu0
      %v5573 = vadd.f32 0.0, %v5572
      %v5574 = vpop.f32.mrb[0].mxu0
      %5575 = vmatprep.mubr.bf16.mxu0 0
      %5576 = vmatmul.mubr.bf16.gmra.mrb[0].mxu0 %v3131
      %v5577 = vpop.f32.mrb[0].mxu0
      %v5578 = vadd.f32 0.0, %v5577
      %v5579 = vpop.f32.mrb[0].mxu0
      %v5580 = vpop.f32.mrb[0].mxu0
      %v5581 = vadd.f32 0.0, %v5580
      %v5582 = vpop.f32.mrb[0].mxu0
      %5583 = vmatprep.mubr.bf16.mxu0 0
      %5584 = vmatmul.mubr.bf16.gmra.mrb[0].mxu0 %v3134
      %v5585 = vpop.f32.mrb[0].mxu0
      %v5586 = vadd.f32 0.0, %v5585
      %v5587 = vpop.f32.mrb[0].mxu0
      %v5588 = vpop.f32.mrb[0].mxu0
      %v5589 = vadd.f32 0.0, %v5588
      %v5590 = vpop.f32.mrb[0].mxu0
      %5591 = vmatprep.mubr.bf16.mxu0 0
      %5592 = vmatmul.mubr.bf16.gmra.mrb[0].mxu0 %v3137
      %v5593 = vpop.f32.mrb[0].mxu0
      %v5594 = vadd.f32 0.0, %v5593
      %v5595 = vpop.f32.mrb[0].mxu0
      %v5596 = vpop.f32.mrb[0].mxu0
      %v5597 = vadd.f32 0.0, %v5596
      %v5598 = vpop.f32.mrb[0].mxu0
      %5599 = vmatprep.mubr.bf16.mxu0 0
      %5600 = vmatmul.mubr.bf16.gmra.mrb[0].mxu0 %v3140
      %v5601 = vpop.f32.mrb[0].mxu0
      %v5602 = vadd.f32 0.0, %v5601
      %v5603 = vpop.f32.mrb[0].mxu0
      %v5604 = vpop.f32.mrb[0].mxu0
      %v5605 = vadd.f32 0.0, %v5604
      %v5606 = vpop.f32.mrb[0].mxu0
      %5607 = vmatprep.mubr.bf16.mxu0 0
      %5608 = vmatmul.mubr.bf16.gmra.mrb[0].mxu0 %v3143
      %v5609 = vpop.f32.mrb[0].mxu0
      %v5610 = vadd.f32 0.0, %v5609
      %v5611 = vpop.f32.mrb[0].mxu0
      %v5612 = vpop.f32.mrb[0].mxu0
      %v5613 = vadd.f32 0.0, %v5612
      %v5614 = vpop.f32.mrb[0].mxu0
      %5615 = vmatprep.mubr.bf16.mxu0 0
      %5616 = vmatmul.mubr.bf16.gmra.mrb[0].mxu0 %v3146
      %v5617 = vpop.f32.mrb[0].mxu0
      %v5618 = vadd.f32 0.0, %v5617
      %v5619 = vpop.f32.mrb[0].mxu0
      %v5620 = vpop.f32.mrb[0].mxu0
      %v5621 = vadd.f32 0.0, %v5620
      %v5622 = vpop.f32.mrb[0].mxu0
      %5623 = vmatprep.mubr.bf16.mxu0 0
      %5624 = vmatmul.mubr.bf16.gmra.mrb[0].mxu0 %v3149
      %v5625 = vpop.f32.mrb[0].mxu0
      %v5626 = vadd.f32 0.0, %v5625
      %v5627 = vpop.f32.mrb[0].mxu0
      %v5628 = vpop.f32.mrb[0].mxu0
      %v5629 = vadd.f32 0.0, %v5628
      %v5630 = vpop.f32.mrb[0].mxu0
      %5631 = vmatprep.mubr.bf16.mxu0 0
      %5632 = vmatmul.mubr.bf16.gmra.mrb[0].mxu0 %v3152
      %v5633 = vpop.f32.mrb[0].mxu0
      %v5634 = vadd.f32 0.0, %v5633
      %v5635 = vpop.f32.mrb[0].mxu0
      %v5636 = vpop.f32.mrb[0].mxu0
      %v5637 = vadd.f32 0.0, %v5636
      %v5638 = vpop.f32.mrb[0].mxu0
      %5639 = vmatprep.mubr.bf16.mxu0 0
      %5640 = vmatmul.mubr.bf16.gmra.mrb[0].mxu0 %v3155
      %v5641 = vpop.f32.mrb[0].mxu0
      %v5642 = vadd.f32 0.0, %v5641
      %v5643 = vpop.f32.mrb[0].mxu0
      %v5644 = vpop.f32.mrb[0].mxu0
      %v5645 = vadd.f32 0.0, %v5644
      %v5646 = vpop.f32.mrb[0].mxu0
      %5647 = vmatprep.mubr.bf16.mxu0 0
      %5648 = vmatmul.mubr.bf16.gmra.mrb[0].mxu0 %v3158
      %v5649 = vpop.f32.mrb[0].mxu0
      %v5650 = vadd.f32 0.0, %v5649
      %v5651 = vpop.f32.mrb[0].mxu0
      %v5652 = vpop.f32.mrb[0].mxu0
      %v5653 = vadd.f32 0.0, %v5652
      %v5654 = vpop.f32.mrb[0].mxu0
      %5655 = vmatprep.mubr.bf16.mxu0 0
      %5656 = vmatmul.mubr.bf16.gmra.mrb[0].mxu0 %v3161
      %v5657 = vpop.f32.mrb[0].mxu0
      %v5658 = vadd.f32 0.0, %v5657
      %v5659 = vpop.f32.mrb[0].mxu0
      %v5660 = vpop.f32.mrb[0].mxu0
      %v5661 = vadd.f32 0.0, %v5660
      %v5662 = vpop.f32.mrb[0].mxu0
      %5663 = vmatprep.mubr.bf16.mxu0 0
      %5664 = vmatmul.mubr.bf16.gmra.mrb[0].mxu0 %v3164
      %v5665 = vpop.f32.mrb[0].mxu0
      %v5666 = vadd.f32 0.0, %v5665
      %v5667 = vpop.f32.mrb[0].mxu0
      %v5668 = vpop.f32.mrb[0].mxu0
      %v5669 = vadd.f32 0.0, %v5668
      %v5670 = vpop.f32.mrb[0].mxu0
      %5671 = vmatprep.mubr.bf16.mxu0 0
      %5672 = vmatmul.mubr.bf16.gmra.mrb[0].mxu0 %v3167
      %v5673 = vpop.f32.mrb[0].mxu0
      %v5674 = vadd.f32 0.0, %v5673
      %v5675 = vpop.f32.mrb[0].mxu0
      %v5676 = vpop.f32.mrb[0].mxu0
      %v5677 = vadd.f32 0.0, %v5676
      %v5678 = vpop.f32.mrb[0].mxu0
      %5679 = vmatprep.mubr.bf16.mxu0 0
      %5680 = vmatmul.mubr.bf16.gmra.mrb[0].mxu0 %v3170
      %v5681 = vpop.f32.mrb[0].mxu0
      %v5682 = vadd.f32 0.0, %v5681
      %v5683 = vpop.f32.mrb[0].mxu0
      %v5684 = vpop.f32.mrb[0].mxu0
      %v5685 = vadd.f32 0.0, %v5684
      %v5686 = vpop.f32.mrb[0].mxu0
      %5687 = vmatprep.mubr.bf16.mxu0 0
      %5688 = vmatmul.mubr.bf16.gmra.mrb[0].mxu0 %v3173
      %v5689 = vpop.f32.mrb[0].mxu0
      %v5690 = vadd.f32 0.0, %v5689
      %v5691 = vpop.f32.mrb[0].mxu0
      %v5692 = vpop.f32.mrb[0].mxu0
      %v5693 = vadd.f32 0.0, %v5692
      %v5694 = vpop.f32.mrb[0].mxu0
      %5695 = vmatprep.mubr.bf16.mxu0 0
      %5696 = vmatmul.mubr.bf16.gmra.mrb[0].mxu0 %v3176
      %v5697 = vpop.f32.mrb[0].mxu0
      %v5698 = vadd.f32 0.0, %v5697
      %v5699 = vpop.f32.mrb[0].mxu0
      %v5700 = vpop.f32.mrb[0].mxu0
      %v5701 = vadd.f32 0.0, %v5700
      %v5702 = vpop.f32.mrb[0].mxu0
      %5703 = vmatprep.mubr.bf16.mxu0 0
      %5704 = vmatmul.mubr.bf16.gmra.mrb[0].mxu0 %v3179
      %v5705 = vpop.f32.mrb[0].mxu0
      %v5706 = vadd.f32 0.0, %v5705
      %v5707 = vpop.f32.mrb[0].mxu0
      %v5708 = vpop.f32.mrb[0].mxu0
      %v5709 = vadd.f32 0.0, %v5708
      %v5710 = vpop.f32.mrb[0].mxu0
      %5711 = vmatprep.mubr.bf16.mxu0 0
      %5712 = vmatmul.mubr.bf16.gmra.mrb[0].mxu0 %v3182
      %v5713 = vpop.f32.mrb[0].mxu0
      %v5714 = vadd.f32 0.0, %v5713
      %v5715 = vpop.f32.mrb[0].mxu0
      %v5716 = vpop.f32.mrb[0].mxu0
      %v5717 = vadd.f32 0.0, %v5716
      %v5718 = vpop.f32.mrb[0].mxu0
      %5719 = vmatprep.mubr.bf16.mxu0 0
      %5720 = vmatmul.mubr.bf16.gmra.mrb[0].mxu0 %v3185
      %v5721 = vpop.f32.mrb[0].mxu0
      %v5722 = vadd.f32 0.0, %v5721
      %v5723 = vpop.f32.mrb[0].mxu0
      %v5724 = vpop.f32.mrb[0].mxu0
      %v5725 = vadd.f32 0.0, %v5724
      %v5726 = vpop.f32.mrb[0].mxu0
      %5727 = vmatprep.mubr.bf16.mxu0 0
      %5728 = vmatmul.mubr.bf16.gmra.mrb[0].mxu0 %v3188
      %v5729 = vpop.f32.mrb[0].mxu0
      %v5730 = vadd.f32 0.0, %v5729
      %v5731 = vpop.f32.mrb[0].mxu0
      %v5732 = vpop.f32.mrb[0].mxu0
      %v5733 = vadd.f32 0.0, %v5732
      %v5734 = vpop.f32.mrb[0].mxu0
      %5735 = vmatprep.mubr.bf16.mxu0 0
      %5736 = vmatmul.mubr.bf16.gmra.mrb[0].mxu0 %v3191
      %v5737 = vpop.f32.mrb[0].mxu0
      %v5738 = vadd.f32 0.0, %v5737
      %v5739 = vpop.f32.mrb[0].mxu0
      %v5740 = vpop.f32.mrb[0].mxu0
      %v5741 = vadd.f32 0.0, %v5740
      %v5742 = vpop.f32.mrb[0].mxu0
      %5743 = vmatprep.mubr.bf16.mxu0 0
      %5744 = vmatmul.mubr.bf16.gmra.mrb[0].mxu0 %v3194
      %v5745 = vpop.f32.mrb[0].mxu0
      %v5746 = vadd.f32 0.0, %v5745
      %v5747 = vpop.f32.mrb[0].mxu0
      %v5748 = vpop.f32.mrb[0].mxu0
      %v5749 = vadd.f32 0.0, %v5748
      %v5750 = vpop.f32.mrb[0].mxu0
      %5751 = vmatprep.mubr.bf16.mxu0 0
      %5752 = vmatmul.mubr.bf16.gmra.mrb[0].mxu0 %v3197
      %v5753 = vpop.f32.mrb[0].mxu0
      %v5754 = vadd.f32 0.0, %v5753
      %v5755 = vpop.f32.mrb[0].mxu0
      %v5756 = vpop.f32.mrb[0].mxu0
      %v5757 = vadd.f32 0.0, %v5756
      %v5758 = vpop.f32.mrb[0].mxu0
      %5759 = vmatprep.mubr.bf16.mxu0 0
      %5760 = vmatmul.mubr.bf16.gmra.mrb[0].mxu0 %v3200
      %v5761 = vpop.f32.mrb[0].mxu0
      %v5762 = vadd.f32 0.0, %v5761
      %v5763 = vpop.f32.mrb[0].mxu0
      %v5764 = vpop.f32.mrb[0].mxu0
      %v5765 = vadd.f32 0.0, %v5764
      %v5766 = vpop.f32.mrb[0].mxu0
      %5767 = vmatprep.mubr.bf16.mxu0 0
      %5768 = vmatmul.mubr.bf16.gmra.mrb[0].mxu0 %v3203
      %v5769 = vpop.f32.mrb[0].mxu0
      %v5770 = vadd.f32 0.0, %v5769
      %v5771 = vpop.f32.mrb[0].mxu0
      %v5772 = vpop.f32.mrb[0].mxu0
      %v5773 = vadd.f32 0.0, %v5772
      %v5774 = vpop.f32.mrb[0].mxu0
      %5775 = vmatprep.mubr.bf16.mxu0 0
      %5776 = vmatmul.mubr.bf16.gmra.mrb[0].mxu0 %v3206
      %v5777 = vpop.f32.mrb[0].mxu0
      %v5778 = vadd.f32 0.0, %v5777
      %v5779 = vpop.f32.mrb[0].mxu0
      %v5780 = vpop.f32.mrb[0].mxu0
      %v5781 = vadd.f32 0.0, %v5780
      %v5782 = vpop.f32.mrb[0].mxu0
      %5783 = vmatprep.mubr.bf16.mxu0 0
      %5784 = vmatmul.mubr.bf16.gmra.mrb[0].mxu0 %v3209
      %v5785 = vpop.f32.mrb[0].mxu0
      %v5786 = vadd.f32 0.0, %v5785
      %v5787 = vpop.f32.mrb[0].mxu0
      %v5788 = vpop.f32.mrb[0].mxu0
      %v5789 = vadd.f32 0.0, %v5788
      %v5790 = vpop.f32.mrb[0].mxu0
      %5791 = vmatprep.mubr.bf16.mxu0 0
      %5792 = vmatmul.mubr.bf16.gmra.mrb[0].mxu0 %v3212
      %v5793 = vpop.f32.mrb[0].mxu0
      %v5794 = vadd.f32 0.0, %v5793
      %v5795 = vpop.f32.mrb[0].mxu0
      %v5796 = vpop.f32.mrb[0].mxu0
      %v5797 = vadd.f32 0.0, %v5796
      %v5798 = vpop.f32.mrb[0].mxu0
      %5799 = vmatprep.mubr.bf16.mxu0 0
      %5800 = vmatmul.mubr.bf16.gmra.mrb[0].mxu0 %v3215
      %v5801 = vpop.f32.mrb[0].mxu0
      %v5802 = vadd.f32 0.0, %v5801
      %v5803 = vpop.f32.mrb[0].mxu0
      %v5804 = vpop.f32.mrb[0].mxu0
      %v5805 = vadd.f32 0.0, %v5804
      %v5806 = vpop.f32.mrb[0].mxu0
      %5807 = vmatprep.mubr.bf16.mxu0 0
      %5808 = vmatmul.mubr.bf16.gmra.mrb[0].mxu0 %v3218
      %v5809 = vpop.f32.mrb[0].mxu0
      %v5810 = vadd.f32 0.0, %v5809
      %v5811 = vpop.f32.mrb[0].mxu0
      %v5812 = vpop.f32.mrb[0].mxu0
      %v5813 = vadd.f32 0.0, %v5812
      %v5814 = vpop.f32.mrb[0].mxu0
      %5815 = vmatprep.mubr.bf16.mxu0 0
      %5816 = vmatmul.mubr.bf16.gmra.mrb[0].mxu0 %v3221
      %v5817 = vpop.f32.mrb[0].mxu0
      %v5818 = vadd.f32 0.0, %v5817
      %v5819 = vpop.f32.mrb[0].mxu0
      %v5820 = vpop.f32.mrb[0].mxu0
      %v5821 = vadd.f32 0.0, %v5820
      %v5822 = vpop.f32.mrb[0].mxu0
      %5823 = vmatprep.mubr.bf16.mxu0 0
      %5824 = vmatmul.mubr.bf16.gmra.mrb[0].mxu0 %v3224
      %v5825 = vpop.f32.mrb[0].mxu0
      %v5826 = vadd.f32 0.0, %v5825
      %v5827 = vpop.f32.mrb[0].mxu0
      %v5828 = vpop.f32.mrb[0].mxu0
      %v5829 = vadd.f32 0.0, %v5828
      %v5830 = vpop.f32.mrb[0].mxu0
      %5831 = vmatprep.mubr.bf16.mxu0 0
      %5832 = vmatmul.mubr.bf16.gmra.mrb[0].mxu0 %v3227
      %v5833 = vpop.f32.mrb[0].mxu0
      %v5834 = vadd.f32 0.0, %v5833
      %v5835 = vpop.f32.mrb[0].mxu0
      %v5836 = vpop.f32.mrb[0].mxu0
      %v5837 = vadd.f32 0.0, %v5836
      %v5838 = vpop.f32.mrb[0].mxu0
      %5839 = vmatprep.mubr.bf16.mxu0 0
      %5840 = vmatmul.mubr.bf16.gmra.mrb[0].mxu0 %v5303
      %v5841 = vpop.f32.mrb[0].mxu0
      %v5842 = vadd.f32 0.0, %v5841
      %v5843 = vpop.f32.mrb[0].mxu0
      %v5844 = vpop.f32.mrb[0].mxu0
      %v5845 = vadd.f32 0.0, %v5844
      %v5846 = vpop.f32.mrb[0].mxu0
      %5847 = vmatprep.mubr.bf16.mxu0 0
      %5848 = vmatmul.mubr.bf16.gmra.mrb[0].mxu0 %v5306
      %v5849 = vpop.f32.mrb[0].mxu0
      %v5850 = vadd.f32 0.0, %v5849
      %v5851 = vpop.f32.mrb[0].mxu0
      %v5852 = vpop.f32.mrb[0].mxu0
      %v5853 = vadd.f32 0.0, %v5852
      %v5854 = vpop.f32.mrb[0].mxu0
      %5855 = vdwg.mxu0
      %v5856 = vadd.f32 %v5162, %v5346
      %v5857 = vadd.f32 %v5163, %v5349
      %v5858 = vadd.f32 %v5164, %v5354
      %v5859 = vadd.f32 %v5165, %v5357
      %v5860 = vadd.f32 %v5166, %v5362
      %v5861 = vadd.f32 %v5167, %v5365
      %v5862 = vadd.f32 %v5168, %v5370
      %v5863 = vadd.f32 %v5169, %v5373
      %v5864 = vadd.f32 %v5170, %v5378
      %v5865 = vadd.f32 %v5171, %v5381
      %v5866 = vadd.f32 %v5172, %v5386
      %v5867 = vadd.f32 %v5173, %v5389
      %v5868 = vadd.f32 %v5174, %v5394
      %v5869 = vadd.f32 %v5175, %v5397
      %v5870 = vadd.f32 %v5176, %v5402
      %v5871 = vadd.f32 %v5177, %v5405
      %v5872 = vadd.f32 %v5178, %v5410
      %v5873 = vadd.f32 %v5179, %v5413
      %v5874 = vadd.f32 %v5180, %v5418
      %v5875 = vadd.f32 %v5181, %v5421
      %v5876 = vadd.f32 %v5182, %v5426
      %v5877 = vadd.f32 %v5183, %v5429
      %v5878 = vadd.f32 %v5184, %v5434
      %v5879 = vadd.f32 %v5185, %v5437
      %v5880 = vadd.f32 %v5186, %v5442
      %v5881 = vadd.f32 %v5187, %v5445
      %v5882 = vadd.f32 %v5188, %v5450
      %v5883 = vadd.f32 %v5189, %v5453
      %v5884 = vadd.f32 %v5190, %v5458
      %v5885 = vadd.f32 %v5191, %v5461
      %v5886 = vadd.f32 %v5192, %v5466
      %v5887 = vadd.f32 %v5193, %v5469
      %v5888 = vadd.f32 %v5194, %v5474
      %v5889 = vadd.f32 %v5195, %v5477
      %v5890 = vadd.f32 %v5196, %v5482
      %v5891 = vadd.f32 %v5197, %v5485
      %v5892 = vadd.f32 %v5198, %v5490
      %v5893 = vadd.f32 %v5199, %v5493
      %v5894 = vadd.f32 %v5200, %v5498
      %v5895 = vadd.f32 %v5201, %v5501
      %v5896 = vadd.f32 %v5202, %v5506
      %v5897 = vadd.f32 %v5203, %v5509
      %v5898 = vadd.f32 %v5204, %v5514
      %v5899 = vadd.f32 %v5205, %v5517
      %v5900 = vadd.f32 %v5206, %v5522
      %v5901 = vadd.f32 %v5207, %v5525
      %v5902 = vadd.f32 %v5208, %v5530
      %v5903 = vadd.f32 %v5209, %v5533
      %v5904 = vadd.f32 %v5210, %v5538
      %v5905 = vadd.f32 %v5211, %v5541
      %v5906 = vadd.f32 %v5212, %v5546
      %v5907 = vadd.f32 %v5213, %v5549
      %v5908 = vadd.f32 %v5214, %v5554
      %v5909 = vadd.f32 %v5215, %v5557
      %v5910 = vadd.f32 %v5216, %v5562
      %v5911 = vadd.f32 %v5217, %v5565
      %v5912 = vadd.f32 %v5218, %v5570
      %v5913 = vadd.f32 %v5219, %v5573
      %v5914 = vadd.f32 %v5220, %v5578
      %v5915 = vadd.f32 %v5221, %v5581
      %v5916 = vadd.f32 %v5222, %v5586
      %v5917 = vadd.f32 %v5223, %v5589
      %v5918 = vadd.f32 %v5224, %v5594
      %v5919 = vadd.f32 %v5225, %v5597
      %v5920 = vadd.f32 %v5226, %v5602
      %v5921 = vadd.f32 %v5227, %v5605
      %v5922 = vadd.f32 %v5228, %v5610
      %v5923 = vadd.f32 %v5229, %v5613
      %v5924 = vadd.f32 %v5230, %v5618
      %v5925 = vadd.f32 %v5231, %v5621
      %v5926 = vadd.f32 %v5232, %v5626
      %v5927 = vadd.f32 %v5233, %v5629
      %v5928 = vadd.f32 %v5234, %v5634
      %v5929 = vadd.f32 %v5235, %v5637
      %v5930 = vadd.f32 %v5236, %v5642
      %v5931 = vadd.f32 %v5237, %v5645
      %v5932 = vadd.f32 %v5238, %v5650
      %v5933 = vadd.f32 %v5239, %v5653
      %v5934 = vadd.f32 %v5240, %v5658
      %v5935 = vadd.f32 %v5241, %v5661
      %v5936 = vadd.f32 %v5242, %v5666
      %v5937 = vadd.f32 %v5243, %v5669
      %v5938 = vadd.f32 %v5244, %v5674
      %v5939 = vadd.f32 %v5245, %v5677
      %v5940 = vadd.f32 %v5246, %v5682
      %v5941 = vadd.f32 %v5247, %v5685
      %v5942 = vadd.f32 %v5248, %v5690
      %v5943 = vadd.f32 %v5249, %v5693
      %v5944 = vadd.f32 %v5250, %v5698
      %v5945 = vadd.f32 %v5251, %v5701
      %v5946 = vadd.f32 %v5252, %v5706
      %v5947 = vadd.f32 %v5253, %v5709
      %v5948 = vadd.f32 %v5254, %v5714
      %v5949 = vadd.f32 %v5255, %v5717
      %v5950 = vadd.f32 %v5256, %v5722
      %v5951 = vadd.f32 %v5257, %v5725
      %v5952 = vadd.f32 %v5258, %v5730
      %v5953 = vadd.f32 %v5259, %v5733
      %v5954 = vadd.f32 %v5260, %v5738
      %v5955 = vadd.f32 %v5261, %v5741
      %v5956 = vadd.f32 %v5262, %v5746
      %v5957 = vadd.f32 %v5263, %v5749
      %v5958 = vadd.f32 %v5264, %v5754
      %v5959 = vadd.f32 %v5265, %v5757
      %v5960 = vadd.f32 %v5266, %v5762
      %v5961 = vadd.f32 %v5267, %v5765
      %v5962 = vadd.f32 %v5268, %v5770
      %v5963 = vadd.f32 %v5269, %v5773
      %v5964 = vadd.f32 %v5270, %v5778
      %v5965 = vadd.f32 %v5271, %v5781
      %v5966 = vadd.f32 %v5272, %v5786
      %v5967 = vadd.f32 %v5273, %v5789
      %v5968 = vadd.f32 %v5274, %v5794
      %v5969 = vadd.f32 %v5275, %v5797
      %v5970 = vadd.f32 %v5276, %v5802
      %v5971 = vadd.f32 %v5277, %v5805
      %v5972 = vadd.f32 %v5278, %v5810
      %v5973 = vadd.f32 %v5279, %v5813
      %v5974 = vadd.f32 %v5280, %v5818
      %v5975 = vadd.f32 %v5281, %v5821
      %v5976 = vadd.f32 %v5282, %v5826
      %v5977 = vadd.f32 %v5283, %v5829
      %v5978 = vadd.f32 %v5284, %v5834
      %v5979 = vadd.f32 %v5285, %v5837
      %v5980 = vadd.f32 %v5286, %v5842
      %v5981 = vadd.f32 %v5287, %v5845
      %v5982 = vadd.f32 %v5288, %v5850
      %v5983 = vadd.f32 %v5289, %v5853
      %v5985 = vshrl.u32 %v359, 16
      %v5987 = vrot.slane %v5985, 4
      %v5988 = vshll.u32 %v359, 16
      %v5990 = vrot.slane %v5988, 5
      %v5991 = vor.u32 %v5987, %v5990
      %v5992 = vrot.slane %v5991, 4
      %v5994 = vshll.u32 %v360, 16
      %v5996 = vrot.slane %v5994, 5
      %v5997 = vsel %vm372, %v5992, %v5996
      %v5998 = vshrl.u32 %v360, 16
      %v6000 = vrot.slane %v5998, 4
      %v6001 = vor.u32 %v6000, %v5996
      %v6002 = vrot.slane %v6001, 4
      %v6004 = vshll.u32 %v361, 16
      %v6006 = vrot.slane %v6004, 5
      %v6007 = vsel %vm372, %v6002, %v6006
      %v6008 = vshrl.u32 %v361, 16
      %v6010 = vrot.slane %v6008, 4
      %v6011 = vor.u32 %v6010, %v6006
      %v6012 = vrot.slane %v6011, 4
      %v6014 = vshll.u32 %v362, 16
      %v6016 = vrot.slane %v6014, 5
      %v6017 = vsel %vm372, %v6012, %v6016
      %v6018 = vshrl.u32 %v362, 16
      %v6020 = vrot.slane %v6018, 4
      %v6021 = vor.u32 %v6020, %v6016
      %v6022 = vrot.slane %v6021, 4
      %v6024 = vshll.u32 %v363, 16
      %v6026 = vrot.slane %v6024, 5
      %v6027 = vsel %vm372, %v6022, %v6026
      %s6028 = scalar_lea.vmem %s1, 8
      %v6029 = vld [vmem:[%s6028] sm:$0x3]
      %v6030 = vunpack.c.l.b16 %v5997
      %v6031 = vunpack.c.l.b16 %v6007
      %v6032 = vunpack.c.l.b16 %v6017
      %v6033 = vunpack.c.l.b16 %v6027
      %v6034 = vpack.c.b16 %v6031, %v6030
      %v6035 = vpack.c.b16 %v6033, %v6032
      %v6037 = vsel %vm1975, %v6034, 0
      %v6040 = vsel %vm1975, %v6035, 0
      %v6043 = vsel %vm2168, %v6029, 0
      %6045 = vmatprep.subr.bf16.mxu0 0
      %6046 = vmatpush1.bf16.msra.mxu0 %v6043
      %6047 = vmatprep.subr.bf16.mxu0 0
      %6048 = vmatpush1.bf16.msra.mxu0 0
      %6049 = vmatprep.subr.bf16.mxu0 0
      %6050 = vmatpush1.bf16.msra.mxu0 0
      %6051 = vmatprep.subr.bf16.mxu0 0
      %6052 = vmatpush1.bf16.msra.mxu0 0
      %6053 = vmatprep.subr.bf16.mxu0 0
      %6054 = vmatpush1.bf16.msra.mxu0 0
      %6055 = vmatprep.subr.bf16.mxu0 0
      %6056 = vmatpush1.bf16.msra.mxu0 0
      %6057 = vmatprep.subr.bf16.mxu0 0
      %6058 = vmatpush1.bf16.msra.mxu0 0
      %6059 = vmatprep.subr.bf16.mxu0 0
      %6060 = vmatpush1.bf16.msra.mxu0 0
      %6061 = vmatprep.subr.bf16.mxu0 0
      %6062 = vmatpush1.bf16.msra.mxu0 0
      %6063 = vmatprep.subr.bf16.mxu0 0
      %6064 = vmatpush1.bf16.msra.mxu0 0
      %6065 = vmatprep.subr.bf16.mxu0 0
      %6066 = vmatpush1.bf16.msra.mxu0 0
      %6067 = vmatprep.subr.bf16.mxu0 0
      %6068 = vmatpush1.bf16.msra.mxu0 0
      %6069 = vmatprep.subr.bf16.mxu0 0
      %6070 = vmatpush1.bf16.msra.mxu0 0
      %6071 = vmatprep.subr.bf16.mxu0 0
      %6072 = vmatpush1.bf16.msra.mxu0 0
      %6073 = vmatprep.subr.bf16.mxu0 0
      %6074 = vmatpush1.bf16.msra.mxu0 0
      %6075 = vmatprep.subr.bf16.mxu0 0
      %6076 = vmatpush1.bf16.msra.mxu0 0
      %6077 = vmatprep.mubr.bf16.mxu0 0
      %6078 = vmatmul.mubr.bf16.gmra.mrb[0].mxu0 %v1983
      %v6079 = vpop.f32.mrb[0].mxu0
      %v6080 = vadd.f32 0.0, %v6079
      %v6081 = vpop.f32.mrb[0].mxu0
      %v6082 = vpop.f32.mrb[0].mxu0
      %v6083 = vadd.f32 0.0, %v6082
      %v6084 = vpop.f32.mrb[0].mxu0
      %6085 = vmatprep.mubr.bf16.mxu0 0
      %6086 = vmatmul.mubr.bf16.gmra.mrb[0].mxu0 %v1986
      %v6087 = vpop.f32.mrb[0].mxu0
      %v6088 = vadd.f32 0.0, %v6087
      %v6089 = vpop.f32.mrb[0].mxu0
      %v6090 = vpop.f32.mrb[0].mxu0
      %v6091 = vadd.f32 0.0, %v6090
      %v6092 = vpop.f32.mrb[0].mxu0
      %6093 = vmatprep.mubr.bf16.mxu0 0
      %6094 = vmatmul.mubr.bf16.gmra.mrb[0].mxu0 %v1989
      %v6095 = vpop.f32.mrb[0].mxu0
      %v6096 = vadd.f32 0.0, %v6095
      %v6097 = vpop.f32.mrb[0].mxu0
      %v6098 = vpop.f32.mrb[0].mxu0
      %v6099 = vadd.f32 0.0, %v6098
      %v6100 = vpop.f32.mrb[0].mxu0
      %6101 = vmatprep.mubr.bf16.mxu0 0
      %6102 = vmatmul.mubr.bf16.gmra.mrb[0].mxu0 %v1992
      %v6103 = vpop.f32.mrb[0].mxu0
      %v6104 = vadd.f32 0.0, %v6103
      %v6105 = vpop.f32.mrb[0].mxu0
      %v6106 = vpop.f32.mrb[0].mxu0
      %v6107 = vadd.f32 0.0, %v6106
      %v6108 = vpop.f32.mrb[0].mxu0
      %6109 = vmatprep.mubr.bf16.mxu0 0
      %6110 = vmatmul.mubr.bf16.gmra.mrb[0].mxu0 %v1995
      %v6111 = vpop.f32.mrb[0].mxu0
      %v6112 = vadd.f32 0.0, %v6111
      %v6113 = vpop.f32.mrb[0].mxu0
      %v6114 = vpop.f32.mrb[0].mxu0
      %v6115 = vadd.f32 0.0, %v6114
      %v6116 = vpop.f32.mrb[0].mxu0
      %6117 = vmatprep.mubr.bf16.mxu0 0
      %6118 = vmatmul.mubr.bf16.gmra.mrb[0].mxu0 %v1998
      %v6119 = vpop.f32.mrb[0].mxu0
      %v6120 = vadd.f32 0.0, %v6119
      %v6121 = vpop.f32.mrb[0].mxu0
      %v6122 = vpop.f32.mrb[0].mxu0
      %v6123 = vadd.f32 0.0, %v6122
      %v6124 = vpop.f32.mrb[0].mxu0
      %6125 = vmatprep.mubr.bf16.mxu0 0
      %6126 = vmatmul.mubr.bf16.gmra.mrb[0].mxu0 %v2001
      %v6127 = vpop.f32.mrb[0].mxu0
      %v6128 = vadd.f32 0.0, %v6127
      %v6129 = vpop.f32.mrb[0].mxu0
      %v6130 = vpop.f32.mrb[0].mxu0
      %v6131 = vadd.f32 0.0, %v6130
      %v6132 = vpop.f32.mrb[0].mxu0
      %6133 = vmatprep.mubr.bf16.mxu0 0
      %6134 = vmatmul.mubr.bf16.gmra.mrb[0].mxu0 %v2004
      %v6135 = vpop.f32.mrb[0].mxu0
      %v6136 = vadd.f32 0.0, %v6135
      %v6137 = vpop.f32.mrb[0].mxu0
      %v6138 = vpop.f32.mrb[0].mxu0
      %v6139 = vadd.f32 0.0, %v6138
      %v6140 = vpop.f32.mrb[0].mxu0
      %6141 = vmatprep.mubr.bf16.mxu0 0
      %6142 = vmatmul.mubr.bf16.gmra.mrb[0].mxu0 %v2007
      %v6143 = vpop.f32.mrb[0].mxu0
      %v6144 = vadd.f32 0.0, %v6143
      %v6145 = vpop.f32.mrb[0].mxu0
      %v6146 = vpop.f32.mrb[0].mxu0
      %v6147 = vadd.f32 0.0, %v6146
      %v6148 = vpop.f32.mrb[0].mxu0
      %6149 = vmatprep.mubr.bf16.mxu0 0
      %6150 = vmatmul.mubr.bf16.gmra.mrb[0].mxu0 %v2010
      %v6151 = vpop.f32.mrb[0].mxu0
      %v6152 = vadd.f32 0.0, %v6151
      %v6153 = vpop.f32.mrb[0].mxu0
      %v6154 = vpop.f32.mrb[0].mxu0
      %v6155 = vadd.f32 0.0, %v6154
      %v6156 = vpop.f32.mrb[0].mxu0
      %6157 = vmatprep.mubr.bf16.mxu0 0
      %6158 = vmatmul.mubr.bf16.gmra.mrb[0].mxu0 %v2013
      %v6159 = vpop.f32.mrb[0].mxu0
      %v6160 = vadd.f32 0.0, %v6159
      %v6161 = vpop.f32.mrb[0].mxu0
      %v6162 = vpop.f32.mrb[0].mxu0
      %v6163 = vadd.f32 0.0, %v6162
      %v6164 = vpop.f32.mrb[0].mxu0
      %6165 = vmatprep.mubr.bf16.mxu0 0
      %6166 = vmatmul.mubr.bf16.gmra.mrb[0].mxu0 %v2016
      %v6167 = vpop.f32.mrb[0].mxu0
      %v6168 = vadd.f32 0.0, %v6167
      %v6169 = vpop.f32.mrb[0].mxu0
      %v6170 = vpop.f32.mrb[0].mxu0
      %v6171 = vadd.f32 0.0, %v6170
      %v6172 = vpop.f32.mrb[0].mxu0
      %6173 = vmatprep.mubr.bf16.mxu0 0
      %6174 = vmatmul.mubr.bf16.gmra.mrb[0].mxu0 %v2019
      %v6175 = vpop.f32.mrb[0].mxu0
      %v6176 = vadd.f32 0.0, %v6175
      %v6177 = vpop.f32.mrb[0].mxu0
      %v6178 = vpop.f32.mrb[0].mxu0
      %v6179 = vadd.f32 0.0, %v6178
      %v6180 = vpop.f32.mrb[0].mxu0
      %6181 = vmatprep.mubr.bf16.mxu0 0
      %6182 = vmatmul.mubr.bf16.gmra.mrb[0].mxu0 %v2022
      %v6183 = vpop.f32.mrb[0].mxu0
      %v6184 = vadd.f32 0.0, %v6183
      %v6185 = vpop.f32.mrb[0].mxu0
      %v6186 = vpop.f32.mrb[0].mxu0
      %v6187 = vadd.f32 0.0, %v6186
      %v6188 = vpop.f32.mrb[0].mxu0
      %6189 = vmatprep.mubr.bf16.mxu0 0
      %6190 = vmatmul.mubr.bf16.gmra.mrb[0].mxu0 %v2025
      %v6191 = vpop.f32.mrb[0].mxu0
      %v6192 = vadd.f32 0.0, %v6191
      %v6193 = vpop.f32.mrb[0].mxu0
      %v6194 = vpop.f32.mrb[0].mxu0
      %v6195 = vadd.f32 0.0, %v6194
      %v6196 = vpop.f32.mrb[0].mxu0
      %6197 = vmatprep.mubr.bf16.mxu0 0
      %6198 = vmatmul.mubr.bf16.gmra.mrb[0].mxu0 %v2028
      %v6199 = vpop.f32.mrb[0].mxu0
      %v6200 = vadd.f32 0.0, %v6199
      %v6201 = vpop.f32.mrb[0].mxu0
      %v6202 = vpop.f32.mrb[0].mxu0
      %v6203 = vadd.f32 0.0, %v6202
      %v6204 = vpop.f32.mrb[0].mxu0
      %6205 = vmatprep.mubr.bf16.mxu0 0
      %6206 = vmatmul.mubr.bf16.gmra.mrb[0].mxu0 %v2031
      %v6207 = vpop.f32.mrb[0].mxu0
      %v6208 = vadd.f32 0.0, %v6207
      %v6209 = vpop.f32.mrb[0].mxu0
      %v6210 = vpop.f32.mrb[0].mxu0
      %v6211 = vadd.f32 0.0, %v6210
      %v6212 = vpop.f32.mrb[0].mxu0
      %6213 = vmatprep.mubr.bf16.mxu0 0
      %6214 = vmatmul.mubr.bf16.gmra.mrb[0].mxu0 %v2034
      %v6215 = vpop.f32.mrb[0].mxu0
      %v6216 = vadd.f32 0.0, %v6215
      %v6217 = vpop.f32.mrb[0].mxu0
      %v6218 = vpop.f32.mrb[0].mxu0
      %v6219 = vadd.f32 0.0, %v6218
      %v6220 = vpop.f32.mrb[0].mxu0
      %6221 = vmatprep.mubr.bf16.mxu0 0
      %6222 = vmatmul.mubr.bf16.gmra.mrb[0].mxu0 %v2037
      %v6223 = vpop.f32.mrb[0].mxu0
      %v6224 = vadd.f32 0.0, %v6223
      %v6225 = vpop.f32.mrb[0].mxu0
      %v6226 = vpop.f32.mrb[0].mxu0
      %v6227 = vadd.f32 0.0, %v6226
      %v6228 = vpop.f32.mrb[0].mxu0
      %6229 = vmatprep.mubr.bf16.mxu0 0
      %6230 = vmatmul.mubr.bf16.gmra.mrb[0].mxu0 %v2040
      %v6231 = vpop.f32.mrb[0].mxu0
      %v6232 = vadd.f32 0.0, %v6231
      %v6233 = vpop.f32.mrb[0].mxu0
      %v6234 = vpop.f32.mrb[0].mxu0
      %v6235 = vadd.f32 0.0, %v6234
      %v6236 = vpop.f32.mrb[0].mxu0
      %6237 = vmatprep.mubr.bf16.mxu0 0
      %6238 = vmatmul.mubr.bf16.gmra.mrb[0].mxu0 %v2043
      %v6239 = vpop.f32.mrb[0].mxu0
      %v6240 = vadd.f32 0.0, %v6239
      %v6241 = vpop.f32.mrb[0].mxu0
      %v6242 = vpop.f32.mrb[0].mxu0
      %v6243 = vadd.f32 0.0, %v6242
      %v6244 = vpop.f32.mrb[0].mxu0
      %6245 = vmatprep.mubr.bf16.mxu0 0
      %6246 = vmatmul.mubr.bf16.gmra.mrb[0].mxu0 %v2046
      %v6247 = vpop.f32.mrb[0].mxu0
      %v6248 = vadd.f32 0.0, %v6247
      %v6249 = vpop.f32.mrb[0].mxu0
      %v6250 = vpop.f32.mrb[0].mxu0
      %v6251 = vadd.f32 0.0, %v6250
      %v6252 = vpop.f32.mrb[0].mxu0
      %6253 = vmatprep.mubr.bf16.mxu0 0
      %6254 = vmatmul.mubr.bf16.gmra.mrb[0].mxu0 %v2049
      %v6255 = vpop.f32.mrb[0].mxu0
      %v6256 = vadd.f32 0.0, %v6255
      %v6257 = vpop.f32.mrb[0].mxu0
      %v6258 = vpop.f32.mrb[0].mxu0
      %v6259 = vadd.f32 0.0, %v6258
      %v6260 = vpop.f32.mrb[0].mxu0
      %6261 = vmatprep.mubr.bf16.mxu0 0
      %6262 = vmatmul.mubr.bf16.gmra.mrb[0].mxu0 %v2052
      %v6263 = vpop.f32.mrb[0].mxu0
      %v6264 = vadd.f32 0.0, %v6263
      %v6265 = vpop.f32.mrb[0].mxu0
      %v6266 = vpop.f32.mrb[0].mxu0
      %v6267 = vadd.f32 0.0, %v6266
      %v6268 = vpop.f32.mrb[0].mxu0
      %6269 = vmatprep.mubr.bf16.mxu0 0
      %6270 = vmatmul.mubr.bf16.gmra.mrb[0].mxu0 %v2055
      %v6271 = vpop.f32.mrb[0].mxu0
      %v6272 = vadd.f32 0.0, %v6271
      %v6273 = vpop.f32.mrb[0].mxu0
      %v6274 = vpop.f32.mrb[0].mxu0
      %v6275 = vadd.f32 0.0, %v6274
      %v6276 = vpop.f32.mrb[0].mxu0
      %6277 = vmatprep.mubr.bf16.mxu0 0
      %6278 = vmatmul.mubr.bf16.gmra.mrb[0].mxu0 %v2058
      %v6279 = vpop.f32.mrb[0].mxu0
      %v6280 = vadd.f32 0.0, %v6279
      %v6281 = vpop.f32.mrb[0].mxu0
      %v6282 = vpop.f32.mrb[0].mxu0
      %v6283 = vadd.f32 0.0, %v6282
      %v6284 = vpop.f32.mrb[0].mxu0
      %6285 = vmatprep.mubr.bf16.mxu0 0
      %6286 = vmatmul.mubr.bf16.gmra.mrb[0].mxu0 %v2061
      %v6287 = vpop.f32.mrb[0].mxu0
      %v6288 = vadd.f32 0.0, %v6287
      %v6289 = vpop.f32.mrb[0].mxu0
      %v6290 = vpop.f32.mrb[0].mxu0
      %v6291 = vadd.f32 0.0, %v6290
      %v6292 = vpop.f32.mrb[0].mxu0
      %6293 = vmatprep.mubr.bf16.mxu0 0
      %6294 = vmatmul.mubr.bf16.gmra.mrb[0].mxu0 %v2064
      %v6295 = vpop.f32.mrb[0].mxu0
      %v6296 = vadd.f32 0.0, %v6295
      %v6297 = vpop.f32.mrb[0].mxu0
      %v6298 = vpop.f32.mrb[0].mxu0
      %v6299 = vadd.f32 0.0, %v6298
      %v6300 = vpop.f32.mrb[0].mxu0
      %6301 = vmatprep.mubr.bf16.mxu0 0
      %6302 = vmatmul.mubr.bf16.gmra.mrb[0].mxu0 %v2067
      %v6303 = vpop.f32.mrb[0].mxu0
      %v6304 = vadd.f32 0.0, %v6303
      %v6305 = vpop.f32.mrb[0].mxu0
      %v6306 = vpop.f32.mrb[0].mxu0
      %v6307 = vadd.f32 0.0, %v6306
      %v6308 = vpop.f32.mrb[0].mxu0
      %6309 = vmatprep.mubr.bf16.mxu0 0
      %6310 = vmatmul.mubr.bf16.gmra.mrb[0].mxu0 %v2070
      %v6311 = vpop.f32.mrb[0].mxu0
      %v6312 = vadd.f32 0.0, %v6311
      %v6313 = vpop.f32.mrb[0].mxu0
      %v6314 = vpop.f32.mrb[0].mxu0
      %v6315 = vadd.f32 0.0, %v6314
      %v6316 = vpop.f32.mrb[0].mxu0
      %6317 = vmatprep.mubr.bf16.mxu0 0
      %6318 = vmatmul.mubr.bf16.gmra.mrb[0].mxu0 %v2073
      %v6319 = vpop.f32.mrb[0].mxu0
      %v6320 = vadd.f32 0.0, %v6319
      %v6321 = vpop.f32.mrb[0].mxu0
      %v6322 = vpop.f32.mrb[0].mxu0
      %v6323 = vadd.f32 0.0, %v6322
      %v6324 = vpop.f32.mrb[0].mxu0
      %6325 = vmatprep.mubr.bf16.mxu0 0
      %6326 = vmatmul.mubr.bf16.gmra.mrb[0].mxu0 %v2076
      %v6327 = vpop.f32.mrb[0].mxu0
      %v6328 = vadd.f32 0.0, %v6327
      %v6329 = vpop.f32.mrb[0].mxu0
      %v6330 = vpop.f32.mrb[0].mxu0
      %v6331 = vadd.f32 0.0, %v6330
      %v6332 = vpop.f32.mrb[0].mxu0
      %6333 = vmatprep.mubr.bf16.mxu0 0
      %6334 = vmatmul.mubr.bf16.gmra.mrb[0].mxu0 %v2079
      %v6335 = vpop.f32.mrb[0].mxu0
      %v6336 = vadd.f32 0.0, %v6335
      %v6337 = vpop.f32.mrb[0].mxu0
      %v6338 = vpop.f32.mrb[0].mxu0
      %v6339 = vadd.f32 0.0, %v6338
      %v6340 = vpop.f32.mrb[0].mxu0
      %6341 = vmatprep.mubr.bf16.mxu0 0
      %6342 = vmatmul.mubr.bf16.gmra.mrb[0].mxu0 %v2082
      %v6343 = vpop.f32.mrb[0].mxu0
      %v6344 = vadd.f32 0.0, %v6343
      %v6345 = vpop.f32.mrb[0].mxu0
      %v6346 = vpop.f32.mrb[0].mxu0
      %v6347 = vadd.f32 0.0, %v6346
      %v6348 = vpop.f32.mrb[0].mxu0
      %6349 = vmatprep.mubr.bf16.mxu0 0
      %6350 = vmatmul.mubr.bf16.gmra.mrb[0].mxu0 %v2085
      %v6351 = vpop.f32.mrb[0].mxu0
      %v6352 = vadd.f32 0.0, %v6351
      %v6353 = vpop.f32.mrb[0].mxu0
      %v6354 = vpop.f32.mrb[0].mxu0
      %v6355 = vadd.f32 0.0, %v6354
      %v6356 = vpop.f32.mrb[0].mxu0
      %6357 = vmatprep.mubr.bf16.mxu0 0
      %6358 = vmatmul.mubr.bf16.gmra.mrb[0].mxu0 %v2088
      %v6359 = vpop.f32.mrb[0].mxu0
      %v6360 = vadd.f32 0.0, %v6359
      %v6361 = vpop.f32.mrb[0].mxu0
      %v6362 = vpop.f32.mrb[0].mxu0
      %v6363 = vadd.f32 0.0, %v6362
      %v6364 = vpop.f32.mrb[0].mxu0
      %6365 = vmatprep.mubr.bf16.mxu0 0
      %6366 = vmatmul.mubr.bf16.gmra.mrb[0].mxu0 %v2091
      %v6367 = vpop.f32.mrb[0].mxu0
      %v6368 = vadd.f32 0.0, %v6367
      %v6369 = vpop.f32.mrb[0].mxu0
      %v6370 = vpop.f32.mrb[0].mxu0
      %v6371 = vadd.f32 0.0, %v6370
      %v6372 = vpop.f32.mrb[0].mxu0
      %6373 = vmatprep.mubr.bf16.mxu0 0
      %6374 = vmatmul.mubr.bf16.gmra.mrb[0].mxu0 %v2094
      %v6375 = vpop.f32.mrb[0].mxu0
      %v6376 = vadd.f32 0.0, %v6375
      %v6377 = vpop.f32.mrb[0].mxu0
      %v6378 = vpop.f32.mrb[0].mxu0
      %v6379 = vadd.f32 0.0, %v6378
      %v6380 = vpop.f32.mrb[0].mxu0
      %6381 = vmatprep.mubr.bf16.mxu0 0
      %6382 = vmatmul.mubr.bf16.gmra.mrb[0].mxu0 %v2097
      %v6383 = vpop.f32.mrb[0].mxu0
      %v6384 = vadd.f32 0.0, %v6383
      %v6385 = vpop.f32.mrb[0].mxu0
      %v6386 = vpop.f32.mrb[0].mxu0
      %v6387 = vadd.f32 0.0, %v6386
      %v6388 = vpop.f32.mrb[0].mxu0
      %6389 = vmatprep.mubr.bf16.mxu0 0
      %6390 = vmatmul.mubr.bf16.gmra.mrb[0].mxu0 %v2100
      %v6391 = vpop.f32.mrb[0].mxu0
      %v6392 = vadd.f32 0.0, %v6391
      %v6393 = vpop.f32.mrb[0].mxu0
      %v6394 = vpop.f32.mrb[0].mxu0
      %v6395 = vadd.f32 0.0, %v6394
      %v6396 = vpop.f32.mrb[0].mxu0
      %6397 = vmatprep.mubr.bf16.mxu0 0
      %6398 = vmatmul.mubr.bf16.gmra.mrb[0].mxu0 %v2103
      %v6399 = vpop.f32.mrb[0].mxu0
      %v6400 = vadd.f32 0.0, %v6399
      %v6401 = vpop.f32.mrb[0].mxu0
      %v6402 = vpop.f32.mrb[0].mxu0
      %v6403 = vadd.f32 0.0, %v6402
      %v6404 = vpop.f32.mrb[0].mxu0
      %6405 = vmatprep.mubr.bf16.mxu0 0
      %6406 = vmatmul.mubr.bf16.gmra.mrb[0].mxu0 %v2106
      %v6407 = vpop.f32.mrb[0].mxu0
      %v6408 = vadd.f32 0.0, %v6407
      %v6409 = vpop.f32.mrb[0].mxu0
      %v6410 = vpop.f32.mrb[0].mxu0
      %v6411 = vadd.f32 0.0, %v6410
      %v6412 = vpop.f32.mrb[0].mxu0
      %6413 = vmatprep.mubr.bf16.mxu0 0
      %6414 = vmatmul.mubr.bf16.gmra.mrb[0].mxu0 %v2109
      %v6415 = vpop.f32.mrb[0].mxu0
      %v6416 = vadd.f32 0.0, %v6415
      %v6417 = vpop.f32.mrb[0].mxu0
      %v6418 = vpop.f32.mrb[0].mxu0
      %v6419 = vadd.f32 0.0, %v6418
      %v6420 = vpop.f32.mrb[0].mxu0
      %6421 = vmatprep.mubr.bf16.mxu0 0
      %6422 = vmatmul.mubr.bf16.gmra.mrb[0].mxu0 %v2112
      %v6423 = vpop.f32.mrb[0].mxu0
      %v6424 = vadd.f32 0.0, %v6423
      %v6425 = vpop.f32.mrb[0].mxu0
      %v6426 = vpop.f32.mrb[0].mxu0
      %v6427 = vadd.f32 0.0, %v6426
      %v6428 = vpop.f32.mrb[0].mxu0
      %6429 = vmatprep.mubr.bf16.mxu0 0
      %6430 = vmatmul.mubr.bf16.gmra.mrb[0].mxu0 %v2115
      %v6431 = vpop.f32.mrb[0].mxu0
      %v6432 = vadd.f32 0.0, %v6431
      %v6433 = vpop.f32.mrb[0].mxu0
      %v6434 = vpop.f32.mrb[0].mxu0
      %v6435 = vadd.f32 0.0, %v6434
      %v6436 = vpop.f32.mrb[0].mxu0
      %6437 = vmatprep.mubr.bf16.mxu0 0
      %6438 = vmatmul.mubr.bf16.gmra.mrb[0].mxu0 %v2118
      %v6439 = vpop.f32.mrb[0].mxu0
      %v6440 = vadd.f32 0.0, %v6439
      %v6441 = vpop.f32.mrb[0].mxu0
      %v6442 = vpop.f32.mrb[0].mxu0
      %v6443 = vadd.f32 0.0, %v6442
      %v6444 = vpop.f32.mrb[0].mxu0
      %6445 = vmatprep.mubr.bf16.mxu0 0
      %6446 = vmatmul.mubr.bf16.gmra.mrb[0].mxu0 %v2121
      %v6447 = vpop.f32.mrb[0].mxu0
      %v6448 = vadd.f32 0.0, %v6447
      %v6449 = vpop.f32.mrb[0].mxu0
      %v6450 = vpop.f32.mrb[0].mxu0
      %v6451 = vadd.f32 0.0, %v6450
      %v6452 = vpop.f32.mrb[0].mxu0
      %6453 = vmatprep.mubr.bf16.mxu0 0
      %6454 = vmatmul.mubr.bf16.gmra.mrb[0].mxu0 %v2124
      %v6455 = vpop.f32.mrb[0].mxu0
      %v6456 = vadd.f32 0.0, %v6455
      %v6457 = vpop.f32.mrb[0].mxu0
      %v6458 = vpop.f32.mrb[0].mxu0
      %v6459 = vadd.f32 0.0, %v6458
      %v6460 = vpop.f32.mrb[0].mxu0
      %6461 = vmatprep.mubr.bf16.mxu0 0
      %6462 = vmatmul.mubr.bf16.gmra.mrb[0].mxu0 %v2127
      %v6463 = vpop.f32.mrb[0].mxu0
      %v6464 = vadd.f32 0.0, %v6463
      %v6465 = vpop.f32.mrb[0].mxu0
      %v6466 = vpop.f32.mrb[0].mxu0
      %v6467 = vadd.f32 0.0, %v6466
      %v6468 = vpop.f32.mrb[0].mxu0
      %6469 = vmatprep.mubr.bf16.mxu0 0
      %6470 = vmatmul.mubr.bf16.gmra.mrb[0].mxu0 %v2130
      %v6471 = vpop.f32.mrb[0].mxu0
      %v6472 = vadd.f32 0.0, %v6471
      %v6473 = vpop.f32.mrb[0].mxu0
      %v6474 = vpop.f32.mrb[0].mxu0
      %v6475 = vadd.f32 0.0, %v6474
      %v6476 = vpop.f32.mrb[0].mxu0
      %6477 = vmatprep.mubr.bf16.mxu0 0
      %6478 = vmatmul.mubr.bf16.gmra.mrb[0].mxu0 %v2133
      %v6479 = vpop.f32.mrb[0].mxu0
      %v6480 = vadd.f32 0.0, %v6479
      %v6481 = vpop.f32.mrb[0].mxu0
      %v6482 = vpop.f32.mrb[0].mxu0
      %v6483 = vadd.f32 0.0, %v6482
      %v6484 = vpop.f32.mrb[0].mxu0
      %6485 = vmatprep.mubr.bf16.mxu0 0
      %6486 = vmatmul.mubr.bf16.gmra.mrb[0].mxu0 %v2136
      %v6487 = vpop.f32.mrb[0].mxu0
      %v6488 = vadd.f32 0.0, %v6487
      %v6489 = vpop.f32.mrb[0].mxu0
      %v6490 = vpop.f32.mrb[0].mxu0
      %v6491 = vadd.f32 0.0, %v6490
      %v6492 = vpop.f32.mrb[0].mxu0
      %6493 = vmatprep.mubr.bf16.mxu0 0
      %6494 = vmatmul.mubr.bf16.gmra.mrb[0].mxu0 %v2139
      %v6495 = vpop.f32.mrb[0].mxu0
      %v6496 = vadd.f32 0.0, %v6495
      %v6497 = vpop.f32.mrb[0].mxu0
      %v6498 = vpop.f32.mrb[0].mxu0
      %v6499 = vadd.f32 0.0, %v6498
      %v6500 = vpop.f32.mrb[0].mxu0
      %6501 = vmatprep.mubr.bf16.mxu0 0
      %6502 = vmatmul.mubr.bf16.gmra.mrb[0].mxu0 %v2142
      %v6503 = vpop.f32.mrb[0].mxu0
      %v6504 = vadd.f32 0.0, %v6503
      %v6505 = vpop.f32.mrb[0].mxu0
      %v6506 = vpop.f32.mrb[0].mxu0
      %v6507 = vadd.f32 0.0, %v6506
      %v6508 = vpop.f32.mrb[0].mxu0
      %6509 = vmatprep.mubr.bf16.mxu0 0
      %6510 = vmatmul.mubr.bf16.gmra.mrb[0].mxu0 %v2145
      %v6511 = vpop.f32.mrb[0].mxu0
      %v6512 = vadd.f32 0.0, %v6511
      %v6513 = vpop.f32.mrb[0].mxu0
      %v6514 = vpop.f32.mrb[0].mxu0
      %v6515 = vadd.f32 0.0, %v6514
      %v6516 = vpop.f32.mrb[0].mxu0
      %6517 = vmatprep.mubr.bf16.mxu0 0
      %6518 = vmatmul.mubr.bf16.gmra.mrb[0].mxu0 %v2148
      %v6519 = vpop.f32.mrb[0].mxu0
      %v6520 = vadd.f32 0.0, %v6519
      %v6521 = vpop.f32.mrb[0].mxu0
      %v6522 = vpop.f32.mrb[0].mxu0
      %v6523 = vadd.f32 0.0, %v6522
      %v6524 = vpop.f32.mrb[0].mxu0
      %6525 = vmatprep.mubr.bf16.mxu0 0
      %6526 = vmatmul.mubr.bf16.gmra.mrb[0].mxu0 %v2151
      %v6527 = vpop.f32.mrb[0].mxu0
      %v6528 = vadd.f32 0.0, %v6527
      %v6529 = vpop.f32.mrb[0].mxu0
      %v6530 = vpop.f32.mrb[0].mxu0
      %v6531 = vadd.f32 0.0, %v6530
      %v6532 = vpop.f32.mrb[0].mxu0
      %6533 = vmatprep.mubr.bf16.mxu0 0
      %6534 = vmatmul.mubr.bf16.gmra.mrb[0].mxu0 %v2154
      %v6535 = vpop.f32.mrb[0].mxu0
      %v6536 = vadd.f32 0.0, %v6535
      %v6537 = vpop.f32.mrb[0].mxu0
      %v6538 = vpop.f32.mrb[0].mxu0
      %v6539 = vadd.f32 0.0, %v6538
      %v6540 = vpop.f32.mrb[0].mxu0
      %6541 = vmatprep.mubr.bf16.mxu0 0
      %6542 = vmatmul.mubr.bf16.gmra.mrb[0].mxu0 %v2157
      %v6543 = vpop.f32.mrb[0].mxu0
      %v6544 = vadd.f32 0.0, %v6543
      %v6545 = vpop.f32.mrb[0].mxu0
      %v6546 = vpop.f32.mrb[0].mxu0
      %v6547 = vadd.f32 0.0, %v6546
      %v6548 = vpop.f32.mrb[0].mxu0
      %6549 = vmatprep.mubr.bf16.mxu0 0
      %6550 = vmatmul.mubr.bf16.gmra.mrb[0].mxu0 %v2160
      %v6551 = vpop.f32.mrb[0].mxu0
      %v6552 = vadd.f32 0.0, %v6551
      %v6553 = vpop.f32.mrb[0].mxu0
      %v6554 = vpop.f32.mrb[0].mxu0
      %v6555 = vadd.f32 0.0, %v6554
      %v6556 = vpop.f32.mrb[0].mxu0
      %6557 = vmatprep.mubr.bf16.mxu0 0
      %6558 = vmatmul.mubr.bf16.gmra.mrb[0].mxu0 %v2163
      %v6559 = vpop.f32.mrb[0].mxu0
      %v6560 = vadd.f32 0.0, %v6559
      %v6561 = vpop.f32.mrb[0].mxu0
      %v6562 = vpop.f32.mrb[0].mxu0
      %v6563 = vadd.f32 0.0, %v6562
      %v6564 = vpop.f32.mrb[0].mxu0
      %6565 = vmatprep.mubr.bf16.mxu0 0
      %6566 = vmatmul.mubr.bf16.gmra.mrb[0].mxu0 %v2166
      %v6567 = vpop.f32.mrb[0].mxu0
      %v6568 = vadd.f32 0.0, %v6567
      %v6569 = vpop.f32.mrb[0].mxu0
      %v6570 = vpop.f32.mrb[0].mxu0
      %v6571 = vadd.f32 0.0, %v6570
      %v6572 = vpop.f32.mrb[0].mxu0
      %6573 = vmatprep.mubr.bf16.mxu0 0
      %6574 = vmatmul.mubr.bf16.gmra.mrb[0].mxu0 %v6037
      %v6575 = vpop.f32.mrb[0].mxu0
      %v6576 = vadd.f32 0.0, %v6575
      %v6577 = vpop.f32.mrb[0].mxu0
      %v6578 = vpop.f32.mrb[0].mxu0
      %v6579 = vadd.f32 0.0, %v6578
      %v6580 = vpop.f32.mrb[0].mxu0
      %6581 = vmatprep.mubr.bf16.mxu0 0
      %6582 = vmatmul.mubr.bf16.gmra.mrb[0].mxu0 %v6040
      %v6583 = vpop.f32.mrb[0].mxu0
      %v6584 = vadd.f32 0.0, %v6583
      %v6585 = vpop.f32.mrb[0].mxu0
      %v6586 = vpop.f32.mrb[0].mxu0
      %v6587 = vadd.f32 0.0, %v6586
      %v6588 = vpop.f32.mrb[0].mxu0
      %6589 = vdwg.mxu0
      %v6590 = vadd.f32 %v5856, %v6080
      %v6591 = vadd.f32 %v5857, %v6083
      %v6592 = vadd.f32 %v5858, %v6088
      %v6593 = vadd.f32 %v5859, %v6091
      %v6594 = vadd.f32 %v5860, %v6096
      %v6595 = vadd.f32 %v5861, %v6099
      %v6596 = vadd.f32 %v5862, %v6104
      %v6597 = vadd.f32 %v5863, %v6107
      %v6598 = vadd.f32 %v5864, %v6112
      %v6599 = vadd.f32 %v5865, %v6115
      %v6600 = vadd.f32 %v5866, %v6120
      %v6601 = vadd.f32 %v5867, %v6123
      %v6602 = vadd.f32 %v5868, %v6128
      %v6603 = vadd.f32 %v5869, %v6131
      %v6604 = vadd.f32 %v5870, %v6136
      %v6605 = vadd.f32 %v5871, %v6139
      %v6606 = vadd.f32 %v5872, %v6144
      %v6607 = vadd.f32 %v5873, %v6147
      %v6608 = vadd.f32 %v5874, %v6152
      %v6609 = vadd.f32 %v5875, %v6155
      %v6610 = vadd.f32 %v5876, %v6160
      %v6611 = vadd.f32 %v5877, %v6163
      %v6612 = vadd.f32 %v5878, %v6168
      %v6613 = vadd.f32 %v5879, %v6171
      %v6614 = vadd.f32 %v5880, %v6176
      %v6615 = vadd.f32 %v5881, %v6179
      %v6616 = vadd.f32 %v5882, %v6184
      %v6617 = vadd.f32 %v5883, %v6187
      %v6618 = vadd.f32 %v5884, %v6192
      %v6619 = vadd.f32 %v5885, %v6195
      %v6620 = vadd.f32 %v5886, %v6200
      %v6621 = vadd.f32 %v5887, %v6203
      %v6622 = vadd.f32 %v5888, %v6208
      %v6623 = vadd.f32 %v5889, %v6211
      %v6624 = vadd.f32 %v5890, %v6216
      %v6625 = vadd.f32 %v5891, %v6219
      %v6626 = vadd.f32 %v5892, %v6224
      %v6627 = vadd.f32 %v5893, %v6227
      %v6628 = vadd.f32 %v5894, %v6232
      %v6629 = vadd.f32 %v5895, %v6235
      %v6630 = vadd.f32 %v5896, %v6240
      %v6631 = vadd.f32 %v5897, %v6243
      %v6632 = vadd.f32 %v5898, %v6248
      %v6633 = vadd.f32 %v5899, %v6251
      %v6634 = vadd.f32 %v5900, %v6256
      %v6635 = vadd.f32 %v5901, %v6259
      %v6636 = vadd.f32 %v5902, %v6264
      %v6637 = vadd.f32 %v5903, %v6267
      %v6638 = vadd.f32 %v5904, %v6272
      %v6639 = vadd.f32 %v5905, %v6275
      %v6640 = vadd.f32 %v5906, %v6280
      %v6641 = vadd.f32 %v5907, %v6283
      %v6642 = vadd.f32 %v5908, %v6288
      %v6643 = vadd.f32 %v5909, %v6291
      %v6644 = vadd.f32 %v5910, %v6296
      %v6645 = vadd.f32 %v5911, %v6299
      %v6646 = vadd.f32 %v5912, %v6304
      %v6647 = vadd.f32 %v5913, %v6307
      %v6648 = vadd.f32 %v5914, %v6312
      %v6649 = vadd.f32 %v5915, %v6315
      %v6650 = vadd.f32 %v5916, %v6320
      %v6651 = vadd.f32 %v5917, %v6323
      %v6652 = vadd.f32 %v5918, %v6328
      %v6653 = vadd.f32 %v5919, %v6331
      %v6654 = vadd.f32 %v5920, %v6336
      %v6655 = vadd.f32 %v5921, %v6339
      %v6656 = vadd.f32 %v5922, %v6344
      %v6657 = vadd.f32 %v5923, %v6347
      %v6658 = vadd.f32 %v5924, %v6352
      %v6659 = vadd.f32 %v5925, %v6355
      %v6660 = vadd.f32 %v5926, %v6360
      %v6661 = vadd.f32 %v5927, %v6363
      %v6662 = vadd.f32 %v5928, %v6368
      %v6663 = vadd.f32 %v5929, %v6371
      %v6664 = vadd.f32 %v5930, %v6376
      %v6665 = vadd.f32 %v5931, %v6379
      %v6666 = vadd.f32 %v5932, %v6384
      %v6667 = vadd.f32 %v5933, %v6387
      %v6668 = vadd.f32 %v5934, %v6392
      %v6669 = vadd.f32 %v5935, %v6395
      %v6670 = vadd.f32 %v5936, %v6400
      %v6671 = vadd.f32 %v5937, %v6403
      %v6672 = vadd.f32 %v5938, %v6408
      %v6673 = vadd.f32 %v5939, %v6411
      %v6674 = vadd.f32 %v5940, %v6416
      %v6675 = vadd.f32 %v5941, %v6419
      %v6676 = vadd.f32 %v5942, %v6424
      %v6677 = vadd.f32 %v5943, %v6427
      %v6678 = vadd.f32 %v5944, %v6432
      %v6679 = vadd.f32 %v5945, %v6435
      %v6680 = vadd.f32 %v5946, %v6440
      %v6681 = vadd.f32 %v5947, %v6443
      %v6682 = vadd.f32 %v5948, %v6448
      %v6683 = vadd.f32 %v5949, %v6451
      %v6684 = vadd.f32 %v5950, %v6456
      %v6685 = vadd.f32 %v5951, %v6459
      %v6686 = vadd.f32 %v5952, %v6464
      %v6687 = vadd.f32 %v5953, %v6467
      %v6688 = vadd.f32 %v5954, %v6472
      %v6689 = vadd.f32 %v5955, %v6475
      %v6690 = vadd.f32 %v5956, %v6480
      %v6691 = vadd.f32 %v5957, %v6483
      %v6692 = vadd.f32 %v5958, %v6488
      %v6693 = vadd.f32 %v5959, %v6491
      %v6694 = vadd.f32 %v5960, %v6496
      %v6695 = vadd.f32 %v5961, %v6499
      %v6696 = vadd.f32 %v5962, %v6504
      %v6697 = vadd.f32 %v5963, %v6507
      %v6698 = vadd.f32 %v5964, %v6512
      %v6699 = vadd.f32 %v5965, %v6515
      %v6700 = vadd.f32 %v5966, %v6520
      %v6701 = vadd.f32 %v5967, %v6523
      %v6702 = vadd.f32 %v5968, %v6528
      %v6703 = vadd.f32 %v5969, %v6531
      %v6704 = vadd.f32 %v5970, %v6536
      %v6705 = vadd.f32 %v5971, %v6539
      %v6706 = vadd.f32 %v5972, %v6544
      %v6707 = vadd.f32 %v5973, %v6547
      %v6708 = vadd.f32 %v5974, %v6552
      %v6709 = vadd.f32 %v5975, %v6555
      %v6710 = vadd.f32 %v5976, %v6560
      %v6711 = vadd.f32 %v5977, %v6563
      %v6712 = vadd.f32 %v5978, %v6568
      %v6713 = vadd.f32 %v5979, %v6571
      %v6714 = vadd.f32 %v5980, %v6576
      %v6715 = vadd.f32 %v5981, %v6579
      %v6716 = vadd.f32 %v5982, %v6584
      %v6717 = vadd.f32 %v5983, %v6587
      %v6719 = vrot.slane %v359, 5
      %v6720 = vrot.slane %v6719, 4
      %v6721 = vrot.slane %v360, 5
      %v6722 = vsel %vm3811, %v6720, %v6721
      %v6723 = vrot.slane %v6721, 4
      %v6724 = vrot.slane %v361, 5
      %v6725 = vsel %vm3811, %v6723, %v6724
      %v6726 = vrot.slane %v6724, 4
      %v6727 = vrot.slane %v362, 5
      %v6728 = vsel %vm3811, %v6726, %v6727
      %v6729 = vrot.slane %v6727, 4
      %v6730 = vrot.slane %v363, 5
      %v6731 = vsel %vm3811, %v6729, %v6730
      %s6732 = scalar_lea.vmem %s1, 10
      %v6733 = vld [vmem:[%s6732] sm:$0x3]
      %v6734 = vunpack.c.l.b16 %v6722
      %v6735 = vunpack.c.l.b16 %v6725
      %v6736 = vunpack.c.l.b16 %v6728
      %v6737 = vunpack.c.l.b16 %v6731
      %v6738 = vpack.c.b16 %v6735, %v6734
      %v6739 = vpack.c.b16 %v6737, %v6736
      %v6741 = vsel %vm1975, %v6738, 0
      %v6744 = vsel %vm1975, %v6739, 0
      %v6747 = vsel %vm2168, %v6733, 0
      %6749 = vmatprep.subr.bf16.mxu0 0
      %6750 = vmatpush1.bf16.msra.mxu0 %v6747
      %6751 = vmatprep.subr.bf16.mxu0 0
      %6752 = vmatpush1.bf16.msra.mxu0 0
      %6753 = vmatprep.subr.bf16.mxu0 0
      %6754 = vmatpush1.bf16.msra.mxu0 0
      %6755 = vmatprep.subr.bf16.mxu0 0
      %6756 = vmatpush1.bf16.msra.mxu0 0
      %6757 = vmatprep.subr.bf16.mxu0 0
      %6758 = vmatpush1.bf16.msra.mxu0 0
      %6759 = vmatprep.subr.bf16.mxu0 0
      %6760 = vmatpush1.bf16.msra.mxu0 0
      %6761 = vmatprep.subr.bf16.mxu0 0
      %6762 = vmatpush1.bf16.msra.mxu0 0
      %6763 = vmatprep.subr.bf16.mxu0 0
      %6764 = vmatpush1.bf16.msra.mxu0 0
      %6765 = vmatprep.subr.bf16.mxu0 0
      %6766 = vmatpush1.bf16.msra.mxu0 0
      %6767 = vmatprep.subr.bf16.mxu0 0
      %6768 = vmatpush1.bf16.msra.mxu0 0
      %6769 = vmatprep.subr.bf16.mxu0 0
      %6770 = vmatpush1.bf16.msra.mxu0 0
      %6771 = vmatprep.subr.bf16.mxu0 0
      %6772 = vmatpush1.bf16.msra.mxu0 0
      %6773 = vmatprep.subr.bf16.mxu0 0
      %6774 = vmatpush1.bf16.msra.mxu0 0
      %6775 = vmatprep.subr.bf16.mxu0 0
      %6776 = vmatpush1.bf16.msra.mxu0 0
      %6777 = vmatprep.subr.bf16.mxu0 0
      %6778 = vmatpush1.bf16.msra.mxu0 0
      %6779 = vmatprep.subr.bf16.mxu0 0
      %6780 = vmatpush1.bf16.msra.mxu0 0
      %6781 = vmatprep.mubr.bf16.mxu0 0
      %6782 = vmatmul.mubr.bf16.gmra.mrb[0].mxu0 %v4429
      %v6783 = vpop.f32.mrb[0].mxu0
      %v6784 = vadd.f32 0.0, %v6783
      %v6785 = vpop.f32.mrb[0].mxu0
      %v6786 = vpop.f32.mrb[0].mxu0
      %v6787 = vadd.f32 0.0, %v6786
      %v6788 = vpop.f32.mrb[0].mxu0
      %6789 = vmatprep.mubr.bf16.mxu0 0
      %6790 = vmatmul.mubr.bf16.gmra.mrb[0].mxu0 %v4432
      %v6791 = vpop.f32.mrb[0].mxu0
      %v6792 = vadd.f32 0.0, %v6791
      %v6793 = vpop.f32.mrb[0].mxu0
      %v6794 = vpop.f32.mrb[0].mxu0
      %v6795 = vadd.f32 0.0, %v6794
      %v6796 = vpop.f32.mrb[0].mxu0
      %6797 = vmatprep.mubr.bf16.mxu0 0
      %6798 = vmatmul.mubr.bf16.gmra.mrb[0].mxu0 %v4435
      %v6799 = vpop.f32.mrb[0].mxu0
      %v6800 = vadd.f32 0.0, %v6799
      %v6801 = vpop.f32.mrb[0].mxu0
      %v6802 = vpop.f32.mrb[0].mxu0
      %v6803 = vadd.f32 0.0, %v6802
      %v6804 = vpop.f32.mrb[0].mxu0
      %6805 = vmatprep.mubr.bf16.mxu0 0
      %6806 = vmatmul.mubr.bf16.gmra.mrb[0].mxu0 %v4438
      %v6807 = vpop.f32.mrb[0].mxu0
      %v6808 = vadd.f32 0.0, %v6807
      %v6809 = vpop.f32.mrb[0].mxu0
      %v6810 = vpop.f32.mrb[0].mxu0
      %v6811 = vadd.f32 0.0, %v6810
      %v6812 = vpop.f32.mrb[0].mxu0
      %6813 = vmatprep.mubr.bf16.mxu0 0
      %6814 = vmatmul.mubr.bf16.gmra.mrb[0].mxu0 %v4441
      %v6815 = vpop.f32.mrb[0].mxu0
      %v6816 = vadd.f32 0.0, %v6815
      %v6817 = vpop.f32.mrb[0].mxu0
      %v6818 = vpop.f32.mrb[0].mxu0
      %v6819 = vadd.f32 0.0, %v6818
      %v6820 = vpop.f32.mrb[0].mxu0
      %6821 = vmatprep.mubr.bf16.mxu0 0
      %6822 = vmatmul.mubr.bf16.gmra.mrb[0].mxu0 %v4444
      %v6823 = vpop.f32.mrb[0].mxu0
      %v6824 = vadd.f32 0.0, %v6823
      %v6825 = vpop.f32.mrb[0].mxu0
      %v6826 = vpop.f32.mrb[0].mxu0
      %v6827 = vadd.f32 0.0, %v6826
      %v6828 = vpop.f32.mrb[0].mxu0
      %6829 = vmatprep.mubr.bf16.mxu0 0
      %6830 = vmatmul.mubr.bf16.gmra.mrb[0].mxu0 %v4447
      %v6831 = vpop.f32.mrb[0].mxu0
      %v6832 = vadd.f32 0.0, %v6831
      %v6833 = vpop.f32.mrb[0].mxu0
      %v6834 = vpop.f32.mrb[0].mxu0
      %v6835 = vadd.f32 0.0, %v6834
      %v6836 = vpop.f32.mrb[0].mxu0
      %6837 = vmatprep.mubr.bf16.mxu0 0
      %6838 = vmatmul.mubr.bf16.gmra.mrb[0].mxu0 %v4450
      %v6839 = vpop.f32.mrb[0].mxu0
      %v6840 = vadd.f32 0.0, %v6839
      %v6841 = vpop.f32.mrb[0].mxu0
      %v6842 = vpop.f32.mrb[0].mxu0
      %v6843 = vadd.f32 0.0, %v6842
      %v6844 = vpop.f32.mrb[0].mxu0
      %6845 = vmatprep.mubr.bf16.mxu0 0
      %6846 = vmatmul.mubr.bf16.gmra.mrb[0].mxu0 %v4453
      %v6847 = vpop.f32.mrb[0].mxu0
      %v6848 = vadd.f32 0.0, %v6847
      %v6849 = vpop.f32.mrb[0].mxu0
      %v6850 = vpop.f32.mrb[0].mxu0
      %v6851 = vadd.f32 0.0, %v6850
      %v6852 = vpop.f32.mrb[0].mxu0
      %6853 = vmatprep.mubr.bf16.mxu0 0
      %6854 = vmatmul.mubr.bf16.gmra.mrb[0].mxu0 %v4456
      %v6855 = vpop.f32.mrb[0].mxu0
      %v6856 = vadd.f32 0.0, %v6855
      %v6857 = vpop.f32.mrb[0].mxu0
      %v6858 = vpop.f32.mrb[0].mxu0
      %v6859 = vadd.f32 0.0, %v6858
      %v6860 = vpop.f32.mrb[0].mxu0
      %6861 = vmatprep.mubr.bf16.mxu0 0
      %6862 = vmatmul.mubr.bf16.gmra.mrb[0].mxu0 %v4459
      %v6863 = vpop.f32.mrb[0].mxu0
      %v6864 = vadd.f32 0.0, %v6863
      %v6865 = vpop.f32.mrb[0].mxu0
      %v6866 = vpop.f32.mrb[0].mxu0
      %v6867 = vadd.f32 0.0, %v6866
      %v6868 = vpop.f32.mrb[0].mxu0
      %6869 = vmatprep.mubr.bf16.mxu0 0
      %6870 = vmatmul.mubr.bf16.gmra.mrb[0].mxu0 %v4462
      %v6871 = vpop.f32.mrb[0].mxu0
      %v6872 = vadd.f32 0.0, %v6871
      %v6873 = vpop.f32.mrb[0].mxu0
      %v6874 = vpop.f32.mrb[0].mxu0
      %v6875 = vadd.f32 0.0, %v6874
      %v6876 = vpop.f32.mrb[0].mxu0
      %6877 = vmatprep.mubr.bf16.mxu0 0
      %6878 = vmatmul.mubr.bf16.gmra.mrb[0].mxu0 %v4465
      %v6879 = vpop.f32.mrb[0].mxu0
      %v6880 = vadd.f32 0.0, %v6879
      %v6881 = vpop.f32.mrb[0].mxu0
      %v6882 = vpop.f32.mrb[0].mxu0
      %v6883 = vadd.f32 0.0, %v6882
      %v6884 = vpop.f32.mrb[0].mxu0
      %6885 = vmatprep.mubr.bf16.mxu0 0
      %6886 = vmatmul.mubr.bf16.gmra.mrb[0].mxu0 %v4468
      %v6887 = vpop.f32.mrb[0].mxu0
      %v6888 = vadd.f32 0.0, %v6887
      %v6889 = vpop.f32.mrb[0].mxu0
      %v6890 = vpop.f32.mrb[0].mxu0
      %v6891 = vadd.f32 0.0, %v6890
      %v6892 = vpop.f32.mrb[0].mxu0
      %6893 = vmatprep.mubr.bf16.mxu0 0
      %6894 = vmatmul.mubr.bf16.gmra.mrb[0].mxu0 %v4471
      %v6895 = vpop.f32.mrb[0].mxu0
      %v6896 = vadd.f32 0.0, %v6895
      %v6897 = vpop.f32.mrb[0].mxu0
      %v6898 = vpop.f32.mrb[0].mxu0
      %v6899 = vadd.f32 0.0, %v6898
      %v6900 = vpop.f32.mrb[0].mxu0
      %6901 = vmatprep.mubr.bf16.mxu0 0
      %6902 = vmatmul.mubr.bf16.gmra.mrb[0].mxu0 %v4474
      %v6903 = vpop.f32.mrb[0].mxu0
      %v6904 = vadd.f32 0.0, %v6903
      %v6905 = vpop.f32.mrb[0].mxu0
      %v6906 = vpop.f32.mrb[0].mxu0
      %v6907 = vadd.f32 0.0, %v6906
      %v6908 = vpop.f32.mrb[0].mxu0
      %6909 = vmatprep.mubr.bf16.mxu0 0
      %6910 = vmatmul.mubr.bf16.gmra.mrb[0].mxu0 %v4477
      %v6911 = vpop.f32.mrb[0].mxu0
      %v6912 = vadd.f32 0.0, %v6911
      %v6913 = vpop.f32.mrb[0].mxu0
      %v6914 = vpop.f32.mrb[0].mxu0
      %v6915 = vadd.f32 0.0, %v6914
      %v6916 = vpop.f32.mrb[0].mxu0
      %6917 = vmatprep.mubr.bf16.mxu0 0
      %6918 = vmatmul.mubr.bf16.gmra.mrb[0].mxu0 %v4480
      %v6919 = vpop.f32.mrb[0].mxu0
      %v6920 = vadd.f32 0.0, %v6919
      %v6921 = vpop.f32.mrb[0].mxu0
      %v6922 = vpop.f32.mrb[0].mxu0
      %v6923 = vadd.f32 0.0, %v6922
      %v6924 = vpop.f32.mrb[0].mxu0
      %6925 = vmatprep.mubr.bf16.mxu0 0
      %6926 = vmatmul.mubr.bf16.gmra.mrb[0].mxu0 %v4483
      %v6927 = vpop.f32.mrb[0].mxu0
      %v6928 = vadd.f32 0.0, %v6927
      %v6929 = vpop.f32.mrb[0].mxu0
      %v6930 = vpop.f32.mrb[0].mxu0
      %v6931 = vadd.f32 0.0, %v6930
      %v6932 = vpop.f32.mrb[0].mxu0
      %6933 = vmatprep.mubr.bf16.mxu0 0
      %6934 = vmatmul.mubr.bf16.gmra.mrb[0].mxu0 %v4486
      %v6935 = vpop.f32.mrb[0].mxu0
      %v6936 = vadd.f32 0.0, %v6935
      %v6937 = vpop.f32.mrb[0].mxu0
      %v6938 = vpop.f32.mrb[0].mxu0
      %v6939 = vadd.f32 0.0, %v6938
      %v6940 = vpop.f32.mrb[0].mxu0
      %6941 = vmatprep.mubr.bf16.mxu0 0
      %6942 = vmatmul.mubr.bf16.gmra.mrb[0].mxu0 %v4489
      %v6943 = vpop.f32.mrb[0].mxu0
      %v6944 = vadd.f32 0.0, %v6943
      %v6945 = vpop.f32.mrb[0].mxu0
      %v6946 = vpop.f32.mrb[0].mxu0
      %v6947 = vadd.f32 0.0, %v6946
      %v6948 = vpop.f32.mrb[0].mxu0
      %6949 = vmatprep.mubr.bf16.mxu0 0
      %6950 = vmatmul.mubr.bf16.gmra.mrb[0].mxu0 %v4492
      %v6951 = vpop.f32.mrb[0].mxu0
      %v6952 = vadd.f32 0.0, %v6951
      %v6953 = vpop.f32.mrb[0].mxu0
      %v6954 = vpop.f32.mrb[0].mxu0
      %v6955 = vadd.f32 0.0, %v6954
      %v6956 = vpop.f32.mrb[0].mxu0
      %6957 = vmatprep.mubr.bf16.mxu0 0
      %6958 = vmatmul.mubr.bf16.gmra.mrb[0].mxu0 %v4495
      %v6959 = vpop.f32.mrb[0].mxu0
      %v6960 = vadd.f32 0.0, %v6959
      %v6961 = vpop.f32.mrb[0].mxu0
      %v6962 = vpop.f32.mrb[0].mxu0
      %v6963 = vadd.f32 0.0, %v6962
      %v6964 = vpop.f32.mrb[0].mxu0
      %6965 = vmatprep.mubr.bf16.mxu0 0
      %6966 = vmatmul.mubr.bf16.gmra.mrb[0].mxu0 %v4498
      %v6967 = vpop.f32.mrb[0].mxu0
      %v6968 = vadd.f32 0.0, %v6967
      %v6969 = vpop.f32.mrb[0].mxu0
      %v6970 = vpop.f32.mrb[0].mxu0
      %v6971 = vadd.f32 0.0, %v6970
      %v6972 = vpop.f32.mrb[0].mxu0
      %6973 = vmatprep.mubr.bf16.mxu0 0
      %6974 = vmatmul.mubr.bf16.gmra.mrb[0].mxu0 %v4501
      %v6975 = vpop.f32.mrb[0].mxu0
      %v6976 = vadd.f32 0.0, %v6975
      %v6977 = vpop.f32.mrb[0].mxu0
      %v6978 = vpop.f32.mrb[0].mxu0
      %v6979 = vadd.f32 0.0, %v6978
      %v6980 = vpop.f32.mrb[0].mxu0
      %6981 = vmatprep.mubr.bf16.mxu0 0
      %6982 = vmatmul.mubr.bf16.gmra.mrb[0].mxu0 %v4504
      %v6983 = vpop.f32.mrb[0].mxu0
      %v6984 = vadd.f32 0.0, %v6983
      %v6985 = vpop.f32.mrb[0].mxu0
      %v6986 = vpop.f32.mrb[0].mxu0
      %v6987 = vadd.f32 0.0, %v6986
      %v6988 = vpop.f32.mrb[0].mxu0
      %6989 = vmatprep.mubr.bf16.mxu0 0
      %6990 = vmatmul.mubr.bf16.gmra.mrb[0].mxu0 %v4507
      %v6991 = vpop.f32.mrb[0].mxu0
      %v6992 = vadd.f32 0.0, %v6991
      %v6993 = vpop.f32.mrb[0].mxu0
      %v6994 = vpop.f32.mrb[0].mxu0
      %v6995 = vadd.f32 0.0, %v6994
      %v6996 = vpop.f32.mrb[0].mxu0
      %6997 = vmatprep.mubr.bf16.mxu0 0
      %6998 = vmatmul.mubr.bf16.gmra.mrb[0].mxu0 %v4510
      %v6999 = vpop.f32.mrb[0].mxu0
      %v7000 = vadd.f32 0.0, %v6999
      %v7001 = vpop.f32.mrb[0].mxu0
      %v7002 = vpop.f32.mrb[0].mxu0
      %v7003 = vadd.f32 0.0, %v7002
      %v7004 = vpop.f32.mrb[0].mxu0
      %7005 = vmatprep.mubr.bf16.mxu0 0
      %7006 = vmatmul.mubr.bf16.gmra.mrb[0].mxu0 %v4513
      %v7007 = vpop.f32.mrb[0].mxu0
      %v7008 = vadd.f32 0.0, %v7007
      %v7009 = vpop.f32.mrb[0].mxu0
      %v7010 = vpop.f32.mrb[0].mxu0
      %v7011 = vadd.f32 0.0, %v7010
      %v7012 = vpop.f32.mrb[0].mxu0
      %7013 = vmatprep.mubr.bf16.mxu0 0
      %7014 = vmatmul.mubr.bf16.gmra.mrb[0].mxu0 %v4516
      %v7015 = vpop.f32.mrb[0].mxu0
      %v7016 = vadd.f32 0.0, %v7015
      %v7017 = vpop.f32.mrb[0].mxu0
      %v7018 = vpop.f32.mrb[0].mxu0
      %v7019 = vadd.f32 0.0, %v7018
      %v7020 = vpop.f32.mrb[0].mxu0
      %7021 = vmatprep.mubr.bf16.mxu0 0
      %7022 = vmatmul.mubr.bf16.gmra.mrb[0].mxu0 %v4519
      %v7023 = vpop.f32.mrb[0].mxu0
      %v7024 = vadd.f32 0.0, %v7023
      %v7025 = vpop.f32.mrb[0].mxu0
      %v7026 = vpop.f32.mrb[0].mxu0
      %v7027 = vadd.f32 0.0, %v7026
      %v7028 = vpop.f32.mrb[0].mxu0
      %7029 = vmatprep.mubr.bf16.mxu0 0
      %7030 = vmatmul.mubr.bf16.gmra.mrb[0].mxu0 %v4522
      %v7031 = vpop.f32.mrb[0].mxu0
      %v7032 = vadd.f32 0.0, %v7031
      %v7033 = vpop.f32.mrb[0].mxu0
      %v7034 = vpop.f32.mrb[0].mxu0
      %v7035 = vadd.f32 0.0, %v7034
      %v7036 = vpop.f32.mrb[0].mxu0
      %7037 = vmatprep.mubr.bf16.mxu0 0
      %7038 = vmatmul.mubr.bf16.gmra.mrb[0].mxu0 %v4525
      %v7039 = vpop.f32.mrb[0].mxu0
      %v7040 = vadd.f32 0.0, %v7039
      %v7041 = vpop.f32.mrb[0].mxu0
      %v7042 = vpop.f32.mrb[0].mxu0
      %v7043 = vadd.f32 0.0, %v7042
      %v7044 = vpop.f32.mrb[0].mxu0
      %7045 = vmatprep.mubr.bf16.mxu0 0
      %7046 = vmatmul.mubr.bf16.gmra.mrb[0].mxu0 %v4528
      %v7047 = vpop.f32.mrb[0].mxu0
      %v7048 = vadd.f32 0.0, %v7047
      %v7049 = vpop.f32.mrb[0].mxu0
      %v7050 = vpop.f32.mrb[0].mxu0
      %v7051 = vadd.f32 0.0, %v7050
      %v7052 = vpop.f32.mrb[0].mxu0
      %7053 = vmatprep.mubr.bf16.mxu0 0
      %7054 = vmatmul.mubr.bf16.gmra.mrb[0].mxu0 %v4531
      %v7055 = vpop.f32.mrb[0].mxu0
      %v7056 = vadd.f32 0.0, %v7055
      %v7057 = vpop.f32.mrb[0].mxu0
      %v7058 = vpop.f32.mrb[0].mxu0
      %v7059 = vadd.f32 0.0, %v7058
      %v7060 = vpop.f32.mrb[0].mxu0
      %7061 = vmatprep.mubr.bf16.mxu0 0
      %7062 = vmatmul.mubr.bf16.gmra.mrb[0].mxu0 %v4534
      %v7063 = vpop.f32.mrb[0].mxu0
      %v7064 = vadd.f32 0.0, %v7063
      %v7065 = vpop.f32.mrb[0].mxu0
      %v7066 = vpop.f32.mrb[0].mxu0
      %v7067 = vadd.f32 0.0, %v7066
      %v7068 = vpop.f32.mrb[0].mxu0
      %7069 = vmatprep.mubr.bf16.mxu0 0
      %7070 = vmatmul.mubr.bf16.gmra.mrb[0].mxu0 %v4537
      %v7071 = vpop.f32.mrb[0].mxu0
      %v7072 = vadd.f32 0.0, %v7071
      %v7073 = vpop.f32.mrb[0].mxu0
      %v7074 = vpop.f32.mrb[0].mxu0
      %v7075 = vadd.f32 0.0, %v7074
      %v7076 = vpop.f32.mrb[0].mxu0
      %7077 = vmatprep.mubr.bf16.mxu0 0
      %7078 = vmatmul.mubr.bf16.gmra.mrb[0].mxu0 %v4540
      %v7079 = vpop.f32.mrb[0].mxu0
      %v7080 = vadd.f32 0.0, %v7079
      %v7081 = vpop.f32.mrb[0].mxu0
      %v7082 = vpop.f32.mrb[0].mxu0
      %v7083 = vadd.f32 0.0, %v7082
      %v7084 = vpop.f32.mrb[0].mxu0
      %7085 = vmatprep.mubr.bf16.mxu0 0
      %7086 = vmatmul.mubr.bf16.gmra.mrb[0].mxu0 %v4543
      %v7087 = vpop.f32.mrb[0].mxu0
      %v7088 = vadd.f32 0.0, %v7087
      %v7089 = vpop.f32.mrb[0].mxu0
      %v7090 = vpop.f32.mrb[0].mxu0
      %v7091 = vadd.f32 0.0, %v7090
      %v7092 = vpop.f32.mrb[0].mxu0
      %7093 = vmatprep.mubr.bf16.mxu0 0
      %7094 = vmatmul.mubr.bf16.gmra.mrb[0].mxu0 %v4546
      %v7095 = vpop.f32.mrb[0].mxu0
      %v7096 = vadd.f32 0.0, %v7095
      %v7097 = vpop.f32.mrb[0].mxu0
      %v7098 = vpop.f32.mrb[0].mxu0
      %v7099 = vadd.f32 0.0, %v7098
      %v7100 = vpop.f32.mrb[0].mxu0
      %7101 = vmatprep.mubr.bf16.mxu0 0
      %7102 = vmatmul.mubr.bf16.gmra.mrb[0].mxu0 %v4549
      %v7103 = vpop.f32.mrb[0].mxu0
      %v7104 = vadd.f32 0.0, %v7103
      %v7105 = vpop.f32.mrb[0].mxu0
      %v7106 = vpop.f32.mrb[0].mxu0
      %v7107 = vadd.f32 0.0, %v7106
      %v7108 = vpop.f32.mrb[0].mxu0
      %7109 = vmatprep.mubr.bf16.mxu0 0
      %7110 = vmatmul.mubr.bf16.gmra.mrb[0].mxu0 %v4552
      %v7111 = vpop.f32.mrb[0].mxu0
      %v7112 = vadd.f32 0.0, %v7111
      %v7113 = vpop.f32.mrb[0].mxu0
      %v7114 = vpop.f32.mrb[0].mxu0
      %v7115 = vadd.f32 0.0, %v7114
      %v7116 = vpop.f32.mrb[0].mxu0
      %7117 = vmatprep.mubr.bf16.mxu0 0
      %7118 = vmatmul.mubr.bf16.gmra.mrb[0].mxu0 %v4555
      %v7119 = vpop.f32.mrb[0].mxu0
      %v7120 = vadd.f32 0.0, %v7119
      %v7121 = vpop.f32.mrb[0].mxu0
      %v7122 = vpop.f32.mrb[0].mxu0
      %v7123 = vadd.f32 0.0, %v7122
      %v7124 = vpop.f32.mrb[0].mxu0
      %7125 = vmatprep.mubr.bf16.mxu0 0
      %7126 = vmatmul.mubr.bf16.gmra.mrb[0].mxu0 %v4558
      %v7127 = vpop.f32.mrb[0].mxu0
      %v7128 = vadd.f32 0.0, %v7127
      %v7129 = vpop.f32.mrb[0].mxu0
      %v7130 = vpop.f32.mrb[0].mxu0
      %v7131 = vadd.f32 0.0, %v7130
      %v7132 = vpop.f32.mrb[0].mxu0
      %7133 = vmatprep.mubr.bf16.mxu0 0
      %7134 = vmatmul.mubr.bf16.gmra.mrb[0].mxu0 %v4561
      %v7135 = vpop.f32.mrb[0].mxu0
      %v7136 = vadd.f32 0.0, %v7135
      %v7137 = vpop.f32.mrb[0].mxu0
      %v7138 = vpop.f32.mrb[0].mxu0
      %v7139 = vadd.f32 0.0, %v7138
      %v7140 = vpop.f32.mrb[0].mxu0
      %7141 = vmatprep.mubr.bf16.mxu0 0
      %7142 = vmatmul.mubr.bf16.gmra.mrb[0].mxu0 %v4564
      %v7143 = vpop.f32.mrb[0].mxu0
      %v7144 = vadd.f32 0.0, %v7143
      %v7145 = vpop.f32.mrb[0].mxu0
      %v7146 = vpop.f32.mrb[0].mxu0
      %v7147 = vadd.f32 0.0, %v7146
      %v7148 = vpop.f32.mrb[0].mxu0
      %7149 = vmatprep.mubr.bf16.mxu0 0
      %7150 = vmatmul.mubr.bf16.gmra.mrb[0].mxu0 %v4567
      %v7151 = vpop.f32.mrb[0].mxu0
      %v7152 = vadd.f32 0.0, %v7151
      %v7153 = vpop.f32.mrb[0].mxu0
      %v7154 = vpop.f32.mrb[0].mxu0
      %v7155 = vadd.f32 0.0, %v7154
      %v7156 = vpop.f32.mrb[0].mxu0
      %7157 = vmatprep.mubr.bf16.mxu0 0
      %7158 = vmatmul.mubr.bf16.gmra.mrb[0].mxu0 %v4570
      %v7159 = vpop.f32.mrb[0].mxu0
      %v7160 = vadd.f32 0.0, %v7159
      %v7161 = vpop.f32.mrb[0].mxu0
      %v7162 = vpop.f32.mrb[0].mxu0
      %v7163 = vadd.f32 0.0, %v7162
      %v7164 = vpop.f32.mrb[0].mxu0
      %7165 = vmatprep.mubr.bf16.mxu0 0
      %7166 = vmatmul.mubr.bf16.gmra.mrb[0].mxu0 %v4573
      %v7167 = vpop.f32.mrb[0].mxu0
      %v7168 = vadd.f32 0.0, %v7167
      %v7169 = vpop.f32.mrb[0].mxu0
      %v7170 = vpop.f32.mrb[0].mxu0
      %v7171 = vadd.f32 0.0, %v7170
      %v7172 = vpop.f32.mrb[0].mxu0
      %7173 = vmatprep.mubr.bf16.mxu0 0
      %7174 = vmatmul.mubr.bf16.gmra.mrb[0].mxu0 %v4576
      %v7175 = vpop.f32.mrb[0].mxu0
      %v7176 = vadd.f32 0.0, %v7175
      %v7177 = vpop.f32.mrb[0].mxu0
      %v7178 = vpop.f32.mrb[0].mxu0
      %v7179 = vadd.f32 0.0, %v7178
      %v7180 = vpop.f32.mrb[0].mxu0
      %7181 = vmatprep.mubr.bf16.mxu0 0
      %7182 = vmatmul.mubr.bf16.gmra.mrb[0].mxu0 %v4579
      %v7183 = vpop.f32.mrb[0].mxu0
      %v7184 = vadd.f32 0.0, %v7183
      %v7185 = vpop.f32.mrb[0].mxu0
      %v7186 = vpop.f32.mrb[0].mxu0
      %v7187 = vadd.f32 0.0, %v7186
      %v7188 = vpop.f32.mrb[0].mxu0
      %7189 = vmatprep.mubr.bf16.mxu0 0
      %7190 = vmatmul.mubr.bf16.gmra.mrb[0].mxu0 %v4582
      %v7191 = vpop.f32.mrb[0].mxu0
      %v7192 = vadd.f32 0.0, %v7191
      %v7193 = vpop.f32.mrb[0].mxu0
      %v7194 = vpop.f32.mrb[0].mxu0
      %v7195 = vadd.f32 0.0, %v7194
      %v7196 = vpop.f32.mrb[0].mxu0
      %7197 = vmatprep.mubr.bf16.mxu0 0
      %7198 = vmatmul.mubr.bf16.gmra.mrb[0].mxu0 %v4585
      %v7199 = vpop.f32.mrb[0].mxu0
      %v7200 = vadd.f32 0.0, %v7199
      %v7201 = vpop.f32.mrb[0].mxu0
      %v7202 = vpop.f32.mrb[0].mxu0
      %v7203 = vadd.f32 0.0, %v7202
      %v7204 = vpop.f32.mrb[0].mxu0
      %7205 = vmatprep.mubr.bf16.mxu0 0
      %7206 = vmatmul.mubr.bf16.gmra.mrb[0].mxu0 %v4588
      %v7207 = vpop.f32.mrb[0].mxu0
      %v7208 = vadd.f32 0.0, %v7207
      %v7209 = vpop.f32.mrb[0].mxu0
      %v7210 = vpop.f32.mrb[0].mxu0
      %v7211 = vadd.f32 0.0, %v7210
      %v7212 = vpop.f32.mrb[0].mxu0
      %7213 = vmatprep.mubr.bf16.mxu0 0
      %7214 = vmatmul.mubr.bf16.gmra.mrb[0].mxu0 %v4591
      %v7215 = vpop.f32.mrb[0].mxu0
      %v7216 = vadd.f32 0.0, %v7215
      %v7217 = vpop.f32.mrb[0].mxu0
      %v7218 = vpop.f32.mrb[0].mxu0
      %v7219 = vadd.f32 0.0, %v7218
      %v7220 = vpop.f32.mrb[0].mxu0
      %7221 = vmatprep.mubr.bf16.mxu0 0
      %7222 = vmatmul.mubr.bf16.gmra.mrb[0].mxu0 %v4594
      %v7223 = vpop.f32.mrb[0].mxu0
      %v7224 = vadd.f32 0.0, %v7223
      %v7225 = vpop.f32.mrb[0].mxu0
      %v7226 = vpop.f32.mrb[0].mxu0
      %v7227 = vadd.f32 0.0, %v7226
      %v7228 = vpop.f32.mrb[0].mxu0
      %7229 = vmatprep.mubr.bf16.mxu0 0
      %7230 = vmatmul.mubr.bf16.gmra.mrb[0].mxu0 %v4597
      %v7231 = vpop.f32.mrb[0].mxu0
      %v7232 = vadd.f32 0.0, %v7231
      %v7233 = vpop.f32.mrb[0].mxu0
      %v7234 = vpop.f32.mrb[0].mxu0
      %v7235 = vadd.f32 0.0, %v7234
      %v7236 = vpop.f32.mrb[0].mxu0
      %7237 = vmatprep.mubr.bf16.mxu0 0
      %7238 = vmatmul.mubr.bf16.gmra.mrb[0].mxu0 %v4600
      %v7239 = vpop.f32.mrb[0].mxu0
      %v7240 = vadd.f32 0.0, %v7239
      %v7241 = vpop.f32.mrb[0].mxu0
      %v7242 = vpop.f32.mrb[0].mxu0
      %v7243 = vadd.f32 0.0, %v7242
      %v7244 = vpop.f32.mrb[0].mxu0
      %7245 = vmatprep.mubr.bf16.mxu0 0
      %7246 = vmatmul.mubr.bf16.gmra.mrb[0].mxu0 %v4603
      %v7247 = vpop.f32.mrb[0].mxu0
      %v7248 = vadd.f32 0.0, %v7247
      %v7249 = vpop.f32.mrb[0].mxu0
      %v7250 = vpop.f32.mrb[0].mxu0
      %v7251 = vadd.f32 0.0, %v7250
      %v7252 = vpop.f32.mrb[0].mxu0
      %7253 = vmatprep.mubr.bf16.mxu0 0
      %7254 = vmatmul.mubr.bf16.gmra.mrb[0].mxu0 %v4606
      %v7255 = vpop.f32.mrb[0].mxu0
      %v7256 = vadd.f32 0.0, %v7255
      %v7257 = vpop.f32.mrb[0].mxu0
      %v7258 = vpop.f32.mrb[0].mxu0
      %v7259 = vadd.f32 0.0, %v7258
      %v7260 = vpop.f32.mrb[0].mxu0
      %7261 = vmatprep.mubr.bf16.mxu0 0
      %7262 = vmatmul.mubr.bf16.gmra.mrb[0].mxu0 %v4609
      %v7263 = vpop.f32.mrb[0].mxu0
      %v7264 = vadd.f32 0.0, %v7263
      %v7265 = vpop.f32.mrb[0].mxu0
      %v7266 = vpop.f32.mrb[0].mxu0
      %v7267 = vadd.f32 0.0, %v7266
      %v7268 = vpop.f32.mrb[0].mxu0
      %7269 = vmatprep.mubr.bf16.mxu0 0
      %7270 = vmatmul.mubr.bf16.gmra.mrb[0].mxu0 %v4612
      %v7271 = vpop.f32.mrb[0].mxu0
      %v7272 = vadd.f32 0.0, %v7271
      %v7273 = vpop.f32.mrb[0].mxu0
      %v7274 = vpop.f32.mrb[0].mxu0
      %v7275 = vadd.f32 0.0, %v7274
      %v7276 = vpop.f32.mrb[0].mxu0
      %7277 = vmatprep.mubr.bf16.mxu0 0
      %7278 = vmatmul.mubr.bf16.gmra.mrb[0].mxu0 %v6741
      %v7279 = vpop.f32.mrb[0].mxu0
      %v7280 = vadd.f32 0.0, %v7279
      %v7281 = vpop.f32.mrb[0].mxu0
      %v7282 = vpop.f32.mrb[0].mxu0
      %v7283 = vadd.f32 0.0, %v7282
      %v7284 = vpop.f32.mrb[0].mxu0
      %7285 = vmatprep.mubr.bf16.mxu0 0
      %7286 = vmatmul.mubr.bf16.gmra.mrb[0].mxu0 %v6744
      %v7287 = vpop.f32.mrb[0].mxu0
      %v7288 = vadd.f32 0.0, %v7287
      %v7289 = vpop.f32.mrb[0].mxu0
      %v7290 = vpop.f32.mrb[0].mxu0
      %v7291 = vadd.f32 0.0, %v7290
      %v7292 = vpop.f32.mrb[0].mxu0
      %7293 = vdwg.mxu0
      %v7294 = vadd.f32 %v6590, %v6784
      %v7295 = vadd.f32 %v6591, %v6787
      %v7296 = vadd.f32 %v6592, %v6792
      %v7297 = vadd.f32 %v6593, %v6795
      %v7298 = vadd.f32 %v6594, %v6800
      %v7299 = vadd.f32 %v6595, %v6803
      %v7300 = vadd.f32 %v6596, %v6808
      %v7301 = vadd.f32 %v6597, %v6811
      %v7302 = vadd.f32 %v6598, %v6816
      %v7303 = vadd.f32 %v6599, %v6819
      %v7304 = vadd.f32 %v6600, %v6824
      %v7305 = vadd.f32 %v6601, %v6827
      %v7306 = vadd.f32 %v6602, %v6832
      %v7307 = vadd.f32 %v6603, %v6835
      %v7308 = vadd.f32 %v6604, %v6840
      %v7309 = vadd.f32 %v6605, %v6843
      %v7310 = vadd.f32 %v6606, %v6848
      %v7311 = vadd.f32 %v6607, %v6851
      %v7312 = vadd.f32 %v6608, %v6856
      %v7313 = vadd.f32 %v6609, %v6859
      %v7314 = vadd.f32 %v6610, %v6864
      %v7315 = vadd.f32 %v6611, %v6867
      %v7316 = vadd.f32 %v6612, %v6872
      %v7317 = vadd.f32 %v6613, %v6875
      %v7318 = vadd.f32 %v6614, %v6880
      %v7319 = vadd.f32 %v6615, %v6883
      %v7320 = vadd.f32 %v6616, %v6888
      %v7321 = vadd.f32 %v6617, %v6891
      %v7322 = vadd.f32 %v6618, %v6896
      %v7323 = vadd.f32 %v6619, %v6899
      %v7324 = vadd.f32 %v6620, %v6904
      %v7325 = vadd.f32 %v6621, %v6907
      %v7326 = vadd.f32 %v6622, %v6912
      %v7327 = vadd.f32 %v6623, %v6915
      %v7328 = vadd.f32 %v6624, %v6920
      %v7329 = vadd.f32 %v6625, %v6923
      %v7330 = vadd.f32 %v6626, %v6928
      %v7331 = vadd.f32 %v6627, %v6931
      %v7332 = vadd.f32 %v6628, %v6936
      %v7333 = vadd.f32 %v6629, %v6939
      %v7334 = vadd.f32 %v6630, %v6944
      %v7335 = vadd.f32 %v6631, %v6947
      %v7336 = vadd.f32 %v6632, %v6952
      %v7337 = vadd.f32 %v6633, %v6955
      %v7338 = vadd.f32 %v6634, %v6960
      %v7339 = vadd.f32 %v6635, %v6963
      %v7340 = vadd.f32 %v6636, %v6968
      %v7341 = vadd.f32 %v6637, %v6971
      %v7342 = vadd.f32 %v6638, %v6976
      %v7343 = vadd.f32 %v6639, %v6979
      %v7344 = vadd.f32 %v6640, %v6984
      %v7345 = vadd.f32 %v6641, %v6987
      %v7346 = vadd.f32 %v6642, %v6992
      %v7347 = vadd.f32 %v6643, %v6995
      %v7348 = vadd.f32 %v6644, %v7000
      %v7349 = vadd.f32 %v6645, %v7003
      %v7350 = vadd.f32 %v6646, %v7008
      %v7351 = vadd.f32 %v6647, %v7011
      %v7352 = vadd.f32 %v6648, %v7016
      %v7353 = vadd.f32 %v6649, %v7019
      %v7354 = vadd.f32 %v6650, %v7024
      %v7355 = vadd.f32 %v6651, %v7027
      %v7356 = vadd.f32 %v6652, %v7032
      %v7357 = vadd.f32 %v6653, %v7035
      %v7358 = vadd.f32 %v6654, %v7040
      %v7359 = vadd.f32 %v6655, %v7043
      %v7360 = vadd.f32 %v6656, %v7048
      %v7361 = vadd.f32 %v6657, %v7051
      %v7362 = vadd.f32 %v6658, %v7056
      %v7363 = vadd.f32 %v6659, %v7059
      %v7364 = vadd.f32 %v6660, %v7064
      %v7365 = vadd.f32 %v6661, %v7067
      %v7366 = vadd.f32 %v6662, %v7072
      %v7367 = vadd.f32 %v6663, %v7075
      %v7368 = vadd.f32 %v6664, %v7080
      %v7369 = vadd.f32 %v6665, %v7083
      %v7370 = vadd.f32 %v6666, %v7088
      %v7371 = vadd.f32 %v6667, %v7091
      %v7372 = vadd.f32 %v6668, %v7096
      %v7373 = vadd.f32 %v6669, %v7099
      %v7374 = vadd.f32 %v6670, %v7104
      %v7375 = vadd.f32 %v6671, %v7107
      %v7376 = vadd.f32 %v6672, %v7112
      %v7377 = vadd.f32 %v6673, %v7115
      %v7378 = vadd.f32 %v6674, %v7120
      %v7379 = vadd.f32 %v6675, %v7123
      %v7380 = vadd.f32 %v6676, %v7128
      %v7381 = vadd.f32 %v6677, %v7131
      %v7382 = vadd.f32 %v6678, %v7136
      %v7383 = vadd.f32 %v6679, %v7139
      %v7384 = vadd.f32 %v6680, %v7144
      %v7385 = vadd.f32 %v6681, %v7147
      %v7386 = vadd.f32 %v6682, %v7152
      %v7387 = vadd.f32 %v6683, %v7155
      %v7388 = vadd.f32 %v6684, %v7160
      %v7389 = vadd.f32 %v6685, %v7163
      %v7390 = vadd.f32 %v6686, %v7168
      %v7391 = vadd.f32 %v6687, %v7171
      %v7392 = vadd.f32 %v6688, %v7176
      %v7393 = vadd.f32 %v6689, %v7179
      %v7394 = vadd.f32 %v6690, %v7184
      %v7395 = vadd.f32 %v6691, %v7187
      %v7396 = vadd.f32 %v6692, %v7192
      %v7397 = vadd.f32 %v6693, %v7195
      %v7398 = vadd.f32 %v6694, %v7200
      %v7399 = vadd.f32 %v6695, %v7203
      %v7400 = vadd.f32 %v6696, %v7208
      %v7401 = vadd.f32 %v6697, %v7211
      %v7402 = vadd.f32 %v6698, %v7216
      %v7403 = vadd.f32 %v6699, %v7219
      %v7404 = vadd.f32 %v6700, %v7224
      %v7405 = vadd.f32 %v6701, %v7227
      %v7406 = vadd.f32 %v6702, %v7232
      %v7407 = vadd.f32 %v6703, %v7235
      %v7408 = vadd.f32 %v6704, %v7240
      %v7409 = vadd.f32 %v6705, %v7243
      %v7410 = vadd.f32 %v6706, %v7248
      %v7411 = vadd.f32 %v6707, %v7251
      %v7412 = vadd.f32 %v6708, %v7256
      %v7413 = vadd.f32 %v6709, %v7259
      %v7414 = vadd.f32 %v6710, %v7264
      %v7415 = vadd.f32 %v6711, %v7267
      %v7416 = vadd.f32 %v6712, %v7272
      %v7417 = vadd.f32 %v6713, %v7275
      %v7418 = vadd.f32 %v6714, %v7280
      %v7419 = vadd.f32 %v6715, %v7283
      %v7420 = vadd.f32 %v6716, %v7288
      %v7421 = vadd.f32 %v6717, %v7291
      %s7422 = scalar_lea.vmem %s1, 12
      %v7423 = vld [vmem:[%s7422] sm:$0x3]
      %v7428 = vunpack.c.l.b16 %v364
      %v7429 = vunpack.c.l.b16 %v365
      %v7430 = vunpack.c.l.b16 %v366
      %v7431 = vunpack.c.l.b16 %v367
      %v7432 = vpack.c.b16 %v7429, %v7428
      %v7433 = vpack.c.b16 %v7431, %v7430
      %v7435 = vsel %vm1975, %v7432, 0
      %v7438 = vsel %vm1975, %v7433, 0
      %v7441 = vsel %vm2168, %v7423, 0
      %7443 = vmatprep.subr.bf16.mxu0 0
      %7444 = vmatpush1.bf16.msra.mxu0 %v7441
      %7445 = vmatprep.subr.bf16.mxu0 0
      %7446 = vmatpush1.bf16.msra.mxu0 0
      %7447 = vmatprep.subr.bf16.mxu0 0
      %7448 = vmatpush1.bf16.msra.mxu0 0
      %7449 = vmatprep.subr.bf16.mxu0 0
      %7450 = vmatpush1.bf16.msra.mxu0 0
      %7451 = vmatprep.subr.bf16.mxu0 0
      %7452 = vmatpush1.bf16.msra.mxu0 0
      %7453 = vmatprep.subr.bf16.mxu0 0
      %7454 = vmatpush1.bf16.msra.mxu0 0
      %7455 = vmatprep.subr.bf16.mxu0 0
      %7456 = vmatpush1.bf16.msra.mxu0 0
      %7457 = vmatprep.subr.bf16.mxu0 0
      %7458 = vmatpush1.bf16.msra.mxu0 0
      %7459 = vmatprep.subr.bf16.mxu0 0
      %7460 = vmatpush1.bf16.msra.mxu0 0
      %7461 = vmatprep.subr.bf16.mxu0 0
      %7462 = vmatpush1.bf16.msra.mxu0 0
      %7463 = vmatprep.subr.bf16.mxu0 0
      %7464 = vmatpush1.bf16.msra.mxu0 0
      %7465 = vmatprep.subr.bf16.mxu0 0
      %7466 = vmatpush1.bf16.msra.mxu0 0
      %7467 = vmatprep.subr.bf16.mxu0 0
      %7468 = vmatpush1.bf16.msra.mxu0 0
      %7469 = vmatprep.subr.bf16.mxu0 0
      %7470 = vmatpush1.bf16.msra.mxu0 0
      %7471 = vmatprep.subr.bf16.mxu0 0
      %7472 = vmatpush1.bf16.msra.mxu0 0
      %7473 = vmatprep.subr.bf16.mxu0 0
      %7474 = vmatpush1.bf16.msra.mxu0 0
      %7475 = vmatprep.mubr.bf16.mxu0 0
      %7476 = vmatmul.mubr.bf16.gmra.mrb[0].mxu0 %v3050
      %v7477 = vpop.f32.mrb[0].mxu0
      %v7478 = vadd.f32 0.0, %v7477
      %v7479 = vpop.f32.mrb[0].mxu0
      %v7480 = vpop.f32.mrb[0].mxu0
      %v7481 = vadd.f32 0.0, %v7480
      %v7482 = vpop.f32.mrb[0].mxu0
      %7483 = vmatprep.mubr.bf16.mxu0 0
      %7484 = vmatmul.mubr.bf16.gmra.mrb[0].mxu0 %v3053
      %v7485 = vpop.f32.mrb[0].mxu0
      %v7486 = vadd.f32 0.0, %v7485
      %v7487 = vpop.f32.mrb[0].mxu0
      %v7488 = vpop.f32.mrb[0].mxu0
      %v7489 = vadd.f32 0.0, %v7488
      %v7490 = vpop.f32.mrb[0].mxu0
      %7491 = vmatprep.mubr.bf16.mxu0 0
      %7492 = vmatmul.mubr.bf16.gmra.mrb[0].mxu0 %v3056
      %v7493 = vpop.f32.mrb[0].mxu0
      %v7494 = vadd.f32 0.0, %v7493
      %v7495 = vpop.f32.mrb[0].mxu0
      %v7496 = vpop.f32.mrb[0].mxu0
      %v7497 = vadd.f32 0.0, %v7496
      %v7498 = vpop.f32.mrb[0].mxu0
      %7499 = vmatprep.mubr.bf16.mxu0 0
      %7500 = vmatmul.mubr.bf16.gmra.mrb[0].mxu0 %v3059
      %v7501 = vpop.f32.mrb[0].mxu0
      %v7502 = vadd.f32 0.0, %v7501
      %v7503 = vpop.f32.mrb[0].mxu0
      %v7504 = vpop.f32.mrb[0].mxu0
      %v7505 = vadd.f32 0.0, %v7504
      %v7506 = vpop.f32.mrb[0].mxu0
      %7507 = vmatprep.mubr.bf16.mxu0 0
      %7508 = vmatmul.mubr.bf16.gmra.mrb[0].mxu0 %v3062
      %v7509 = vpop.f32.mrb[0].mxu0
      %v7510 = vadd.f32 0.0, %v7509
      %v7511 = vpop.f32.mrb[0].mxu0
      %v7512 = vpop.f32.mrb[0].mxu0
      %v7513 = vadd.f32 0.0, %v7512
      %v7514 = vpop.f32.mrb[0].mxu0
      %7515 = vmatprep.mubr.bf16.mxu0 0
      %7516 = vmatmul.mubr.bf16.gmra.mrb[0].mxu0 %v3065
      %v7517 = vpop.f32.mrb[0].mxu0
      %v7518 = vadd.f32 0.0, %v7517
      %v7519 = vpop.f32.mrb[0].mxu0
      %v7520 = vpop.f32.mrb[0].mxu0
      %v7521 = vadd.f32 0.0, %v7520
      %v7522 = vpop.f32.mrb[0].mxu0
      %7523 = vmatprep.mubr.bf16.mxu0 0
      %7524 = vmatmul.mubr.bf16.gmra.mrb[0].mxu0 %v3068
      %v7525 = vpop.f32.mrb[0].mxu0
      %v7526 = vadd.f32 0.0, %v7525
      %v7527 = vpop.f32.mrb[0].mxu0
      %v7528 = vpop.f32.mrb[0].mxu0
      %v7529 = vadd.f32 0.0, %v7528
      %v7530 = vpop.f32.mrb[0].mxu0
      %7531 = vmatprep.mubr.bf16.mxu0 0
      %7532 = vmatmul.mubr.bf16.gmra.mrb[0].mxu0 %v3071
      %v7533 = vpop.f32.mrb[0].mxu0
      %v7534 = vadd.f32 0.0, %v7533
      %v7535 = vpop.f32.mrb[0].mxu0
      %v7536 = vpop.f32.mrb[0].mxu0
      %v7537 = vadd.f32 0.0, %v7536
      %v7538 = vpop.f32.mrb[0].mxu0
      %7539 = vmatprep.mubr.bf16.mxu0 0
      %7540 = vmatmul.mubr.bf16.gmra.mrb[0].mxu0 %v3074
      %v7541 = vpop.f32.mrb[0].mxu0
      %v7542 = vadd.f32 0.0, %v7541
      %v7543 = vpop.f32.mrb[0].mxu0
      %v7544 = vpop.f32.mrb[0].mxu0
      %v7545 = vadd.f32 0.0, %v7544
      %v7546 = vpop.f32.mrb[0].mxu0
      %7547 = vmatprep.mubr.bf16.mxu0 0
      %7548 = vmatmul.mubr.bf16.gmra.mrb[0].mxu0 %v3077
      %v7549 = vpop.f32.mrb[0].mxu0
      %v7550 = vadd.f32 0.0, %v7549
      %v7551 = vpop.f32.mrb[0].mxu0
      %v7552 = vpop.f32.mrb[0].mxu0
      %v7553 = vadd.f32 0.0, %v7552
      %v7554 = vpop.f32.mrb[0].mxu0
      %7555 = vmatprep.mubr.bf16.mxu0 0
      %7556 = vmatmul.mubr.bf16.gmra.mrb[0].mxu0 %v3080
      %v7557 = vpop.f32.mrb[0].mxu0
      %v7558 = vadd.f32 0.0, %v7557
      %v7559 = vpop.f32.mrb[0].mxu0
      %v7560 = vpop.f32.mrb[0].mxu0
      %v7561 = vadd.f32 0.0, %v7560
      %v7562 = vpop.f32.mrb[0].mxu0
      %7563 = vmatprep.mubr.bf16.mxu0 0
      %7564 = vmatmul.mubr.bf16.gmra.mrb[0].mxu0 %v3083
      %v7565 = vpop.f32.mrb[0].mxu0
      %v7566 = vadd.f32 0.0, %v7565
      %v7567 = vpop.f32.mrb[0].mxu0
      %v7568 = vpop.f32.mrb[0].mxu0
      %v7569 = vadd.f32 0.0, %v7568
      %v7570 = vpop.f32.mrb[0].mxu0
      %7571 = vmatprep.mubr.bf16.mxu0 0
      %7572 = vmatmul.mubr.bf16.gmra.mrb[0].mxu0 %v3086
      %v7573 = vpop.f32.mrb[0].mxu0
      %v7574 = vadd.f32 0.0, %v7573
      %v7575 = vpop.f32.mrb[0].mxu0
      %v7576 = vpop.f32.mrb[0].mxu0
      %v7577 = vadd.f32 0.0, %v7576
      %v7578 = vpop.f32.mrb[0].mxu0
      %7579 = vmatprep.mubr.bf16.mxu0 0
      %7580 = vmatmul.mubr.bf16.gmra.mrb[0].mxu0 %v3089
      %v7581 = vpop.f32.mrb[0].mxu0
      %v7582 = vadd.f32 0.0, %v7581
      %v7583 = vpop.f32.mrb[0].mxu0
      %v7584 = vpop.f32.mrb[0].mxu0
      %v7585 = vadd.f32 0.0, %v7584
      %v7586 = vpop.f32.mrb[0].mxu0
      %7587 = vmatprep.mubr.bf16.mxu0 0
      %7588 = vmatmul.mubr.bf16.gmra.mrb[0].mxu0 %v3092
      %v7589 = vpop.f32.mrb[0].mxu0
      %v7590 = vadd.f32 0.0, %v7589
      %v7591 = vpop.f32.mrb[0].mxu0
      %v7592 = vpop.f32.mrb[0].mxu0
      %v7593 = vadd.f32 0.0, %v7592
      %v7594 = vpop.f32.mrb[0].mxu0
      %7595 = vmatprep.mubr.bf16.mxu0 0
      %7596 = vmatmul.mubr.bf16.gmra.mrb[0].mxu0 %v3095
      %v7597 = vpop.f32.mrb[0].mxu0
      %v7598 = vadd.f32 0.0, %v7597
      %v7599 = vpop.f32.mrb[0].mxu0
      %v7600 = vpop.f32.mrb[0].mxu0
      %v7601 = vadd.f32 0.0, %v7600
      %v7602 = vpop.f32.mrb[0].mxu0
      %7603 = vmatprep.mubr.bf16.mxu0 0
      %7604 = vmatmul.mubr.bf16.gmra.mrb[0].mxu0 %v3098
      %v7605 = vpop.f32.mrb[0].mxu0
      %v7606 = vadd.f32 0.0, %v7605
      %v7607 = vpop.f32.mrb[0].mxu0
      %v7608 = vpop.f32.mrb[0].mxu0
      %v7609 = vadd.f32 0.0, %v7608
      %v7610 = vpop.f32.mrb[0].mxu0
      %7611 = vmatprep.mubr.bf16.mxu0 0
      %7612 = vmatmul.mubr.bf16.gmra.mrb[0].mxu0 %v3101
      %v7613 = vpop.f32.mrb[0].mxu0
      %v7614 = vadd.f32 0.0, %v7613
      %v7615 = vpop.f32.mrb[0].mxu0
      %v7616 = vpop.f32.mrb[0].mxu0
      %v7617 = vadd.f32 0.0, %v7616
      %v7618 = vpop.f32.mrb[0].mxu0
      %7619 = vmatprep.mubr.bf16.mxu0 0
      %7620 = vmatmul.mubr.bf16.gmra.mrb[0].mxu0 %v3104
      %v7621 = vpop.f32.mrb[0].mxu0
      %v7622 = vadd.f32 0.0, %v7621
      %v7623 = vpop.f32.mrb[0].mxu0
      %v7624 = vpop.f32.mrb[0].mxu0
      %v7625 = vadd.f32 0.0, %v7624
      %v7626 = vpop.f32.mrb[0].mxu0
      %7627 = vmatprep.mubr.bf16.mxu0 0
      %7628 = vmatmul.mubr.bf16.gmra.mrb[0].mxu0 %v3107
      %v7629 = vpop.f32.mrb[0].mxu0
      %v7630 = vadd.f32 0.0, %v7629
      %v7631 = vpop.f32.mrb[0].mxu0
      %v7632 = vpop.f32.mrb[0].mxu0
      %v7633 = vadd.f32 0.0, %v7632
      %v7634 = vpop.f32.mrb[0].mxu0
      %7635 = vmatprep.mubr.bf16.mxu0 0
      %7636 = vmatmul.mubr.bf16.gmra.mrb[0].mxu0 %v3110
      %v7637 = vpop.f32.mrb[0].mxu0
      %v7638 = vadd.f32 0.0, %v7637
      %v7639 = vpop.f32.mrb[0].mxu0
      %v7640 = vpop.f32.mrb[0].mxu0
      %v7641 = vadd.f32 0.0, %v7640
      %v7642 = vpop.f32.mrb[0].mxu0
      %7643 = vmatprep.mubr.bf16.mxu0 0
      %7644 = vmatmul.mubr.bf16.gmra.mrb[0].mxu0 %v3113
      %v7645 = vpop.f32.mrb[0].mxu0
      %v7646 = vadd.f32 0.0, %v7645
      %v7647 = vpop.f32.mrb[0].mxu0
      %v7648 = vpop.f32.mrb[0].mxu0
      %v7649 = vadd.f32 0.0, %v7648
      %v7650 = vpop.f32.mrb[0].mxu0
      %7651 = vmatprep.mubr.bf16.mxu0 0
      %7652 = vmatmul.mubr.bf16.gmra.mrb[0].mxu0 %v3116
      %v7653 = vpop.f32.mrb[0].mxu0
      %v7654 = vadd.f32 0.0, %v7653
      %v7655 = vpop.f32.mrb[0].mxu0
      %v7656 = vpop.f32.mrb[0].mxu0
      %v7657 = vadd.f32 0.0, %v7656
      %v7658 = vpop.f32.mrb[0].mxu0
      %7659 = vmatprep.mubr.bf16.mxu0 0
      %7660 = vmatmul.mubr.bf16.gmra.mrb[0].mxu0 %v3119
      %v7661 = vpop.f32.mrb[0].mxu0
      %v7662 = vadd.f32 0.0, %v7661
      %v7663 = vpop.f32.mrb[0].mxu0
      %v7664 = vpop.f32.mrb[0].mxu0
      %v7665 = vadd.f32 0.0, %v7664
      %v7666 = vpop.f32.mrb[0].mxu0
      %7667 = vmatprep.mubr.bf16.mxu0 0
      %7668 = vmatmul.mubr.bf16.gmra.mrb[0].mxu0 %v3122
      %v7669 = vpop.f32.mrb[0].mxu0
      %v7670 = vadd.f32 0.0, %v7669
      %v7671 = vpop.f32.mrb[0].mxu0
      %v7672 = vpop.f32.mrb[0].mxu0
      %v7673 = vadd.f32 0.0, %v7672
      %v7674 = vpop.f32.mrb[0].mxu0
      %7675 = vmatprep.mubr.bf16.mxu0 0
      %7676 = vmatmul.mubr.bf16.gmra.mrb[0].mxu0 %v3125
      %v7677 = vpop.f32.mrb[0].mxu0
      %v7678 = vadd.f32 0.0, %v7677
      %v7679 = vpop.f32.mrb[0].mxu0
      %v7680 = vpop.f32.mrb[0].mxu0
      %v7681 = vadd.f32 0.0, %v7680
      %v7682 = vpop.f32.mrb[0].mxu0
      %7683 = vmatprep.mubr.bf16.mxu0 0
      %7684 = vmatmul.mubr.bf16.gmra.mrb[0].mxu0 %v3128
      %v7685 = vpop.f32.mrb[0].mxu0
      %v7686 = vadd.f32 0.0, %v7685
      %v7687 = vpop.f32.mrb[0].mxu0
      %v7688 = vpop.f32.mrb[0].mxu0
      %v7689 = vadd.f32 0.0, %v7688
      %v7690 = vpop.f32.mrb[0].mxu0
      %7691 = vmatprep.mubr.bf16.mxu0 0
      %7692 = vmatmul.mubr.bf16.gmra.mrb[0].mxu0 %v3131
      %v7693 = vpop.f32.mrb[0].mxu0
      %v7694 = vadd.f32 0.0, %v7693
      %v7695 = vpop.f32.mrb[0].mxu0
      %v7696 = vpop.f32.mrb[0].mxu0
      %v7697 = vadd.f32 0.0, %v7696
      %v7698 = vpop.f32.mrb[0].mxu0
      %7699 = vmatprep.mubr.bf16.mxu0 0
      %7700 = vmatmul.mubr.bf16.gmra.mrb[0].mxu0 %v3134
      %v7701 = vpop.f32.mrb[0].mxu0
      %v7702 = vadd.f32 0.0, %v7701
      %v7703 = vpop.f32.mrb[0].mxu0
      %v7704 = vpop.f32.mrb[0].mxu0
      %v7705 = vadd.f32 0.0, %v7704
      %v7706 = vpop.f32.mrb[0].mxu0
      %7707 = vmatprep.mubr.bf16.mxu0 0
      %7708 = vmatmul.mubr.bf16.gmra.mrb[0].mxu0 %v3137
      %v7709 = vpop.f32.mrb[0].mxu0
      %v7710 = vadd.f32 0.0, %v7709
      %v7711 = vpop.f32.mrb[0].mxu0
      %v7712 = vpop.f32.mrb[0].mxu0
      %v7713 = vadd.f32 0.0, %v7712
      %v7714 = vpop.f32.mrb[0].mxu0
      %7715 = vmatprep.mubr.bf16.mxu0 0
      %7716 = vmatmul.mubr.bf16.gmra.mrb[0].mxu0 %v3140
      %v7717 = vpop.f32.mrb[0].mxu0
      %v7718 = vadd.f32 0.0, %v7717
      %v7719 = vpop.f32.mrb[0].mxu0
      %v7720 = vpop.f32.mrb[0].mxu0
      %v7721 = vadd.f32 0.0, %v7720
      %v7722 = vpop.f32.mrb[0].mxu0
      %7723 = vmatprep.mubr.bf16.mxu0 0
      %7724 = vmatmul.mubr.bf16.gmra.mrb[0].mxu0 %v3143
      %v7725 = vpop.f32.mrb[0].mxu0
      %v7726 = vadd.f32 0.0, %v7725
      %v7727 = vpop.f32.mrb[0].mxu0
      %v7728 = vpop.f32.mrb[0].mxu0
      %v7729 = vadd.f32 0.0, %v7728
      %v7730 = vpop.f32.mrb[0].mxu0
      %7731 = vmatprep.mubr.bf16.mxu0 0
      %7732 = vmatmul.mubr.bf16.gmra.mrb[0].mxu0 %v3146
      %v7733 = vpop.f32.mrb[0].mxu0
      %v7734 = vadd.f32 0.0, %v7733
      %v7735 = vpop.f32.mrb[0].mxu0
      %v7736 = vpop.f32.mrb[0].mxu0
      %v7737 = vadd.f32 0.0, %v7736
      %v7738 = vpop.f32.mrb[0].mxu0
      %7739 = vmatprep.mubr.bf16.mxu0 0
      %7740 = vmatmul.mubr.bf16.gmra.mrb[0].mxu0 %v3149
      %v7741 = vpop.f32.mrb[0].mxu0
      %v7742 = vadd.f32 0.0, %v7741
      %v7743 = vpop.f32.mrb[0].mxu0
      %v7744 = vpop.f32.mrb[0].mxu0
      %v7745 = vadd.f32 0.0, %v7744
      %v7746 = vpop.f32.mrb[0].mxu0
      %7747 = vmatprep.mubr.bf16.mxu0 0
      %7748 = vmatmul.mubr.bf16.gmra.mrb[0].mxu0 %v3152
      %v7749 = vpop.f32.mrb[0].mxu0
      %v7750 = vadd.f32 0.0, %v7749
      %v7751 = vpop.f32.mrb[0].mxu0
      %v7752 = vpop.f32.mrb[0].mxu0
      %v7753 = vadd.f32 0.0, %v7752
      %v7754 = vpop.f32.mrb[0].mxu0
      %7755 = vmatprep.mubr.bf16.mxu0 0
      %7756 = vmatmul.mubr.bf16.gmra.mrb[0].mxu0 %v3155
      %v7757 = vpop.f32.mrb[0].mxu0
      %v7758 = vadd.f32 0.0, %v7757
      %v7759 = vpop.f32.mrb[0].mxu0
      %v7760 = vpop.f32.mrb[0].mxu0
      %v7761 = vadd.f32 0.0, %v7760
      %v7762 = vpop.f32.mrb[0].mxu0
      %7763 = vmatprep.mubr.bf16.mxu0 0
      %7764 = vmatmul.mubr.bf16.gmra.mrb[0].mxu0 %v3158
      %v7765 = vpop.f32.mrb[0].mxu0
      %v7766 = vadd.f32 0.0, %v7765
      %v7767 = vpop.f32.mrb[0].mxu0
      %v7768 = vpop.f32.mrb[0].mxu0
      %v7769 = vadd.f32 0.0, %v7768
      %v7770 = vpop.f32.mrb[0].mxu0
      %7771 = vmatprep.mubr.bf16.mxu0 0
      %7772 = vmatmul.mubr.bf16.gmra.mrb[0].mxu0 %v3161
      %v7773 = vpop.f32.mrb[0].mxu0
      %v7774 = vadd.f32 0.0, %v7773
      %v7775 = vpop.f32.mrb[0].mxu0
      %v7776 = vpop.f32.mrb[0].mxu0
      %v7777 = vadd.f32 0.0, %v7776
      %v7778 = vpop.f32.mrb[0].mxu0
      %7779 = vmatprep.mubr.bf16.mxu0 0
      %7780 = vmatmul.mubr.bf16.gmra.mrb[0].mxu0 %v3164
      %v7781 = vpop.f32.mrb[0].mxu0
      %v7782 = vadd.f32 0.0, %v7781
      %v7783 = vpop.f32.mrb[0].mxu0
      %v7784 = vpop.f32.mrb[0].mxu0
      %v7785 = vadd.f32 0.0, %v7784
      %v7786 = vpop.f32.mrb[0].mxu0
      %7787 = vmatprep.mubr.bf16.mxu0 0
      %7788 = vmatmul.mubr.bf16.gmra.mrb[0].mxu0 %v3167
      %v7789 = vpop.f32.mrb[0].mxu0
      %v7790 = vadd.f32 0.0, %v7789
      %v7791 = vpop.f32.mrb[0].mxu0
      %v7792 = vpop.f32.mrb[0].mxu0
      %v7793 = vadd.f32 0.0, %v7792
      %v7794 = vpop.f32.mrb[0].mxu0
      %7795 = vmatprep.mubr.bf16.mxu0 0
      %7796 = vmatmul.mubr.bf16.gmra.mrb[0].mxu0 %v3170
      %v7797 = vpop.f32.mrb[0].mxu0
      %v7798 = vadd.f32 0.0, %v7797
      %v7799 = vpop.f32.mrb[0].mxu0
      %v7800 = vpop.f32.mrb[0].mxu0
      %v7801 = vadd.f32 0.0, %v7800
      %v7802 = vpop.f32.mrb[0].mxu0
      %7803 = vmatprep.mubr.bf16.mxu0 0
      %7804 = vmatmul.mubr.bf16.gmra.mrb[0].mxu0 %v3173
      %v7805 = vpop.f32.mrb[0].mxu0
      %v7806 = vadd.f32 0.0, %v7805
      %v7807 = vpop.f32.mrb[0].mxu0
      %v7808 = vpop.f32.mrb[0].mxu0
      %v7809 = vadd.f32 0.0, %v7808
      %v7810 = vpop.f32.mrb[0].mxu0
      %7811 = vmatprep.mubr.bf16.mxu0 0
      %7812 = vmatmul.mubr.bf16.gmra.mrb[0].mxu0 %v3176
      %v7813 = vpop.f32.mrb[0].mxu0
      %v7814 = vadd.f32 0.0, %v7813
      %v7815 = vpop.f32.mrb[0].mxu0
      %v7816 = vpop.f32.mrb[0].mxu0
      %v7817 = vadd.f32 0.0, %v7816
      %v7818 = vpop.f32.mrb[0].mxu0
      %7819 = vmatprep.mubr.bf16.mxu0 0
      %7820 = vmatmul.mubr.bf16.gmra.mrb[0].mxu0 %v3179
      %v7821 = vpop.f32.mrb[0].mxu0
      %v7822 = vadd.f32 0.0, %v7821
      %v7823 = vpop.f32.mrb[0].mxu0
      %v7824 = vpop.f32.mrb[0].mxu0
      %v7825 = vadd.f32 0.0, %v7824
      %v7826 = vpop.f32.mrb[0].mxu0
      %7827 = vmatprep.mubr.bf16.mxu0 0
      %7828 = vmatmul.mubr.bf16.gmra.mrb[0].mxu0 %v3182
      %v7829 = vpop.f32.mrb[0].mxu0
      %v7830 = vadd.f32 0.0, %v7829
      %v7831 = vpop.f32.mrb[0].mxu0
      %v7832 = vpop.f32.mrb[0].mxu0
      %v7833 = vadd.f32 0.0, %v7832
      %v7834 = vpop.f32.mrb[0].mxu0
      %7835 = vmatprep.mubr.bf16.mxu0 0
      %7836 = vmatmul.mubr.bf16.gmra.mrb[0].mxu0 %v3185
      %v7837 = vpop.f32.mrb[0].mxu0
      %v7838 = vadd.f32 0.0, %v7837
      %v7839 = vpop.f32.mrb[0].mxu0
      %v7840 = vpop.f32.mrb[0].mxu0
      %v7841 = vadd.f32 0.0, %v7840
      %v7842 = vpop.f32.mrb[0].mxu0
      %7843 = vmatprep.mubr.bf16.mxu0 0
      %7844 = vmatmul.mubr.bf16.gmra.mrb[0].mxu0 %v3188
      %v7845 = vpop.f32.mrb[0].mxu0
      %v7846 = vadd.f32 0.0, %v7845
      %v7847 = vpop.f32.mrb[0].mxu0
      %v7848 = vpop.f32.mrb[0].mxu0
      %v7849 = vadd.f32 0.0, %v7848
      %v7850 = vpop.f32.mrb[0].mxu0
      %7851 = vmatprep.mubr.bf16.mxu0 0
      %7852 = vmatmul.mubr.bf16.gmra.mrb[0].mxu0 %v3191
      %v7853 = vpop.f32.mrb[0].mxu0
      %v7854 = vadd.f32 0.0, %v7853
      %v7855 = vpop.f32.mrb[0].mxu0
      %v7856 = vpop.f32.mrb[0].mxu0
      %v7857 = vadd.f32 0.0, %v7856
      %v7858 = vpop.f32.mrb[0].mxu0
      %7859 = vmatprep.mubr.bf16.mxu0 0
      %7860 = vmatmul.mubr.bf16.gmra.mrb[0].mxu0 %v3194
      %v7861 = vpop.f32.mrb[0].mxu0
      %v7862 = vadd.f32 0.0, %v7861
      %v7863 = vpop.f32.mrb[0].mxu0
      %v7864 = vpop.f32.mrb[0].mxu0
      %v7865 = vadd.f32 0.0, %v7864
      %v7866 = vpop.f32.mrb[0].mxu0
      %7867 = vmatprep.mubr.bf16.mxu0 0
      %7868 = vmatmul.mubr.bf16.gmra.mrb[0].mxu0 %v3197
      %v7869 = vpop.f32.mrb[0].mxu0
      %v7870 = vadd.f32 0.0, %v7869
      %v7871 = vpop.f32.mrb[0].mxu0
      %v7872 = vpop.f32.mrb[0].mxu0
      %v7873 = vadd.f32 0.0, %v7872
      %v7874 = vpop.f32.mrb[0].mxu0
      %7875 = vmatprep.mubr.bf16.mxu0 0
      %7876 = vmatmul.mubr.bf16.gmra.mrb[0].mxu0 %v3200
      %v7877 = vpop.f32.mrb[0].mxu0
      %v7878 = vadd.f32 0.0, %v7877
      %v7879 = vpop.f32.mrb[0].mxu0
      %v7880 = vpop.f32.mrb[0].mxu0
      %v7881 = vadd.f32 0.0, %v7880
      %v7882 = vpop.f32.mrb[0].mxu0
      %7883 = vmatprep.mubr.bf16.mxu0 0
      %7884 = vmatmul.mubr.bf16.gmra.mrb[0].mxu0 %v3203
      %v7885 = vpop.f32.mrb[0].mxu0
      %v7886 = vadd.f32 0.0, %v7885
      %v7887 = vpop.f32.mrb[0].mxu0
      %v7888 = vpop.f32.mrb[0].mxu0
      %v7889 = vadd.f32 0.0, %v7888
      %v7890 = vpop.f32.mrb[0].mxu0
      %7891 = vmatprep.mubr.bf16.mxu0 0
      %7892 = vmatmul.mubr.bf16.gmra.mrb[0].mxu0 %v3206
      %v7893 = vpop.f32.mrb[0].mxu0
      %v7894 = vadd.f32 0.0, %v7893
      %v7895 = vpop.f32.mrb[0].mxu0
      %v7896 = vpop.f32.mrb[0].mxu0
      %v7897 = vadd.f32 0.0, %v7896
      %v7898 = vpop.f32.mrb[0].mxu0
      %7899 = vmatprep.mubr.bf16.mxu0 0
      %7900 = vmatmul.mubr.bf16.gmra.mrb[0].mxu0 %v3209
      %v7901 = vpop.f32.mrb[0].mxu0
      %v7902 = vadd.f32 0.0, %v7901
      %v7903 = vpop.f32.mrb[0].mxu0
      %v7904 = vpop.f32.mrb[0].mxu0
      %v7905 = vadd.f32 0.0, %v7904
      %v7906 = vpop.f32.mrb[0].mxu0
      %7907 = vmatprep.mubr.bf16.mxu0 0
      %7908 = vmatmul.mubr.bf16.gmra.mrb[0].mxu0 %v3212
      %v7909 = vpop.f32.mrb[0].mxu0
      %v7910 = vadd.f32 0.0, %v7909
      %v7911 = vpop.f32.mrb[0].mxu0
      %v7912 = vpop.f32.mrb[0].mxu0
      %v7913 = vadd.f32 0.0, %v7912
      %v7914 = vpop.f32.mrb[0].mxu0
      %7915 = vmatprep.mubr.bf16.mxu0 0
      %7916 = vmatmul.mubr.bf16.gmra.mrb[0].mxu0 %v3215
      %v7917 = vpop.f32.mrb[0].mxu0
      %v7918 = vadd.f32 0.0, %v7917
      %v7919 = vpop.f32.mrb[0].mxu0
      %v7920 = vpop.f32.mrb[0].mxu0
      %v7921 = vadd.f32 0.0, %v7920
      %v7922 = vpop.f32.mrb[0].mxu0
      %7923 = vmatprep.mubr.bf16.mxu0 0
      %7924 = vmatmul.mubr.bf16.gmra.mrb[0].mxu0 %v3218
      %v7925 = vpop.f32.mrb[0].mxu0
      %v7926 = vadd.f32 0.0, %v7925
      %v7927 = vpop.f32.mrb[0].mxu0
      %v7928 = vpop.f32.mrb[0].mxu0
      %v7929 = vadd.f32 0.0, %v7928
      %v7930 = vpop.f32.mrb[0].mxu0
      %7931 = vmatprep.mubr.bf16.mxu0 0
      %7932 = vmatmul.mubr.bf16.gmra.mrb[0].mxu0 %v3221
      %v7933 = vpop.f32.mrb[0].mxu0
      %v7934 = vadd.f32 0.0, %v7933
      %v7935 = vpop.f32.mrb[0].mxu0
      %v7936 = vpop.f32.mrb[0].mxu0
      %v7937 = vadd.f32 0.0, %v7936
      %v7938 = vpop.f32.mrb[0].mxu0
      %7939 = vmatprep.mubr.bf16.mxu0 0
      %7940 = vmatmul.mubr.bf16.gmra.mrb[0].mxu0 %v3224
      %v7941 = vpop.f32.mrb[0].mxu0
      %v7942 = vadd.f32 0.0, %v7941
      %v7943 = vpop.f32.mrb[0].mxu0
      %v7944 = vpop.f32.mrb[0].mxu0
      %v7945 = vadd.f32 0.0, %v7944
      %v7946 = vpop.f32.mrb[0].mxu0
      %7947 = vmatprep.mubr.bf16.mxu0 0
      %7948 = vmatmul.mubr.bf16.gmra.mrb[0].mxu0 %v3227
      %v7949 = vpop.f32.mrb[0].mxu0
      %v7950 = vadd.f32 0.0, %v7949
      %v7951 = vpop.f32.mrb[0].mxu0
      %v7952 = vpop.f32.mrb[0].mxu0
      %v7953 = vadd.f32 0.0, %v7952
      %v7954 = vpop.f32.mrb[0].mxu0
      %7955 = vmatprep.mubr.bf16.mxu0 0
      %7956 = vmatmul.mubr.bf16.gmra.mrb[0].mxu0 %v5303
      %v7957 = vpop.f32.mrb[0].mxu0
      %v7958 = vadd.f32 0.0, %v7957
      %v7959 = vpop.f32.mrb[0].mxu0
      %v7960 = vpop.f32.mrb[0].mxu0
      %v7961 = vadd.f32 0.0, %v7960
      %v7962 = vpop.f32.mrb[0].mxu0
      %7963 = vmatprep.mubr.bf16.mxu0 0
      %7964 = vmatmul.mubr.bf16.gmra.mrb[0].mxu0 %v5306
      %v7965 = vpop.f32.mrb[0].mxu0
      %v7966 = vadd.f32 0.0, %v7965
      %v7967 = vpop.f32.mrb[0].mxu0
      %v7968 = vpop.f32.mrb[0].mxu0
      %v7969 = vadd.f32 0.0, %v7968
      %v7970 = vpop.f32.mrb[0].mxu0
      %7971 = vmatprep.mubr.bf16.mxu0 0
      %7972 = vmatmul.mubr.bf16.gmra.mrb[0].mxu0 %v7435
      %v7973 = vpop.f32.mrb[0].mxu0
      %v7974 = vadd.f32 0.0, %v7973
      %v7975 = vpop.f32.mrb[0].mxu0
      %v7976 = vpop.f32.mrb[0].mxu0
      %v7977 = vadd.f32 0.0, %v7976
      %v7978 = vpop.f32.mrb[0].mxu0
      %7979 = vmatprep.mubr.bf16.mxu0 0
      %7980 = vmatmul.mubr.bf16.gmra.mrb[0].mxu0 %v7438
      %v7981 = vpop.f32.mrb[0].mxu0
      %v7982 = vadd.f32 0.0, %v7981
      %v7983 = vpop.f32.mrb[0].mxu0
      %v7984 = vpop.f32.mrb[0].mxu0
      %v7985 = vadd.f32 0.0, %v7984
      %v7986 = vpop.f32.mrb[0].mxu0
      %7987 = vdwg.mxu0
      %v7988 = vadd.f32 %v7294, %v7478
      %v7989 = vadd.f32 %v7295, %v7481
      %v7990 = vadd.f32 %v7296, %v7486
      %v7991 = vadd.f32 %v7297, %v7489
      %v7992 = vadd.f32 %v7298, %v7494
      %v7993 = vadd.f32 %v7299, %v7497
      %v7994 = vadd.f32 %v7300, %v7502
      %v7995 = vadd.f32 %v7301, %v7505
      %v7996 = vadd.f32 %v7302, %v7510
      %v7997 = vadd.f32 %v7303, %v7513
      %v7998 = vadd.f32 %v7304, %v7518
      %v7999 = vadd.f32 %v7305, %v7521
      %v8000 = vadd.f32 %v7306, %v7526
      %v8001 = vadd.f32 %v7307, %v7529
      %v8002 = vadd.f32 %v7308, %v7534
      %v8003 = vadd.f32 %v7309, %v7537
      %v8004 = vadd.f32 %v7310, %v7542
      %v8005 = vadd.f32 %v7311, %v7545
      %v8006 = vadd.f32 %v7312, %v7550
      %v8007 = vadd.f32 %v7313, %v7553
      %v8008 = vadd.f32 %v7314, %v7558
      %v8009 = vadd.f32 %v7315, %v7561
      %v8010 = vadd.f32 %v7316, %v7566
      %v8011 = vadd.f32 %v7317, %v7569
      %v8012 = vadd.f32 %v7318, %v7574
      %v8013 = vadd.f32 %v7319, %v7577
      %v8014 = vadd.f32 %v7320, %v7582
      %v8015 = vadd.f32 %v7321, %v7585
      %v8016 = vadd.f32 %v7322, %v7590
      %v8017 = vadd.f32 %v7323, %v7593
      %v8018 = vadd.f32 %v7324, %v7598
      %v8019 = vadd.f32 %v7325, %v7601
      %v8020 = vadd.f32 %v7326, %v7606
      %v8021 = vadd.f32 %v7327, %v7609
      %v8022 = vadd.f32 %v7328, %v7614
      %v8023 = vadd.f32 %v7329, %v7617
      %v8024 = vadd.f32 %v7330, %v7622
      %v8025 = vadd.f32 %v7331, %v7625
      %v8026 = vadd.f32 %v7332, %v7630
      %v8027 = vadd.f32 %v7333, %v7633
      %v8028 = vadd.f32 %v7334, %v7638
      %v8029 = vadd.f32 %v7335, %v7641
      %v8030 = vadd.f32 %v7336, %v7646
      %v8031 = vadd.f32 %v7337, %v7649
      %v8032 = vadd.f32 %v7338, %v7654
      %v8033 = vadd.f32 %v7339, %v7657
      %v8034 = vadd.f32 %v7340, %v7662
      %v8035 = vadd.f32 %v7341, %v7665
      %v8036 = vadd.f32 %v7342, %v7670
      %v8037 = vadd.f32 %v7343, %v7673
      %v8038 = vadd.f32 %v7344, %v7678
      %v8039 = vadd.f32 %v7345, %v7681
      %v8040 = vadd.f32 %v7346, %v7686
      %v8041 = vadd.f32 %v7347, %v7689
      %v8042 = vadd.f32 %v7348, %v7694
      %v8043 = vadd.f32 %v7349, %v7697
      %v8044 = vadd.f32 %v7350, %v7702
      %v8045 = vadd.f32 %v7351, %v7705
      %v8046 = vadd.f32 %v7352, %v7710
      %v8047 = vadd.f32 %v7353, %v7713
      %v8048 = vadd.f32 %v7354, %v7718
      %v8049 = vadd.f32 %v7355, %v7721
      %v8050 = vadd.f32 %v7356, %v7726
      %v8051 = vadd.f32 %v7357, %v7729
      %v8052 = vadd.f32 %v7358, %v7734
      %v8053 = vadd.f32 %v7359, %v7737
      %v8054 = vadd.f32 %v7360, %v7742
      %v8055 = vadd.f32 %v7361, %v7745
      %v8056 = vadd.f32 %v7362, %v7750
      %v8057 = vadd.f32 %v7363, %v7753
      %v8058 = vadd.f32 %v7364, %v7758
      %v8059 = vadd.f32 %v7365, %v7761
      %v8060 = vadd.f32 %v7366, %v7766
      %v8061 = vadd.f32 %v7367, %v7769
      %v8062 = vadd.f32 %v7368, %v7774
      %v8063 = vadd.f32 %v7369, %v7777
      %v8064 = vadd.f32 %v7370, %v7782
      %v8065 = vadd.f32 %v7371, %v7785
      %v8066 = vadd.f32 %v7372, %v7790
      %v8067 = vadd.f32 %v7373, %v7793
      %v8068 = vadd.f32 %v7374, %v7798
      %v8069 = vadd.f32 %v7375, %v7801
      %v8070 = vadd.f32 %v7376, %v7806
      %v8071 = vadd.f32 %v7377, %v7809
      %v8072 = vadd.f32 %v7378, %v7814
      %v8073 = vadd.f32 %v7379, %v7817
      %v8074 = vadd.f32 %v7380, %v7822
      %v8075 = vadd.f32 %v7381, %v7825
      %v8076 = vadd.f32 %v7382, %v7830
      %v8077 = vadd.f32 %v7383, %v7833
      %v8078 = vadd.f32 %v7384, %v7838
      %v8079 = vadd.f32 %v7385, %v7841
      %v8080 = vadd.f32 %v7386, %v7846
      %v8081 = vadd.f32 %v7387, %v7849
      %v8082 = vadd.f32 %v7388, %v7854
      %v8083 = vadd.f32 %v7389, %v7857
      %v8084 = vadd.f32 %v7390, %v7862
      %v8085 = vadd.f32 %v7391, %v7865
      %v8086 = vadd.f32 %v7392, %v7870
      %v8087 = vadd.f32 %v7393, %v7873
      %v8088 = vadd.f32 %v7394, %v7878
      %v8089 = vadd.f32 %v7395, %v7881
      %v8090 = vadd.f32 %v7396, %v7886
      %v8091 = vadd.f32 %v7397, %v7889
      %v8092 = vadd.f32 %v7398, %v7894
      %v8093 = vadd.f32 %v7399, %v7897
      %v8094 = vadd.f32 %v7400, %v7902
      %v8095 = vadd.f32 %v7401, %v7905
      %v8096 = vadd.f32 %v7402, %v7910
      %v8097 = vadd.f32 %v7403, %v7913
      %v8098 = vadd.f32 %v7404, %v7918
      %v8099 = vadd.f32 %v7405, %v7921
      %v8100 = vadd.f32 %v7406, %v7926
      %v8101 = vadd.f32 %v7407, %v7929
      %v8102 = vadd.f32 %v7408, %v7934
      %v8103 = vadd.f32 %v7409, %v7937
      %v8104 = vadd.f32 %v7410, %v7942
      %v8105 = vadd.f32 %v7411, %v7945
      %v8106 = vadd.f32 %v7412, %v7950
      %v8107 = vadd.f32 %v7413, %v7953
      %v8108 = vadd.f32 %v7414, %v7958
      %v8109 = vadd.f32 %v7415, %v7961
      %v8110 = vadd.f32 %v7416, %v7966
      %v8111 = vadd.f32 %v7417, %v7969
      %v8112 = vadd.f32 %v7418, %v7974
      %v8113 = vadd.f32 %v7419, %v7977
      %v8114 = vadd.f32 %v7420, %v7982
      %v8115 = vadd.f32 %v7421, %v7985
      %v8117 = vshrl.u32 %v364, 16
      %v8119 = vrot.slane %v8117, 4
      %v8120 = vshll.u32 %v364, 16
      %v8122 = vrot.slane %v8120, 5
      %v8123 = vor.u32 %v8119, %v8122
      %v8124 = vrot.slane %v8123, 4
      %v8126 = vshll.u32 %v365, 16
      %v8128 = vrot.slane %v8126, 5
      %v8129 = vsel %vm372, %v8124, %v8128
      %v8130 = vshrl.u32 %v365, 16
      %v8132 = vrot.slane %v8130, 4
      %v8133 = vor.u32 %v8132, %v8128
      %v8134 = vrot.slane %v8133, 4
      %v8136 = vshll.u32 %v366, 16
      %v8138 = vrot.slane %v8136, 5
      %v8139 = vsel %vm372, %v8134, %v8138
      %v8140 = vshrl.u32 %v366, 16
      %v8142 = vrot.slane %v8140, 4
      %v8143 = vor.u32 %v8142, %v8138
      %v8144 = vrot.slane %v8143, 4
      %v8146 = vshll.u32 %v367, 16
      %v8148 = vrot.slane %v8146, 5
      %v8149 = vsel %vm372, %v8144, %v8148
      %v8150 = vshrl.u32 %v367, 16
      %v8152 = vrot.slane %v8150, 4
      %v8153 = vor.u32 %v8152, %v8148
      %v8154 = vrot.slane %v8153, 4
      %v8156 = vshll.u32 %v368, 16
      %v8158 = vrot.slane %v8156, 5
      %v8159 = vsel %vm372, %v8154, %v8158
      %s8160 = scalar_lea.vmem %s1, 14
      %v8161 = vld [vmem:[%s8160] sm:$0x3]
      %v8162 = vunpack.c.l.b16 %v8129
      %v8163 = vunpack.c.l.b16 %v8139
      %v8164 = vunpack.c.l.b16 %v8149
      %v8165 = vunpack.c.l.b16 %v8159
      %v8166 = vpack.c.b16 %v8163, %v8162
      %v8167 = vpack.c.b16 %v8165, %v8164
      %v8169 = vsel %vm1975, %v8166, 0
      %v8172 = vsel %vm1975, %v8167, 0
      %v8175 = vsel %vm2168, %v8161, 0
      %8177 = vmatprep.subr.bf16.mxu0 0
      %8178 = vmatpush1.bf16.msra.mxu0 %v8175
      %8179 = vmatprep.subr.bf16.mxu0 0
      %8180 = vmatpush1.bf16.msra.mxu0 0
      %8181 = vmatprep.subr.bf16.mxu0 0
      %8182 = vmatpush1.bf16.msra.mxu0 0
      %8183 = vmatprep.subr.bf16.mxu0 0
      %8184 = vmatpush1.bf16.msra.mxu0 0
      %8185 = vmatprep.subr.bf16.mxu0 0
      %8186 = vmatpush1.bf16.msra.mxu0 0
      %8187 = vmatprep.subr.bf16.mxu0 0
      %8188 = vmatpush1.bf16.msra.mxu0 0
      %8189 = vmatprep.subr.bf16.mxu0 0
      %8190 = vmatpush1.bf16.msra.mxu0 0
      %8191 = vmatprep.subr.bf16.mxu0 0
      %8192 = vmatpush1.bf16.msra.mxu0 0
      %8193 = vmatprep.subr.bf16.mxu0 0
      %8194 = vmatpush1.bf16.msra.mxu0 0
      %8195 = vmatprep.subr.bf16.mxu0 0
      %8196 = vmatpush1.bf16.msra.mxu0 0
      %8197 = vmatprep.subr.bf16.mxu0 0
      %8198 = vmatpush1.bf16.msra.mxu0 0
      %8199 = vmatprep.subr.bf16.mxu0 0
      %8200 = vmatpush1.bf16.msra.mxu0 0
      %8201 = vmatprep.subr.bf16.mxu0 0
      %8202 = vmatpush1.bf16.msra.mxu0 0
      %8203 = vmatprep.subr.bf16.mxu0 0
      %8204 = vmatpush1.bf16.msra.mxu0 0
      %8205 = vmatprep.subr.bf16.mxu0 0
      %8206 = vmatpush1.bf16.msra.mxu0 0
      %8207 = vmatprep.subr.bf16.mxu0 0
      %8208 = vmatpush1.bf16.msra.mxu0 0
      %8209 = vmatprep.mubr.bf16.mxu0 0
      %8210 = vmatmul.mubr.bf16.gmra.mrb[0].mxu0 %v1989
      %v8211 = vpop.f32.mrb[0].mxu0
      %v8212 = vadd.f32 0.0, %v8211
      %v8213 = vpop.f32.mrb[0].mxu0
      %v8214 = vpop.f32.mrb[0].mxu0
      %v8215 = vadd.f32 0.0, %v8214
      %v8216 = vpop.f32.mrb[0].mxu0
      %8217 = vmatprep.mubr.bf16.mxu0 0
      %8218 = vmatmul.mubr.bf16.gmra.mrb[0].mxu0 %v1992
      %v8219 = vpop.f32.mrb[0].mxu0
      %v8220 = vadd.f32 0.0, %v8219
      %v8221 = vpop.f32.mrb[0].mxu0
      %v8222 = vpop.f32.mrb[0].mxu0
      %v8223 = vadd.f32 0.0, %v8222
      %v8224 = vpop.f32.mrb[0].mxu0
      %8225 = vmatprep.mubr.bf16.mxu0 0
      %8226 = vmatmul.mubr.bf16.gmra.mrb[0].mxu0 %v1995
      %v8227 = vpop.f32.mrb[0].mxu0
      %v8228 = vadd.f32 0.0, %v8227
      %v8229 = vpop.f32.mrb[0].mxu0
      %v8230 = vpop.f32.mrb[0].mxu0
      %v8231 = vadd.f32 0.0, %v8230
      %v8232 = vpop.f32.mrb[0].mxu0
      %8233 = vmatprep.mubr.bf16.mxu0 0
      %8234 = vmatmul.mubr.bf16.gmra.mrb[0].mxu0 %v1998
      %v8235 = vpop.f32.mrb[0].mxu0
      %v8236 = vadd.f32 0.0, %v8235
      %v8237 = vpop.f32.mrb[0].mxu0
      %v8238 = vpop.f32.mrb[0].mxu0
      %v8239 = vadd.f32 0.0, %v8238
      %v8240 = vpop.f32.mrb[0].mxu0
      %8241 = vmatprep.mubr.bf16.mxu0 0
      %8242 = vmatmul.mubr.bf16.gmra.mrb[0].mxu0 %v2001
      %v8243 = vpop.f32.mrb[0].mxu0
      %v8244 = vadd.f32 0.0, %v8243
      %v8245 = vpop.f32.mrb[0].mxu0
      %v8246 = vpop.f32.mrb[0].mxu0
      %v8247 = vadd.f32 0.0, %v8246
      %v8248 = vpop.f32.mrb[0].mxu0
      %8249 = vmatprep.mubr.bf16.mxu0 0
      %8250 = vmatmul.mubr.bf16.gmra.mrb[0].mxu0 %v2004
      %v8251 = vpop.f32.mrb[0].mxu0
      %v8252 = vadd.f32 0.0, %v8251
      %v8253 = vpop.f32.mrb[0].mxu0
      %v8254 = vpop.f32.mrb[0].mxu0
      %v8255 = vadd.f32 0.0, %v8254
      %v8256 = vpop.f32.mrb[0].mxu0
      %8257 = vmatprep.mubr.bf16.mxu0 0
      %8258 = vmatmul.mubr.bf16.gmra.mrb[0].mxu0 %v2007
      %v8259 = vpop.f32.mrb[0].mxu0
      %v8260 = vadd.f32 0.0, %v8259
      %v8261 = vpop.f32.mrb[0].mxu0
      %v8262 = vpop.f32.mrb[0].mxu0
      %v8263 = vadd.f32 0.0, %v8262
      %v8264 = vpop.f32.mrb[0].mxu0
      %8265 = vmatprep.mubr.bf16.mxu0 0
      %8266 = vmatmul.mubr.bf16.gmra.mrb[0].mxu0 %v2010
      %v8267 = vpop.f32.mrb[0].mxu0
      %v8268 = vadd.f32 0.0, %v8267
      %v8269 = vpop.f32.mrb[0].mxu0
      %v8270 = vpop.f32.mrb[0].mxu0
      %v8271 = vadd.f32 0.0, %v8270
      %v8272 = vpop.f32.mrb[0].mxu0
      %8273 = vmatprep.mubr.bf16.mxu0 0
      %8274 = vmatmul.mubr.bf16.gmra.mrb[0].mxu0 %v2013
      %v8275 = vpop.f32.mrb[0].mxu0
      %v8276 = vadd.f32 0.0, %v8275
      %v8277 = vpop.f32.mrb[0].mxu0
      %v8278 = vpop.f32.mrb[0].mxu0
      %v8279 = vadd.f32 0.0, %v8278
      %v8280 = vpop.f32.mrb[0].mxu0
      %8281 = vmatprep.mubr.bf16.mxu0 0
      %8282 = vmatmul.mubr.bf16.gmra.mrb[0].mxu0 %v2016
      %v8283 = vpop.f32.mrb[0].mxu0
      %v8284 = vadd.f32 0.0, %v8283
      %v8285 = vpop.f32.mrb[0].mxu0
      %v8286 = vpop.f32.mrb[0].mxu0
      %v8287 = vadd.f32 0.0, %v8286
      %v8288 = vpop.f32.mrb[0].mxu0
      %8289 = vmatprep.mubr.bf16.mxu0 0
      %8290 = vmatmul.mubr.bf16.gmra.mrb[0].mxu0 %v2019
      %v8291 = vpop.f32.mrb[0].mxu0
      %v8292 = vadd.f32 0.0, %v8291
      %v8293 = vpop.f32.mrb[0].mxu0
      %v8294 = vpop.f32.mrb[0].mxu0
      %v8295 = vadd.f32 0.0, %v8294
      %v8296 = vpop.f32.mrb[0].mxu0
      %8297 = vmatprep.mubr.bf16.mxu0 0
      %8298 = vmatmul.mubr.bf16.gmra.mrb[0].mxu0 %v2022
      %v8299 = vpop.f32.mrb[0].mxu0
      %v8300 = vadd.f32 0.0, %v8299
      %v8301 = vpop.f32.mrb[0].mxu0
      %v8302 = vpop.f32.mrb[0].mxu0
      %v8303 = vadd.f32 0.0, %v8302
      %v8304 = vpop.f32.mrb[0].mxu0
      %8305 = vmatprep.mubr.bf16.mxu0 0
      %8306 = vmatmul.mubr.bf16.gmra.mrb[0].mxu0 %v2025
      %v8307 = vpop.f32.mrb[0].mxu0
      %v8308 = vadd.f32 0.0, %v8307
      %v8309 = vpop.f32.mrb[0].mxu0
      %v8310 = vpop.f32.mrb[0].mxu0
      %v8311 = vadd.f32 0.0, %v8310
      %v8312 = vpop.f32.mrb[0].mxu0
      %8313 = vmatprep.mubr.bf16.mxu0 0
      %8314 = vmatmul.mubr.bf16.gmra.mrb[0].mxu0 %v2028
      %v8315 = vpop.f32.mrb[0].mxu0
      %v8316 = vadd.f32 0.0, %v8315
      %v8317 = vpop.f32.mrb[0].mxu0
      %v8318 = vpop.f32.mrb[0].mxu0
      %v8319 = vadd.f32 0.0, %v8318
      %v8320 = vpop.f32.mrb[0].mxu0
      %8321 = vmatprep.mubr.bf16.mxu0 0
      %8322 = vmatmul.mubr.bf16.gmra.mrb[0].mxu0 %v2031
      %v8323 = vpop.f32.mrb[0].mxu0
      %v8324 = vadd.f32 0.0, %v8323
      %v8325 = vpop.f32.mrb[0].mxu0
      %v8326 = vpop.f32.mrb[0].mxu0
      %v8327 = vadd.f32 0.0, %v8326
      %v8328 = vpop.f32.mrb[0].mxu0
      %8329 = vmatprep.mubr.bf16.mxu0 0
      %8330 = vmatmul.mubr.bf16.gmra.mrb[0].mxu0 %v2034
      %v8331 = vpop.f32.mrb[0].mxu0
      %v8332 = vadd.f32 0.0, %v8331
      %v8333 = vpop.f32.mrb[0].mxu0
      %v8334 = vpop.f32.mrb[0].mxu0
      %v8335 = vadd.f32 0.0, %v8334
      %v8336 = vpop.f32.mrb[0].mxu0
      %8337 = vmatprep.mubr.bf16.mxu0 0
      %8338 = vmatmul.mubr.bf16.gmra.mrb[0].mxu0 %v2037
      %v8339 = vpop.f32.mrb[0].mxu0
      %v8340 = vadd.f32 0.0, %v8339
      %v8341 = vpop.f32.mrb[0].mxu0
      %v8342 = vpop.f32.mrb[0].mxu0
      %v8343 = vadd.f32 0.0, %v8342
      %v8344 = vpop.f32.mrb[0].mxu0
      %8345 = vmatprep.mubr.bf16.mxu0 0
      %8346 = vmatmul.mubr.bf16.gmra.mrb[0].mxu0 %v2040
      %v8347 = vpop.f32.mrb[0].mxu0
      %v8348 = vadd.f32 0.0, %v8347
      %v8349 = vpop.f32.mrb[0].mxu0
      %v8350 = vpop.f32.mrb[0].mxu0
      %v8351 = vadd.f32 0.0, %v8350
      %v8352 = vpop.f32.mrb[0].mxu0
      %8353 = vmatprep.mubr.bf16.mxu0 0
      %8354 = vmatmul.mubr.bf16.gmra.mrb[0].mxu0 %v2043
      %v8355 = vpop.f32.mrb[0].mxu0
      %v8356 = vadd.f32 0.0, %v8355
      %v8357 = vpop.f32.mrb[0].mxu0
      %v8358 = vpop.f32.mrb[0].mxu0
      %v8359 = vadd.f32 0.0, %v8358
      %v8360 = vpop.f32.mrb[0].mxu0
      %8361 = vmatprep.mubr.bf16.mxu0 0
      %8362 = vmatmul.mubr.bf16.gmra.mrb[0].mxu0 %v2046
      %v8363 = vpop.f32.mrb[0].mxu0
      %v8364 = vadd.f32 0.0, %v8363
      %v8365 = vpop.f32.mrb[0].mxu0
      %v8366 = vpop.f32.mrb[0].mxu0
      %v8367 = vadd.f32 0.0, %v8366
      %v8368 = vpop.f32.mrb[0].mxu0
      %8369 = vmatprep.mubr.bf16.mxu0 0
      %8370 = vmatmul.mubr.bf16.gmra.mrb[0].mxu0 %v2049
      %v8371 = vpop.f32.mrb[0].mxu0
      %v8372 = vadd.f32 0.0, %v8371
      %v8373 = vpop.f32.mrb[0].mxu0
      %v8374 = vpop.f32.mrb[0].mxu0
      %v8375 = vadd.f32 0.0, %v8374
      %v8376 = vpop.f32.mrb[0].mxu0
      %8377 = vmatprep.mubr.bf16.mxu0 0
      %8378 = vmatmul.mubr.bf16.gmra.mrb[0].mxu0 %v2052
      %v8379 = vpop.f32.mrb[0].mxu0
      %v8380 = vadd.f32 0.0, %v8379
      %v8381 = vpop.f32.mrb[0].mxu0
      %v8382 = vpop.f32.mrb[0].mxu0
      %v8383 = vadd.f32 0.0, %v8382
      %v8384 = vpop.f32.mrb[0].mxu0
      %8385 = vmatprep.mubr.bf16.mxu0 0
      %8386 = vmatmul.mubr.bf16.gmra.mrb[0].mxu0 %v2055
      %v8387 = vpop.f32.mrb[0].mxu0
      %v8388 = vadd.f32 0.0, %v8387
      %v8389 = vpop.f32.mrb[0].mxu0
      %v8390 = vpop.f32.mrb[0].mxu0
      %v8391 = vadd.f32 0.0, %v8390
      %v8392 = vpop.f32.mrb[0].mxu0
      %8393 = vmatprep.mubr.bf16.mxu0 0
      %8394 = vmatmul.mubr.bf16.gmra.mrb[0].mxu0 %v2058
      %v8395 = vpop.f32.mrb[0].mxu0
      %v8396 = vadd.f32 0.0, %v8395
      %v8397 = vpop.f32.mrb[0].mxu0
      %v8398 = vpop.f32.mrb[0].mxu0
      %v8399 = vadd.f32 0.0, %v8398
      %v8400 = vpop.f32.mrb[0].mxu0
      %8401 = vmatprep.mubr.bf16.mxu0 0
      %8402 = vmatmul.mubr.bf16.gmra.mrb[0].mxu0 %v2061
      %v8403 = vpop.f32.mrb[0].mxu0
      %v8404 = vadd.f32 0.0, %v8403
      %v8405 = vpop.f32.mrb[0].mxu0
      %v8406 = vpop.f32.mrb[0].mxu0
      %v8407 = vadd.f32 0.0, %v8406
      %v8408 = vpop.f32.mrb[0].mxu0
      %8409 = vmatprep.mubr.bf16.mxu0 0
      %8410 = vmatmul.mubr.bf16.gmra.mrb[0].mxu0 %v2064
      %v8411 = vpop.f32.mrb[0].mxu0
      %v8412 = vadd.f32 0.0, %v8411
      %v8413 = vpop.f32.mrb[0].mxu0
      %v8414 = vpop.f32.mrb[0].mxu0
      %v8415 = vadd.f32 0.0, %v8414
      %v8416 = vpop.f32.mrb[0].mxu0
      %8417 = vmatprep.mubr.bf16.mxu0 0
      %8418 = vmatmul.mubr.bf16.gmra.mrb[0].mxu0 %v2067
      %v8419 = vpop.f32.mrb[0].mxu0
      %v8420 = vadd.f32 0.0, %v8419
      %v8421 = vpop.f32.mrb[0].mxu0
      %v8422 = vpop.f32.mrb[0].mxu0
      %v8423 = vadd.f32 0.0, %v8422
      %v8424 = vpop.f32.mrb[0].mxu0
      %8425 = vmatprep.mubr.bf16.mxu0 0
      %8426 = vmatmul.mubr.bf16.gmra.mrb[0].mxu0 %v2070
      %v8427 = vpop.f32.mrb[0].mxu0
      %v8428 = vadd.f32 0.0, %v8427
      %v8429 = vpop.f32.mrb[0].mxu0
      %v8430 = vpop.f32.mrb[0].mxu0
      %v8431 = vadd.f32 0.0, %v8430
      %v8432 = vpop.f32.mrb[0].mxu0
      %8433 = vmatprep.mubr.bf16.mxu0 0
      %8434 = vmatmul.mubr.bf16.gmra.mrb[0].mxu0 %v2073
      %v8435 = vpop.f32.mrb[0].mxu0
      %v8436 = vadd.f32 0.0, %v8435
      %v8437 = vpop.f32.mrb[0].mxu0
      %v8438 = vpop.f32.mrb[0].mxu0
      %v8439 = vadd.f32 0.0, %v8438
      %v8440 = vpop.f32.mrb[0].mxu0
      %8441 = vmatprep.mubr.bf16.mxu0 0
      %8442 = vmatmul.mubr.bf16.gmra.mrb[0].mxu0 %v2076
      %v8443 = vpop.f32.mrb[0].mxu0
      %v8444 = vadd.f32 0.0, %v8443
      %v8445 = vpop.f32.mrb[0].mxu0
      %v8446 = vpop.f32.mrb[0].mxu0
      %v8447 = vadd.f32 0.0, %v8446
      %v8448 = vpop.f32.mrb[0].mxu0
      %8449 = vmatprep.mubr.bf16.mxu0 0
      %8450 = vmatmul.mubr.bf16.gmra.mrb[0].mxu0 %v2079
      %v8451 = vpop.f32.mrb[0].mxu0
      %v8452 = vadd.f32 0.0, %v8451
      %v8453 = vpop.f32.mrb[0].mxu0
      %v8454 = vpop.f32.mrb[0].mxu0
      %v8455 = vadd.f32 0.0, %v8454
      %v8456 = vpop.f32.mrb[0].mxu0
      %8457 = vmatprep.mubr.bf16.mxu0 0
      %8458 = vmatmul.mubr.bf16.gmra.mrb[0].mxu0 %v2082
      %v8459 = vpop.f32.mrb[0].mxu0
      %v8460 = vadd.f32 0.0, %v8459
      %v8461 = vpop.f32.mrb[0].mxu0
      %v8462 = vpop.f32.mrb[0].mxu0
      %v8463 = vadd.f32 0.0, %v8462
      %v8464 = vpop.f32.mrb[0].mxu0
      %8465 = vmatprep.mubr.bf16.mxu0 0
      %8466 = vmatmul.mubr.bf16.gmra.mrb[0].mxu0 %v2085
      %v8467 = vpop.f32.mrb[0].mxu0
      %v8468 = vadd.f32 0.0, %v8467
      %v8469 = vpop.f32.mrb[0].mxu0
      %v8470 = vpop.f32.mrb[0].mxu0
      %v8471 = vadd.f32 0.0, %v8470
      %v8472 = vpop.f32.mrb[0].mxu0
      %8473 = vmatprep.mubr.bf16.mxu0 0
      %8474 = vmatmul.mubr.bf16.gmra.mrb[0].mxu0 %v2088
      %v8475 = vpop.f32.mrb[0].mxu0
      %v8476 = vadd.f32 0.0, %v8475
      %v8477 = vpop.f32.mrb[0].mxu0
      %v8478 = vpop.f32.mrb[0].mxu0
      %v8479 = vadd.f32 0.0, %v8478
      %v8480 = vpop.f32.mrb[0].mxu0
      %8481 = vmatprep.mubr.bf16.mxu0 0
      %8482 = vmatmul.mubr.bf16.gmra.mrb[0].mxu0 %v2091
      %v8483 = vpop.f32.mrb[0].mxu0
      %v8484 = vadd.f32 0.0, %v8483
      %v8485 = vpop.f32.mrb[0].mxu0
      %v8486 = vpop.f32.mrb[0].mxu0
      %v8487 = vadd.f32 0.0, %v8486
      %v8488 = vpop.f32.mrb[0].mxu0
      %8489 = vmatprep.mubr.bf16.mxu0 0
      %8490 = vmatmul.mubr.bf16.gmra.mrb[0].mxu0 %v2094
      %v8491 = vpop.f32.mrb[0].mxu0
      %v8492 = vadd.f32 0.0, %v8491
      %v8493 = vpop.f32.mrb[0].mxu0
      %v8494 = vpop.f32.mrb[0].mxu0
      %v8495 = vadd.f32 0.0, %v8494
      %v8496 = vpop.f32.mrb[0].mxu0
      %8497 = vmatprep.mubr.bf16.mxu0 0
      %8498 = vmatmul.mubr.bf16.gmra.mrb[0].mxu0 %v2097
      %v8499 = vpop.f32.mrb[0].mxu0
      %v8500 = vadd.f32 0.0, %v8499
      %v8501 = vpop.f32.mrb[0].mxu0
      %v8502 = vpop.f32.mrb[0].mxu0
      %v8503 = vadd.f32 0.0, %v8502
      %v8504 = vpop.f32.mrb[0].mxu0
      %8505 = vmatprep.mubr.bf16.mxu0 0
      %8506 = vmatmul.mubr.bf16.gmra.mrb[0].mxu0 %v2100
      %v8507 = vpop.f32.mrb[0].mxu0
      %v8508 = vadd.f32 0.0, %v8507
      %v8509 = vpop.f32.mrb[0].mxu0
      %v8510 = vpop.f32.mrb[0].mxu0
      %v8511 = vadd.f32 0.0, %v8510
      %v8512 = vpop.f32.mrb[0].mxu0
      %8513 = vmatprep.mubr.bf16.mxu0 0
      %8514 = vmatmul.mubr.bf16.gmra.mrb[0].mxu0 %v2103
      %v8515 = vpop.f32.mrb[0].mxu0
      %v8516 = vadd.f32 0.0, %v8515
      %v8517 = vpop.f32.mrb[0].mxu0
      %v8518 = vpop.f32.mrb[0].mxu0
      %v8519 = vadd.f32 0.0, %v8518
      %v8520 = vpop.f32.mrb[0].mxu0
      %8521 = vmatprep.mubr.bf16.mxu0 0
      %8522 = vmatmul.mubr.bf16.gmra.mrb[0].mxu0 %v2106
      %v8523 = vpop.f32.mrb[0].mxu0
      %v8524 = vadd.f32 0.0, %v8523
      %v8525 = vpop.f32.mrb[0].mxu0
      %v8526 = vpop.f32.mrb[0].mxu0
      %v8527 = vadd.f32 0.0, %v8526
      %v8528 = vpop.f32.mrb[0].mxu0
      %8529 = vmatprep.mubr.bf16.mxu0 0
      %8530 = vmatmul.mubr.bf16.gmra.mrb[0].mxu0 %v2109
      %v8531 = vpop.f32.mrb[0].mxu0
      %v8532 = vadd.f32 0.0, %v8531
      %v8533 = vpop.f32.mrb[0].mxu0
      %v8534 = vpop.f32.mrb[0].mxu0
      %v8535 = vadd.f32 0.0, %v8534
      %v8536 = vpop.f32.mrb[0].mxu0
      %8537 = vmatprep.mubr.bf16.mxu0 0
      %8538 = vmatmul.mubr.bf16.gmra.mrb[0].mxu0 %v2112
      %v8539 = vpop.f32.mrb[0].mxu0
      %v8540 = vadd.f32 0.0, %v8539
      %v8541 = vpop.f32.mrb[0].mxu0
      %v8542 = vpop.f32.mrb[0].mxu0
      %v8543 = vadd.f32 0.0, %v8542
      %v8544 = vpop.f32.mrb[0].mxu0
      %8545 = vmatprep.mubr.bf16.mxu0 0
      %8546 = vmatmul.mubr.bf16.gmra.mrb[0].mxu0 %v2115
      %v8547 = vpop.f32.mrb[0].mxu0
      %v8548 = vadd.f32 0.0, %v8547
      %v8549 = vpop.f32.mrb[0].mxu0
      %v8550 = vpop.f32.mrb[0].mxu0
      %v8551 = vadd.f32 0.0, %v8550
      %v8552 = vpop.f32.mrb[0].mxu0
      %8553 = vmatprep.mubr.bf16.mxu0 0
      %8554 = vmatmul.mubr.bf16.gmra.mrb[0].mxu0 %v2118
      %v8555 = vpop.f32.mrb[0].mxu0
      %v8556 = vadd.f32 0.0, %v8555
      %v8557 = vpop.f32.mrb[0].mxu0
      %v8558 = vpop.f32.mrb[0].mxu0
      %v8559 = vadd.f32 0.0, %v8558
      %v8560 = vpop.f32.mrb[0].mxu0
      %8561 = vmatprep.mubr.bf16.mxu0 0
      %8562 = vmatmul.mubr.bf16.gmra.mrb[0].mxu0 %v2121
      %v8563 = vpop.f32.mrb[0].mxu0
      %v8564 = vadd.f32 0.0, %v8563
      %v8565 = vpop.f32.mrb[0].mxu0
      %v8566 = vpop.f32.mrb[0].mxu0
      %v8567 = vadd.f32 0.0, %v8566
      %v8568 = vpop.f32.mrb[0].mxu0
      %8569 = vmatprep.mubr.bf16.mxu0 0
      %8570 = vmatmul.mubr.bf16.gmra.mrb[0].mxu0 %v2124
      %v8571 = vpop.f32.mrb[0].mxu0
      %v8572 = vadd.f32 0.0, %v8571
      %v8573 = vpop.f32.mrb[0].mxu0
      %v8574 = vpop.f32.mrb[0].mxu0
      %v8575 = vadd.f32 0.0, %v8574
      %v8576 = vpop.f32.mrb[0].mxu0
      %8577 = vmatprep.mubr.bf16.mxu0 0
      %8578 = vmatmul.mubr.bf16.gmra.mrb[0].mxu0 %v2127
      %v8579 = vpop.f32.mrb[0].mxu0
      %v8580 = vadd.f32 0.0, %v8579
      %v8581 = vpop.f32.mrb[0].mxu0
      %v8582 = vpop.f32.mrb[0].mxu0
      %v8583 = vadd.f32 0.0, %v8582
      %v8584 = vpop.f32.mrb[0].mxu0
      %8585 = vmatprep.mubr.bf16.mxu0 0
      %8586 = vmatmul.mubr.bf16.gmra.mrb[0].mxu0 %v2130
      %v8587 = vpop.f32.mrb[0].mxu0
      %v8588 = vadd.f32 0.0, %v8587
      %v8589 = vpop.f32.mrb[0].mxu0
      %v8590 = vpop.f32.mrb[0].mxu0
      %v8591 = vadd.f32 0.0, %v8590
      %v8592 = vpop.f32.mrb[0].mxu0
      %8593 = vmatprep.mubr.bf16.mxu0 0
      %8594 = vmatmul.mubr.bf16.gmra.mrb[0].mxu0 %v2133
      %v8595 = vpop.f32.mrb[0].mxu0
      %v8596 = vadd.f32 0.0, %v8595
      %v8597 = vpop.f32.mrb[0].mxu0
      %v8598 = vpop.f32.mrb[0].mxu0
      %v8599 = vadd.f32 0.0, %v8598
      %v8600 = vpop.f32.mrb[0].mxu0
      %8601 = vmatprep.mubr.bf16.mxu0 0
      %8602 = vmatmul.mubr.bf16.gmra.mrb[0].mxu0 %v2136
      %v8603 = vpop.f32.mrb[0].mxu0
      %v8604 = vadd.f32 0.0, %v8603
      %v8605 = vpop.f32.mrb[0].mxu0
      %v8606 = vpop.f32.mrb[0].mxu0
      %v8607 = vadd.f32 0.0, %v8606
      %v8608 = vpop.f32.mrb[0].mxu0
      %8609 = vmatprep.mubr.bf16.mxu0 0
      %8610 = vmatmul.mubr.bf16.gmra.mrb[0].mxu0 %v2139
      %v8611 = vpop.f32.mrb[0].mxu0
      %v8612 = vadd.f32 0.0, %v8611
      %v8613 = vpop.f32.mrb[0].mxu0
      %v8614 = vpop.f32.mrb[0].mxu0
      %v8615 = vadd.f32 0.0, %v8614
      %v8616 = vpop.f32.mrb[0].mxu0
      %8617 = vmatprep.mubr.bf16.mxu0 0
      %8618 = vmatmul.mubr.bf16.gmra.mrb[0].mxu0 %v2142
      %v8619 = vpop.f32.mrb[0].mxu0
      %v8620 = vadd.f32 0.0, %v8619
      %v8621 = vpop.f32.mrb[0].mxu0
      %v8622 = vpop.f32.mrb[0].mxu0
      %v8623 = vadd.f32 0.0, %v8622
      %v8624 = vpop.f32.mrb[0].mxu0
      %8625 = vmatprep.mubr.bf16.mxu0 0
      %8626 = vmatmul.mubr.bf16.gmra.mrb[0].mxu0 %v2145
      %v8627 = vpop.f32.mrb[0].mxu0
      %v8628 = vadd.f32 0.0, %v8627
      %v8629 = vpop.f32.mrb[0].mxu0
      %v8630 = vpop.f32.mrb[0].mxu0
      %v8631 = vadd.f32 0.0, %v8630
      %v8632 = vpop.f32.mrb[0].mxu0
      %8633 = vmatprep.mubr.bf16.mxu0 0
      %8634 = vmatmul.mubr.bf16.gmra.mrb[0].mxu0 %v2148
      %v8635 = vpop.f32.mrb[0].mxu0
      %v8636 = vadd.f32 0.0, %v8635
      %v8637 = vpop.f32.mrb[0].mxu0
      %v8638 = vpop.f32.mrb[0].mxu0
      %v8639 = vadd.f32 0.0, %v8638
      %v8640 = vpop.f32.mrb[0].mxu0
      %8641 = vmatprep.mubr.bf16.mxu0 0
      %8642 = vmatmul.mubr.bf16.gmra.mrb[0].mxu0 %v2151
      %v8643 = vpop.f32.mrb[0].mxu0
      %v8644 = vadd.f32 0.0, %v8643
      %v8645 = vpop.f32.mrb[0].mxu0
      %v8646 = vpop.f32.mrb[0].mxu0
      %v8647 = vadd.f32 0.0, %v8646
      %v8648 = vpop.f32.mrb[0].mxu0
      %8649 = vmatprep.mubr.bf16.mxu0 0
      %8650 = vmatmul.mubr.bf16.gmra.mrb[0].mxu0 %v2154
      %v8651 = vpop.f32.mrb[0].mxu0
      %v8652 = vadd.f32 0.0, %v8651
      %v8653 = vpop.f32.mrb[0].mxu0
      %v8654 = vpop.f32.mrb[0].mxu0
      %v8655 = vadd.f32 0.0, %v8654
      %v8656 = vpop.f32.mrb[0].mxu0
      %8657 = vmatprep.mubr.bf16.mxu0 0
      %8658 = vmatmul.mubr.bf16.gmra.mrb[0].mxu0 %v2157
      %v8659 = vpop.f32.mrb[0].mxu0
      %v8660 = vadd.f32 0.0, %v8659
      %v8661 = vpop.f32.mrb[0].mxu0
      %v8662 = vpop.f32.mrb[0].mxu0
      %v8663 = vadd.f32 0.0, %v8662
      %v8664 = vpop.f32.mrb[0].mxu0
      %8665 = vmatprep.mubr.bf16.mxu0 0
      %8666 = vmatmul.mubr.bf16.gmra.mrb[0].mxu0 %v2160
      %v8667 = vpop.f32.mrb[0].mxu0
      %v8668 = vadd.f32 0.0, %v8667
      %v8669 = vpop.f32.mrb[0].mxu0
      %v8670 = vpop.f32.mrb[0].mxu0
      %v8671 = vadd.f32 0.0, %v8670
      %v8672 = vpop.f32.mrb[0].mxu0
      %8673 = vmatprep.mubr.bf16.mxu0 0
      %8674 = vmatmul.mubr.bf16.gmra.mrb[0].mxu0 %v2163
      %v8675 = vpop.f32.mrb[0].mxu0
      %v8676 = vadd.f32 0.0, %v8675
      %v8677 = vpop.f32.mrb[0].mxu0
      %v8678 = vpop.f32.mrb[0].mxu0
      %v8679 = vadd.f32 0.0, %v8678
      %v8680 = vpop.f32.mrb[0].mxu0
      %8681 = vmatprep.mubr.bf16.mxu0 0
      %8682 = vmatmul.mubr.bf16.gmra.mrb[0].mxu0 %v2166
      %v8683 = vpop.f32.mrb[0].mxu0
      %v8684 = vadd.f32 0.0, %v8683
      %v8685 = vpop.f32.mrb[0].mxu0
      %v8686 = vpop.f32.mrb[0].mxu0
      %v8687 = vadd.f32 0.0, %v8686
      %v8688 = vpop.f32.mrb[0].mxu0
      %8689 = vmatprep.mubr.bf16.mxu0 0
      %8690 = vmatmul.mubr.bf16.gmra.mrb[0].mxu0 %v6037
      %v8691 = vpop.f32.mrb[0].mxu0
      %v8692 = vadd.f32 0.0, %v8691
      %v8693 = vpop.f32.mrb[0].mxu0
      %v8694 = vpop.f32.mrb[0].mxu0
      %v8695 = vadd.f32 0.0, %v8694
      %v8696 = vpop.f32.mrb[0].mxu0
      %8697 = vmatprep.mubr.bf16.mxu0 0
      %8698 = vmatmul.mubr.bf16.gmra.mrb[0].mxu0 %v6040
      %v8699 = vpop.f32.mrb[0].mxu0
      %v8700 = vadd.f32 0.0, %v8699
      %v8701 = vpop.f32.mrb[0].mxu0
      %v8702 = vpop.f32.mrb[0].mxu0
      %v8703 = vadd.f32 0.0, %v8702
      %v8704 = vpop.f32.mrb[0].mxu0
      %8705 = vmatprep.mubr.bf16.mxu0 0
      %8706 = vmatmul.mubr.bf16.gmra.mrb[0].mxu0 %v8169
      %v8707 = vpop.f32.mrb[0].mxu0
      %v8708 = vadd.f32 0.0, %v8707
      %v8709 = vpop.f32.mrb[0].mxu0
      %v8710 = vpop.f32.mrb[0].mxu0
      %v8711 = vadd.f32 0.0, %v8710
      %v8712 = vpop.f32.mrb[0].mxu0
      %8713 = vmatprep.mubr.bf16.mxu0 0
      %8714 = vmatmul.mubr.bf16.gmra.mrb[0].mxu0 %v8172
      %v8715 = vpop.f32.mrb[0].mxu0
      %v8716 = vadd.f32 0.0, %v8715
      %v8717 = vpop.f32.mrb[0].mxu0
      %v8718 = vpop.f32.mrb[0].mxu0
      %v8719 = vadd.f32 0.0, %v8718
      %v8720 = vpop.f32.mrb[0].mxu0
      %8721 = vdwg.mxu0
      %v8722 = vadd.f32 %v7988, %v8212
      %v8723 = vadd.f32 %v7989, %v8215
      %v8724 = vadd.f32 %v7990, %v8220
      %v8725 = vadd.f32 %v7991, %v8223
      %v8726 = vadd.f32 %v7992, %v8228
      %v8727 = vadd.f32 %v7993, %v8231
      %v8728 = vadd.f32 %v7994, %v8236
      %v8729 = vadd.f32 %v7995, %v8239
      %v8730 = vadd.f32 %v7996, %v8244
      %v8731 = vadd.f32 %v7997, %v8247
      %v8732 = vadd.f32 %v7998, %v8252
      %v8733 = vadd.f32 %v7999, %v8255
      %v8734 = vadd.f32 %v8000, %v8260
      %v8735 = vadd.f32 %v8001, %v8263
      %v8736 = vadd.f32 %v8002, %v8268
      %v8737 = vadd.f32 %v8003, %v8271
      %v8738 = vadd.f32 %v8004, %v8276
      %v8739 = vadd.f32 %v8005, %v8279
      %v8740 = vadd.f32 %v8006, %v8284
      %v8741 = vadd.f32 %v8007, %v8287
      %v8742 = vadd.f32 %v8008, %v8292
      %v8743 = vadd.f32 %v8009, %v8295
      %v8744 = vadd.f32 %v8010, %v8300
      %v8745 = vadd.f32 %v8011, %v8303
      %v8746 = vadd.f32 %v8012, %v8308
      %v8747 = vadd.f32 %v8013, %v8311
      %v8748 = vadd.f32 %v8014, %v8316
      %v8749 = vadd.f32 %v8015, %v8319
      %v8750 = vadd.f32 %v8016, %v8324
      %v8751 = vadd.f32 %v8017, %v8327
      %v8752 = vadd.f32 %v8018, %v8332
      %v8753 = vadd.f32 %v8019, %v8335
      %v8754 = vadd.f32 %v8020, %v8340
      %v8755 = vadd.f32 %v8021, %v8343
      %v8756 = vadd.f32 %v8022, %v8348
      %v8757 = vadd.f32 %v8023, %v8351
      %v8758 = vadd.f32 %v8024, %v8356
      %v8759 = vadd.f32 %v8025, %v8359
      %v8760 = vadd.f32 %v8026, %v8364
      %v8761 = vadd.f32 %v8027, %v8367
      %v8762 = vadd.f32 %v8028, %v8372
      %v8763 = vadd.f32 %v8029, %v8375
      %v8764 = vadd.f32 %v8030, %v8380
      %v8765 = vadd.f32 %v8031, %v8383
      %v8766 = vadd.f32 %v8032, %v8388
      %v8767 = vadd.f32 %v8033, %v8391
      %v8768 = vadd.f32 %v8034, %v8396
      %v8769 = vadd.f32 %v8035, %v8399
      %v8770 = vadd.f32 %v8036, %v8404
      %v8771 = vadd.f32 %v8037, %v8407
      %v8772 = vadd.f32 %v8038, %v8412
      %v8773 = vadd.f32 %v8039, %v8415
      %v8774 = vadd.f32 %v8040, %v8420
      %v8775 = vadd.f32 %v8041, %v8423
      %v8776 = vadd.f32 %v8042, %v8428
      %v8777 = vadd.f32 %v8043, %v8431
      %v8778 = vadd.f32 %v8044, %v8436
      %v8779 = vadd.f32 %v8045, %v8439
      %v8780 = vadd.f32 %v8046, %v8444
      %v8781 = vadd.f32 %v8047, %v8447
      %v8782 = vadd.f32 %v8048, %v8452
      %v8783 = vadd.f32 %v8049, %v8455
      %v8784 = vadd.f32 %v8050, %v8460
      %v8785 = vadd.f32 %v8051, %v8463
      %v8786 = vadd.f32 %v8052, %v8468
      %v8787 = vadd.f32 %v8053, %v8471
      %v8788 = vadd.f32 %v8054, %v8476
      %v8789 = vadd.f32 %v8055, %v8479
      %v8790 = vadd.f32 %v8056, %v8484
      %v8791 = vadd.f32 %v8057, %v8487
      %v8792 = vadd.f32 %v8058, %v8492
      %v8793 = vadd.f32 %v8059, %v8495
      %v8794 = vadd.f32 %v8060, %v8500
      %v8795 = vadd.f32 %v8061, %v8503
      %v8796 = vadd.f32 %v8062, %v8508
      %v8797 = vadd.f32 %v8063, %v8511
      %v8798 = vadd.f32 %v8064, %v8516
      %v8799 = vadd.f32 %v8065, %v8519
      %v8800 = vadd.f32 %v8066, %v8524
      %v8801 = vadd.f32 %v8067, %v8527
      %v8802 = vadd.f32 %v8068, %v8532
      %v8803 = vadd.f32 %v8069, %v8535
      %v8804 = vadd.f32 %v8070, %v8540
      %v8805 = vadd.f32 %v8071, %v8543
      %v8806 = vadd.f32 %v8072, %v8548
      %v8807 = vadd.f32 %v8073, %v8551
      %v8808 = vadd.f32 %v8074, %v8556
      %v8809 = vadd.f32 %v8075, %v8559
      %v8810 = vadd.f32 %v8076, %v8564
      %v8811 = vadd.f32 %v8077, %v8567
      %v8812 = vadd.f32 %v8078, %v8572
      %v8813 = vadd.f32 %v8079, %v8575
      %v8814 = vadd.f32 %v8080, %v8580
      %v8815 = vadd.f32 %v8081, %v8583
      %v8816 = vadd.f32 %v8082, %v8588
      %v8817 = vadd.f32 %v8083, %v8591
      %v8818 = vadd.f32 %v8084, %v8596
      %v8819 = vadd.f32 %v8085, %v8599
      %v8820 = vadd.f32 %v8086, %v8604
      %v8821 = vadd.f32 %v8087, %v8607
      %v8822 = vadd.f32 %v8088, %v8612
      %v8823 = vadd.f32 %v8089, %v8615
      %v8824 = vadd.f32 %v8090, %v8620
      %v8825 = vadd.f32 %v8091, %v8623
      %v8826 = vadd.f32 %v8092, %v8628
      %v8827 = vadd.f32 %v8093, %v8631
      %v8828 = vadd.f32 %v8094, %v8636
      %v8829 = vadd.f32 %v8095, %v8639
      %v8830 = vadd.f32 %v8096, %v8644
      %v8831 = vadd.f32 %v8097, %v8647
      %v8832 = vadd.f32 %v8098, %v8652
      %v8833 = vadd.f32 %v8099, %v8655
      %v8834 = vadd.f32 %v8100, %v8660
      %v8835 = vadd.f32 %v8101, %v8663
      %v8836 = vadd.f32 %v8102, %v8668
      %v8837 = vadd.f32 %v8103, %v8671
      %v8838 = vadd.f32 %v8104, %v8676
      %v8839 = vadd.f32 %v8105, %v8679
      %v8840 = vadd.f32 %v8106, %v8684
      %v8841 = vadd.f32 %v8107, %v8687
      %v8842 = vadd.f32 %v8108, %v8692
      %v8843 = vadd.f32 %v8109, %v8695
      %v8844 = vadd.f32 %v8110, %v8700
      %v8845 = vadd.f32 %v8111, %v8703
      %v8846 = vadd.f32 %v8112, %v8708
      %v8847 = vadd.f32 %v8113, %v8711
      %v8848 = vadd.f32 %v8114, %v8716
      %v8849 = vadd.f32 %v8115, %v8719
      %v8851 = vrot.slane %v364, 5
      %v8852 = vrot.slane %v8851, 4
      %v8853 = vrot.slane %v365, 5
      %v8854 = vsel %vm3811, %v8852, %v8853
      %v8855 = vrot.slane %v8853, 4
      %v8856 = vrot.slane %v366, 5
      %v8857 = vsel %vm3811, %v8855, %v8856
      %v8858 = vrot.slane %v8856, 4
      %v8859 = vrot.slane %v367, 5
      %v8860 = vsel %vm3811, %v8858, %v8859
      %v8861 = vrot.slane %v8859, 4
      %v8862 = vrot.slane %v368, 5
      %v8863 = vsel %vm3811, %v8861, %v8862
      %s8864 = scalar_lea.vmem %s1, 16
      %v8865 = vld [vmem:[%s8864] sm:$0x3]
      %v8866 = vunpack.c.l.b16 %v8854
      %v8867 = vunpack.c.l.b16 %v8857
      %v8868 = vunpack.c.l.b16 %v8860
      %v8869 = vunpack.c.l.b16 %v8863
      %v8870 = vpack.c.b16 %v8867, %v8866
      %v8871 = vpack.c.b16 %v8869, %v8868
      %v8873 = vsel %vm1975, %v8870, 0
      %v8876 = vsel %vm1975, %v8871, 0
      %v8879 = vsel %vm2168, %v8865, 0
      %8881 = vmatprep.subr.bf16.mxu0 0
      %8882 = vmatpush1.bf16.msra.mxu0 %v8879
      %8883 = vmatprep.subr.bf16.mxu0 0
      %8884 = vmatpush1.bf16.msra.mxu0 0
      %8885 = vmatprep.subr.bf16.mxu0 0
      %8886 = vmatpush1.bf16.msra.mxu0 0
      %8887 = vmatprep.subr.bf16.mxu0 0
      %8888 = vmatpush1.bf16.msra.mxu0 0
      %8889 = vmatprep.subr.bf16.mxu0 0
      %8890 = vmatpush1.bf16.msra.mxu0 0
      %8891 = vmatprep.subr.bf16.mxu0 0
      %8892 = vmatpush1.bf16.msra.mxu0 0
      %8893 = vmatprep.subr.bf16.mxu0 0
      %8894 = vmatpush1.bf16.msra.mxu0 0
      %8895 = vmatprep.subr.bf16.mxu0 0
      %8896 = vmatpush1.bf16.msra.mxu0 0
      %8897 = vmatprep.subr.bf16.mxu0 0
      %8898 = vmatpush1.bf16.msra.mxu0 0
      %8899 = vmatprep.subr.bf16.mxu0 0
      %8900 = vmatpush1.bf16.msra.mxu0 0
      %8901 = vmatprep.subr.bf16.mxu0 0
      %8902 = vmatpush1.bf16.msra.mxu0 0
      %8903 = vmatprep.subr.bf16.mxu0 0
      %8904 = vmatpush1.bf16.msra.mxu0 0
      %8905 = vmatprep.subr.bf16.mxu0 0
      %8906 = vmatpush1.bf16.msra.mxu0 0
      %8907 = vmatprep.subr.bf16.mxu0 0
      %8908 = vmatpush1.bf16.msra.mxu0 0
      %8909 = vmatprep.subr.bf16.mxu0 0
      %8910 = vmatpush1.bf16.msra.mxu0 0
      %8911 = vmatprep.subr.bf16.mxu0 0
      %8912 = vmatpush1.bf16.msra.mxu0 0
      %8913 = vmatprep.mubr.bf16.mxu0 0
      %8914 = vmatmul.mubr.bf16.gmra.mrb[0].mxu0 %v4435
      %v8915 = vpop.f32.mrb[0].mxu0
      %v8916 = vadd.f32 0.0, %v8915
      %v8917 = vpop.f32.mrb[0].mxu0
      %v8918 = vpop.f32.mrb[0].mxu0
      %v8919 = vadd.f32 0.0, %v8918
      %v8920 = vpop.f32.mrb[0].mxu0
      %8921 = vmatprep.mubr.bf16.mxu0 0
      %8922 = vmatmul.mubr.bf16.gmra.mrb[0].mxu0 %v4438
      %v8923 = vpop.f32.mrb[0].mxu0
      %v8924 = vadd.f32 0.0, %v8923
      %v8925 = vpop.f32.mrb[0].mxu0
      %v8926 = vpop.f32.mrb[0].mxu0
      %v8927 = vadd.f32 0.0, %v8926
      %v8928 = vpop.f32.mrb[0].mxu0
      %8929 = vmatprep.mubr.bf16.mxu0 0
      %8930 = vmatmul.mubr.bf16.gmra.mrb[0].mxu0 %v4441
      %v8931 = vpop.f32.mrb[0].mxu0
      %v8932 = vadd.f32 0.0, %v8931
      %v8933 = vpop.f32.mrb[0].mxu0
      %v8934 = vpop.f32.mrb[0].mxu0
      %v8935 = vadd.f32 0.0, %v8934
      %v8936 = vpop.f32.mrb[0].mxu0
      %8937 = vmatprep.mubr.bf16.mxu0 0
      %8938 = vmatmul.mubr.bf16.gmra.mrb[0].mxu0 %v4444
      %v8939 = vpop.f32.mrb[0].mxu0
      %v8940 = vadd.f32 0.0, %v8939
      %v8941 = vpop.f32.mrb[0].mxu0
      %v8942 = vpop.f32.mrb[0].mxu0
      %v8943 = vadd.f32 0.0, %v8942
      %v8944 = vpop.f32.mrb[0].mxu0
      %8945 = vmatprep.mubr.bf16.mxu0 0
      %8946 = vmatmul.mubr.bf16.gmra.mrb[0].mxu0 %v4447
      %v8947 = vpop.f32.mrb[0].mxu0
      %v8948 = vadd.f32 0.0, %v8947
      %v8949 = vpop.f32.mrb[0].mxu0
      %v8950 = vpop.f32.mrb[0].mxu0
      %v8951 = vadd.f32 0.0, %v8950
      %v8952 = vpop.f32.mrb[0].mxu0
      %8953 = vmatprep.mubr.bf16.mxu0 0
      %8954 = vmatmul.mubr.bf16.gmra.mrb[0].mxu0 %v4450
      %v8955 = vpop.f32.mrb[0].mxu0
      %v8956 = vadd.f32 0.0, %v8955
      %v8957 = vpop.f32.mrb[0].mxu0
      %v8958 = vpop.f32.mrb[0].mxu0
      %v8959 = vadd.f32 0.0, %v8958
      %v8960 = vpop.f32.mrb[0].mxu0
      %8961 = vmatprep.mubr.bf16.mxu0 0
      %8962 = vmatmul.mubr.bf16.gmra.mrb[0].mxu0 %v4453
      %v8963 = vpop.f32.mrb[0].mxu0
      %v8964 = vadd.f32 0.0, %v8963
      %v8965 = vpop.f32.mrb[0].mxu0
      %v8966 = vpop.f32.mrb[0].mxu0
      %v8967 = vadd.f32 0.0, %v8966
      %v8968 = vpop.f32.mrb[0].mxu0
      %8969 = vmatprep.mubr.bf16.mxu0 0
      %8970 = vmatmul.mubr.bf16.gmra.mrb[0].mxu0 %v4456
      %v8971 = vpop.f32.mrb[0].mxu0
      %v8972 = vadd.f32 0.0, %v8971
      %v8973 = vpop.f32.mrb[0].mxu0
      %v8974 = vpop.f32.mrb[0].mxu0
      %v8975 = vadd.f32 0.0, %v8974
      %v8976 = vpop.f32.mrb[0].mxu0
      %8977 = vmatprep.mubr.bf16.mxu0 0
      %8978 = vmatmul.mubr.bf16.gmra.mrb[0].mxu0 %v4459
      %v8979 = vpop.f32.mrb[0].mxu0
      %v8980 = vadd.f32 0.0, %v8979
      %v8981 = vpop.f32.mrb[0].mxu0
      %v8982 = vpop.f32.mrb[0].mxu0
      %v8983 = vadd.f32 0.0, %v8982
      %v8984 = vpop.f32.mrb[0].mxu0
      %8985 = vmatprep.mubr.bf16.mxu0 0
      %8986 = vmatmul.mubr.bf16.gmra.mrb[0].mxu0 %v4462
      %v8987 = vpop.f32.mrb[0].mxu0
      %v8988 = vadd.f32 0.0, %v8987
      %v8989 = vpop.f32.mrb[0].mxu0
      %v8990 = vpop.f32.mrb[0].mxu0
      %v8991 = vadd.f32 0.0, %v8990
      %v8992 = vpop.f32.mrb[0].mxu0
      %8993 = vmatprep.mubr.bf16.mxu0 0
      %8994 = vmatmul.mubr.bf16.gmra.mrb[0].mxu0 %v4465
      %v8995 = vpop.f32.mrb[0].mxu0
      %v8996 = vadd.f32 0.0, %v8995
      %v8997 = vpop.f32.mrb[0].mxu0
      %v8998 = vpop.f32.mrb[0].mxu0
      %v8999 = vadd.f32 0.0, %v8998
      %v9000 = vpop.f32.mrb[0].mxu0
      %9001 = vmatprep.mubr.bf16.mxu0 0
      %9002 = vmatmul.mubr.bf16.gmra.mrb[0].mxu0 %v4468
      %v9003 = vpop.f32.mrb[0].mxu0
      %v9004 = vadd.f32 0.0, %v9003
      %v9005 = vpop.f32.mrb[0].mxu0
      %v9006 = vpop.f32.mrb[0].mxu0
      %v9007 = vadd.f32 0.0, %v9006
      %v9008 = vpop.f32.mrb[0].mxu0
      %9009 = vmatprep.mubr.bf16.mxu0 0
      %9010 = vmatmul.mubr.bf16.gmra.mrb[0].mxu0 %v4471
      %v9011 = vpop.f32.mrb[0].mxu0
      %v9012 = vadd.f32 0.0, %v9011
      %v9013 = vpop.f32.mrb[0].mxu0
      %v9014 = vpop.f32.mrb[0].mxu0
      %v9015 = vadd.f32 0.0, %v9014
      %v9016 = vpop.f32.mrb[0].mxu0
      %9017 = vmatprep.mubr.bf16.mxu0 0
      %9018 = vmatmul.mubr.bf16.gmra.mrb[0].mxu0 %v4474
      %v9019 = vpop.f32.mrb[0].mxu0
      %v9020 = vadd.f32 0.0, %v9019
      %v9021 = vpop.f32.mrb[0].mxu0
      %v9022 = vpop.f32.mrb[0].mxu0
      %v9023 = vadd.f32 0.0, %v9022
      %v9024 = vpop.f32.mrb[0].mxu0
      %9025 = vmatprep.mubr.bf16.mxu0 0
      %9026 = vmatmul.mubr.bf16.gmra.mrb[0].mxu0 %v4477
      %v9027 = vpop.f32.mrb[0].mxu0
      %v9028 = vadd.f32 0.0, %v9027
      %v9029 = vpop.f32.mrb[0].mxu0
      %v9030 = vpop.f32.mrb[0].mxu0
      %v9031 = vadd.f32 0.0, %v9030
      %v9032 = vpop.f32.mrb[0].mxu0
      %9033 = vmatprep.mubr.bf16.mxu0 0
      %9034 = vmatmul.mubr.bf16.gmra.mrb[0].mxu0 %v4480
      %v9035 = vpop.f32.mrb[0].mxu0
      %v9036 = vadd.f32 0.0, %v9035
      %v9037 = vpop.f32.mrb[0].mxu0
      %v9038 = vpop.f32.mrb[0].mxu0
      %v9039 = vadd.f32 0.0, %v9038
      %v9040 = vpop.f32.mrb[0].mxu0
      %9041 = vmatprep.mubr.bf16.mxu0 0
      %9042 = vmatmul.mubr.bf16.gmra.mrb[0].mxu0 %v4483
      %v9043 = vpop.f32.mrb[0].mxu0
      %v9044 = vadd.f32 0.0, %v9043
      %v9045 = vpop.f32.mrb[0].mxu0
      %v9046 = vpop.f32.mrb[0].mxu0
      %v9047 = vadd.f32 0.0, %v9046
      %v9048 = vpop.f32.mrb[0].mxu0
      %9049 = vmatprep.mubr.bf16.mxu0 0
      %9050 = vmatmul.mubr.bf16.gmra.mrb[0].mxu0 %v4486
      %v9051 = vpop.f32.mrb[0].mxu0
      %v9052 = vadd.f32 0.0, %v9051
      %v9053 = vpop.f32.mrb[0].mxu0
      %v9054 = vpop.f32.mrb[0].mxu0
      %v9055 = vadd.f32 0.0, %v9054
      %v9056 = vpop.f32.mrb[0].mxu0
      %9057 = vmatprep.mubr.bf16.mxu0 0
      %9058 = vmatmul.mubr.bf16.gmra.mrb[0].mxu0 %v4489
      %v9059 = vpop.f32.mrb[0].mxu0
      %v9060 = vadd.f32 0.0, %v9059
      %v9061 = vpop.f32.mrb[0].mxu0
      %v9062 = vpop.f32.mrb[0].mxu0
      %v9063 = vadd.f32 0.0, %v9062
      %v9064 = vpop.f32.mrb[0].mxu0
      %9065 = vmatprep.mubr.bf16.mxu0 0
      %9066 = vmatmul.mubr.bf16.gmra.mrb[0].mxu0 %v4492
      %v9067 = vpop.f32.mrb[0].mxu0
      %v9068 = vadd.f32 0.0, %v9067
      %v9069 = vpop.f32.mrb[0].mxu0
      %v9070 = vpop.f32.mrb[0].mxu0
      %v9071 = vadd.f32 0.0, %v9070
      %v9072 = vpop.f32.mrb[0].mxu0
      %9073 = vmatprep.mubr.bf16.mxu0 0
      %9074 = vmatmul.mubr.bf16.gmra.mrb[0].mxu0 %v4495
      %v9075 = vpop.f32.mrb[0].mxu0
      %v9076 = vadd.f32 0.0, %v9075
      %v9077 = vpop.f32.mrb[0].mxu0
      %v9078 = vpop.f32.mrb[0].mxu0
      %v9079 = vadd.f32 0.0, %v9078
      %v9080 = vpop.f32.mrb[0].mxu0
      %9081 = vmatprep.mubr.bf16.mxu0 0
      %9082 = vmatmul.mubr.bf16.gmra.mrb[0].mxu0 %v4498
      %v9083 = vpop.f32.mrb[0].mxu0
      %v9084 = vadd.f32 0.0, %v9083
      %v9085 = vpop.f32.mrb[0].mxu0
      %v9086 = vpop.f32.mrb[0].mxu0
      %v9087 = vadd.f32 0.0, %v9086
      %v9088 = vpop.f32.mrb[0].mxu0
      %9089 = vmatprep.mubr.bf16.mxu0 0
      %9090 = vmatmul.mubr.bf16.gmra.mrb[0].mxu0 %v4501
      %v9091 = vpop.f32.mrb[0].mxu0
      %v9092 = vadd.f32 0.0, %v9091
      %v9093 = vpop.f32.mrb[0].mxu0
      %v9094 = vpop.f32.mrb[0].mxu0
      %v9095 = vadd.f32 0.0, %v9094
      %v9096 = vpop.f32.mrb[0].mxu0
      %9097 = vmatprep.mubr.bf16.mxu0 0
      %9098 = vmatmul.mubr.bf16.gmra.mrb[0].mxu0 %v4504
      %v9099 = vpop.f32.mrb[0].mxu0
      %v9100 = vadd.f32 0.0, %v9099
      %v9101 = vpop.f32.mrb[0].mxu0
      %v9102 = vpop.f32.mrb[0].mxu0
      %v9103 = vadd.f32 0.0, %v9102
      %v9104 = vpop.f32.mrb[0].mxu0
      %9105 = vmatprep.mubr.bf16.mxu0 0
      %9106 = vmatmul.mubr.bf16.gmra.mrb[0].mxu0 %v4507
      %v9107 = vpop.f32.mrb[0].mxu0
      %v9108 = vadd.f32 0.0, %v9107
      %v9109 = vpop.f32.mrb[0].mxu0
      %v9110 = vpop.f32.mrb[0].mxu0
      %v9111 = vadd.f32 0.0, %v9110
      %v9112 = vpop.f32.mrb[0].mxu0
      %9113 = vmatprep.mubr.bf16.mxu0 0
      %9114 = vmatmul.mubr.bf16.gmra.mrb[0].mxu0 %v4510
      %v9115 = vpop.f32.mrb[0].mxu0
      %v9116 = vadd.f32 0.0, %v9115
      %v9117 = vpop.f32.mrb[0].mxu0
      %v9118 = vpop.f32.mrb[0].mxu0
      %v9119 = vadd.f32 0.0, %v9118
      %v9120 = vpop.f32.mrb[0].mxu0
      %9121 = vmatprep.mubr.bf16.mxu0 0
      %9122 = vmatmul.mubr.bf16.gmra.mrb[0].mxu0 %v4513
      %v9123 = vpop.f32.mrb[0].mxu0
      %v9124 = vadd.f32 0.0, %v9123
      %v9125 = vpop.f32.mrb[0].mxu0
      %v9126 = vpop.f32.mrb[0].mxu0
      %v9127 = vadd.f32 0.0, %v9126
      %v9128 = vpop.f32.mrb[0].mxu0
      %9129 = vmatprep.mubr.bf16.mxu0 0
      %9130 = vmatmul.mubr.bf16.gmra.mrb[0].mxu0 %v4516
      %v9131 = vpop.f32.mrb[0].mxu0
      %v9132 = vadd.f32 0.0, %v9131
      %v9133 = vpop.f32.mrb[0].mxu0
      %v9134 = vpop.f32.mrb[0].mxu0
      %v9135 = vadd.f32 0.0, %v9134
      %v9136 = vpop.f32.mrb[0].mxu0
      %9137 = vmatprep.mubr.bf16.mxu0 0
      %9138 = vmatmul.mubr.bf16.gmra.mrb[0].mxu0 %v4519
      %v9139 = vpop.f32.mrb[0].mxu0
      %v9140 = vadd.f32 0.0, %v9139
      %v9141 = vpop.f32.mrb[0].mxu0
      %v9142 = vpop.f32.mrb[0].mxu0
      %v9143 = vadd.f32 0.0, %v9142
      %v9144 = vpop.f32.mrb[0].mxu0
      %9145 = vmatprep.mubr.bf16.mxu0 0
      %9146 = vmatmul.mubr.bf16.gmra.mrb[0].mxu0 %v4522
      %v9147 = vpop.f32.mrb[0].mxu0
      %v9148 = vadd.f32 0.0, %v9147
      %v9149 = vpop.f32.mrb[0].mxu0
      %v9150 = vpop.f32.mrb[0].mxu0
      %v9151 = vadd.f32 0.0, %v9150
      %v9152 = vpop.f32.mrb[0].mxu0
      %9153 = vmatprep.mubr.bf16.mxu0 0
      %9154 = vmatmul.mubr.bf16.gmra.mrb[0].mxu0 %v4525
      %v9155 = vpop.f32.mrb[0].mxu0
      %v9156 = vadd.f32 0.0, %v9155
      %v9157 = vpop.f32.mrb[0].mxu0
      %v9158 = vpop.f32.mrb[0].mxu0
      %v9159 = vadd.f32 0.0, %v9158
      %v9160 = vpop.f32.mrb[0].mxu0
      %9161 = vmatprep.mubr.bf16.mxu0 0
      %9162 = vmatmul.mubr.bf16.gmra.mrb[0].mxu0 %v4528
      %v9163 = vpop.f32.mrb[0].mxu0
      %v9164 = vadd.f32 0.0, %v9163
      %v9165 = vpop.f32.mrb[0].mxu0
      %v9166 = vpop.f32.mrb[0].mxu0
      %v9167 = vadd.f32 0.0, %v9166
      %v9168 = vpop.f32.mrb[0].mxu0
      %9169 = vmatprep.mubr.bf16.mxu0 0
      %9170 = vmatmul.mubr.bf16.gmra.mrb[0].mxu0 %v4531
      %v9171 = vpop.f32.mrb[0].mxu0
      %v9172 = vadd.f32 0.0, %v9171
      %v9173 = vpop.f32.mrb[0].mxu0
      %v9174 = vpop.f32.mrb[0].mxu0
      %v9175 = vadd.f32 0.0, %v9174
      %v9176 = vpop.f32.mrb[0].mxu0
      %9177 = vmatprep.mubr.bf16.mxu0 0
      %9178 = vmatmul.mubr.bf16.gmra.mrb[0].mxu0 %v4534
      %v9179 = vpop.f32.mrb[0].mxu0
      %v9180 = vadd.f32 0.0, %v9179
      %v9181 = vpop.f32.mrb[0].mxu0
      %v9182 = vpop.f32.mrb[0].mxu0
      %v9183 = vadd.f32 0.0, %v9182
      %v9184 = vpop.f32.mrb[0].mxu0
      %9185 = vmatprep.mubr.bf16.mxu0 0
      %9186 = vmatmul.mubr.bf16.gmra.mrb[0].mxu0 %v4537
      %v9187 = vpop.f32.mrb[0].mxu0
      %v9188 = vadd.f32 0.0, %v9187
      %v9189 = vpop.f32.mrb[0].mxu0
      %v9190 = vpop.f32.mrb[0].mxu0
      %v9191 = vadd.f32 0.0, %v9190
      %v9192 = vpop.f32.mrb[0].mxu0
      %9193 = vmatprep.mubr.bf16.mxu0 0
      %9194 = vmatmul.mubr.bf16.gmra.mrb[0].mxu0 %v4540
      %v9195 = vpop.f32.mrb[0].mxu0
      %v9196 = vadd.f32 0.0, %v9195
      %v9197 = vpop.f32.mrb[0].mxu0
      %v9198 = vpop.f32.mrb[0].mxu0
      %v9199 = vadd.f32 0.0, %v9198
      %v9200 = vpop.f32.mrb[0].mxu0
      %9201 = vmatprep.mubr.bf16.mxu0 0
      %9202 = vmatmul.mubr.bf16.gmra.mrb[0].mxu0 %v4543
      %v9203 = vpop.f32.mrb[0].mxu0
      %v9204 = vadd.f32 0.0, %v9203
      %v9205 = vpop.f32.mrb[0].mxu0
      %v9206 = vpop.f32.mrb[0].mxu0
      %v9207 = vadd.f32 0.0, %v9206
      %v9208 = vpop.f32.mrb[0].mxu0
      %9209 = vmatprep.mubr.bf16.mxu0 0
      %9210 = vmatmul.mubr.bf16.gmra.mrb[0].mxu0 %v4546
      %v9211 = vpop.f32.mrb[0].mxu0
      %v9212 = vadd.f32 0.0, %v9211
      %v9213 = vpop.f32.mrb[0].mxu0
      %v9214 = vpop.f32.mrb[0].mxu0
      %v9215 = vadd.f32 0.0, %v9214
      %v9216 = vpop.f32.mrb[0].mxu0
      %9217 = vmatprep.mubr.bf16.mxu0 0
      %9218 = vmatmul.mubr.bf16.gmra.mrb[0].mxu0 %v4549
      %v9219 = vpop.f32.mrb[0].mxu0
      %v9220 = vadd.f32 0.0, %v9219
      %v9221 = vpop.f32.mrb[0].mxu0
      %v9222 = vpop.f32.mrb[0].mxu0
      %v9223 = vadd.f32 0.0, %v9222
      %v9224 = vpop.f32.mrb[0].mxu0
      %9225 = vmatprep.mubr.bf16.mxu0 0
      %9226 = vmatmul.mubr.bf16.gmra.mrb[0].mxu0 %v4552
      %v9227 = vpop.f32.mrb[0].mxu0
      %v9228 = vadd.f32 0.0, %v9227
      %v9229 = vpop.f32.mrb[0].mxu0
      %v9230 = vpop.f32.mrb[0].mxu0
      %v9231 = vadd.f32 0.0, %v9230
      %v9232 = vpop.f32.mrb[0].mxu0
      %9233 = vmatprep.mubr.bf16.mxu0 0
      %9234 = vmatmul.mubr.bf16.gmra.mrb[0].mxu0 %v4555
      %v9235 = vpop.f32.mrb[0].mxu0
      %v9236 = vadd.f32 0.0, %v9235
      %v9237 = vpop.f32.mrb[0].mxu0
      %v9238 = vpop.f32.mrb[0].mxu0
      %v9239 = vadd.f32 0.0, %v9238
      %v9240 = vpop.f32.mrb[0].mxu0
      %9241 = vmatprep.mubr.bf16.mxu0 0
      %9242 = vmatmul.mubr.bf16.gmra.mrb[0].mxu0 %v4558
      %v9243 = vpop.f32.mrb[0].mxu0
      %v9244 = vadd.f32 0.0, %v9243
      %v9245 = vpop.f32.mrb[0].mxu0
      %v9246 = vpop.f32.mrb[0].mxu0
      %v9247 = vadd.f32 0.0, %v9246
      %v9248 = vpop.f32.mrb[0].mxu0
      %9249 = vmatprep.mubr.bf16.mxu0 0
      %9250 = vmatmul.mubr.bf16.gmra.mrb[0].mxu0 %v4561
      %v9251 = vpop.f32.mrb[0].mxu0
      %v9252 = vadd.f32 0.0, %v9251
      %v9253 = vpop.f32.mrb[0].mxu0
      %v9254 = vpop.f32.mrb[0].mxu0
      %v9255 = vadd.f32 0.0, %v9254
      %v9256 = vpop.f32.mrb[0].mxu0
      %9257 = vmatprep.mubr.bf16.mxu0 0
      %9258 = vmatmul.mubr.bf16.gmra.mrb[0].mxu0 %v4564
      %v9259 = vpop.f32.mrb[0].mxu0
      %v9260 = vadd.f32 0.0, %v9259
      %v9261 = vpop.f32.mrb[0].mxu0
      %v9262 = vpop.f32.mrb[0].mxu0
      %v9263 = vadd.f32 0.0, %v9262
      %v9264 = vpop.f32.mrb[0].mxu0
      %9265 = vmatprep.mubr.bf16.mxu0 0
      %9266 = vmatmul.mubr.bf16.gmra.mrb[0].mxu0 %v4567
      %v9267 = vpop.f32.mrb[0].mxu0
      %v9268 = vadd.f32 0.0, %v9267
      %v9269 = vpop.f32.mrb[0].mxu0
      %v9270 = vpop.f32.mrb[0].mxu0
      %v9271 = vadd.f32 0.0, %v9270
      %v9272 = vpop.f32.mrb[0].mxu0
      %9273 = vmatprep.mubr.bf16.mxu0 0
      %9274 = vmatmul.mubr.bf16.gmra.mrb[0].mxu0 %v4570
      %v9275 = vpop.f32.mrb[0].mxu0
      %v9276 = vadd.f32 0.0, %v9275
      %v9277 = vpop.f32.mrb[0].mxu0
      %v9278 = vpop.f32.mrb[0].mxu0
      %v9279 = vadd.f32 0.0, %v9278
      %v9280 = vpop.f32.mrb[0].mxu0
      %9281 = vmatprep.mubr.bf16.mxu0 0
      %9282 = vmatmul.mubr.bf16.gmra.mrb[0].mxu0 %v4573
      %v9283 = vpop.f32.mrb[0].mxu0
      %v9284 = vadd.f32 0.0, %v9283
      %v9285 = vpop.f32.mrb[0].mxu0
      %v9286 = vpop.f32.mrb[0].mxu0
      %v9287 = vadd.f32 0.0, %v9286
      %v9288 = vpop.f32.mrb[0].mxu0
      %9289 = vmatprep.mubr.bf16.mxu0 0
      %9290 = vmatmul.mubr.bf16.gmra.mrb[0].mxu0 %v4576
      %v9291 = vpop.f32.mrb[0].mxu0
      %v9292 = vadd.f32 0.0, %v9291
      %v9293 = vpop.f32.mrb[0].mxu0
      %v9294 = vpop.f32.mrb[0].mxu0
      %v9295 = vadd.f32 0.0, %v9294
      %v9296 = vpop.f32.mrb[0].mxu0
      %9297 = vmatprep.mubr.bf16.mxu0 0
      %9298 = vmatmul.mubr.bf16.gmra.mrb[0].mxu0 %v4579
      %v9299 = vpop.f32.mrb[0].mxu0
      %v9300 = vadd.f32 0.0, %v9299
      %v9301 = vpop.f32.mrb[0].mxu0
      %v9302 = vpop.f32.mrb[0].mxu0
      %v9303 = vadd.f32 0.0, %v9302
      %v9304 = vpop.f32.mrb[0].mxu0
      %9305 = vmatprep.mubr.bf16.mxu0 0
      %9306 = vmatmul.mubr.bf16.gmra.mrb[0].mxu0 %v4582
      %v9307 = vpop.f32.mrb[0].mxu0
      %v9308 = vadd.f32 0.0, %v9307
      %v9309 = vpop.f32.mrb[0].mxu0
      %v9310 = vpop.f32.mrb[0].mxu0
      %v9311 = vadd.f32 0.0, %v9310
      %v9312 = vpop.f32.mrb[0].mxu0
      %9313 = vmatprep.mubr.bf16.mxu0 0
      %9314 = vmatmul.mubr.bf16.gmra.mrb[0].mxu0 %v4585
      %v9315 = vpop.f32.mrb[0].mxu0
      %v9316 = vadd.f32 0.0, %v9315
      %v9317 = vpop.f32.mrb[0].mxu0
      %v9318 = vpop.f32.mrb[0].mxu0
      %v9319 = vadd.f32 0.0, %v9318
      %v9320 = vpop.f32.mrb[0].mxu0
      %9321 = vmatprep.mubr.bf16.mxu0 0
      %9322 = vmatmul.mubr.bf16.gmra.mrb[0].mxu0 %v4588
      %v9323 = vpop.f32.mrb[0].mxu0
      %v9324 = vadd.f32 0.0, %v9323
      %v9325 = vpop.f32.mrb[0].mxu0
      %v9326 = vpop.f32.mrb[0].mxu0
      %v9327 = vadd.f32 0.0, %v9326
      %v9328 = vpop.f32.mrb[0].mxu0
      %9329 = vmatprep.mubr.bf16.mxu0 0
      %9330 = vmatmul.mubr.bf16.gmra.mrb[0].mxu0 %v4591
      %v9331 = vpop.f32.mrb[0].mxu0
      %v9332 = vadd.f32 0.0, %v9331
      %v9333 = vpop.f32.mrb[0].mxu0
      %v9334 = vpop.f32.mrb[0].mxu0
      %v9335 = vadd.f32 0.0, %v9334
      %v9336 = vpop.f32.mrb[0].mxu0
      %9337 = vmatprep.mubr.bf16.mxu0 0
      %9338 = vmatmul.mubr.bf16.gmra.mrb[0].mxu0 %v4594
      %v9339 = vpop.f32.mrb[0].mxu0
      %v9340 = vadd.f32 0.0, %v9339
      %v9341 = vpop.f32.mrb[0].mxu0
      %v9342 = vpop.f32.mrb[0].mxu0
      %v9343 = vadd.f32 0.0, %v9342
      %v9344 = vpop.f32.mrb[0].mxu0
      %9345 = vmatprep.mubr.bf16.mxu0 0
      %9346 = vmatmul.mubr.bf16.gmra.mrb[0].mxu0 %v4597
      %v9347 = vpop.f32.mrb[0].mxu0
      %v9348 = vadd.f32 0.0, %v9347
      %v9349 = vpop.f32.mrb[0].mxu0
      %v9350 = vpop.f32.mrb[0].mxu0
      %v9351 = vadd.f32 0.0, %v9350
      %v9352 = vpop.f32.mrb[0].mxu0
      %9353 = vmatprep.mubr.bf16.mxu0 0
      %9354 = vmatmul.mubr.bf16.gmra.mrb[0].mxu0 %v4600
      %v9355 = vpop.f32.mrb[0].mxu0
      %v9356 = vadd.f32 0.0, %v9355
      %v9357 = vpop.f32.mrb[0].mxu0
      %v9358 = vpop.f32.mrb[0].mxu0
      %v9359 = vadd.f32 0.0, %v9358
      %v9360 = vpop.f32.mrb[0].mxu0
      %9361 = vmatprep.mubr.bf16.mxu0 0
      %9362 = vmatmul.mubr.bf16.gmra.mrb[0].mxu0 %v4603
      %v9363 = vpop.f32.mrb[0].mxu0
      %v9364 = vadd.f32 0.0, %v9363
      %v9365 = vpop.f32.mrb[0].mxu0
      %v9366 = vpop.f32.mrb[0].mxu0
      %v9367 = vadd.f32 0.0, %v9366
      %v9368 = vpop.f32.mrb[0].mxu0
      %9369 = vmatprep.mubr.bf16.mxu0 0
      %9370 = vmatmul.mubr.bf16.gmra.mrb[0].mxu0 %v4606
      %v9371 = vpop.f32.mrb[0].mxu0
      %v9372 = vadd.f32 0.0, %v9371
      %v9373 = vpop.f32.mrb[0].mxu0
      %v9374 = vpop.f32.mrb[0].mxu0
      %v9375 = vadd.f32 0.0, %v9374
      %v9376 = vpop.f32.mrb[0].mxu0
      %9377 = vmatprep.mubr.bf16.mxu0 0
      %9378 = vmatmul.mubr.bf16.gmra.mrb[0].mxu0 %v4609
      %v9379 = vpop.f32.mrb[0].mxu0
      %v9380 = vadd.f32 0.0, %v9379
      %v9381 = vpop.f32.mrb[0].mxu0
      %v9382 = vpop.f32.mrb[0].mxu0
      %v9383 = vadd.f32 0.0, %v9382
      %v9384 = vpop.f32.mrb[0].mxu0
      %9385 = vmatprep.mubr.bf16.mxu0 0
      %9386 = vmatmul.mubr.bf16.gmra.mrb[0].mxu0 %v4612
      %v9387 = vpop.f32.mrb[0].mxu0
      %v9388 = vadd.f32 0.0, %v9387
      %v9389 = vpop.f32.mrb[0].mxu0
      %v9390 = vpop.f32.mrb[0].mxu0
      %v9391 = vadd.f32 0.0, %v9390
      %v9392 = vpop.f32.mrb[0].mxu0
      %9393 = vmatprep.mubr.bf16.mxu0 0
      %9394 = vmatmul.mubr.bf16.gmra.mrb[0].mxu0 %v6741
      %v9395 = vpop.f32.mrb[0].mxu0
      %v9396 = vadd.f32 0.0, %v9395
      %v9397 = vpop.f32.mrb[0].mxu0
      %v9398 = vpop.f32.mrb[0].mxu0
      %v9399 = vadd.f32 0.0, %v9398
      %v9400 = vpop.f32.mrb[0].mxu0
      %9401 = vmatprep.mubr.bf16.mxu0 0
      %9402 = vmatmul.mubr.bf16.gmra.mrb[0].mxu0 %v6744
      %v9403 = vpop.f32.mrb[0].mxu0
      %v9404 = vadd.f32 0.0, %v9403
      %v9405 = vpop.f32.mrb[0].mxu0
      %v9406 = vpop.f32.mrb[0].mxu0
      %v9407 = vadd.f32 0.0, %v9406
      %v9408 = vpop.f32.mrb[0].mxu0
      %9409 = vmatprep.mubr.bf16.mxu0 0
      %9410 = vmatmul.mubr.bf16.gmra.mrb[0].mxu0 %v8873
      %v9411 = vpop.f32.mrb[0].mxu0
      %v9412 = vadd.f32 0.0, %v9411
      %v9413 = vpop.f32.mrb[0].mxu0
      %v9414 = vpop.f32.mrb[0].mxu0
      %v9415 = vadd.f32 0.0, %v9414
      %v9416 = vpop.f32.mrb[0].mxu0
      %9417 = vmatprep.mubr.bf16.mxu0 0
      %9418 = vmatmul.mubr.bf16.gmra.mrb[0].mxu0 %v8876
      %v9419 = vpop.f32.mrb[0].mxu0
      %v9420 = vadd.f32 0.0, %v9419
      %v9421 = vpop.f32.mrb[0].mxu0
      %v9422 = vpop.f32.mrb[0].mxu0
      %v9423 = vadd.f32 0.0, %v9422
      %v9424 = vpop.f32.mrb[0].mxu0
      %9425 = vdwg.mxu0
      %v9426 = vadd.f32 %v8722, %v8916
      %v9427 = vadd.f32 %v8723, %v8919
      %v9428 = vadd.f32 %v8724, %v8924
      %v9429 = vadd.f32 %v8725, %v8927
      %v9430 = vadd.f32 %v8726, %v8932
      %v9431 = vadd.f32 %v8727, %v8935
      %v9432 = vadd.f32 %v8728, %v8940
      %v9433 = vadd.f32 %v8729, %v8943
      %v9434 = vadd.f32 %v8730, %v8948
      %v9435 = vadd.f32 %v8731, %v8951
      %v9436 = vadd.f32 %v8732, %v8956
      %v9437 = vadd.f32 %v8733, %v8959
      %v9438 = vadd.f32 %v8734, %v8964
      %v9439 = vadd.f32 %v8735, %v8967
      %v9440 = vadd.f32 %v8736, %v8972
      %v9441 = vadd.f32 %v8737, %v8975
      %v9442 = vadd.f32 %v8738, %v8980
      %v9443 = vadd.f32 %v8739, %v8983
      %v9444 = vadd.f32 %v8740, %v8988
      %v9445 = vadd.f32 %v8741, %v8991
      %v9446 = vadd.f32 %v8742, %v8996
      %v9447 = vadd.f32 %v8743, %v8999
      %v9448 = vadd.f32 %v8744, %v9004
      %v9449 = vadd.f32 %v8745, %v9007
      %v9450 = vadd.f32 %v8746, %v9012
      %v9451 = vadd.f32 %v8747, %v9015
      %v9452 = vadd.f32 %v8748, %v9020
      %v9453 = vadd.f32 %v8749, %v9023
      %v9454 = vadd.f32 %v8750, %v9028
      %v9455 = vadd.f32 %v8751, %v9031
      %v9456 = vadd.f32 %v8752, %v9036
      %v9457 = vadd.f32 %v8753, %v9039
      %v9458 = vadd.f32 %v8754, %v9044
      %v9459 = vadd.f32 %v8755, %v9047
      %v9460 = vadd.f32 %v8756, %v9052
      %v9461 = vadd.f32 %v8757, %v9055
      %v9462 = vadd.f32 %v8758, %v9060
      %v9463 = vadd.f32 %v8759, %v9063
      %v9464 = vadd.f32 %v8760, %v9068
      %v9465 = vadd.f32 %v8761, %v9071
      %v9466 = vadd.f32 %v8762, %v9076
      %v9467 = vadd.f32 %v8763, %v9079
      %v9468 = vadd.f32 %v8764, %v9084
      %v9469 = vadd.f32 %v8765, %v9087
      %v9470 = vadd.f32 %v8766, %v9092
      %v9471 = vadd.f32 %v8767, %v9095
      %v9472 = vadd.f32 %v8768, %v9100
      %v9473 = vadd.f32 %v8769, %v9103
      %v9474 = vadd.f32 %v8770, %v9108
      %v9475 = vadd.f32 %v8771, %v9111
      %v9476 = vadd.f32 %v8772, %v9116
      %v9477 = vadd.f32 %v8773, %v9119
      %v9478 = vadd.f32 %v8774, %v9124
      %v9479 = vadd.f32 %v8775, %v9127
      %v9480 = vadd.f32 %v8776, %v9132
      %v9481 = vadd.f32 %v8777, %v9135
      %v9482 = vadd.f32 %v8778, %v9140
      %v9483 = vadd.f32 %v8779, %v9143
      %v9484 = vadd.f32 %v8780, %v9148
      %v9485 = vadd.f32 %v8781, %v9151
      %v9486 = vadd.f32 %v8782, %v9156
      %v9487 = vadd.f32 %v8783, %v9159
      %v9488 = vadd.f32 %v8784, %v9164
      %v9489 = vadd.f32 %v8785, %v9167
      %v9490 = vadd.f32 %v8786, %v9172
      %v9491 = vadd.f32 %v8787, %v9175
      %v9492 = vadd.f32 %v8788, %v9180
      %v9493 = vadd.f32 %v8789, %v9183
      %v9494 = vadd.f32 %v8790, %v9188
      %v9495 = vadd.f32 %v8791, %v9191
      %v9496 = vadd.f32 %v8792, %v9196
      %v9497 = vadd.f32 %v8793, %v9199
      %v9498 = vadd.f32 %v8794, %v9204
      %v9499 = vadd.f32 %v8795, %v9207
      %v9500 = vadd.f32 %v8796, %v9212
      %v9501 = vadd.f32 %v8797, %v9215
      %v9502 = vadd.f32 %v8798, %v9220
      %v9503 = vadd.f32 %v8799, %v9223
      %v9504 = vadd.f32 %v8800, %v9228
      %v9505 = vadd.f32 %v8801, %v9231
      %v9506 = vadd.f32 %v8802, %v9236
      %v9507 = vadd.f32 %v8803, %v9239
      %v9508 = vadd.f32 %v8804, %v9244
      %v9509 = vadd.f32 %v8805, %v9247
      %v9510 = vadd.f32 %v8806, %v9252
      %v9511 = vadd.f32 %v8807, %v9255
      %v9512 = vadd.f32 %v8808, %v9260
      %v9513 = vadd.f32 %v8809, %v9263
      %v9514 = vadd.f32 %v8810, %v9268
      %v9515 = vadd.f32 %v8811, %v9271
      %v9516 = vadd.f32 %v8812, %v9276
      %v9517 = vadd.f32 %v8813, %v9279
      %v9518 = vadd.f32 %v8814, %v9284
      %v9519 = vadd.f32 %v8815, %v9287
      %v9520 = vadd.f32 %v8816, %v9292
      %v9521 = vadd.f32 %v8817, %v9295
      %v9522 = vadd.f32 %v8818, %v9300
      %v9523 = vadd.f32 %v8819, %v9303
      %v9524 = vadd.f32 %v8820, %v9308
      %v9525 = vadd.f32 %v8821, %v9311
      %v9526 = vadd.f32 %v8822, %v9316
      %v9527 = vadd.f32 %v8823, %v9319
      %v9528 = vadd.f32 %v8824, %v9324
      %v9529 = vadd.f32 %v8825, %v9327
      %v9530 = vadd.f32 %v8826, %v9332
      %v9531 = vadd.f32 %v8827, %v9335
      %v9532 = vadd.f32 %v8828, %v9340
      %v9533 = vadd.f32 %v8829, %v9343
      %v9534 = vadd.f32 %v8830, %v9348
      %v9535 = vadd.f32 %v8831, %v9351
      %v9536 = vadd.f32 %v8832, %v9356
      %v9537 = vadd.f32 %v8833, %v9359
      %v9538 = vadd.f32 %v8834, %v9364
      %v9539 = vadd.f32 %v8835, %v9367
      %v9540 = vadd.f32 %v8836, %v9372
      %v9541 = vadd.f32 %v8837, %v9375
      %v9542 = vadd.f32 %v8838, %v9380
      %v9543 = vadd.f32 %v8839, %v9383
      %v9544 = vadd.f32 %v8840, %v9388
      %v9545 = vadd.f32 %v8841, %v9391
      %v9546 = vadd.f32 %v8842, %v9396
      %v9547 = vadd.f32 %v8843, %v9399
      %v9548 = vadd.f32 %v8844, %v9404
      %v9549 = vadd.f32 %v8845, %v9407
      %v9550 = vadd.f32 %v8846, %v9412
      %v9551 = vadd.f32 %v8847, %v9415
      %v9552 = vadd.f32 %v8848, %v9420
      %v9553 = vadd.f32 %v8849, %v9423
      %v9554 = vld [vmem:[%s2] sm:$0x1]
      %v9556 = vlaneseq
      %v9557 = vshrl.u32 %v9556, 7
      %v9558 = vsub.s32 0, %v9557
      %v9559 = vrot.slane %v9554, %v9558
      %v9561 = vmul.f32 %v9426, %v9559
      %v9562 = vmul.f32 %v9427, %v9559
      %v9563 = vmul.f32 %v9428, %v9559
      %v9564 = vmul.f32 %v9429, %v9559
      %v9565 = vmul.f32 %v9430, %v9559
      %v9566 = vmul.f32 %v9431, %v9559
      %v9567 = vmul.f32 %v9432, %v9559
      %v9568 = vmul.f32 %v9433, %v9559
      %v9569 = vmul.f32 %v9434, %v9559
      %v9570 = vmul.f32 %v9435, %v9559
      %v9571 = vmul.f32 %v9436, %v9559
      %v9572 = vmul.f32 %v9437, %v9559
      %v9573 = vmul.f32 %v9438, %v9559
      %v9574 = vmul.f32 %v9439, %v9559
      %v9575 = vmul.f32 %v9440, %v9559
      %v9576 = vmul.f32 %v9441, %v9559
      %v9577 = vmul.f32 %v9442, %v9559
      %v9578 = vmul.f32 %v9443, %v9559
      %v9579 = vmul.f32 %v9444, %v9559
      %v9580 = vmul.f32 %v9445, %v9559
      %v9581 = vmul.f32 %v9446, %v9559
      %v9582 = vmul.f32 %v9447, %v9559
      %v9583 = vmul.f32 %v9448, %v9559
      %v9584 = vmul.f32 %v9449, %v9559
      %v9585 = vmul.f32 %v9450, %v9559
      %v9586 = vmul.f32 %v9451, %v9559
      %v9587 = vmul.f32 %v9452, %v9559
      %v9588 = vmul.f32 %v9453, %v9559
      %v9589 = vmul.f32 %v9454, %v9559
      %v9590 = vmul.f32 %v9455, %v9559
      %v9591 = vmul.f32 %v9456, %v9559
      %v9592 = vmul.f32 %v9457, %v9559
      %v9593 = vmul.f32 %v9458, %v9559
      %v9594 = vmul.f32 %v9459, %v9559
      %v9595 = vmul.f32 %v9460, %v9559
      %v9596 = vmul.f32 %v9461, %v9559
      %v9597 = vmul.f32 %v9462, %v9559
      %v9598 = vmul.f32 %v9463, %v9559
      %v9599 = vmul.f32 %v9464, %v9559
      %v9600 = vmul.f32 %v9465, %v9559
      %v9601 = vmul.f32 %v9466, %v9559
      %v9602 = vmul.f32 %v9467, %v9559
      %v9603 = vmul.f32 %v9468, %v9559
      %v9604 = vmul.f32 %v9469, %v9559
      %v9605 = vmul.f32 %v9470, %v9559
      %v9606 = vmul.f32 %v9471, %v9559
      %v9607 = vmul.f32 %v9472, %v9559
      %v9608 = vmul.f32 %v9473, %v9559
      %v9609 = vmul.f32 %v9474, %v9559
      %v9610 = vmul.f32 %v9475, %v9559
      %v9611 = vmul.f32 %v9476, %v9559
      %v9612 = vmul.f32 %v9477, %v9559
      %v9613 = vmul.f32 %v9478, %v9559
      %v9614 = vmul.f32 %v9479, %v9559
      %v9615 = vmul.f32 %v9480, %v9559
      %v9616 = vmul.f32 %v9481, %v9559
      %v9617 = vmul.f32 %v9482, %v9559
      %v9618 = vmul.f32 %v9483, %v9559
      %v9619 = vmul.f32 %v9484, %v9559
      %v9620 = vmul.f32 %v9485, %v9559
      %v9621 = vmul.f32 %v9486, %v9559
      %v9622 = vmul.f32 %v9487, %v9559
      %v9623 = vmul.f32 %v9488, %v9559
      %v9624 = vmul.f32 %v9489, %v9559
      %v9625 = vmul.f32 %v9490, %v9559
      %v9626 = vmul.f32 %v9491, %v9559
      %v9627 = vmul.f32 %v9492, %v9559
      %v9628 = vmul.f32 %v9493, %v9559
      %v9629 = vmul.f32 %v9494, %v9559
      %v9630 = vmul.f32 %v9495, %v9559
      %v9631 = vmul.f32 %v9496, %v9559
      %v9632 = vmul.f32 %v9497, %v9559
      %v9633 = vmul.f32 %v9498, %v9559
      %v9634 = vmul.f32 %v9499, %v9559
      %v9635 = vmul.f32 %v9500, %v9559
      %v9636 = vmul.f32 %v9501, %v9559
      %v9637 = vmul.f32 %v9502, %v9559
      %v9638 = vmul.f32 %v9503, %v9559
      %v9639 = vmul.f32 %v9504, %v9559
      %v9640 = vmul.f32 %v9505, %v9559
      %v9641 = vmul.f32 %v9506, %v9559
      %v9642 = vmul.f32 %v9507, %v9559
      %v9643 = vmul.f32 %v9508, %v9559
      %v9644 = vmul.f32 %v9509, %v9559
      %v9645 = vmul.f32 %v9510, %v9559
      %v9646 = vmul.f32 %v9511, %v9559
      %v9647 = vmul.f32 %v9512, %v9559
      %v9648 = vmul.f32 %v9513, %v9559
      %v9649 = vmul.f32 %v9514, %v9559
      %v9650 = vmul.f32 %v9515, %v9559
      %v9651 = vmul.f32 %v9516, %v9559
      %v9652 = vmul.f32 %v9517, %v9559
      %v9653 = vmul.f32 %v9518, %v9559
      %v9654 = vmul.f32 %v9519, %v9559
      %v9655 = vmul.f32 %v9520, %v9559
      %v9656 = vmul.f32 %v9521, %v9559
      %v9657 = vmul.f32 %v9522, %v9559
      %v9658 = vmul.f32 %v9523, %v9559
      %v9659 = vmul.f32 %v9524, %v9559
      %v9660 = vmul.f32 %v9525, %v9559
      %v9661 = vmul.f32 %v9526, %v9559
      %v9662 = vmul.f32 %v9527, %v9559
      %v9663 = vmul.f32 %v9528, %v9559
      %v9664 = vmul.f32 %v9529, %v9559
      %v9665 = vmul.f32 %v9530, %v9559
      %v9666 = vmul.f32 %v9531, %v9559
      %v9667 = vmul.f32 %v9532, %v9559
      %v9668 = vmul.f32 %v9533, %v9559
      %v9669 = vmul.f32 %v9534, %v9559
      %v9670 = vmul.f32 %v9535, %v9559
      %v9671 = vmul.f32 %v9536, %v9559
      %v9672 = vmul.f32 %v9537, %v9559
      %v9673 = vmul.f32 %v9538, %v9559
      %v9674 = vmul.f32 %v9539, %v9559
      %v9675 = vmul.f32 %v9540, %v9559
      %v9676 = vmul.f32 %v9541, %v9559
      %v9677 = vmul.f32 %v9542, %v9559
      %v9678 = vmul.f32 %v9543, %v9559
      %v9679 = vmul.f32 %v9544, %v9559
      %v9680 = vmul.f32 %v9545, %v9559
      %v9681 = vmul.f32 %v9546, %v9559
      %v9682 = vmul.f32 %v9547, %v9559
      %v9683 = vmul.f32 %v9548, %v9559
      %v9684 = vmul.f32 %v9549, %v9559
      %v9685 = vmul.f32 %v9550, %v9559
      %v9686 = vmul.f32 %v9551, %v9559
      %v9687 = vmul.f32 %v9552, %v9559
      %v9688 = vmul.f32 %v9553, %v9559
      %v9689 = vld [vmem:[%s3] sm:$0x1]
      %v9691 = vlaneseq
      %v9692 = vshrl.u32 %v9691, 7
      %v9693 = vsub.s32 0, %v9692
      %v9694 = vrot.slane %v9689, %v9693
      %v9696 = vadd.f32 %v9561, %v9694
      %v9697 = vadd.f32 %v9562, %v9694
      %v9698 = vadd.f32 %v9563, %v9694
      %v9699 = vadd.f32 %v9564, %v9694
      %v9700 = vadd.f32 %v9565, %v9694
      %v9701 = vadd.f32 %v9566, %v9694
      %v9702 = vadd.f32 %v9567, %v9694
      %v9703 = vadd.f32 %v9568, %v9694
      %v9704 = vadd.f32 %v9569, %v9694
      %v9705 = vadd.f32 %v9570, %v9694
      %v9706 = vadd.f32 %v9571, %v9694
      %v9707 = vadd.f32 %v9572, %v9694
      %v9708 = vadd.f32 %v9573, %v9694
      %v9709 = vadd.f32 %v9574, %v9694
      %v9710 = vadd.f32 %v9575, %v9694
      %v9711 = vadd.f32 %v9576, %v9694
      %v9712 = vadd.f32 %v9577, %v9694
      %v9713 = vadd.f32 %v9578, %v9694
      %v9714 = vadd.f32 %v9579, %v9694
      %v9715 = vadd.f32 %v9580, %v9694
      %v9716 = vadd.f32 %v9581, %v9694
      %v9717 = vadd.f32 %v9582, %v9694
      %v9718 = vadd.f32 %v9583, %v9694
      %v9719 = vadd.f32 %v9584, %v9694
      %v9720 = vadd.f32 %v9585, %v9694
      %v9721 = vadd.f32 %v9586, %v9694
      %v9722 = vadd.f32 %v9587, %v9694
      %v9723 = vadd.f32 %v9588, %v9694
      %v9724 = vadd.f32 %v9589, %v9694
      %v9725 = vadd.f32 %v9590, %v9694
      %v9726 = vadd.f32 %v9591, %v9694
      %v9727 = vadd.f32 %v9592, %v9694
      %v9728 = vadd.f32 %v9593, %v9694
      %v9729 = vadd.f32 %v9594, %v9694
      %v9730 = vadd.f32 %v9595, %v9694
      %v9731 = vadd.f32 %v9596, %v9694
      %v9732 = vadd.f32 %v9597, %v9694
      %v9733 = vadd.f32 %v9598, %v9694
      %v9734 = vadd.f32 %v9599, %v9694
      %v9735 = vadd.f32 %v9600, %v9694
      %v9736 = vadd.f32 %v9601, %v9694
      %v9737 = vadd.f32 %v9602, %v9694
      %v9738 = vadd.f32 %v9603, %v9694
      %v9739 = vadd.f32 %v9604, %v9694
      %v9740 = vadd.f32 %v9605, %v9694
      %v9741 = vadd.f32 %v9606, %v9694
      %v9742 = vadd.f32 %v9607, %v9694
      %v9743 = vadd.f32 %v9608, %v9694
      %v9744 = vadd.f32 %v9609, %v9694
      %v9745 = vadd.f32 %v9610, %v9694
      %v9746 = vadd.f32 %v9611, %v9694
      %v9747 = vadd.f32 %v9612, %v9694
      %v9748 = vadd.f32 %v9613, %v9694
      %v9749 = vadd.f32 %v9614, %v9694
      %v9750 = vadd.f32 %v9615, %v9694
      %v9751 = vadd.f32 %v9616, %v9694
      %v9752 = vadd.f32 %v9617, %v9694
      %v9753 = vadd.f32 %v9618, %v9694
      %v9754 = vadd.f32 %v9619, %v9694
      %v9755 = vadd.f32 %v9620, %v9694
      %v9756 = vadd.f32 %v9621, %v9694
      %v9757 = vadd.f32 %v9622, %v9694
      %v9758 = vadd.f32 %v9623, %v9694
      %v9759 = vadd.f32 %v9624, %v9694
      %v9760 = vadd.f32 %v9625, %v9694
      %v9761 = vadd.f32 %v9626, %v9694
      %v9762 = vadd.f32 %v9627, %v9694
      %v9763 = vadd.f32 %v9628, %v9694
      %v9764 = vadd.f32 %v9629, %v9694
      %v9765 = vadd.f32 %v9630, %v9694
      %v9766 = vadd.f32 %v9631, %v9694
      %v9767 = vadd.f32 %v9632, %v9694
      %v9768 = vadd.f32 %v9633, %v9694
      %v9769 = vadd.f32 %v9634, %v9694
      %v9770 = vadd.f32 %v9635, %v9694
      %v9771 = vadd.f32 %v9636, %v9694
      %v9772 = vadd.f32 %v9637, %v9694
      %v9773 = vadd.f32 %v9638, %v9694
      %v9774 = vadd.f32 %v9639, %v9694
      %v9775 = vadd.f32 %v9640, %v9694
      %v9776 = vadd.f32 %v9641, %v9694
      %v9777 = vadd.f32 %v9642, %v9694
      %v9778 = vadd.f32 %v9643, %v9694
      %v9779 = vadd.f32 %v9644, %v9694
      %v9780 = vadd.f32 %v9645, %v9694
      %v9781 = vadd.f32 %v9646, %v9694
      %v9782 = vadd.f32 %v9647, %v9694
      %v9783 = vadd.f32 %v9648, %v9694
      %v9784 = vadd.f32 %v9649, %v9694
      %v9785 = vadd.f32 %v9650, %v9694
      %v9786 = vadd.f32 %v9651, %v9694
      %v9787 = vadd.f32 %v9652, %v9694
      %v9788 = vadd.f32 %v9653, %v9694
      %v9789 = vadd.f32 %v9654, %v9694
      %v9790 = vadd.f32 %v9655, %v9694
      %v9791 = vadd.f32 %v9656, %v9694
      %v9792 = vadd.f32 %v9657, %v9694
      %v9793 = vadd.f32 %v9658, %v9694
      %v9794 = vadd.f32 %v9659, %v9694
      %v9795 = vadd.f32 %v9660, %v9694
      %v9796 = vadd.f32 %v9661, %v9694
      %v9797 = vadd.f32 %v9662, %v9694
      %v9798 = vadd.f32 %v9663, %v9694
      %v9799 = vadd.f32 %v9664, %v9694
      %v9800 = vadd.f32 %v9665, %v9694
      %v9801 = vadd.f32 %v9666, %v9694
      %v9802 = vadd.f32 %v9667, %v9694
      %v9803 = vadd.f32 %v9668, %v9694
      %v9804 = vadd.f32 %v9669, %v9694
      %v9805 = vadd.f32 %v9670, %v9694
      %v9806 = vadd.f32 %v9671, %v9694
      %v9807 = vadd.f32 %v9672, %v9694
      %v9808 = vadd.f32 %v9673, %v9694
      %v9809 = vadd.f32 %v9674, %v9694
      %v9810 = vadd.f32 %v9675, %v9694
      %v9811 = vadd.f32 %v9676, %v9694
      %v9812 = vadd.f32 %v9677, %v9694
      %v9813 = vadd.f32 %v9678, %v9694
      %v9814 = vadd.f32 %v9679, %v9694
      %v9815 = vadd.f32 %v9680, %v9694
      %v9816 = vadd.f32 %v9681, %v9694
      %v9817 = vadd.f32 %v9682, %v9694
      %v9818 = vadd.f32 %v9683, %v9694
      %v9819 = vadd.f32 %v9684, %v9694
      %v9820 = vadd.f32 %v9685, %v9694
      %v9821 = vadd.f32 %v9686, %v9694
      %v9822 = vadd.f32 %v9687, %v9694
      %v9823 = vadd.f32 %v9688, %v9694
      %v9824 = vmax.f32 %v9696, 0.0
      %v9825 = vmax.f32 %v9697, 0.0
      %v9826 = vmax.f32 %v9698, 0.0
      %v9827 = vmax.f32 %v9699, 0.0
      %v9828 = vmax.f32 %v9700, 0.0
      %v9829 = vmax.f32 %v9701, 0.0
      %v9830 = vmax.f32 %v9702, 0.0
      %v9831 = vmax.f32 %v9703, 0.0
      %v9832 = vmax.f32 %v9704, 0.0
      %v9833 = vmax.f32 %v9705, 0.0
      %v9834 = vmax.f32 %v9706, 0.0
      %v9835 = vmax.f32 %v9707, 0.0
      %v9836 = vmax.f32 %v9708, 0.0
      %v9837 = vmax.f32 %v9709, 0.0
      %v9838 = vmax.f32 %v9710, 0.0
      %v9839 = vmax.f32 %v9711, 0.0
      %v9840 = vmax.f32 %v9712, 0.0
      %v9841 = vmax.f32 %v9713, 0.0
      %v9842 = vmax.f32 %v9714, 0.0
      %v9843 = vmax.f32 %v9715, 0.0
      %v9844 = vmax.f32 %v9716, 0.0
      %v9845 = vmax.f32 %v9717, 0.0
      %v9846 = vmax.f32 %v9718, 0.0
      %v9847 = vmax.f32 %v9719, 0.0
      %v9848 = vmax.f32 %v9720, 0.0
      %v9849 = vmax.f32 %v9721, 0.0
      %v9850 = vmax.f32 %v9722, 0.0
      %v9851 = vmax.f32 %v9723, 0.0
      %v9852 = vmax.f32 %v9724, 0.0
      %v9853 = vmax.f32 %v9725, 0.0
      %v9854 = vmax.f32 %v9726, 0.0
      %v9855 = vmax.f32 %v9727, 0.0
      %v9856 = vmax.f32 %v9728, 0.0
      %v9857 = vmax.f32 %v9729, 0.0
      %v9858 = vmax.f32 %v9730, 0.0
      %v9859 = vmax.f32 %v9731, 0.0
      %v9860 = vmax.f32 %v9732, 0.0
      %v9861 = vmax.f32 %v9733, 0.0
      %v9862 = vmax.f32 %v9734, 0.0
      %v9863 = vmax.f32 %v9735, 0.0
      %v9864 = vmax.f32 %v9736, 0.0
      %v9865 = vmax.f32 %v9737, 0.0
      %v9866 = vmax.f32 %v9738, 0.0
      %v9867 = vmax.f32 %v9739, 0.0
      %v9868 = vmax.f32 %v9740, 0.0
      %v9869 = vmax.f32 %v9741, 0.0
      %v9870 = vmax.f32 %v9742, 0.0
      %v9871 = vmax.f32 %v9743, 0.0
      %v9872 = vmax.f32 %v9744, 0.0
      %v9873 = vmax.f32 %v9745, 0.0
      %v9874 = vmax.f32 %v9746, 0.0
      %v9875 = vmax.f32 %v9747, 0.0
      %v9876 = vmax.f32 %v9748, 0.0
      %v9877 = vmax.f32 %v9749, 0.0
      %v9878 = vmax.f32 %v9750, 0.0
      %v9879 = vmax.f32 %v9751, 0.0
      %v9880 = vmax.f32 %v9752, 0.0
      %v9881 = vmax.f32 %v9753, 0.0
      %v9882 = vmax.f32 %v9754, 0.0
      %v9883 = vmax.f32 %v9755, 0.0
      %v9884 = vmax.f32 %v9756, 0.0
      %v9885 = vmax.f32 %v9757, 0.0
      %v9886 = vmax.f32 %v9758, 0.0
      %v9887 = vmax.f32 %v9759, 0.0
      %v9888 = vmax.f32 %v9760, 0.0
      %v9889 = vmax.f32 %v9761, 0.0
      %v9890 = vmax.f32 %v9762, 0.0
      %v9891 = vmax.f32 %v9763, 0.0
      %v9892 = vmax.f32 %v9764, 0.0
      %v9893 = vmax.f32 %v9765, 0.0
      %v9894 = vmax.f32 %v9766, 0.0
      %v9895 = vmax.f32 %v9767, 0.0
      %v9896 = vmax.f32 %v9768, 0.0
      %v9897 = vmax.f32 %v9769, 0.0
      %v9898 = vmax.f32 %v9770, 0.0
      %v9899 = vmax.f32 %v9771, 0.0
      %v9900 = vmax.f32 %v9772, 0.0
      %v9901 = vmax.f32 %v9773, 0.0
      %v9902 = vmax.f32 %v9774, 0.0
      %v9903 = vmax.f32 %v9775, 0.0
      %v9904 = vmax.f32 %v9776, 0.0
      %v9905 = vmax.f32 %v9777, 0.0
      %v9906 = vmax.f32 %v9778, 0.0
      %v9907 = vmax.f32 %v9779, 0.0
      %v9908 = vmax.f32 %v9780, 0.0
      %v9909 = vmax.f32 %v9781, 0.0
      %v9910 = vmax.f32 %v9782, 0.0
      %v9911 = vmax.f32 %v9783, 0.0
      %v9912 = vmax.f32 %v9784, 0.0
      %v9913 = vmax.f32 %v9785, 0.0
      %v9914 = vmax.f32 %v9786, 0.0
      %v9915 = vmax.f32 %v9787, 0.0
      %v9916 = vmax.f32 %v9788, 0.0
      %v9917 = vmax.f32 %v9789, 0.0
      %v9918 = vmax.f32 %v9790, 0.0
      %v9919 = vmax.f32 %v9791, 0.0
      %v9920 = vmax.f32 %v9792, 0.0
      %v9921 = vmax.f32 %v9793, 0.0
      %v9922 = vmax.f32 %v9794, 0.0
      %v9923 = vmax.f32 %v9795, 0.0
      %v9924 = vmax.f32 %v9796, 0.0
      %v9925 = vmax.f32 %v9797, 0.0
      %v9926 = vmax.f32 %v9798, 0.0
      %v9927 = vmax.f32 %v9799, 0.0
      %v9928 = vmax.f32 %v9800, 0.0
      %v9929 = vmax.f32 %v9801, 0.0
      %v9930 = vmax.f32 %v9802, 0.0
      %v9931 = vmax.f32 %v9803, 0.0
      %v9932 = vmax.f32 %v9804, 0.0
      %v9933 = vmax.f32 %v9805, 0.0
      %v9934 = vmax.f32 %v9806, 0.0
      %v9935 = vmax.f32 %v9807, 0.0
      %v9936 = vmax.f32 %v9808, 0.0
      %v9937 = vmax.f32 %v9809, 0.0
      %v9938 = vmax.f32 %v9810, 0.0
      %v9939 = vmax.f32 %v9811, 0.0
      %v9940 = vmax.f32 %v9812, 0.0
      %v9941 = vmax.f32 %v9813, 0.0
      %v9942 = vmax.f32 %v9814, 0.0
      %v9943 = vmax.f32 %v9815, 0.0
      %v9944 = vmax.f32 %v9816, 0.0
      %v9945 = vmax.f32 %v9817, 0.0
      %v9946 = vmax.f32 %v9818, 0.0
      %v9947 = vmax.f32 %v9819, 0.0
      %v9948 = vmax.f32 %v9820, 0.0
      %v9949 = vmax.f32 %v9821, 0.0
      %v9950 = vmax.f32 %v9822, 0.0
      %v9951 = vmax.f32 %v9823, 0.0
      %v9952 = vpack.c.bf16 %v9825, %v9824
      %v9953 = vpack.c.bf16 %v9827, %v9826
      %v9954 = vpack.c.bf16 %v9829, %v9828
      %v9955 = vpack.c.bf16 %v9831, %v9830
      %v9956 = vpack.c.bf16 %v9833, %v9832
      %v9957 = vpack.c.bf16 %v9835, %v9834
      %v9958 = vpack.c.bf16 %v9837, %v9836
      %v9959 = vpack.c.bf16 %v9839, %v9838
      %v9960 = vpack.c.bf16 %v9841, %v9840
      %v9961 = vpack.c.bf16 %v9843, %v9842
      %v9962 = vpack.c.bf16 %v9845, %v9844
      %v9963 = vpack.c.bf16 %v9847, %v9846
      %v9964 = vpack.c.bf16 %v9849, %v9848
      %v9965 = vpack.c.bf16 %v9851, %v9850
      %v9966 = vpack.c.bf16 %v9853, %v9852
      %v9967 = vpack.c.bf16 %v9855, %v9854
      %v9968 = vpack.c.bf16 %v9857, %v9856
      %v9969 = vpack.c.bf16 %v9859, %v9858
      %v9970 = vpack.c.bf16 %v9861, %v9860
      %v9971 = vpack.c.bf16 %v9863, %v9862
      %v9972 = vpack.c.bf16 %v9865, %v9864
      %v9973 = vpack.c.bf16 %v9867, %v9866
      %v9974 = vpack.c.bf16 %v9869, %v9868
      %v9975 = vpack.c.bf16 %v9871, %v9870
      %v9976 = vpack.c.bf16 %v9873, %v9872
      %v9977 = vpack.c.bf16 %v9875, %v9874
      %v9978 = vpack.c.bf16 %v9877, %v9876
      %v9979 = vpack.c.bf16 %v9879, %v9878
      %v9980 = vpack.c.bf16 %v9881, %v9880
      %v9981 = vpack.c.bf16 %v9883, %v9882
      %v9982 = vpack.c.bf16 %v9885, %v9884
      %v9983 = vpack.c.bf16 %v9887, %v9886
      %v9984 = vpack.c.bf16 %v9889, %v9888
      %v9985 = vpack.c.bf16 %v9891, %v9890
      %v9986 = vpack.c.bf16 %v9893, %v9892
      %v9987 = vpack.c.bf16 %v9895, %v9894
      %v9988 = vpack.c.bf16 %v9897, %v9896
      %v9989 = vpack.c.bf16 %v9899, %v9898
      %v9990 = vpack.c.bf16 %v9901, %v9900
      %v9991 = vpack.c.bf16 %v9903, %v9902
      %v9992 = vpack.c.bf16 %v9905, %v9904
      %v9993 = vpack.c.bf16 %v9907, %v9906
      %v9994 = vpack.c.bf16 %v9909, %v9908
      %v9995 = vpack.c.bf16 %v9911, %v9910
      %v9996 = vpack.c.bf16 %v9913, %v9912
      %v9997 = vpack.c.bf16 %v9915, %v9914
      %v9998 = vpack.c.bf16 %v9917, %v9916
      %v9999 = vpack.c.bf16 %v9919, %v9918
      %v10000 = vpack.c.bf16 %v9921, %v9920
      %v10001 = vpack.c.bf16 %v9923, %v9922
      %v10002 = vpack.c.bf16 %v9925, %v9924
      %v10003 = vpack.c.bf16 %v9927, %v9926
      %v10004 = vpack.c.bf16 %v9929, %v9928
      %v10005 = vpack.c.bf16 %v9931, %v9930
      %v10006 = vpack.c.bf16 %v9933, %v9932
      %v10007 = vpack.c.bf16 %v9935, %v9934
      %v10008 = vpack.c.bf16 %v9937, %v9936
      %v10009 = vpack.c.bf16 %v9939, %v9938
      %v10010 = vpack.c.bf16 %v9941, %v9940
      %v10011 = vpack.c.bf16 %v9943, %v9942
      %v10012 = vpack.c.bf16 %v9945, %v9944
      %v10013 = vpack.c.bf16 %v9947, %v9946
      %v10014 = vpack.c.bf16 %v9949, %v9948
      %v10015 = vpack.c.bf16 %v9951, %v9950
      %v10080 = vunpack.c.l.b16 %v9952
      %v10081 = vunpack.c.h.b16 %v9952
      %v10082 = vunpack.c.l.b16 %v9953
      %v10083 = vunpack.c.h.b16 %v9953
      %v10084 = vunpack.c.l.b16 %v9954
      %v10085 = vunpack.c.h.b16 %v9954
      %v10086 = vunpack.c.l.b16 %v9955
      %v10087 = vunpack.c.h.b16 %v9955
      %v10088 = vunpack.c.l.b16 %v9956
      %v10089 = vunpack.c.h.b16 %v9956
      %v10090 = vunpack.c.l.b16 %v9957
      %v10091 = vunpack.c.h.b16 %v9957
      %v10092 = vunpack.c.l.b16 %v9958
      %v10093 = vunpack.c.h.b16 %v9958
      %v10094 = vunpack.c.l.b16 %v9959
      %v10095 = vunpack.c.h.b16 %v9959
      %v10096 = vunpack.c.l.b16 %v9960
      %v10097 = vunpack.c.h.b16 %v9960
      %v10098 = vunpack.c.l.b16 %v9961
      %v10099 = vunpack.c.h.b16 %v9961
      %v10100 = vunpack.c.l.b16 %v9962
      %v10101 = vunpack.c.h.b16 %v9962
      %v10102 = vunpack.c.l.b16 %v9963
      %v10103 = vunpack.c.h.b16 %v9963
      %v10104 = vunpack.c.l.b16 %v9964
      %v10105 = vunpack.c.h.b16 %v9964
      %v10106 = vunpack.c.l.b16 %v9965
      %v10107 = vunpack.c.h.b16 %v9965
      %v10108 = vunpack.c.l.b16 %v9966
      %v10109 = vunpack.c.h.b16 %v9966
      %v10110 = vunpack.c.l.b16 %v9967
      %v10111 = vunpack.c.h.b16 %v9967
      %v10112 = vunpack.c.l.b16 %v9968
      %v10113 = vunpack.c.h.b16 %v9968
      %v10114 = vunpack.c.l.b16 %v9969
      %v10115 = vunpack.c.h.b16 %v9969
      %v10116 = vunpack.c.l.b16 %v9970
      %v10117 = vunpack.c.h.b16 %v9970
      %v10118 = vunpack.c.l.b16 %v9971
      %v10119 = vunpack.c.h.b16 %v9971
      %v10120 = vunpack.c.l.b16 %v9972
      %v10121 = vunpack.c.h.b16 %v9972
      %v10122 = vunpack.c.l.b16 %v9973
      %v10123 = vunpack.c.h.b16 %v9973
      %v10124 = vunpack.c.l.b16 %v9974
      %v10125 = vunpack.c.h.b16 %v9974
      %v10126 = vunpack.c.l.b16 %v9975
      %v10127 = vunpack.c.h.b16 %v9975
      %v10128 = vunpack.c.l.b16 %v9976
      %v10129 = vunpack.c.h.b16 %v9976
      %v10130 = vunpack.c.l.b16 %v9977
      %v10131 = vunpack.c.h.b16 %v9977
      %v10132 = vunpack.c.l.b16 %v9978
      %v10133 = vunpack.c.h.b16 %v9978
      %v10134 = vunpack.c.l.b16 %v9979
      %v10135 = vunpack.c.h.b16 %v9979
      %v10136 = vunpack.c.l.b16 %v9980
      %v10137 = vunpack.c.h.b16 %v9980
      %v10138 = vunpack.c.l.b16 %v9981
      %v10139 = vunpack.c.h.b16 %v9981
      %v10140 = vunpack.c.l.b16 %v9982
      %v10141 = vunpack.c.h.b16 %v9982
      %v10142 = vunpack.c.l.b16 %v9983
      %v10143 = vunpack.c.h.b16 %v9983
      %v10144 = vunpack.c.l.b16 %v9984
      %v10145 = vunpack.c.h.b16 %v9984
      %v10146 = vunpack.c.l.b16 %v9985
      %v10147 = vunpack.c.h.b16 %v9985
      %v10148 = vunpack.c.l.b16 %v9986
      %v10149 = vunpack.c.h.b16 %v9986
      %v10150 = vunpack.c.l.b16 %v9987
      %v10151 = vunpack.c.h.b16 %v9987
      %v10152 = vunpack.c.l.b16 %v9988
      %v10153 = vunpack.c.h.b16 %v9988
      %v10154 = vunpack.c.l.b16 %v9989
      %v10155 = vunpack.c.h.b16 %v9989
      %v10156 = vunpack.c.l.b16 %v9990
      %v10157 = vunpack.c.h.b16 %v9990
      %v10158 = vunpack.c.l.b16 %v9991
      %v10159 = vunpack.c.h.b16 %v9991
      %v10160 = vunpack.c.l.b16 %v9992
      %v10161 = vunpack.c.h.b16 %v9992
      %v10162 = vunpack.c.l.b16 %v9993
      %v10163 = vunpack.c.h.b16 %v9993
      %v10164 = vunpack.c.l.b16 %v9994
      %v10165 = vunpack.c.h.b16 %v9994
      %v10166 = vunpack.c.l.b16 %v9995
      %v10167 = vunpack.c.h.b16 %v9995
      %v10168 = vunpack.c.l.b16 %v9996
      %v10169 = vunpack.c.h.b16 %v9996
      %v10170 = vunpack.c.l.b16 %v9997
      %v10171 = vunpack.c.h.b16 %v9997
      %v10172 = vunpack.c.l.b16 %v9998
      %v10173 = vunpack.c.h.b16 %v9998
      %v10174 = vunpack.c.l.b16 %v9999
      %v10175 = vunpack.c.h.b16 %v9999
      %v10176 = vunpack.c.l.b16 %v10000
      %v10177 = vunpack.c.h.b16 %v10000
      %v10178 = vunpack.c.l.b16 %v10001
      %v10179 = vunpack.c.h.b16 %v10001
      %v10180 = vunpack.c.l.b16 %v10002
      %v10181 = vunpack.c.h.b16 %v10002
      %v10182 = vunpack.c.l.b16 %v10003
      %v10183 = vunpack.c.h.b16 %v10003
      %v10184 = vunpack.c.l.b16 %v10004
      %v10185 = vunpack.c.h.b16 %v10004
      %v10186 = vunpack.c.l.b16 %v10005
      %v10187 = vunpack.c.h.b16 %v10005
      %v10188 = vunpack.c.l.b16 %v10006
      %v10189 = vunpack.c.h.b16 %v10006
      %v10190 = vunpack.c.l.b16 %v10007
      %v10191 = vunpack.c.h.b16 %v10007
      %v10192 = vunpack.c.l.b16 %v10008
      %v10193 = vunpack.c.h.b16 %v10008
      %v10194 = vunpack.c.l.b16 %v10009
      %v10195 = vunpack.c.h.b16 %v10009
      %v10196 = vunpack.c.l.b16 %v10010
      %v10197 = vunpack.c.h.b16 %v10010
      %v10198 = vunpack.c.l.b16 %v10011
      %v10199 = vunpack.c.h.b16 %v10011
      %v10200 = vunpack.c.l.b16 %v10012
      %v10201 = vunpack.c.h.b16 %v10012
      %v10202 = vunpack.c.l.b16 %v10013
      %v10203 = vunpack.c.h.b16 %v10013
      %v10204 = vunpack.c.l.b16 %v10014
      %v10205 = vunpack.c.h.b16 %v10014
      %v10206 = vunpack.c.l.b16 %v10015
      %v10207 = vunpack.c.h.b16 %v10015
      %v10208 = vpack.c.b16 %v10080, %v10080
      %v10209 = vpack.c.b16 %v10081, %v10081
      %v10210 = vpack.c.b16 %v10082, %v10082
      %v10211 = vpack.c.b16 %v10083, %v10083
      %v10212 = vpack.c.b16 %v10084, %v10084
      %v10213 = vpack.c.b16 %v10085, %v10085
      %v10214 = vpack.c.b16 %v10086, %v10086
      %v10215 = vpack.c.b16 %v10087, %v10087
      %v10216 = vpack.c.b16 %v10088, %v10088
      %v10217 = vpack.c.b16 %v10089, %v10089
      %v10218 = vpack.c.b16 %v10090, %v10090
      %v10219 = vpack.c.b16 %v10091, %v10091
      %v10220 = vpack.c.b16 %v10092, %v10092
      %v10221 = vpack.c.b16 %v10093, %v10093
      %v10222 = vpack.c.b16 %v10094, %v10094
      %v10223 = vpack.c.b16 %v10095, %v10095
      %v10224 = vpack.c.b16 %v10096, %v10096
      %v10225 = vpack.c.b16 %v10097, %v10097
      %v10226 = vpack.c.b16 %v10098, %v10098
      %v10227 = vpack.c.b16 %v10099, %v10099
      %v10228 = vpack.c.b16 %v10100, %v10100
      %v10229 = vpack.c.b16 %v10101, %v10101
      %v10230 = vpack.c.b16 %v10102, %v10102
      %v10231 = vpack.c.b16 %v10103, %v10103
      %v10232 = vpack.c.b16 %v10104, %v10104
      %v10233 = vpack.c.b16 %v10105, %v10105
      %v10234 = vpack.c.b16 %v10106, %v10106
      %v10235 = vpack.c.b16 %v10107, %v10107
      %v10236 = vpack.c.b16 %v10108, %v10108
      %v10237 = vpack.c.b16 %v10109, %v10109
      %v10238 = vpack.c.b16 %v10110, %v10110
      %v10239 = vpack.c.b16 %v10111, %v10111
      %v10240 = vpack.c.b16 %v10112, %v10112
      %v10241 = vpack.c.b16 %v10113, %v10113
      %v10242 = vpack.c.b16 %v10114, %v10114
      %v10243 = vpack.c.b16 %v10115, %v10115
      %v10244 = vpack.c.b16 %v10116, %v10116
      %v10245 = vpack.c.b16 %v10117, %v10117
      %v10246 = vpack.c.b16 %v10118, %v10118
      %v10247 = vpack.c.b16 %v10119, %v10119
      %v10248 = vpack.c.b16 %v10120, %v10120
      %v10249 = vpack.c.b16 %v10121, %v10121
      %v10250 = vpack.c.b16 %v10122, %v10122
      %v10251 = vpack.c.b16 %v10123, %v10123
      %v10252 = vpack.c.b16 %v10124, %v10124
      %v10253 = vpack.c.b16 %v10125, %v10125
      %v10254 = vpack.c.b16 %v10126, %v10126
      %v10255 = vpack.c.b16 %v10127, %v10127
      %v10256 = vpack.c.b16 %v10128, %v10128
      %v10257 = vpack.c.b16 %v10129, %v10129
      %v10258 = vpack.c.b16 %v10130, %v10130
      %v10259 = vpack.c.b16 %v10131, %v10131
      %v10260 = vpack.c.b16 %v10132, %v10132
      %v10261 = vpack.c.b16 %v10133, %v10133
      %v10262 = vpack.c.b16 %v10134, %v10134
      %v10263 = vpack.c.b16 %v10135, %v10135
      %v10264 = vpack.c.b16 %v10136, %v10136
      %v10265 = vpack.c.b16 %v10137, %v10137
      %v10266 = vpack.c.b16 %v10138, %v10138
      %v10267 = vpack.c.b16 %v10139, %v10139
      %v10268 = vpack.c.b16 %v10140, %v10140
      %v10269 = vpack.c.b16 %v10141, %v10141
      %v10270 = vpack.c.b16 %v10142, %v10142
      %v10271 = vpack.c.b16 %v10143, %v10143
      %v10272 = vpack.c.b16 %v10144, %v10144
      %v10273 = vpack.c.b16 %v10145, %v10145
      %v10274 = vpack.c.b16 %v10146, %v10146
      %v10275 = vpack.c.b16 %v10147, %v10147
      %v10276 = vpack.c.b16 %v10148, %v10148
      %v10277 = vpack.c.b16 %v10149, %v10149
      %v10278 = vpack.c.b16 %v10150, %v10150
      %v10279 = vpack.c.b16 %v10151, %v10151
      %v10280 = vpack.c.b16 %v10152, %v10152
      %v10281 = vpack.c.b16 %v10153, %v10153
      %v10282 = vpack.c.b16 %v10154, %v10154
      %v10283 = vpack.c.b16 %v10155, %v10155
      %v10284 = vpack.c.b16 %v10156, %v10156
      %v10285 = vpack.c.b16 %v10157, %v10157
      %v10286 = vpack.c.b16 %v10158, %v10158
      %v10287 = vpack.c.b16 %v10159, %v10159
      %v10288 = vpack.c.b16 %v10160, %v10160
      %v10289 = vpack.c.b16 %v10161, %v10161
      %v10290 = vpack.c.b16 %v10162, %v10162
      %v10291 = vpack.c.b16 %v10163, %v10163
      %v10292 = vpack.c.b16 %v10164, %v10164
      %v10293 = vpack.c.b16 %v10165, %v10165
      %v10294 = vpack.c.b16 %v10166, %v10166
      %v10295 = vpack.c.b16 %v10167, %v10167
      %v10296 = vpack.c.b16 %v10168, %v10168
      %v10297 = vpack.c.b16 %v10169, %v10169
      %v10298 = vpack.c.b16 %v10170, %v10170
      %v10299 = vpack.c.b16 %v10171, %v10171
      %v10300 = vpack.c.b16 %v10172, %v10172
      %v10301 = vpack.c.b16 %v10173, %v10173
      %v10302 = vpack.c.b16 %v10174, %v10174
      %v10303 = vpack.c.b16 %v10175, %v10175
      %v10304 = vpack.c.b16 %v10176, %v10176
      %v10305 = vpack.c.b16 %v10177, %v10177
      %v10306 = vpack.c.b16 %v10178, %v10178
      %v10307 = vpack.c.b16 %v10179, %v10179
      %v10308 = vpack.c.b16 %v10180, %v10180
      %v10309 = vpack.c.b16 %v10181, %v10181
      %v10310 = vpack.c.b16 %v10182, %v10182
      %v10311 = vpack.c.b16 %v10183, %v10183
      %v10312 = vpack.c.b16 %v10184, %v10184
      %v10313 = vpack.c.b16 %v10185, %v10185
      %v10314 = vpack.c.b16 %v10186, %v10186
      %v10315 = vpack.c.b16 %v10187, %v10187
      %v10316 = vpack.c.b16 %v10188, %v10188
      %v10317 = vpack.c.b16 %v10189, %v10189
      %v10318 = vpack.c.b16 %v10190, %v10190
      %v10319 = vpack.c.b16 %v10191, %v10191
      %v10320 = vpack.c.b16 %v10192, %v10192
      %v10321 = vpack.c.b16 %v10193, %v10193
      %v10322 = vpack.c.b16 %v10194, %v10194
      %v10323 = vpack.c.b16 %v10195, %v10195
      %v10324 = vpack.c.b16 %v10196, %v10196
      %v10325 = vpack.c.b16 %v10197, %v10197
      %v10326 = vpack.c.b16 %v10198, %v10198
      %v10327 = vpack.c.b16 %v10199, %v10199
      %v10328 = vpack.c.b16 %v10200, %v10200
      %v10329 = vpack.c.b16 %v10201, %v10201
      %v10330 = vpack.c.b16 %v10202, %v10202
      %v10331 = vpack.c.b16 %v10203, %v10203
      %v10332 = vpack.c.b16 %v10204, %v10204
      %v10333 = vpack.c.b16 %v10205, %v10205
      %v10334 = vpack.c.b16 %v10206, %v10206
      %v10335 = vpack.c.b16 %v10207, %v10207
      %vm10464 = vcmask 125952
      %10465 = vst.msk [vmem:[%s197] sm:$0xf] %vm10464, %v10208
      %10466 = vst.msk [vmem:[%s197 + $0x4] sm:$0xf] %vm10464, %v10209
      %10467 = vst.msk [vmem:[%s197 + $0x8] sm:$0xf] %vm10464, %v10210
      %10468 = vst.msk [vmem:[%s197 + $0xc] sm:$0xf] %vm10464, %v10211
      %10469 = vst.msk [vmem:[%s197 + $0x10] sm:$0xf] %vm10464, %v10212
      %10470 = vst.msk [vmem:[%s197 + $0x14] sm:$0xf] %vm10464, %v10213
      %10471 = vst.msk [vmem:[%s197 + $0x18] sm:$0xf] %vm10464, %v10214
      %10472 = vst.msk [vmem:[%s197 + $0x1c] sm:$0xf] %vm10464, %v10215
      %10473 = vst.msk [vmem:[%s197 + $0x20] sm:$0xf] %vm10464, %v10216
      %10474 = vst.msk [vmem:[%s197 + $0x24] sm:$0xf] %vm10464, %v10217
      %10475 = vst.msk [vmem:[%s197 + $0x28] sm:$0xf] %vm10464, %v10218
      %10476 = vst.msk [vmem:[%s197 + $0x2c] sm:$0xf] %vm10464, %v10219
      %10477 = vst.msk [vmem:[%s197 + $0x30] sm:$0xf] %vm10464, %v10220
      %10478 = vst.msk [vmem:[%s197 + $0x34] sm:$0xf] %vm10464, %v10221
      %10479 = vst.msk [vmem:[%s197 + $0x38] sm:$0xf] %vm10464, %v10222
      %10480 = vst.msk [vmem:[%s197 + $0x3c] sm:$0xf] %vm10464, %v10223
      %10481 = vst.msk [vmem:[%s197 + $0x40] sm:$0xf] %vm10464, %v10224
      %10482 = vst.msk [vmem:[%s197 + $0x44] sm:$0xf] %vm10464, %v10225
      %10483 = vst.msk [vmem:[%s197 + $0x48] sm:$0xf] %vm10464, %v10226
      %10484 = vst.msk [vmem:[%s197 + $0x4c] sm:$0xf] %vm10464, %v10227
      %10485 = vst.msk [vmem:[%s197 + $0x50] sm:$0xf] %vm10464, %v10228
      %10486 = vst.msk [vmem:[%s197 + $0x54] sm:$0xf] %vm10464, %v10229
      %10487 = vst.msk [vmem:[%s197 + $0x58] sm:$0xf] %vm10464, %v10230
      %10488 = vst.msk [vmem:[%s197 + $0x5c] sm:$0xf] %vm10464, %v10231
      %10489 = vst.msk [vmem:[%s197 + $0x60] sm:$0xf] %vm10464, %v10232
      %10490 = vst.msk [vmem:[%s197 + $0x64] sm:$0xf] %vm10464, %v10233
      %10491 = vst.msk [vmem:[%s197 + $0x68] sm:$0xf] %vm10464, %v10234
      %10492 = vst.msk [vmem:[%s197 + $0x6c] sm:$0xf] %vm10464, %v10235
      %10493 = vst.msk [vmem:[%s197 + $0x70] sm:$0xf] %vm10464, %v10236
      %10494 = vst.msk [vmem:[%s197 + $0x74] sm:$0xf] %vm10464, %v10237
      %10495 = vst.msk [vmem:[%s197 + $0x78] sm:$0xf] %vm10464, %v10238
      %10496 = vst.msk [vmem:[%s197 + $0x7c] sm:$0xf] %vm10464, %v10239
      %10497 = vst.msk [vmem:[%s197 + $0x80] sm:$0xf] %vm10464, %v10240
      %10498 = vst.msk [vmem:[%s197 + $0x84] sm:$0xf] %vm10464, %v10241
      %10499 = vst.msk [vmem:[%s197 + $0x88] sm:$0xf] %vm10464, %v10242
      %10500 = vst.msk [vmem:[%s197 + $0x8c] sm:$0xf] %vm10464, %v10243
      %10501 = vst.msk [vmem:[%s197 + $0x90] sm:$0xf] %vm10464, %v10244
      %10502 = vst.msk [vmem:[%s197 + $0x94] sm:$0xf] %vm10464, %v10245
      %10503 = vst.msk [vmem:[%s197 + $0x98] sm:$0xf] %vm10464, %v10246
      %10504 = vst.msk [vmem:[%s197 + $0x9c] sm:$0xf] %vm10464, %v10247
      %10505 = vst.msk [vmem:[%s197 + $0xa0] sm:$0xf] %vm10464, %v10248
      %10506 = vst.msk [vmem:[%s197 + $0xa4] sm:$0xf] %vm10464, %v10249
      %10507 = vst.msk [vmem:[%s197 + $0xa8] sm:$0xf] %vm10464, %v10250
      %10508 = vst.msk [vmem:[%s197 + $0xac] sm:$0xf] %vm10464, %v10251
      %10509 = vst.msk [vmem:[%s197 + $0xb0] sm:$0xf] %vm10464, %v10252
      %10510 = vst.msk [vmem:[%s197 + $0xb4] sm:$0xf] %vm10464, %v10253
      %10511 = vst.msk [vmem:[%s197 + $0xb8] sm:$0xf] %vm10464, %v10254
      %10512 = vst.msk [vmem:[%s197 + $0xbc] sm:$0xf] %vm10464, %v10255
      %10513 = vst.msk [vmem:[%s197 + $0xc0] sm:$0xf] %vm10464, %v10256
      %10514 = vst.msk [vmem:[%s197 + $0xc4] sm:$0xf] %vm10464, %v10257
      %10515 = vst.msk [vmem:[%s197 + $0xc8] sm:$0xf] %vm10464, %v10258
      %10516 = vst.msk [vmem:[%s197 + $0xcc] sm:$0xf] %vm10464, %v10259
      %10517 = vst.msk [vmem:[%s197 + $0xd0] sm:$0xf] %vm10464, %v10260
      %10518 = vst.msk [vmem:[%s197 + $0xd4] sm:$0xf] %vm10464, %v10261
      %10519 = vst.msk [vmem:[%s197 + $0xd8] sm:$0xf] %vm10464, %v10262
      %10520 = vst.msk [vmem:[%s197 + $0xdc] sm:$0xf] %vm10464, %v10263
      %10521 = vst.msk [vmem:[%s197 + $0xe0] sm:$0xf] %vm10464, %v10264
      %10522 = vst.msk [vmem:[%s197 + $0xe4] sm:$0xf] %vm10464, %v10265
      %10523 = vst.msk [vmem:[%s197 + $0xe8] sm:$0xf] %vm10464, %v10266
      %10524 = vst.msk [vmem:[%s197 + $0xec] sm:$0xf] %vm10464, %v10267
      %10525 = vst.msk [vmem:[%s197 + $0xf0] sm:$0xf] %vm10464, %v10268
      %10526 = vst.msk [vmem:[%s197 + $0xf4] sm:$0xf] %vm10464, %v10269
      %10527 = vst.msk [vmem:[%s197 + $0xf8] sm:$0xf] %vm10464, %v10270
      %10528 = vst.msk [vmem:[%s197 + $0xfc] sm:$0xf] %vm10464, %v10271
      %10529 = vst.msk [vmem:[%s197 + $0x100] sm:$0xf] %vm10464, %v10272
      %10530 = vst.msk [vmem:[%s197 + $0x104] sm:$0xf] %vm10464, %v10273
      %10531 = vst.msk [vmem:[%s197 + $0x108] sm:$0xf] %vm10464, %v10274
      %10532 = vst.msk [vmem:[%s197 + $0x10c] sm:$0xf] %vm10464, %v10275
      %10533 = vst.msk [vmem:[%s197 + $0x110] sm:$0xf] %vm10464, %v10276
      %10534 = vst.msk [vmem:[%s197 + $0x114] sm:$0xf] %vm10464, %v10277
      %10535 = vst.msk [vmem:[%s197 + $0x118] sm:$0xf] %vm10464, %v10278
      %10536 = vst.msk [vmem:[%s197 + $0x11c] sm:$0xf] %vm10464, %v10279
      %10537 = vst.msk [vmem:[%s197 + $0x120] sm:$0xf] %vm10464, %v10280
      %10538 = vst.msk [vmem:[%s197 + $0x124] sm:$0xf] %vm10464, %v10281
      %10539 = vst.msk [vmem:[%s197 + $0x128] sm:$0xf] %vm10464, %v10282
      %10540 = vst.msk [vmem:[%s197 + $0x12c] sm:$0xf] %vm10464, %v10283
      %10541 = vst.msk [vmem:[%s197 + $0x130] sm:$0xf] %vm10464, %v10284
      %10542 = vst.msk [vmem:[%s197 + $0x134] sm:$0xf] %vm10464, %v10285
      %10543 = vst.msk [vmem:[%s197 + $0x138] sm:$0xf] %vm10464, %v10286
      %10544 = vst.msk [vmem:[%s197 + $0x13c] sm:$0xf] %vm10464, %v10287
      %10545 = vst.msk [vmem:[%s197 + $0x140] sm:$0xf] %vm10464, %v10288
      %10546 = vst.msk [vmem:[%s197 + $0x144] sm:$0xf] %vm10464, %v10289
      %10547 = vst.msk [vmem:[%s197 + $0x148] sm:$0xf] %vm10464, %v10290
      %10548 = vst.msk [vmem:[%s197 + $0x14c] sm:$0xf] %vm10464, %v10291
      %10549 = vst.msk [vmem:[%s197 + $0x150] sm:$0xf] %vm10464, %v10292
      %10550 = vst.msk [vmem:[%s197 + $0x154] sm:$0xf] %vm10464, %v10293
      %10551 = vst.msk [vmem:[%s197 + $0x158] sm:$0xf] %vm10464, %v10294
      %10552 = vst.msk [vmem:[%s197 + $0x15c] sm:$0xf] %vm10464, %v10295
      %10553 = vst.msk [vmem:[%s197 + $0x160] sm:$0xf] %vm10464, %v10296
      %10554 = vst.msk [vmem:[%s197 + $0x164] sm:$0xf] %vm10464, %v10297
      %10555 = vst.msk [vmem:[%s197 + $0x168] sm:$0xf] %vm10464, %v10298
      %10556 = vst.msk [vmem:[%s197 + $0x16c] sm:$0xf] %vm10464, %v10299
      %10557 = vst.msk [vmem:[%s197 + $0x170] sm:$0xf] %vm10464, %v10300
      %10558 = vst.msk [vmem:[%s197 + $0x174] sm:$0xf] %vm10464, %v10301
      %10559 = vst.msk [vmem:[%s197 + $0x178] sm:$0xf] %vm10464, %v10302
      %10560 = vst.msk [vmem:[%s197 + $0x17c] sm:$0xf] %vm10464, %v10303
      %10561 = vst.msk [vmem:[%s197 + $0x180] sm:$0xf] %vm10464, %v10304
      %10562 = vst.msk [vmem:[%s197 + $0x184] sm:$0xf] %vm10464, %v10305
      %10563 = vst.msk [vmem:[%s197 + $0x188] sm:$0xf] %vm10464, %v10306
      %10564 = vst.msk [vmem:[%s197 + $0x18c] sm:$0xf] %vm10464, %v10307
      %10565 = vst.msk [vmem:[%s197 + $0x190] sm:$0xf] %vm10464, %v10308
      %10566 = vst.msk [vmem:[%s197 + $0x194] sm:$0xf] %vm10464, %v10309
      %10567 = vst.msk [vmem:[%s197 + $0x198] sm:$0xf] %vm10464, %v10310
      %10568 = vst.msk [vmem:[%s197 + $0x19c] sm:$0xf] %vm10464, %v10311
      %10569 = vst.msk [vmem:[%s197 + $0x1a0] sm:$0xf] %vm10464, %v10312
      %10570 = vst.msk [vmem:[%s197 + $0x1a4] sm:$0xf] %vm10464, %v10313
      %10571 = vst.msk [vmem:[%s197 + $0x1a8] sm:$0xf] %vm10464, %v10314
      %10572 = vst.msk [vmem:[%s197 + $0x1ac] sm:$0xf] %vm10464, %v10315
      %10573 = vst.msk [vmem:[%s197 + $0x1b0] sm:$0xf] %vm10464, %v10316
      %10574 = vst.msk [vmem:[%s197 + $0x1b4] sm:$0xf] %vm10464, %v10317
      %10575 = vst.msk [vmem:[%s197 + $0x1b8] sm:$0xf] %vm10464, %v10318
      %10576 = vst.msk [vmem:[%s197 + $0x1bc] sm:$0xf] %vm10464, %v10319
      %10577 = vst.msk [vmem:[%s197 + $0x1c0] sm:$0xf] %vm10464, %v10320
      %10578 = vst.msk [vmem:[%s197 + $0x1c4] sm:$0xf] %vm10464, %v10321
      %10579 = vst.msk [vmem:[%s197 + $0x1c8] sm:$0xf] %vm10464, %v10322
      %10580 = vst.msk [vmem:[%s197 + $0x1cc] sm:$0xf] %vm10464, %v10323
      %10581 = vst.msk [vmem:[%s197 + $0x1d0] sm:$0xf] %vm10464, %v10324
      %10582 = vst.msk [vmem:[%s197 + $0x1d4] sm:$0xf] %vm10464, %v10325
      %10583 = vst.msk [vmem:[%s197 + $0x1d8] sm:$0xf] %vm10464, %v10326
      %10584 = vst.msk [vmem:[%s197 + $0x1dc] sm:$0xf] %vm10464, %v10327
      %10585 = vst.msk [vmem:[%s197 + $0x1e0] sm:$0xf] %vm10464, %v10328
      %10586 = vst.msk [vmem:[%s197 + $0x1e4] sm:$0xf] %vm10464, %v10329
      %10587 = vst.msk [vmem:[%s197 + $0x1e8] sm:$0xf] %vm10464, %v10330
      %10588 = vst.msk [vmem:[%s197 + $0x1ec] sm:$0xf] %vm10464, %v10331
      %10589 = vst.msk [vmem:[%s197 + $0x1f0] sm:$0xf] %vm10464, %v10332
      %10590 = vst.msk [vmem:[%s197 + $0x1f4] sm:$0xf] %vm10464, %v10333
      %10591 = vst.msk [vmem:[%s197 + $0x1f8] sm:$0xf] %vm10464, %v10334
      %10592 = vst.msk [vmem:[%s197 + $0x1fc] sm:$0xf] %vm10464, %v10335
      %p10593 = scmp.lt.s32.totalorder %s15, 1
      %s10594 = scalar_select %p10593, %s15, 1
      %s10595 = smul.addr %s10594, 128
      %s10596 = smul.addr %s10595, 4
      %s10597 = scalar_lea.vmem %s4, %s10596
      // Predicated region
      $region37: #{tpu_custom_call.1} parent=35 // pred_check
        %p10598 = pneg %p122
      $region38: #{tpu_custom_call.1} parent=35 // pred_check_branch
        %10600 = sbr.rel (%p10598) target = $region40
      $region39: #{tpu_custom_call.1} parent=35 // pred_region
        _
      $region40: #{tpu_custom_call.1} parent=35 // pred_fallthru
        _
    $region36: #{tpu_custom_call.1} parent=5 // pred_fallthru
      _
    %p10601 = scmp.le.s32.totalorder 2, %s10
    // Predicated region
    $region41: #{tpu_custom_call.1} parent=5 // pred_check
      %p10602 = pneg %p10601
    $region42: #{tpu_custom_call.1} parent=5 // pred_check_branch
      %10604 = sbr.rel (%p10602) target = $region44
    $region43: #{tpu_custom_call.1} parent=5 // pred_region
      %s10605 = ssub.s32 %s10, 2
      // Predicated region
      $region45: #{tpu_custom_call.1} parent=43 // pred_check
        %p10606 = pneg %p128
      $region46: #{tpu_custom_call.1} parent=43 // pred_check_branch
        %10608 = sbr.rel (%p10606) target = $region48
      $region47: #{tpu_custom_call.1} parent=43 // pred_region
        %p10609 = scmp.lt.s32.totalorder %s16, 1
        %s10610 = scalar_select %p10609, %s16, 1
        %s10611 = smul.addr %s10610, 128
        %s10612 = smul.addr %s10611, 4
        %s10613 = scalar_lea.vmem %s4, %s10612
      $region48: #{tpu_custom_call.1} parent=43 // pred_fallthru
        _
    $region44: #{tpu_custom_call.1} parent=5 // pred_fallthru
      _
  $region6: #{tpu_custom_call.1} parent=0 // loop_footer
    %s14 = sadd.s32 1, %s10
  $region7: #{tpu_custom_call.1} parent=0 // loop_footer_branch
    %9 = sbr.rel target = $region3
  $region8: #{tpu_custom_call.1} parent=0 // loop_exit
    _

</llo_original>
